<compile_context>
chip_gen: v7x
topology: tpu7x:2x2x1
jax: 0.10.0
libtpu: 0.0.40
codegen_flags: <defaults>
</compile_context>

<pallas_src>
import functools
import math

import jax
import jax.numpy as jnp
from jax.experimental import pallas as pl
from jax.experimental.pallas import tpu as pltpu


# ----------------------------- in-kernel helpers -----------------------------

def _layer_norm(x, g, b, eps=1e-5):
    mu = jnp.mean(x, axis=-1, keepdims=True)
    xc = x - mu
    var = jnp.mean(xc * xc, axis=-1, keepdims=True)
    return xc * jax.lax.rsqrt(var + eps) * g + b


def _erf(x):
    # Abramowitz & Stegun 7.1.26 (|err| < 1.5e-7); only guaranteed-lowering ops.
    a1, a2, a3, a4, a5 = (0.254829592, -0.284496736, 1.421413741,
                          -1.453152027, 1.061405429)
    p = 0.3275911
    sgn = jnp.where(x >= 0.0, 1.0, -1.0)
    ax = jnp.abs(x)
    t = 1.0 / (1.0 + p * ax)
    poly = ((((a5 * t + a4) * t + a3) * t + a2) * t + a1) * t
    return sgn * (1.0 - poly * jnp.exp(-ax * ax))


def _gelu_exact(x):
    # matches torch.nn.GELU() (erf form) to float32 precision
    return 0.5 * x * (1.0 + _erf(x * (1.0 / math.sqrt(2.0))))


def _to_bf16(w):
    """Weight chunk -> bf16 MXU operand.  int8 is widened via i32/f32 (every step
    has a guaranteed Mosaic lowering); int8 magnitudes are exact in bf16 and the
    per-output-channel scale is applied to the f32 matmul OUTPUT instead."""
    if w.dtype == jnp.int8:
        return w.astype(jnp.int32).astype(jnp.float32).astype(jnp.bfloat16)
    return w.astype(jnp.bfloat16)


# ------------------------------- Pallas kernel --------------------------------

def transformer_kernel(x_ref,
                       ln1g_ref, ln1b_ref, wqkv_ref, sqkv_ref, bqkv_ref,
                       wo_ref, so_ref, bo_ref, ln2g_ref, ln2b_ref,
                       w1_ref, s1_ref, b1_ref, w2_ref, s2_ref, b2_ref,
                       lnfg_ref, lnfb_ref,
                       o_ref,
                       x_scr, h2_scr, attn_scr, mask_scr,
                       *, num_heads):
    """grid = (layer, mlp_hidden_chunk).  The residual stream (M, D) lives in
    VMEM scratch across the whole grid; per-layer weights are streamed in."""
    l = pl.program_id(0)
    c = pl.program_id(1)
    B, S, D = x_ref.shape
    M = B * S
    dh = D // num_heads

    # ---- one-time init: load activations, build the causal mask ----
    @pl.when(jnp.logical_and(l == 0, c == 0))
    def _():
        x_scr[...] = x_ref[...].reshape(M, D)          # S is a sublane multiple
        row = jax.lax.broadcasted_iota(jnp.int32, (S, S), 0)
        col = jax.lax.broadcasted_iota(jnp.int32, (S, S), 1)
        mask_scr[...] = jnp.where(col > row, jnp.float32(-1e30), jnp.float32(0.0))

    # ---- attention sub-block (runs once per layer, at chunk 0) ----
    @pl.when(c == 0)
    def _():
        x = x_scr[...]                                               # (M, D) f32
        h = _layer_norm(x, ln1g_ref[0], ln1b_ref[0]).astype(jnp.bfloat16)

        # q/k/v projections; 1/sqrt(dh) is pre-folded into sqkv/bqkv's q third.
        qkv = []
        for j in range(3):
            w = _to_bf16(wqkv_ref[0, :, j * D:(j + 1) * D])          # (D, D) bf16
            y = jnp.dot(h, w, preferred_element_type=jnp.float32)
            y = y * sqkv_ref[0, :, j * D:(j + 1) * D] + bqkv_ref[0, :, j * D:(j + 1) * D]
            qkv.append(y.reshape(B, S, D))
        q, k, v = qkv

        mask = mask_scr[...][None]                                   # (1, S, S)
        for hd in range(num_heads):                                  # static loop
            sl = slice(hd * dh, (hd + 1) * dh)
            s = jnp.einsum('bqd,bkd->bqk', q[..., sl], k[..., sl],
                           preferred_element_type=jnp.float32) + mask
            m = jnp.max(s, axis=-1, keepdims=True)
            e = jnp.exp(s - m)
            p = e * pl.reciprocal(jnp.sum(e, axis=-1, keepdims=True), approx=True)
            oh = jnp.einsum('bqk,bkd->bqd', p, v[..., sl],
                            preferred_element_type=jnp.float32)
            # write each head straight into the (M, D) scratch (no concat)
            attn_scr[:, sl] = oh.reshape(M, dh).astype(jnp.bfloat16)

        attn = jnp.dot(attn_scr[...], _to_bf16(wo_ref[0]),
                       preferred_element_type=jnp.float32) * so_ref[0] + bo_ref[0]
        xa = x + attn
        x_scr[...] = xa                                              # residual accumulator
        h2_scr[...] = _layer_norm(xa, ln2g_ref[0], ln2b_ref[0]).astype(jnp.bfloat16)

    # ---- MLP hidden-dim chunk (runs every grid step) ----
    m1 = jnp.dot(h2_scr[...], _to_bf16(w1_ref[0]),
                 preferred_element_type=jnp.float32) * s1_ref[0] + b1_ref[0]
    m1 = _gelu_exact(m1)                                             # (M, Tk) f32
    part = jnp.dot(m1.astype(jnp.bfloat16), _to_bf16(w2_ref[0]),
                   preferred_element_type=jnp.float32) * s2_ref[0]   # (M, D) f32
    x_scr[...] = x_scr[...] + part

    # ---- layer finalize (+ fused ln_final on the very last step) ----
    @pl.when(c == pl.num_programs(1) - 1)
    def _():
        x_new = x_scr[...] + b2_ref[0]
        x_scr[...] = x_new

        @pl.when(l == pl.num_programs(0) - 1)
        def _():
            o_ref[...] = _layer_norm(x_new, lnfg_ref[...], lnfb_ref[...]).reshape(B, S, D)


# --------------------------------- wrappers -----------------------------------

LAYER_PARAM_NAMES = ("ln1_g", "ln1_b", "wqkv", "sqkv", "bqkv", "wo", "so", "bo",
                     "ln2_g", "ln2_b", "w1", "s1", "b1", "w2", "s2", "b2")


def _vmem_limit_bytes(B, S, D, hidden, tk, w_itemsize):
    """Explicit VMEM budget: double-buffered streamed weight slabs + resident
    scratch + in/out activation blocks + large in-kernel intermediates + Mosaic
    headroom; clamped to 85% of physical VMEM (64 MiB v7x / 128 MiB v5e-v6e).
    On 128 MiB parts the floor is raised to 96 MiB (deeper weight buffering)."""
    f32, bf16 = 4, 2
    M = B * S
    slabs = 2 * (3 * D * D + D * D + D * tk + tk * D) * w_itemsize
    vecs = 2 * (10 * D + 6 * D + 2 * tk) * f32
    scratch = M * D * (f32 + 2 * bf16) + S * S * f32
    io = 2 * 2 * B * S * D * f32
    inter = (4 * M * D + B * S * S + 2 * M * tk) * f32
    deq = max(D * tk, D * D) * (4 + 4 + 2)
    est = slabs + vecs + scratch + io + inter + deq + (8 << 20)
    try:
        cap = int(pltpu.get_tpu_info().vmem_capacity_bytes)
    except Exception:
        cap = 64 * 1024 * 1024                       # v7x-safe fallback
    hi = int(cap * 0.85)
    return int(min(max(est, min(96 * 1024 * 1024, hi)), hi))


def run_text_transformer(x, layer_params, lnf_g, lnf_b, *, num_heads, mlp_chunk=1024):
    B, S, D = x.shape
    lp = dict(zip(LAYER_PARAM_NAMES, layer_params))
    n_layers = lp["wqkv"].shape[0]
    hidden = lp["w1"].shape[2]
    assert n_layers >= 1
    assert S % 8 == 0 and D % num_heads == 0
    tk = min(mlp_chunk, hidden)
    assert hidden % tk == 0
    n_chunks = hidden // tk

    def per_layer(a):          # per-layer slab, resident across MLP chunks
        return pl.BlockSpec((1,) + a.shape[1:], lambda l, c: (l, 0, 0))

    def chunk_cols(a):         # chunked along the hidden (last) dim
        return pl.BlockSpec((1, a.shape[1], tk), lambda l, c: (l, 0, c))

    def chunk_rows(a):         # chunked along the hidden (second-to-last) dim
        return pl.BlockSpec((1, tk, a.shape[2]), lambda l, c: (l, c, 0))

    spec_fn = {"w1": chunk_cols, "s1": chunk_cols, "b1": chunk_cols, "w2": chunk_rows}

    in_specs = ([pl.BlockSpec((B, S, D), lambda l, c: (0, 0, 0))]
                + [spec_fn.get(name, per_layer)(lp[name]) for name in LAYER_PARAM_NAMES]
                + [pl.BlockSpec(lnf_g.shape, lambda l, c: (0, 0)),
                   pl.BlockSpec(lnf_b.shape, lambda l, c: (0, 0))])

    return pl.pallas_call(
        functools.partial(transformer_kernel, num_heads=num_heads),
        grid=(n_layers, n_chunks),
        in_specs=in_specs,
        out_specs=pl.BlockSpec((B, S, D), lambda l, c: (0, 0, 0)),
        out_shape=jax.ShapeDtypeStruct((B, S, D), jnp.float32),
        scratch_shapes=[pltpu.VMEM((B * S, D), jnp.float32),    # residual stream
                        pltpu.VMEM((B * S, D), jnp.bfloat16),   # ln_2(x), reused by MLP chunks
                        pltpu.VMEM((B * S, D), jnp.bfloat16),   # per-head attention outputs
                        pltpu.VMEM((S, S), jnp.float32)],       # causal mask (built once)
        compiler_params=pltpu.CompilerParams(
            dimension_semantics=("arbitrary", "arbitrary"),     # both axes sequential
            vmem_limit_bytes=_vmem_limit_bytes(B, S, D, hidden, tk,
                                               lp["wqkv"].dtype.itemsize)),
    )(x, *[lp[n] for n in LAYER_PARAM_NAMES], lnf_g, lnf_b)


def frozen_open_clip_embed(tokens, params, *, num_heads, layer_idx=1,
                           mlp_chunk=1024, seq_pad=8):
    """Equivalent of FrozenOpenCLIPEmbedder.encode_with_transformer.
    layer_idx=1 ('penultimate'): all blocks but the last; layer_idx=0 ('last'): all.
    Batching multiple prompts (B >= 2-4) per call is recommended: the streamed
    weights are amortised over more matmul rows."""
    assert layer_idx in (0, 1)
    # TODO(synk): open_clip.tokenize (BPE) has no Pallas equivalent; integer ids in.
    x = (params["token_embedding"][tokens]
         + params["positional_embedding"][None]).astype(jnp.float32)
    B, S, D = x.shape
    s_pad = ((S + seq_pad - 1) // seq_pad) * seq_pad
    if s_pad != S:
        # zero pad rows: causally invisible to real rows, sliced off afterwards
        x = jnp.pad(x, ((0, 0), (0, s_pad - S), (0, 0)))
    n_blocks = params["wqkv"].shape[0] - layer_idx
    layer_params = [params[name][:n_blocks] for name in LAYER_PARAM_NAMES]
    z = run_text_transformer(x, layer_params,
                             params["ln_final_g"], params["ln_final_b"],
                             num_heads=num_heads, mlp_chunk=mlp_chunk)
    return z[:, :S]


# ----------------------------- parameter set-up --------------------------------

def init_params(key, *, vocab, width, seq, layers, mlp_ratio=4):
    """Float32 'PyTorch-like' parameters, per-layer weights stacked on axis 0."""
    hidden = mlp_ratio * width
    ks = iter(jax.random.split(key, 20))
    n = lambda shape, s: s * jax.random.normal(next(ks), shape, jnp.float32)
    return {
        "token_embedding": n((vocab, width), 0.02),
        "positional_embedding": n((seq, width), 0.01),
        "ln_final_g": 1.0 + n((1, width), 0.05),
        "ln_final_b": n((1, width), 0.02),
        "ln1_g": 1.0 + n((layers, 1, width), 0.05),
        "ln1_b": n((layers, 1, width), 0.02),
        "wqkv": n((layers, width, 3 * width), 0.02),
        "bqkv": n((layers, 1, 3 * width), 0.01),
        "wo": n((layers, width, width), 0.02),
        "bo": n((layers, 1, width), 0.01),
        "ln2_g": 1.0 + n((layers, 1, width), 0.05),
        "ln2_b": n((layers, 1, width), 0.02),
        "w1": n((layers, width, hidden), 0.02),
        "b1": n((layers, 1, hidden), 0.01),
        "w2": n((layers, hidden, width), 0.02),
        "b2": n((layers, 1, width), 0.01),
    }


def prepare_frozen_params(params, *, num_heads, weight_dtype="int8"):
    """One-time offline transform of the frozen weights:
      * fold the attention 1/sqrt(dh) scale into the q output-channel scales/bias,
      * compress the four big matmul weights (the DMA-bound weight stream):
        int8 + per-output-channel f32 scales (default; dequantised to bf16
        in-kernel so the MXU always sees bf16 -> valid on v5e/v6e/v7x), or
        plain bf16 via weight_dtype="bfloat16"."""
    p = dict(params)
    D = p["wqkv"].shape[1]

    def compress(w):
        if weight_dtype == "int8":
            amax = jnp.max(jnp.abs(w), axis=1, keepdims=True)
            scale = jnp.maximum(amax, 1e-8) / 127.0
            wq = jnp.clip(jnp.round(w / scale), -127, 127).astype(jnp.int8)
            return wq, scale.astype(jnp.float32)
        return (w.astype(jnp.bfloat16),
                jnp.ones((w.shape[0], 1, w.shape[2]), jnp.float32))

    p["wqkv"], sqkv = compress(p["wqkv"])
    p["wo"], p["so"] = compress(p["wo"])
    p["w1"], p["s1"] = compress(p["w1"])
    p["w2"], p["s2"] = compress(p["w2"])
    inv = 1.0 / math.sqrt(D // num_heads)
    p["sqkv"] = sqkv.at[:, :, :D].multiply(inv)
    p["bqkv"] = p["bqkv"].at[:, :, :D].multiply(inv)
    return p


# ------------------------- pure-JAX float32 reference ---------------------------

def reference_forward(tokens, p, *, num_heads, layer_idx=1):
    """encode_with_transformer in plain JAX/f32 on the same (quantised) params."""
    x = (p["token_embedding"][tokens] + p["positional_embedding"][None]).astype(jnp.float32)
    B, S, D = x.shape
    H, dh = num_heads, D // num_heads
    nb = p["wqkv"].shape[0] - layer_idx
    mask = jnp.where(jnp.arange(S)[None, :] > jnp.arange(S)[:, None], -1e30, 0.0)

    def ln(x, g, b, eps=1e-5):
        mu = jnp.mean(x, -1, keepdims=True)
        var = jnp.mean((x - mu) ** 2, -1, keepdims=True)
        return (x - mu) * jax.lax.rsqrt(var + eps) * g + b

    def lin(h, w, s, b):
        return (h @ w.astype(jnp.float32)) * s + b

    for l in range(nb):
        h = ln(x, p["ln1_g"][l], p["ln1_b"][l])
        qkv = lin(h, p["wqkv"][l], p["sqkv"][l], p["bqkv"][l])
        q, k, v = (qkv[..., i * D:(i + 1) * D].reshape(B, S, H, dh) for i in range(3))
        s = jnp.einsum('bqhd,bkhd->bhqk', q, k) + mask
        a = jax.nn.softmax(s, axis=-1)
        o = jnp.einsum('bhqk,bkhd->bqhd', a, v).reshape(B, S, D)
        x = x + lin(o, p["wo"][l], p["so"][l], p["bo"][l])
        h2 = ln(x, p["ln2_g"][l], p["ln2_b"][l])
        m1 = jax.nn.gelu(lin(h2, p["w1"][l], p["s1"][l], p["b1"][l]), approximate=False)
        x = x + lin(m1, p["w2"][l], p["s2"][l], p["b2"][l])
    return ln(x, p["ln_final_g"], p["ln_final_b"])


# ------------------------------------ main --------------------------------------

if __name__ == "__main__":
    # small shapes consistent with the module (real ViT-H-14 text tower: S=77,
    # D=1024, H=16, L=24, hidden=4096, V=49408 -- scaled down; S=77 kept to
    # exercise the sequence padding path, padded to 80 inside the wrapper)
    B, S, D, H, V, L = 2, 77, 128, 4, 512, 3

    key = jax.random.PRNGKey(0)
    k_params, k_tok = jax.random.split(key)
    params = prepare_frozen_params(
        init_params(k_params, vocab=V, width=D, seq=S, layers=L),
        num_heads=H, weight_dtype="int8")

    # synthetic token ids (stand-in for open_clip.tokenize output)
    tokens = jax.random.randint(k_tok, (B, S), 0, V, dtype=jnp.int32)

    z = frozen_open_clip_embed(tokens, params, num_heads=H,
                               layer_idx=1, mlp_chunk=256)   # 'penultimate'
    z = jax.block_until_ready(z)

    assert z.shape == (B, S, D), z.shape
    assert z.dtype == jnp.float32
    assert bool(jnp.all(jnp.isfinite(z)))

    # validate against a pure-JAX f32 reference of the same math
    z_ref = reference_forward(tokens, params, num_heads=H, layer_idx=1)
    err = float(jnp.max(jnp.abs(z - z_ref)))
    assert err < 1e-1, f"max abs err vs reference: {err}"
    print("KERNEL_OK")
</pallas_src>

<mosaic_0001>
module attributes {stable_mosaic.version = 11 : i64} {
  func.func @transformer_kernel(%arg0: i32, %arg1: i32, %arg2: memref<2x80x128xf32, #tpu.memory_space<vmem>>, %arg3: memref<1x1x128xf32, #tpu.memory_space<vmem>>, %arg4: memref<1x1x128xf32, #tpu.memory_space<vmem>>, %arg5: memref<1x128x384xi8, #tpu.memory_space<vmem>>, %arg6: memref<1x1x384xf32, #tpu.memory_space<vmem>>, %arg7: memref<1x1x384xf32, #tpu.memory_space<vmem>>, %arg8: memref<1x128x128xi8, #tpu.memory_space<vmem>>, %arg9: memref<1x1x128xf32, #tpu.memory_space<vmem>>, %arg10: memref<1x1x128xf32, #tpu.memory_space<vmem>>, %arg11: memref<1x1x128xf32, #tpu.memory_space<vmem>>, %arg12: memref<1x1x128xf32, #tpu.memory_space<vmem>>, %arg13: memref<1x128x256xi8, #tpu.memory_space<vmem>>, %arg14: memref<1x1x256xf32, #tpu.memory_space<vmem>>, %arg15: memref<1x1x256xf32, #tpu.memory_space<vmem>>, %arg16: memref<1x256x128xi8, #tpu.memory_space<vmem>>, %arg17: memref<1x1x128xf32, #tpu.memory_space<vmem>>, %arg18: memref<1x1x128xf32, #tpu.memory_space<vmem>>, %arg19: memref<1x128xf32, #tpu.memory_space<vmem>>, %arg20: memref<1x128xf32, #tpu.memory_space<vmem>>, %arg21: memref<2x80x128xf32, #tpu.memory_space<vmem>>, %arg22: memref<160x128xf32, #tpu.memory_space<vmem>>, %arg23: memref<160x128xbf16, #tpu.memory_space<vmem>>, %arg24: memref<160x128xbf16, #tpu.memory_space<vmem>>, %arg25: memref<80x80xf32, #tpu.memory_space<vmem>>) attributes {dimension_semantics = [#tpu.dimension_semantics<arbitrary>, #tpu.dimension_semantics<arbitrary>], iteration_bounds = array<i64: 2, 2>, scalar_prefetch = 0 : i64, scratch_operands = 4 : i64, tpu.core_type = #tpu.core_type<tc>, window_params = [{pipeline_mode = #tpu.pipeline_mode<synchronous>, transform_indices = @transform_0, window_bounds = array<i64: 2, 80, 128>}, {transform_indices = @transform_1, window_bounds = array<i64: 1, 1, 128>}, {transform_indices = @transform_2, window_bounds = array<i64: 1, 1, 128>}, {transform_indices = @transform_3, window_bounds = array<i64: 1, 128, 384>}, {transform_indices = @transform_4, window_bounds = array<i64: 1, 1, 384>}, {transform_indices = @transform_5, window_bounds = array<i64: 1, 1, 384>}, {transform_indices = @transform_6, window_bounds = array<i64: 1, 128, 128>}, {transform_indices = @transform_7, window_bounds = array<i64: 1, 1, 128>}, {transform_indices = @transform_8, window_bounds = array<i64: 1, 1, 128>}, {transform_indices = @transform_9, window_bounds = array<i64: 1, 1, 128>}, {transform_indices = @transform_10, window_bounds = array<i64: 1, 1, 128>}, {transform_indices = @transform_11, window_bounds = array<i64: 1, 128, 256>}, {transform_indices = @transform_12, window_bounds = array<i64: 1, 1, 256>}, {transform_indices = @transform_13, window_bounds = array<i64: 1, 1, 256>}, {transform_indices = @transform_14, window_bounds = array<i64: 1, 256, 128>}, {transform_indices = @transform_15, window_bounds = array<i64: 1, 1, 128>}, {transform_indices = @transform_16, window_bounds = array<i64: 1, 1, 128>}, {pipeline_mode = #tpu.pipeline_mode<synchronous>, transform_indices = @transform_17, window_bounds = array<i64: 1, 128>}, {pipeline_mode = #tpu.pipeline_mode<synchronous>, transform_indices = @transform_18, window_bounds = array<i64: 1, 128>}, {pipeline_mode = #tpu.pipeline_mode<synchronous>, transform_indices = @transform_19, window_bounds = array<i64: 2, 80, 128>}]} {
    %c0_i32 = arith.constant 0 : i32
    %0 = arith.cmpi eq, %arg0, %c0_i32 : i32
    %c0_i32_0 = arith.constant 0 : i32
    %1 = arith.cmpi eq, %arg1, %c0_i32_0 : i32
    %2 = arith.andi %0, %1 : i1
    %3 = arith.extui %2 : i1 to i32
    %c0_i32_1 = arith.constant 0 : i32
    %4 = arith.cmpi ne, %3, %c0_i32_1 : i32
    scf.if %4 {
      %c0_42 = arith.constant 0 : index
      %c0_43 = arith.constant 0 : index
      %c0_44 = arith.constant 0 : index
      %81 = vector.load %arg2[%c0_42, %c0_43, %c0_44] : memref<2x80x128xf32, #tpu.memory_space<vmem>>, vector<2x80x128xf32>
      %82 = vector.shape_cast %81 : vector<2x80x128xf32> to vector<160x128xf32>
      %c0_45 = arith.constant 0 : index
      %c0_46 = arith.constant 0 : index
      %83 = vector.load %arg22[%c0_45, %c0_46] : memref<160x128xf32, #tpu.memory_space<vmem>>, vector<160x128xf32>
      tpu.vector_store %arg22[%c0_45, %c0_46], %82 {strides = array<i32>} : memref<160x128xf32, #tpu.memory_space<vmem>>, vector<160x128xf32>,
      %84 = tpu.iota {dimensions = array<i32: 0>} : vector<80x80xi32>
      %85 = tpu.iota {dimensions = array<i32: 1>} : vector<80x80xi32>
      %86 = arith.cmpi sgt, %85, %84 : vector<80x80xi32>
      %cst_47 = arith.constant -1.000000e+30 : f32
      %cst_48 = arith.constant 0.000000e+00 : f32
      %87 = vector.broadcast %cst_47 : f32 to vector<80x80xf32>
      %88 = vector.broadcast %cst_48 : f32 to vector<80x80xf32>
      %89 = arith.select %86, %87, %88 : vector<80x80xi1>, vector<80x80xf32>
      %c0_49 = arith.constant 0 : index
      %c0_50 = arith.constant 0 : index
      %90 = vector.load %arg25[%c0_49, %c0_50] : memref<80x80xf32, #tpu.memory_space<vmem>>, vector<80x80xf32>
      tpu.vector_store %arg25[%c0_49, %c0_50], %89 {strides = array<i32>} : memref<80x80xf32, #tpu.memory_space<vmem>>, vector<80x80xf32>,
    } else {
    }
    %c0_i32_2 = arith.constant 0 : i32
    %5 = arith.cmpi eq, %arg1, %c0_i32_2 : i32
    %6 = arith.extui %5 : i1 to i32
    %c0_i32_3 = arith.constant 0 : i32
    %7 = arith.cmpi ne, %6, %c0_i32_3 : i32
    scf.if %7 {
      %c0_42 = arith.constant 0 : index
      %c0_43 = arith.constant 0 : index
      %81 = vector.load %arg22[%c0_42, %c0_43] : memref<160x128xf32, #tpu.memory_space<vmem>>, vector<160x128xf32>
      %c0_44 = arith.constant 0 : index
      %c0_45 = arith.constant 0 : index
      %c0_46 = arith.constant 0 : index
      %82 = vector.load %arg3[%c0_44, %c0_45, %c0_46] : memref<1x1x128xf32, #tpu.memory_space<vmem>>, vector<1x1x128xf32>
      %83 = vector.shape_cast %82 : vector<1x1x128xf32> to vector<1x128xf32>
      %c0_47 = arith.constant 0 : index
      %c0_48 = arith.constant 0 : index
      %c0_49 = arith.constant 0 : index
      %84 = vector.load %arg4[%c0_47, %c0_48, %c0_49] : memref<1x1x128xf32, #tpu.memory_space<vmem>>, vector<1x1x128xf32>
      %85 = vector.shape_cast %84 : vector<1x1x128xf32> to vector<1x128xf32>
      %cst_50 = arith.constant dense<0.000000e+00> : vector<160xf32>
      %86 = vector.multi_reduction <add>, %81, %cst_50 [1] : vector<160x128xf32> to vector<160xf32>
      %87 = vector.shape_cast %86 : vector<160xf32> to vector<160x1xf32>
      %cst_51 = arith.constant 1.280000e+02 : f32
      %88 = vector.broadcast %cst_51 : f32 to vector<160x1xf32>
      %89 = arith.divf %87, %88 : vector<160x1xf32>
      %90 = vector.broadcast %89 : vector<160x1xf32> to vector<160x128xf32>
      %91 = arith.subf %81, %90 : vector<160x128xf32>
      %92 = arith.mulf %91, %91 : vector<160x128xf32>
      %cst_52 = arith.constant dense<0.000000e+00> : vector<160xf32>
      %93 = vector.multi_reduction <add>, %92, %cst_52 [1] : vector<160x128xf32> to vector<160xf32>
      %94 = vector.shape_cast %93 : vector<160xf32> to vector<160x1xf32>
      %cst_53 = arith.constant 1.280000e+02 : f32
      %95 = vector.broadcast %cst_53 : f32 to vector<160x1xf32>
      %96 = arith.divf %94, %95 : vector<160x1xf32>
      %cst_54 = arith.constant 9.99999974E-6 : f32
      %97 = vector.broadcast %cst_54 : f32 to vector<160x1xf32>
      %98 = arith.addf %96, %97 : vector<160x1xf32>
      %99 = math.rsqrt %98 : vector<160x1xf32>
      %100 = vector.broadcast %99 : vector<160x1xf32> to vector<160x128xf32>
      %101 = arith.mulf %91, %100 : vector<160x128xf32>
      %102 = vector.broadcast %83 : vector<1x128xf32> to vector<160x128xf32>
      %103 = arith.mulf %101, %102 : vector<160x128xf32>
      %104 = vector.broadcast %85 : vector<1x128xf32> to vector<160x128xf32>
      %105 = arith.addf %103, %104 : vector<160x128xf32>
      %106 = arith.truncf %105 : vector<160x128xf32> to vector<160x128xbf16>
      %c0_55 = arith.constant 0 : index
      %c0_56 = arith.constant 0 : index
      %c0_57 = arith.constant 0 : index
      %107 = vector.load %arg5[%c0_55, %c0_56, %c0_57] : memref<1x128x384xi8, #tpu.memory_space<vmem>>, vector<1x128x128xi8>
      %108 = vector.shape_cast %107 : vector<1x128x128xi8> to vector<128x128xi8>
      %109 = arith.extsi %108 : vector<128x128xi8> to vector<128x128xi32>
      %110 = arith.sitofp %109 : vector<128x128xi32> to vector<128x128xf32>
      %111 = arith.truncf %110 : vector<128x128xf32> to vector<128x128xbf16>
      %cst_58 = arith.constant dense<0.000000e+00> : vector<160x128xf32>
      %112 = tpu.matmul %106, %111, %cst_58 {dimension_numbers = #tpu.dot_dimension_numbers<[1], [0], [0], [1], [0, 0, 1, 1], [], []>} : vector<160x128xbf16>, vector<128x128xbf16>, vector<160x128xf32> -> vector<160x128xf32>
      %c0_59 = arith.constant 0 : index
      %c0_60 = arith.constant 0 : index
      %c0_61 = arith.constant 0 : index
      %113 = vector.load %arg6[%c0_59, %c0_60, %c0_61] : memref<1x1x384xf32, #tpu.memory_space<vmem>>, vector<1x1x128xf32>
      %114 = vector.shape_cast %113 : vector<1x1x128xf32> to vector<1x128xf32>
      %115 = vector.broadcast %114 : vector<1x128xf32> to vector<160x128xf32>
      %116 = arith.mulf %112, %115 : vector<160x128xf32>
      %c0_62 = arith.constant 0 : index
      %c0_63 = arith.constant 0 : index
      %c0_64 = arith.constant 0 : index
      %117 = vector.load %arg7[%c0_62, %c0_63, %c0_64] : memref<1x1x384xf32, #tpu.memory_space<vmem>>, vector<1x1x128xf32>
      %118 = vector.shape_cast %117 : vector<1x1x128xf32> to vector<1x128xf32>
      %119 = vector.broadcast %118 : vector<1x128xf32> to vector<160x128xf32>
      %120 = arith.addf %116, %119 : vector<160x128xf32>
      %121 = vector.shape_cast %120 : vector<160x128xf32> to vector<2x80x128xf32>
      %c0_65 = arith.constant 0 : index
      %c0_66 = arith.constant 0 : index
      %c128 = arith.constant 128 : index
      %122 = vector.load %arg5[%c0_65, %c0_66, %c128] : memref<1x128x384xi8, #tpu.memory_space<vmem>>, vector<1x128x128xi8>
      %123 = vector.shape_cast %122 : vector<1x128x128xi8> to vector<128x128xi8>
      %124 = arith.extsi %123 : vector<128x128xi8> to vector<128x128xi32>
      %125 = arith.sitofp %124 : vector<128x128xi32> to vector<128x128xf32>
      %126 = arith.truncf %125 : vector<128x128xf32> to vector<128x128xbf16>
      %cst_67 = arith.constant dense<0.000000e+00> : vector<160x128xf32>
      %127 = tpu.matmul %106, %126, %cst_67 {dimension_numbers = #tpu.dot_dimension_numbers<[1], [0], [0], [1], [0, 0, 1, 1], [], []>} : vector<160x128xbf16>, vector<128x128xbf16>, vector<160x128xf32> -> vector<160x128xf32>
      %c0_68 = arith.constant 0 : index
      %c0_69 = arith.constant 0 : index
      %c128_70 = arith.constant 128 : index
      %128 = vector.load %arg6[%c0_68, %c0_69, %c128_70] : memref<1x1x384xf32, #tpu.memory_space<vmem>>, vector<1x1x128xf32>
      %129 = vector.shape_cast %128 : vector<1x1x128xf32> to vector<1x128xf32>
      %130 = vector.broadcast %129 : vector<1x128xf32> to vector<160x128xf32>
      %131 = arith.mulf %127, %130 : vector<160x128xf32>
      %c0_71 = arith.constant 0 : index
      %c0_72 = arith.constant 0 : index
      %c128_73 = arith.constant 128 : index
      %132 = vector.load %arg7[%c0_71, %c0_72, %c128_73] : memref<1x1x384xf32, #tpu.memory_space<vmem>>, vector<1x1x128xf32>
      %133 = vector.shape_cast %132 : vector<1x1x128xf32> to vector<1x128xf32>
      %134 = vector.broadcast %133 : vector<1x128xf32> to vector<160x128xf32>
      %135 = arith.addf %131, %134 : vector<160x128xf32>
      %136 = vector.shape_cast %135 : vector<160x128xf32> to vector<2x80x128xf32>
      %c0_74 = arith.constant 0 : index
      %c0_75 = arith.constant 0 : index
      %c256 = arith.constant 256 : index
      %137 = vector.load %arg5[%c0_74, %c0_75, %c256] : memref<1x128x384xi8, #tpu.memory_space<vmem>>, vector<1x128x128xi8>
      %138 = vector.shape_cast %137 : vector<1x128x128xi8> to vector<128x128xi8>
      %139 = arith.extsi %138 : vector<128x128xi8> to vector<128x128xi32>
      %140 = arith.sitofp %139 : vector<128x128xi32> to vector<128x128xf32>
      %141 = arith.truncf %140 : vector<128x128xf32> to vector<128x128xbf16>
      %cst_76 = arith.constant dense<0.000000e+00> : vector<160x128xf32>
      %142 = tpu.matmul %106, %141, %cst_76 {dimension_numbers = #tpu.dot_dimension_numbers<[1], [0], [0], [1], [0, 0, 1, 1], [], []>} : vector<160x128xbf16>, vector<128x128xbf16>, vector<160x128xf32> -> vector<160x128xf32>
      %c0_77 = arith.constant 0 : index
      %c0_78 = arith.constant 0 : index
      %c256_79 = arith.constant 256 : index
      %143 = vector.load %arg6[%c0_77, %c0_78, %c256_79] : memref<1x1x384xf32, #tpu.memory_space<vmem>>, vector<1x1x128xf32>
      %144 = vector.shape_cast %143 : vector<1x1x128xf32> to vector<1x128xf32>
      %145 = vector.broadcast %144 : vector<1x128xf32> to vector<160x128xf32>
      %146 = arith.mulf %142, %145 : vector<160x128xf32>
      %c0_80 = arith.constant 0 : index
      %c0_81 = arith.constant 0 : index
      %c256_82 = arith.constant 256 : index
      %147 = vector.load %arg7[%c0_80, %c0_81, %c256_82] : memref<1x1x384xf32, #tpu.memory_space<vmem>>, vector<1x1x128xf32>
      %148 = vector.shape_cast %147 : vector<1x1x128xf32> to vector<1x128xf32>
      %149 = vector.broadcast %148 : vector<1x128xf32> to vector<160x128xf32>
      %150 = arith.addf %146, %149 : vector<160x128xf32>
      %151 = vector.shape_cast %150 : vector<160x128xf32> to vector<2x80x128xf32>
      %c0_83 = arith.constant 0 : index
      %c0_84 = arith.constant 0 : index
      %152 = vector.load %arg25[%c0_83, %c0_84] : memref<80x80xf32, #tpu.memory_space<vmem>>, vector<80x80xf32>
      %153 = vector.shape_cast %152 : vector<80x80xf32> to vector<1x80x80xf32>
      %154 = vector.extract_strided_slice %121 {offsets = [0, 0, 0], sizes = [2, 80, 32], strides = [1, 1, 1]} : vector<2x80x128xf32> to vector<2x80x32xf32>
      %155 = vector.extract_strided_slice %136 {offsets = [0, 0, 0], sizes = [2, 80, 32], strides = [1, 1, 1]} : vector<2x80x128xf32> to vector<2x80x32xf32>
      "tpu.trace_start"() <{level = 10 : i32, message = "bqd,bkd->bqk"}> : () -> ()
      %cst_85 = arith.constant dense<0.000000e+00> : vector<2x80x80xf32>
      %156 = tpu.matmul %154, %155, %cst_85 {dimension_numbers = #tpu.dot_dimension_numbers<[2], [2], [1], [1], [0, 0, 0, 1, 1, 1], [0], [0]>} : vector<2x80x32xf32>, vector<2x80x32xf32>, vector<2x80x80xf32> -> vector<2x80x80xf32>
      "tpu.trace_stop"() : () -> ()
      %157 = vector.broadcast %153 : vector<1x80x80xf32> to vector<2x80x80xf32>
      %158 = arith.addf %156, %157 : vector<2x80x80xf32>
      %cst_86 = arith.constant dense<0xFF800000> : vector<2x80xf32>
      %159 = vector.multi_reduction <maximumf>, %158, %cst_86 [2] : vector<2x80x80xf32> to vector<2x80xf32>
      %160 = vector.shape_cast %159 : vector<2x80xf32> to vector<2x80x1xf32>
      %161 = vector.broadcast %160 : vector<2x80x1xf32> to vector<2x80x80xf32>
      %162 = arith.subf %158, %161 : vector<2x80x80xf32>
      %163 = math.exp %162 : vector<2x80x80xf32>
      %cst_87 = arith.constant dense<0.000000e+00> : vector<2x80xf32>
      %164 = vector.multi_reduction <add>, %163, %cst_87 [2] : vector<2x80x80xf32> to vector<2x80xf32>
      %165 = vector.shape_cast %164 : vector<2x80xf32> to vector<2x80x1xf32>
      %166 = tpu.reciprocal %165 {approx = true} : vector<2x80x1xf32> -> vector<2x80x1xf32>
      %167 = vector.broadcast %166 : vector<2x80x1xf32> to vector<2x80x80xf32>
      %168 = arith.mulf %163, %167 : vector<2x80x80xf32>
      %169 = vector.extract_strided_slice %151 {offsets = [0, 0, 0], sizes = [2, 80, 32], strides = [1, 1, 1]} : vector<2x80x128xf32> to vector<2x80x32xf32>
      "tpu.trace_start"() <{level = 10 : i32, message = "bqk,bkd->bqd"}> : () -> ()
      %cst_88 = arith.constant dense<0.000000e+00> : vector<2x80x32xf32>
      %170 = tpu.matmul %168, %169, %cst_88 {dimension_numbers = #tpu.dot_dimension_numbers<[2], [1], [1], [2], [0, 0, 0, 1, 1, 2], [0], [0]>} : vector<2x80x80xf32>, vector<2x80x32xf32>, vector<2x80x32xf32> -> vector<2x80x32xf32>
      "tpu.trace_stop"() : () -> ()
      %171 = vector.shape_cast %170 : vector<2x80x32xf32> to vector<160x32xf32>
      %172 = arith.truncf %171 : vector<160x32xf32> to vector<160x32xbf16>
      %c0_89 = arith.constant 0 : index
      %c0_90 = arith.constant 0 : index
      %173 = vector.load %arg24[%c0_89, %c0_90] : memref<160x128xbf16, #tpu.memory_space<vmem>>, vector<160x32xbf16>
      tpu.vector_store %arg24[%c0_89, %c0_90], %172 {strides = array<i32>} : memref<160x128xbf16, #tpu.memory_space<vmem>>, vector<160x32xbf16>,
      %174 = vector.extract_strided_slice %121 {offsets = [0, 0, 32], sizes = [2, 80, 32], strides = [1, 1, 1]} : vector<2x80x128xf32> to vector<2x80x32xf32>
      %175 = vector.extract_strided_slice %136 {offsets = [0, 0, 32], sizes = [2, 80, 32], strides = [1, 1, 1]} : vector<2x80x128xf32> to vector<2x80x32xf32>
      "tpu.trace_start"() <{level = 10 : i32, message = "bqd,bkd->bqk"}> : () -> ()
      %cst_91 = arith.constant dense<0.000000e+00> : vector<2x80x80xf32>
      %176 = tpu.matmul %174, %175, %cst_91 {dimension_numbers = #tpu.dot_dimension_numbers<[2], [2], [1], [1], [0, 0, 0, 1, 1, 1], [0], [0]>} : vector<2x80x32xf32>, vector<2x80x32xf32>, vector<2x80x80xf32> -> vector<2x80x80xf32>
      "tpu.trace_stop"() : () -> ()
      %177 = vector.broadcast %153 : vector<1x80x80xf32> to vector<2x80x80xf32>
      %178 = arith.addf %176, %177 : vector<2x80x80xf32>
      %cst_92 = arith.constant dense<0xFF800000> : vector<2x80xf32>
      %179 = vector.multi_reduction <maximumf>, %178, %cst_92 [2] : vector<2x80x80xf32> to vector<2x80xf32>
      %180 = vector.shape_cast %179 : vector<2x80xf32> to vector<2x80x1xf32>
      %181 = vector.broadcast %180 : vector<2x80x1xf32> to vector<2x80x80xf32>
      %182 = arith.subf %178, %181 : vector<2x80x80xf32>
      %183 = math.exp %182 : vector<2x80x80xf32>
      %cst_93 = arith.constant dense<0.000000e+00> : vector<2x80xf32>
      %184 = vector.multi_reduction <add>, %183, %cst_93 [2] : vector<2x80x80xf32> to vector<2x80xf32>
      %185 = vector.shape_cast %184 : vector<2x80xf32> to vector<2x80x1xf32>
      %186 = tpu.reciprocal %185 {approx = true} : vector<2x80x1xf32> -> vector<2x80x1xf32>
      %187 = vector.broadcast %186 : vector<2x80x1xf32> to vector<2x80x80xf32>
      %188 = arith.mulf %183, %187 : vector<2x80x80xf32>
      %189 = vector.extract_strided_slice %151 {offsets = [0, 0, 32], sizes = [2, 80, 32], strides = [1, 1, 1]} : vector<2x80x128xf32> to vector<2x80x32xf32>
      "tpu.trace_start"() <{level = 10 : i32, message = "bqk,bkd->bqd"}> : () -> ()
      %cst_94 = arith.constant dense<0.000000e+00> : vector<2x80x32xf32>
      %190 = tpu.matmul %188, %189, %cst_94 {dimension_numbers = #tpu.dot_dimension_numbers<[2], [1], [1], [2], [0, 0, 0, 1, 1, 2], [0], [0]>} : vector<2x80x80xf32>, vector<2x80x32xf32>, vector<2x80x32xf32> -> vector<2x80x32xf32>
      "tpu.trace_stop"() : () -> ()
      %191 = vector.shape_cast %190 : vector<2x80x32xf32> to vector<160x32xf32>
      %192 = arith.truncf %191 : vector<160x32xf32> to vector<160x32xbf16>
      %c0_95 = arith.constant 0 : index
      %c32 = arith.constant 32 : index
      %193 = vector.load %arg24[%c0_95, %c32] : memref<160x128xbf16, #tpu.memory_space<vmem>>, vector<160x32xbf16>
      tpu.vector_store %arg24[%c0_95, %c32], %192 {strides = array<i32>} : memref<160x128xbf16, #tpu.memory_space<vmem>>, vector<160x32xbf16>,
      %194 = vector.extract_strided_slice %121 {offsets = [0, 0, 64], sizes = [2, 80, 32], strides = [1, 1, 1]} : vector<2x80x128xf32> to vector<2x80x32xf32>
      %195 = vector.extract_strided_slice %136 {offsets = [0, 0, 64], sizes = [2, 80, 32], strides = [1, 1, 1]} : vector<2x80x128xf32> to vector<2x80x32xf32>
      "tpu.trace_start"() <{level = 10 : i32, message = "bqd,bkd->bqk"}> : () -> ()
      %cst_96 = arith.constant dense<0.000000e+00> : vector<2x80x80xf32>
      %196 = tpu.matmul %194, %195, %cst_96 {dimension_numbers = #tpu.dot_dimension_numbers<[2], [2], [1], [1], [0, 0, 0, 1, 1, 1], [0], [0]>} : vector<2x80x32xf32>, vector<2x80x32xf32>, vector<2x80x80xf32> -> vector<2x80x80xf32>
      "tpu.trace_stop"() : () -> ()
      %197 = vector.broadcast %153 : vector<1x80x80xf32> to vector<2x80x80xf32>
      %198 = arith.addf %196, %197 : vector<2x80x80xf32>
      %cst_97 = arith.constant dense<0xFF800000> : vector<2x80xf32>
      %199 = vector.multi_reduction <maximumf>, %198, %cst_97 [2] : vector<2x80x80xf32> to vector<2x80xf32>
      %200 = vector.shape_cast %199 : vector<2x80xf32> to vector<2x80x1xf32>
      %201 = vector.broadcast %200 : vector<2x80x1xf32> to vector<2x80x80xf32>
      %202 = arith.subf %198, %201 : vector<2x80x80xf32>
      %203 = math.exp %202 : vector<2x80x80xf32>
      %cst_98 = arith.constant dense<0.000000e+00> : vector<2x80xf32>
      %204 = vector.multi_reduction <add>, %203, %cst_98 [2] : vector<2x80x80xf32> to vector<2x80xf32>
      %205 = vector.shape_cast %204 : vector<2x80xf32> to vector<2x80x1xf32>
      %206 = tpu.reciprocal %205 {approx = true} : vector<2x80x1xf32> -> vector<2x80x1xf32>
      %207 = vector.broadcast %206 : vector<2x80x1xf32> to vector<2x80x80xf32>
      %208 = arith.mulf %203, %207 : vector<2x80x80xf32>
      %209 = vector.extract_strided_slice %151 {offsets = [0, 0, 64], sizes = [2, 80, 32], strides = [1, 1, 1]} : vector<2x80x128xf32> to vector<2x80x32xf32>
      "tpu.trace_start"() <{level = 10 : i32, message = "bqk,bkd->bqd"}> : () -> ()
      %cst_99 = arith.constant dense<0.000000e+00> : vector<2x80x32xf32>
      %210 = tpu.matmul %208, %209, %cst_99 {dimension_numbers = #tpu.dot_dimension_numbers<[2], [1], [1], [2], [0, 0, 0, 1, 1, 2], [0], [0]>} : vector<2x80x80xf32>, vector<2x80x32xf32>, vector<2x80x32xf32> -> vector<2x80x32xf32>
      "tpu.trace_stop"() : () -> ()
      %211 = vector.shape_cast %210 : vector<2x80x32xf32> to vector<160x32xf32>
      %212 = arith.truncf %211 : vector<160x32xf32> to vector<160x32xbf16>
      %c0_100 = arith.constant 0 : index
      %c64 = arith.constant 64 : index
      %213 = vector.load %arg24[%c0_100, %c64] : memref<160x128xbf16, #tpu.memory_space<vmem>>, vector<160x32xbf16>
      tpu.vector_store %arg24[%c0_100, %c64], %212 {strides = array<i32>} : memref<160x128xbf16, #tpu.memory_space<vmem>>, vector<160x32xbf16>,
      %214 = vector.extract_strided_slice %121 {offsets = [0, 0, 96], sizes = [2, 80, 32], strides = [1, 1, 1]} : vector<2x80x128xf32> to vector<2x80x32xf32>
      %215 = vector.extract_strided_slice %136 {offsets = [0, 0, 96], sizes = [2, 80, 32], strides = [1, 1, 1]} : vector<2x80x128xf32> to vector<2x80x32xf32>
      "tpu.trace_start"() <{level = 10 : i32, message = "bqd,bkd->bqk"}> : () -> ()
      %cst_101 = arith.constant dense<0.000000e+00> : vector<2x80x80xf32>
      %216 = tpu.matmul %214, %215, %cst_101 {dimension_numbers = #tpu.dot_dimension_numbers<[2], [2], [1], [1], [0, 0, 0, 1, 1, 1], [0], [0]>} : vector<2x80x32xf32>, vector<2x80x32xf32>, vector<2x80x80xf32> -> vector<2x80x80xf32>
      "tpu.trace_stop"() : () -> ()
      %217 = vector.broadcast %153 : vector<1x80x80xf32> to vector<2x80x80xf32>
      %218 = arith.addf %216, %217 : vector<2x80x80xf32>
      %cst_102 = arith.constant dense<0xFF800000> : vector<2x80xf32>
      %219 = vector.multi_reduction <maximumf>, %218, %cst_102 [2] : vector<2x80x80xf32> to vector<2x80xf32>
      %220 = vector.shape_cast %219 : vector<2x80xf32> to vector<2x80x1xf32>
      %221 = vector.broadcast %220 : vector<2x80x1xf32> to vector<2x80x80xf32>
      %222 = arith.subf %218, %221 : vector<2x80x80xf32>
      %223 = math.exp %222 : vector<2x80x80xf32>
      %cst_103 = arith.constant dense<0.000000e+00> : vector<2x80xf32>
      %224 = vector.multi_reduction <add>, %223, %cst_103 [2] : vector<2x80x80xf32> to vector<2x80xf32>
      %225 = vector.shape_cast %224 : vector<2x80xf32> to vector<2x80x1xf32>
      %226 = tpu.reciprocal %225 {approx = true} : vector<2x80x1xf32> -> vector<2x80x1xf32>
      %227 = vector.broadcast %226 : vector<2x80x1xf32> to vector<2x80x80xf32>
      %228 = arith.mulf %223, %227 : vector<2x80x80xf32>
      %229 = vector.extract_strided_slice %151 {offsets = [0, 0, 96], sizes = [2, 80, 32], strides = [1, 1, 1]} : vector<2x80x128xf32> to vector<2x80x32xf32>
      "tpu.trace_start"() <{level = 10 : i32, message = "bqk,bkd->bqd"}> : () -> ()
      %cst_104 = arith.constant dense<0.000000e+00> : vector<2x80x32xf32>
      %230 = tpu.matmul %228, %229, %cst_104 {dimension_numbers = #tpu.dot_dimension_numbers<[2], [1], [1], [2], [0, 0, 0, 1, 1, 2], [0], [0]>} : vector<2x80x80xf32>, vector<2x80x32xf32>, vector<2x80x32xf32> -> vector<2x80x32xf32>
      "tpu.trace_stop"() : () -> ()
      %231 = vector.shape_cast %230 : vector<2x80x32xf32> to vector<160x32xf32>
      %232 = arith.truncf %231 : vector<160x32xf32> to vector<160x32xbf16>
      %c0_105 = arith.constant 0 : index
      %c96 = arith.constant 96 : index
      %233 = vector.load %arg24[%c0_105, %c96] : memref<160x128xbf16, #tpu.memory_space<vmem>>, vector<160x32xbf16>
      tpu.vector_store %arg24[%c0_105, %c96], %232 {strides = array<i32>} : memref<160x128xbf16, #tpu.memory_space<vmem>>, vector<160x32xbf16>,
      %c0_106 = arith.constant 0 : index
      %c0_107 = arith.constant 0 : index
      %234 = vector.load %arg24[%c0_106, %c0_107] : memref<160x128xbf16, #tpu.memory_space<vmem>>, vector<160x128xbf16>
      %c0_108 = arith.constant 0 : index
      %c0_109 = arith.constant 0 : index
      %c0_110 = arith.constant 0 : index
      %235 = vector.load %arg8[%c0_108, %c0_109, %c0_110] : memref<1x128x128xi8, #tpu.memory_space<vmem>>, vector<1x128x128xi8>
      %236 = vector.shape_cast %235 : vector<1x128x128xi8> to vector<128x128xi8>
      %237 = arith.extsi %236 : vector<128x128xi8> to vector<128x128xi32>
      %238 = arith.sitofp %237 : vector<128x128xi32> to vector<128x128xf32>
      %239 = arith.truncf %238 : vector<128x128xf32> to vector<128x128xbf16>
      %cst_111 = arith.constant dense<0.000000e+00> : vector<160x128xf32>
      %240 = tpu.matmul %234, %239, %cst_111 {dimension_numbers = #tpu.dot_dimension_numbers<[1], [0], [0], [1], [0, 0, 1, 1], [], []>} : vector<160x128xbf16>, vector<128x128xbf16>, vector<160x128xf32> -> vector<160x128xf32>
      %c0_112 = arith.constant 0 : index
      %c0_113 = arith.constant 0 : index
      %c0_114 = arith.constant 0 : index
      %241 = vector.load %arg9[%c0_112, %c0_113, %c0_114] : memref<1x1x128xf32, #tpu.memory_space<vmem>>, vector<1x1x128xf32>
      %242 = vector.shape_cast %241 : vector<1x1x128xf32> to vector<1x128xf32>
      %243 = vector.broadcast %242 : vector<1x128xf32> to vector<160x128xf32>
      %244 = arith.mulf %240, %243 : vector<160x128xf32>
      %c0_115 = arith.constant 0 : index
      %c0_116 = arith.constant 0 : index
      %c0_117 = arith.constant 0 : index
      %245 = vector.load %arg10[%c0_115, %c0_116, %c0_117] : memref<1x1x128xf32, #tpu.memory_space<vmem>>, vector<1x1x128xf32>
      %246 = vector.shape_cast %245 : vector<1x1x128xf32> to vector<1x128xf32>
      %247 = vector.broadcast %246 : vector<1x128xf32> to vector<160x128xf32>
      %248 = arith.addf %244, %247 : vector<160x128xf32>
      %249 = arith.addf %81, %248 : vector<160x128xf32>
      %c0_118 = arith.constant 0 : index
      %c0_119 = arith.constant 0 : index
      %250 = vector.load %arg22[%c0_118, %c0_119] : memref<160x128xf32, #tpu.memory_space<vmem>>, vector<160x128xf32>
      tpu.vector_store %arg22[%c0_118, %c0_119], %249 {strides = array<i32>} : memref<160x128xf32, #tpu.memory_space<vmem>>, vector<160x128xf32>,
      %c0_120 = arith.constant 0 : index
      %c0_121 = arith.constant 0 : index
      %c0_122 = arith.constant 0 : index
      %251 = vector.load %arg11[%c0_120, %c0_121, %c0_122] : memref<1x1x128xf32, #tpu.memory_space<vmem>>, vector<1x1x128xf32>
      %252 = vector.shape_cast %251 : vector<1x1x128xf32> to vector<1x128xf32>
      %c0_123 = arith.constant 0 : index
      %c0_124 = arith.constant 0 : index
      %c0_125 = arith.constant 0 : index
      %253 = vector.load %arg12[%c0_123, %c0_124, %c0_125] : memref<1x1x128xf32, #tpu.memory_space<vmem>>, vector<1x1x128xf32>
      %254 = vector.shape_cast %253 : vector<1x1x128xf32> to vector<1x128xf32>
      %cst_126 = arith.constant dense<0.000000e+00> : vector<160xf32>
      %255 = vector.multi_reduction <add>, %249, %cst_126 [1] : vector<160x128xf32> to vector<160xf32>
      %256 = vector.shape_cast %255 : vector<160xf32> to vector<160x1xf32>
      %cst_127 = arith.constant 1.280000e+02 : f32
      %257 = vector.broadcast %cst_127 : f32 to vector<160x1xf32>
      %258 = arith.divf %256, %257 : vector<160x1xf32>
      %259 = vector.broadcast %258 : vector<160x1xf32> to vector<160x128xf32>
      %260 = arith.subf %249, %259 : vector<160x128xf32>
      %261 = arith.mulf %260, %260 : vector<160x128xf32>
      %cst_128 = arith.constant dense<0.000000e+00> : vector<160xf32>
      %262 = vector.multi_reduction <add>, %261, %cst_128 [1] : vector<160x128xf32> to vector<160xf32>
      %263 = vector.shape_cast %262 : vector<160xf32> to vector<160x1xf32>
      %cst_129 = arith.constant 1.280000e+02 : f32
      %264 = vector.broadcast %cst_129 : f32 to vector<160x1xf32>
      %265 = arith.divf %263, %264 : vector<160x1xf32>
      %cst_130 = arith.constant 9.99999974E-6 : f32
      %266 = vector.broadcast %cst_130 : f32 to vector<160x1xf32>
      %267 = arith.addf %265, %266 : vector<160x1xf32>
      %268 = math.rsqrt %267 : vector<160x1xf32>
      %269 = vector.broadcast %268 : vector<160x1xf32> to vector<160x128xf32>
      %270 = arith.mulf %260, %269 : vector<160x128xf32>
      %271 = vector.broadcast %252 : vector<1x128xf32> to vector<160x128xf32>
      %272 = arith.mulf %270, %271 : vector<160x128xf32>
      %273 = vector.broadcast %254 : vector<1x128xf32> to vector<160x128xf32>
      %274 = arith.addf %272, %273 : vector<160x128xf32>
      %275 = arith.truncf %274 : vector<160x128xf32> to vector<160x128xbf16>
      %c0_131 = arith.constant 0 : index
      %c0_132 = arith.constant 0 : index
      %276 = vector.load %arg23[%c0_131, %c0_132] : memref<160x128xbf16, #tpu.memory_space<vmem>>, vector<160x128xbf16>
      tpu.vector_store %arg23[%c0_131, %c0_132], %275 {strides = array<i32>} : memref<160x128xbf16, #tpu.memory_space<vmem>>, vector<160x128xbf16>,
    } else {
    }
    %c0 = arith.constant 0 : index
    %c0_4 = arith.constant 0 : index
    %8 = vector.load %arg23[%c0, %c0_4] : memref<160x128xbf16, #tpu.memory_space<vmem>>, vector<160x128xbf16>
    %c0_5 = arith.constant 0 : index
    %c0_6 = arith.constant 0 : index
    %c0_7 = arith.constant 0 : index
    %9 = vector.load %arg13[%c0_5, %c0_6, %c0_7] : memref<1x128x256xi8, #tpu.memory_space<vmem>>, vector<1x128x256xi8>
    %10 = vector.shape_cast %9 : vector<1x128x256xi8> to vector<128x256xi8>
    %11 = arith.extsi %10 : vector<128x256xi8> to vector<128x256xi32>
    %12 = arith.sitofp %11 : vector<128x256xi32> to vector<128x256xf32>
    %13 = arith.truncf %12 : vector<128x256xf32> to vector<128x256xbf16>
    %cst = arith.constant dense<0.000000e+00> : vector<160x256xf32>
    %14 = tpu.matmul %8, %13, %cst {dimension_numbers = #tpu.dot_dimension_numbers<[1], [0], [0], [1], [0, 0, 1, 1], [], []>} : vector<160x128xbf16>, vector<128x256xbf16>, vector<160x256xf32> -> vector<160x256xf32>
    %c0_8 = arith.constant 0 : index
    %c0_9 = arith.constant 0 : index
    %c0_10 = arith.constant 0 : index
    %15 = vector.load %arg14[%c0_8, %c0_9, %c0_10] : memref<1x1x256xf32, #tpu.memory_space<vmem>>, vector<1x1x256xf32>
    %16 = vector.shape_cast %15 : vector<1x1x256xf32> to vector<1x256xf32>
    %17 = vector.broadcast %16 : vector<1x256xf32> to vector<160x256xf32>
    %18 = arith.mulf %14, %17 : vector<160x256xf32>
    %c0_11 = arith.constant 0 : index
    %c0_12 = arith.constant 0 : index
    %c0_13 = arith.constant 0 : index
    %19 = vector.load %arg15[%c0_11, %c0_12, %c0_13] : memref<1x1x256xf32, #tpu.memory_space<vmem>>, vector<1x1x256xf32>
    %20 = vector.shape_cast %19 : vector<1x1x256xf32> to vector<1x256xf32>
    %21 = vector.broadcast %20 : vector<1x256xf32> to vector<160x256xf32>
    %22 = arith.addf %18, %21 : vector<160x256xf32>
    %cst_14 = arith.constant 5.000000e-01 : f32
    %23 = vector.broadcast %cst_14 : f32 to vector<160x256xf32>
    %24 = arith.mulf %23, %22 : vector<160x256xf32>
    %cst_15 = arith.constant 0.707106769 : f32
    %25 = vector.broadcast %cst_15 : f32 to vector<160x256xf32>
    %26 = arith.mulf %22, %25 : vector<160x256xf32>
    %cst_16 = arith.constant 0.000000e+00 : f32
    %27 = vector.broadcast %cst_16 : f32 to vector<160x256xf32>
    %28 = arith.cmpf oge, %26, %27 : vector<160x256xf32>
    %cst_17 = arith.constant 1.000000e+00 : f32
    %cst_18 = arith.constant -1.000000e+00 : f32
    %29 = vector.broadcast %cst_17 : f32 to vector<160x256xf32>
    %30 = vector.broadcast %cst_18 : f32 to vector<160x256xf32>
    %31 = arith.select %28, %29, %30 : vector<160x256xi1>, vector<160x256xf32>
    %32 = math.absf %26 : vector<160x256xf32>
    %cst_19 = arith.constant 0.327591091 : f32
    %33 = vector.broadcast %cst_19 : f32 to vector<160x256xf32>
    %34 = arith.mulf %33, %32 : vector<160x256xf32>
    %cst_20 = arith.constant 1.000000e+00 : f32
    %35 = vector.broadcast %cst_20 : f32 to vector<160x256xf32>
    %36 = arith.addf %35, %34 : vector<160x256xf32>
    %cst_21 = arith.constant 1.000000e+00 : f32
    %37 = vector.broadcast %cst_21 : f32 to vector<160x256xf32>
    %38 = arith.divf %37, %36 : vector<160x256xf32>
    %cst_22 = arith.constant 1.06140542 : f32
    %39 = vector.broadcast %cst_22 : f32 to vector<160x256xf32>
    %40 = arith.mulf %39, %38 : vector<160x256xf32>
    %cst_23 = arith.constant -1.45315206 : f32
    %41 = vector.broadcast %cst_23 : f32 to vector<160x256xf32>
    %42 = arith.addf %40, %41 : vector<160x256xf32>
    %43 = arith.mulf %42, %38 : vector<160x256xf32>
    %cst_24 = arith.constant 1.42141378 : f32
    %44 = vector.broadcast %cst_24 : f32 to vector<160x256xf32>
    %45 = arith.addf %43, %44 : vector<160x256xf32>
    %46 = arith.mulf %45, %38 : vector<160x256xf32>
    %cst_25 = arith.constant -0.284496725 : f32
    %47 = vector.broadcast %cst_25 : f32 to vector<160x256xf32>
    %48 = arith.addf %46, %47 : vector<160x256xf32>
    %49 = arith.mulf %48, %38 : vector<160x256xf32>
    %cst_26 = arith.constant 0.254829586 : f32
    %50 = vector.broadcast %cst_26 : f32 to vector<160x256xf32>
    %51 = arith.addf %49, %50 : vector<160x256xf32>
    %52 = arith.mulf %51, %38 : vector<160x256xf32>
    %cst_27 = arith.constant 0.000000e+00 : f32
    %53 = vector.broadcast %cst_27 : f32 to vector<160x256xf32>
    %54 = arith.subf %53, %32 : vector<160x256xf32>
    %55 = arith.mulf %54, %32 : vector<160x256xf32>
    %56 = math.exp %55 : vector<160x256xf32>
    %57 = arith.mulf %52, %56 : vector<160x256xf32>
    %cst_28 = arith.constant 1.000000e+00 : f32
    %58 = vector.broadcast %cst_28 : f32 to vector<160x256xf32>
    %59 = arith.subf %58, %57 : vector<160x256xf32>
    %60 = arith.mulf %31, %59 : vector<160x256xf32>
    %cst_29 = arith.constant 1.000000e+00 : f32
    %61 = vector.broadcast %cst_29 : f32 to vector<160x256xf32>
    %62 = arith.addf %61, %60 : vector<160x256xf32>
    %63 = arith.mulf %24, %62 : vector<160x256xf32>
    %64 = arith.truncf %63 : vector<160x256xf32> to vector<160x256xbf16>
    %c0_30 = arith.constant 0 : index
    %c0_31 = arith.constant 0 : index
    %c0_32 = arith.constant 0 : index
    %65 = vector.load %arg16[%c0_30, %c0_31, %c0_32] : memref<1x256x128xi8, #tpu.memory_space<vmem>>, vector<1x256x128xi8>
    %66 = vector.shape_cast %65 : vector<1x256x128xi8> to vector<256x128xi8>
    %67 = arith.extsi %66 : vector<256x128xi8> to vector<256x128xi32>
    %68 = arith.sitofp %67 : vector<256x128xi32> to vector<256x128xf32>
    %69 = arith.truncf %68 : vector<256x128xf32> to vector<256x128xbf16>
    %cst_33 = arith.constant dense<0.000000e+00> : vector<160x128xf32>
    %70 = tpu.matmul %64, %69, %cst_33 {dimension_numbers = #tpu.dot_dimension_numbers<[1], [0], [0], [1], [0, 0, 1, 1], [], []>} : vector<160x256xbf16>, vector<256x128xbf16>, vector<160x128xf32> -> vector<160x128xf32>
    %c0_34 = arith.constant 0 : index
    %c0_35 = arith.constant 0 : index
    %c0_36 = arith.constant 0 : index
    %71 = vector.load %arg17[%c0_34, %c0_35, %c0_36] : memref<1x1x128xf32, #tpu.memory_space<vmem>>, vector<1x1x128xf32>
    %72 = vector.shape_cast %71 : vector<1x1x128xf32> to vector<1x128xf32>
    %73 = vector.broadcast %72 : vector<1x128xf32> to vector<160x128xf32>
    %74 = arith.mulf %70, %73 : vector<160x128xf32>
    %c0_37 = arith.constant 0 : index
    %c0_38 = arith.constant 0 : index
    %75 = vector.load %arg22[%c0_37, %c0_38] : memref<160x128xf32, #tpu.memory_space<vmem>>, vector<160x128xf32>
    %76 = arith.addf %75, %74 : vector<160x128xf32>
    %c0_39 = arith.constant 0 : index
    %c0_40 = arith.constant 0 : index
    %77 = vector.load %arg22[%c0_39, %c0_40] : memref<160x128xf32, #tpu.memory_space<vmem>>, vector<160x128xf32>
    tpu.vector_store %arg22[%c0_39, %c0_40], %76 {strides = array<i32>} : memref<160x128xf32, #tpu.memory_space<vmem>>, vector<160x128xf32>,
    %c1_i32 = arith.constant 1 : i32
    %78 = arith.cmpi eq, %arg1, %c1_i32 : i32
    %79 = arith.extui %78 : i1 to i32
    %c0_i32_41 = arith.constant 0 : i32
    %80 = arith.cmpi ne, %79, %c0_i32_41 : i32
    scf.if %80 {
      %c0_42 = arith.constant 0 : index
      %c0_43 = arith.constant 0 : index
      %81 = vector.load %arg22[%c0_42, %c0_43] : memref<160x128xf32, #tpu.memory_space<vmem>>, vector<160x128xf32>
      %c0_44 = arith.constant 0 : index
      %c0_45 = arith.constant 0 : index
      %c0_46 = arith.constant 0 : index
      %82 = vector.load %arg18[%c0_44, %c0_45, %c0_46] : memref<1x1x128xf32, #tpu.memory_space<vmem>>, vector<1x1x128xf32>
      %83 = vector.shape_cast %82 : vector<1x1x128xf32> to vector<1x128xf32>
      %84 = vector.broadcast %83 : vector<1x128xf32> to vector<160x128xf32>
      %85 = arith.addf %81, %84 : vector<160x128xf32>
      %c0_47 = arith.constant 0 : index
      %c0_48 = arith.constant 0 : index
      %86 = vector.load %arg22[%c0_47, %c0_48] : memref<160x128xf32, #tpu.memory_space<vmem>>, vector<160x128xf32>
      tpu.vector_store %arg22[%c0_47, %c0_48], %85 {strides = array<i32>} : memref<160x128xf32, #tpu.memory_space<vmem>>, vector<160x128xf32>,
      %c1_i32_49 = arith.constant 1 : i32
      %87 = arith.cmpi eq, %arg0, %c1_i32_49 : i32
      %88 = arith.extui %87 : i1 to i32
      %c0_i32_50 = arith.constant 0 : i32
      %89 = arith.cmpi ne, %88, %c0_i32_50 : i32
      scf.if %89 {
        %c0_51 = arith.constant 0 : index
        %c0_52 = arith.constant 0 : index
        %90 = vector.load %arg19[%c0_51, %c0_52] : memref<1x128xf32, #tpu.memory_space<vmem>>, vector<1x128xf32>
        %c0_53 = arith.constant 0 : index
        %c0_54 = arith.constant 0 : index
        %91 = vector.load %arg20[%c0_53, %c0_54] : memref<1x128xf32, #tpu.memory_space<vmem>>, vector<1x128xf32>
        %cst_55 = arith.constant dense<0.000000e+00> : vector<160xf32>
        %92 = vector.multi_reduction <add>, %85, %cst_55 [1] : vector<160x128xf32> to vector<160xf32>
        %93 = vector.shape_cast %92 : vector<160xf32> to vector<160x1xf32>
        %cst_56 = arith.constant 1.280000e+02 : f32
        %94 = vector.broadcast %cst_56 : f32 to vector<160x1xf32>
        %95 = arith.divf %93, %94 : vector<160x1xf32>
        %96 = vector.broadcast %95 : vector<160x1xf32> to vector<160x128xf32>
        %97 = arith.subf %85, %96 : vector<160x128xf32>
        %98 = arith.mulf %97, %97 : vector<160x128xf32>
        %cst_57 = arith.constant dense<0.000000e+00> : vector<160xf32>
        %99 = vector.multi_reduction <add>, %98, %cst_57 [1] : vector<160x128xf32> to vector<160xf32>
        %100 = vector.shape_cast %99 : vector<160xf32> to vector<160x1xf32>
        %cst_58 = arith.constant 1.280000e+02 : f32
        %101 = vector.broadcast %cst_58 : f32 to vector<160x1xf32>
        %102 = arith.divf %100, %101 : vector<160x1xf32>
        %cst_59 = arith.constant 9.99999974E-6 : f32
        %103 = vector.broadcast %cst_59 : f32 to vector<160x1xf32>
        %104 = arith.addf %102, %103 : vector<160x1xf32>
        %105 = math.rsqrt %104 : vector<160x1xf32>
        %106 = vector.broadcast %105 : vector<160x1xf32> to vector<160x128xf32>
        %107 = arith.mulf %97, %106 : vector<160x128xf32>
        %108 = vector.broadcast %90 : vector<1x128xf32> to vector<160x128xf32>
        %109 = arith.mulf %107, %108 : vector<160x128xf32>
        %110 = vector.broadcast %91 : vector<1x128xf32> to vector<160x128xf32>
        %111 = arith.addf %109, %110 : vector<160x128xf32>
        %112 = vector.shape_cast %111 : vector<160x128xf32> to vector<2x80x128xf32>
        %c0_60 = arith.constant 0 : index
        %c0_61 = arith.constant 0 : index
        %c0_62 = arith.constant 0 : index
        %113 = vector.load %arg21[%c0_60, %c0_61, %c0_62] : memref<2x80x128xf32, #tpu.memory_space<vmem>>, vector<2x80x128xf32>
        tpu.vector_store %arg21[%c0_60, %c0_61, %c0_62], %112 {strides = array<i32>} : memref<2x80x128xf32, #tpu.memory_space<vmem>>, vector<2x80x128xf32>,
      } else {
      }
    } else {
    }
    return
  }
  func.func @transform_0(%arg0: i32, %arg1: i32) -> (i32, i32, i32) {
    %c0_i32 = arith.constant 0 : i32
    %c0_i32_0 = arith.constant 0 : i32
    %c0_i32_1 = arith.constant 0 : i32
    %c0_i32_2 = arith.constant 0 : i32
    return %c0_i32, %c0_i32_0, %c0_i32_1 : i32, i32, i32
  }
  func.func @transform_1(%arg0: i32, %arg1: i32) -> (i32, i32, i32) {
    %c0_i32 = arith.constant 0 : i32
    %c0_i32_0 = arith.constant 0 : i32
    %c0_i32_1 = arith.constant 0 : i32
    return %arg0, %c0_i32, %c0_i32_0 : i32, i32, i32
  }
  func.func @transform_2(%arg0: i32, %arg1: i32) -> (i32, i32, i32) {
    %c0_i32 = arith.constant 0 : i32
    %c0_i32_0 = arith.constant 0 : i32
    %c0_i32_1 = arith.constant 0 : i32
    return %arg0, %c0_i32, %c0_i32_0 : i32, i32, i32
  }
  func.func @transform_3(%arg0: i32, %arg1: i32) -> (i32, i32, i32) {
    %c0_i32 = arith.constant 0 : i32
    %c0_i32_0 = arith.constant 0 : i32
    %c0_i32_1 = arith.constant 0 : i32
    return %arg0, %c0_i32, %c0_i32_0 : i32, i32, i32
  }
  func.func @transform_4(%arg0: i32, %arg1: i32) -> (i32, i32, i32) {
    %c0_i32 = arith.constant 0 : i32
    %c0_i32_0 = arith.constant 0 : i32
    %c0_i32_1 = arith.constant 0 : i32
    return %arg0, %c0_i32, %c0_i32_0 : i32, i32, i32
  }
  func.func @transform_5(%arg0: i32, %arg1: i32) -> (i32, i32, i32) {
    %c0_i32 = arith.constant 0 : i32
    %c0_i32_0 = arith.constant 0 : i32
    %c0_i32_1 = arith.constant 0 : i32
    return %arg0, %c0_i32, %c0_i32_0 : i32, i32, i32
  }
  func.func @transform_6(%arg0: i32, %arg1: i32) -> (i32, i32, i32) {
    %c0_i32 = arith.constant 0 : i32
    %c0_i32_0 = arith.constant 0 : i32
    %c0_i32_1 = arith.constant 0 : i32
    return %arg0, %c0_i32, %c0_i32_0 : i32, i32, i32
  }
  func.func @transform_7(%arg0: i32, %arg1: i32) -> (i32, i32, i32) {
    %c0_i32 = arith.constant 0 : i32
    %c0_i32_0 = arith.constant 0 : i32
    %c0_i32_1 = arith.constant 0 : i32
    return %arg0, %c0_i32, %c0_i32_0 : i32, i32, i32
  }
  func.func @transform_8(%arg0: i32, %arg1: i32) -> (i32, i32, i32) {
    %c0_i32 = arith.constant 0 : i32
    %c0_i32_0 = arith.constant 0 : i32
    %c0_i32_1 = arith.constant 0 : i32
    return %arg0, %c0_i32, %c0_i32_0 : i32, i32, i32
  }
  func.func @transform_9(%arg0: i32, %arg1: i32) -> (i32, i32, i32) {
    %c0_i32 = arith.constant 0 : i32
    %c0_i32_0 = arith.constant 0 : i32
    %c0_i32_1 = arith.constant 0 : i32
    return %arg0, %c0_i32, %c0_i32_0 : i32, i32, i32
  }
  func.func @transform_10(%arg0: i32, %arg1: i32) -> (i32, i32, i32) {
    %c0_i32 = arith.constant 0 : i32
    %c0_i32_0 = arith.constant 0 : i32
    %c0_i32_1 = arith.constant 0 : i32
    return %arg0, %c0_i32, %c0_i32_0 : i32, i32, i32
  }
  func.func @transform_11(%arg0: i32, %arg1: i32) -> (i32, i32, i32) {
    %c0_i32 = arith.constant 0 : i32
    %c0_i32_0 = arith.constant 0 : i32
    return %arg0, %c0_i32, %arg1 : i32, i32, i32
  }
  func.func @transform_12(%arg0: i32, %arg1: i32) -> (i32, i32, i32) {
    %c0_i32 = arith.constant 0 : i32
    %c0_i32_0 = arith.constant 0 : i32
    return %arg0, %c0_i32, %arg1 : i32, i32, i32
  }
  func.func @transform_13(%arg0: i32, %arg1: i32) -> (i32, i32, i32) {
    %c0_i32 = arith.constant 0 : i32
    %c0_i32_0 = arith.constant 0 : i32
    return %arg0, %c0_i32, %arg1 : i32, i32, i32
  }
  func.func @transform_14(%arg0: i32, %arg1: i32) -> (i32, i32, i32) {
    %c0_i32 = arith.constant 0 : i32
    %c0_i32_0 = arith.constant 0 : i32
    return %arg0, %arg1, %c0_i32 : i32, i32, i32
  }
  func.func @transform_15(%arg0: i32, %arg1: i32) -> (i32, i32, i32) {
    %c0_i32 = arith.constant 0 : i32
    %c0_i32_0 = arith.constant 0 : i32
    %c0_i32_1 = arith.constant 0 : i32
    return %arg0, %c0_i32, %c0_i32_0 : i32, i32, i32
  }
  func.func @transform_16(%arg0: i32, %arg1: i32) -> (i32, i32, i32) {
    %c0_i32 = arith.constant 0 : i32
    %c0_i32_0 = arith.constant 0 : i32
    %c0_i32_1 = arith.constant 0 : i32
    return %arg0, %c0_i32, %c0_i32_0 : i32, i32, i32
  }
  func.func @transform_17(%arg0: i32, %arg1: i32) -> (i32, i32) {
    %c0_i32 = arith.constant 0 : i32
    %c0_i32_0 = arith.constant 0 : i32
    %c0_i32_1 = arith.constant 0 : i32
    return %c0_i32, %c0_i32_0 : i32, i32
  }
  func.func @transform_18(%arg0: i32, %arg1: i32) -> (i32, i32) {
    %c0_i32 = arith.constant 0 : i32
    %c0_i32_0 = arith.constant 0 : i32
    %c0_i32_1 = arith.constant 0 : i32
    return %c0_i32, %c0_i32_0 : i32, i32
  }
  func.func @transform_19(%arg0: i32, %arg1: i32) -> (i32, i32, i32) {
    %c0_i32 = arith.constant 0 : i32
    %c0_i32_0 = arith.constant 0 : i32
    %c0_i32_1 = arith.constant 0 : i32
    %c0_i32_2 = arith.constant 0 : i32
    return %c0_i32, %c0_i32_0, %c0_i32_1 : i32, i32, i32
  }
}

</mosaic_0001>

<llo_original>
// kernel: tpu_custom_call.1
$region0: #{tpu_custom_call.1}
  #allocation0 [shape = 'u32[]', space=smem, size = 0x4, offset = 0x4, fixed_abs, tag = 'smem constant byte address 0x4 - core index']
  #allocation1 [shape = 'u32[144,128]{1,0:T(1,128)}', space=vmem, size = 0x12000, scoped, tag = 'internal scratch']
  #allocation2 [shape = 'f32[160,128]{1,0:T(8,128)}', space=vmem, size = 0x14000, scoped, tag = 'scratch operand']
  #allocation3 [shape = 'bf16[160,128]{1,0:T(16,128)(2,1)}', space=vmem, size = 0xa000, scoped, tag = 'scratch operand']
  #allocation4 [shape = 'bf16[160,128]{1,0:T(16,128)(2,1)}', space=vmem, size = 0xa000, scoped, tag = 'scratch operand']
  #allocation5 [shape = 'f32[80,80]{1,0:T(8,128)}', space=vmem, size = 0xa000, scoped, tag = 'scratch operand']
  %s0 = inlined_call_operand.hbm [shape: f32[2,80,128], index: 0, kind: input, shape index: {}]
  %s1 = inlined_call_operand.vmem [shape: f32[2,1,128], index: 1, kind: input, shape index: {}]
  %s2 = inlined_call_operand.hbm [shape: f32[2,1,128], index: 2, kind: input, shape index: {}]
  %s3 = inlined_call_operand.hbm [shape: s8[2,128,384], index: 3, kind: input, shape index: {}]
  %s4 = inlined_call_operand.hbm [shape: f32[2,1,384], index: 4, kind: input, shape index: {}]
  %s5 = inlined_call_operand.hbm [shape: f32[2,1,384], index: 5, kind: input, shape index: {}]
  %s6 = inlined_call_operand.hbm [shape: s8[2,128,128], index: 6, kind: input, shape index: {}]
  %s7 = inlined_call_operand.vmem [shape: f32[2,1,128], index: 7, kind: input, shape index: {}]
  %s8 = inlined_call_operand.vmem [shape: f32[2,1,128], index: 8, kind: input, shape index: {}]
  %s9 = inlined_call_operand.vmem [shape: f32[2,1,128], index: 9, kind: input, shape index: {}]
  %s10 = inlined_call_operand.vmem [shape: f32[2,1,128], index: 10, kind: input, shape index: {}]
  %s11 = inlined_call_operand.hbm [shape: s8[2,128,512], index: 11, kind: input, shape index: {}]
  %s12 = inlined_call_operand.vmem [shape: f32[2,1,512], index: 12, kind: input, shape index: {}]
  %s13 = inlined_call_operand.vmem [shape: f32[2,1,512], index: 13, kind: input, shape index: {}]
  %s14 = inlined_call_operand.hbm [shape: s8[2,512,128], index: 14, kind: input, shape index: {}]
  %s15 = inlined_call_operand.vmem [shape: f32[2,1,128], index: 15, kind: input, shape index: {}]
  %s16 = inlined_call_operand.vmem [shape: f32[2,1,128], index: 16, kind: input, shape index: {}]
  %s17 = inlined_call_operand.vmem [shape: f32[1,128], index: 17, kind: input, shape index: {}]
  %s18 = inlined_call_operand.vmem [shape: f32[1,128], index: 18, kind: input, shape index: {}]
  %s19 = inlined_call_operand.hbm [shape: f32[2,80,128], index: 19, kind: output, shape index: {}]
  %s20 = sld [smem:[#allocation0]]
  $region157: #{tpu_custom_call.1} parent=0
    _
  %s22 = ssub.s32 1, %s20
  %s23 = scalar_select 0, %s22, %s20
  $region1: #{tpu_custom_call.1} parent=0
    #allocation6 [shape = 'u8[81920]{0}', space=vmem, size = 0x14000, scoped, tag = 'input window, operand 0, single buffered']
    #allocation7 [shape = 's32[2]{0}', space=sflag, size = 0x8, scoped, tag = 'scoped memory for tpu_custom_call.1']
    #allocation8 [shape = 's32[2]{0}', space=sflag, size = 0x8, scoped, tag = 'scoped memory for tpu_custom_call.1']
    #allocation9 [shape = 'u8[1024]{0}', space=vmem, size = 0x400, scoped, tag = 'input window, operand 2']
    #allocation10 [shape = 's32[2]{0}', space=sflag, size = 0x8, scoped, tag = 'scoped memory for tpu_custom_call.1']
    #allocation11 [shape = 'u8[98304]{0}', space=vmem, size = 0x18000, scoped, tag = 'input window, operand 3']
    #allocation12 [shape = 'u8[3072]{0}', space=vmem, size = 0xc00, scoped, tag = 'input window, operand 4']
    #allocation13 [shape = 's32[2]{0}', space=sflag, size = 0x8, scoped, tag = 'scoped memory for tpu_custom_call.1']
    #allocation14 [shape = 'u8[3072]{0}', space=vmem, size = 0xc00, scoped, tag = 'input window, operand 5']
    #allocation15 [shape = 'u8[32768]{0}', space=vmem, size = 0x8000, scoped, tag = 'input window, operand 6']
    #allocation16 [shape = 's32[2]{0}', space=sflag, size = 0x8, scoped, tag = 'scoped memory for tpu_custom_call.1']
    #allocation17 [shape = 'u8[65536]{0}', space=vmem, size = 0x10000, scoped, tag = 'input window, operand 11']
    #allocation18 [shape = 'u8[65536]{0}', space=vmem, size = 0x10000, scoped, tag = 'input window, operand 14']
    #allocation19 [shape = 's32[2]{0}', space=sflag, size = 0x8, scoped, tag = 'scoped memory for tpu_custom_call.1']
    #allocation20 [shape = 'u8[81920]{0}', space=vmem, size = 0x14000, scoped, tag = 'output window, operand 0, single buffered']
    %24 = vsyncpa [#allocation7], 0
    %25 = vsyncpa [#allocation10], 0
    %s26 = scalar_lea.sflag [#allocation10], 1
    %27 = vsyncpa %s26, 0
    %28 = vsyncpa [#allocation13], 0
    %s29 = scalar_lea.sflag [#allocation13], 1
    %30 = vsyncpa %s29, 0
    %31 = vsyncpa [#allocation16], 0
    %s32 = scalar_lea.sflag [#allocation16], 1
    %33 = vsyncpa %s32, 0
    %34 = vsyncpa [#allocation19], 0
    %s35 = scalar_lea.sflag [#allocation19], 1
    %36 = vsyncpa %s35, 0
    %37 = vsyncpa [#allocation8], 0
    loop: start=0, step=1, limit=6
    $region2: #{tpu_custom_call.1} parent=1 // loop_pre_header
      _
    $region3: #{tpu_custom_call.1} parent=1 // loop_header
      %s39 = sphi 0, %s43
      %p40 = scmp.ge.s32.totalorder %s39, 6
      %s46 = sphi 0, %s58
      %s47 = sphi 0, %s54
      %s48 = sphi 0, %s46
      %s49 = sphi 0, %s47
      %s50 = sphi 0, %s48
      %s51 = sphi 0, %s49
      %s59 = sphi 0, %s59
      %s61 = sphi 0, %s59
      %s62 = sphi 0, %s61
      %s76 = sphi 0, %s62
      %s82 = sphi 0, %s84
      %s85 = sphi 0, %s82
      %s86 = sphi 0, %s85
      %s102 = sphi 0, %s86
      %s108 = sphi 0, %s110
      %s111 = sphi 0, %s108
      %s112 = sphi 0, %s111
      %s128 = sphi 0, %s112
      %s134 = sphi 0, %s136
      %s137 = sphi 0, %s134
      %s138 = sphi 0, %s137
      %s154 = sphi 0, %s138
      %s160 = sphi 0, %s162
      %s163 = sphi 0, %s160
      %s164 = sphi 0, %s163
      %s180 = sphi 0, %s164
      %s186 = sphi 0, %s188
      %s189 = sphi 0, %s186
      %s190 = sphi 0, %s189
      %s206 = sphi 0, %s190
      %s212 = sphi 0, %s214
      %s215 = sphi 0, %s212
      %s216 = sphi 0, %s215
      %s232 = sphi 0, %s216
      %s238 = sphi 0, %s240
      %s241 = sphi 0, %s238
      %s242 = sphi 0, %s241
      %s258 = sphi 0, %s242
      %s264 = sphi 0, %s266
      %s267 = sphi 0, %s264
      %s268 = sphi 0, %s267
      %s284 = sphi 0, %s268
      %s290 = sphi 0, %s292
      %s293 = sphi 0, %s290
      %s294 = sphi 0, %s293
      %s310 = sphi 0, %s294
      %s316 = sphi 0, %s318
      %s319 = sphi 0, %s316
      %s320 = sphi 0, %s319
      %s336 = sphi 0, %s320
      %s344 = sphi 0, %s346
      %s347 = sphi 0, %s344
      %s348 = sphi 0, %s347
      %s364 = sphi 0, %s348
      %s372 = sphi 0, %s374
      %s375 = sphi 0, %s372
      %s376 = sphi 0, %s375
      %s392 = sphi 0, %s376
      %s400 = sphi 0, %s402
      %s403 = sphi 0, %s400
      %s404 = sphi 0, %s403
      %s420 = sphi 0, %s404
      %s428 = sphi 0, %s430
      %s431 = sphi 0, %s428
      %s432 = sphi 0, %s431
      %s448 = sphi 0, %s432
      %s454 = sphi 0, %s456
      %s457 = sphi 0, %s454
      %s458 = sphi 0, %s457
      %s474 = sphi 0, %s458
      %s480 = sphi 0, %s482
      %s483 = sphi 0, %s480
      %s484 = sphi 0, %s483
      %s500 = sphi 0, %s484
      %s504 = sphi 0, %s504
      %s506 = sphi 0, %s504
      %s507 = sphi 0, %s506
      %s521 = sphi 0, %s507
      %s525 = sphi 0, %s525
      %s527 = sphi 0, %s525
      %s528 = sphi 0, %s527
      %s542 = sphi 0, %s528
      %s546 = sphi 0, %s546
      %s548 = sphi 0, %s546
      %s549 = sphi 0, %s548
      %s563 = sphi 0, %s549
    $region4: #{tpu_custom_call.1} parent=1 // loop_header_branch
      %42 = sbr.rel (%p40) target = $region8
    $region5: #{tpu_custom_call.1} parent=1 // loop_body
      %s44 = ssub.s32 %s39, 1
      %s45 = ssub.s32 %s39, 2
      %s52 = sadd.s32 1, %s47
      %p53 = scmp.ge.s32.totalorder %s52, 2
      %s54 = scalar_select %p53, 0, %s52
      %s55 = sadd.s32 1, %s46
      %s56 = scalar_select %p53, %s55, %s46
      %p57 = scmp.ge.s32.totalorder %s56, 2
      %s58 = scalar_select %p57, 0, %s56
      %s60 = sadd.s32 %s59, 1
      %p63 = scmp.eq.s32.totalorder %s39, 3
      %p64 = scmp.ne.s32.totalorder %s59, %s61
      %p65 = scmp.eq.s32.totalorder %s39, 0
      %p66 = por %p64, %p65
      %p67 = scmp.ne.s32.totalorder %s59, %s61
      %p68 = scmp.eq.s32.totalorder %s44, 3
      %p69 = por %p67, %p68
      %p70 = scmp.ne.s32.totalorder %s61, %s62
      %p71 = scmp.eq.s32.totalorder %s44, 0
      %p72 = por %p70, %p71
      %p73 = scmp.ne.s32.totalorder %s61, %s62
      %p74 = scmp.eq.s32.totalorder %s45, 3
      %p75 = por %p73, %p74
      %p77 = scmp.ne.s32.totalorder %s62, %s76
      %p78 = scmp.eq.s32.totalorder %s45, 0
      %p79 = por %p77, %p78
      %s80 = ssub.s32 %s46, %s58
      %p81 = scmp.eq.s32.totalorder %s80, 0
      %s83 = sadd.s32 %s82, 1
      %s84 = scalar_select %p81, %s82, %s83
      %p87 = pneg %p81
      %p88 = scmp.eq.s32.totalorder %s39, 3
      %p89 = por %p87, %p88
      %p90 = scmp.ne.s32.totalorder %s82, %s85
      %p91 = scmp.eq.s32.totalorder %s39, 0
      %p92 = por %p90, %p91
      %p93 = scmp.ne.s32.totalorder %s82, %s85
      %p94 = scmp.eq.s32.totalorder %s44, 3
      %p95 = por %p93, %p94
      %p96 = scmp.ne.s32.totalorder %s85, %s86
      %p97 = scmp.eq.s32.totalorder %s44, 0
      %p98 = por %p96, %p97
      %p99 = scmp.ne.s32.totalorder %s85, %s86
      %p100 = scmp.eq.s32.totalorder %s45, 3
      %p101 = por %p99, %p100
      %p103 = scmp.ne.s32.totalorder %s86, %s102
      %p104 = scmp.eq.s32.totalorder %s45, 0
      %p105 = por %p103, %p104
      %s106 = ssub.s32 %s46, %s58
      %p107 = scmp.eq.s32.totalorder %s106, 0
      %s109 = sadd.s32 %s108, 1
      %s110 = scalar_select %p107, %s108, %s109
      %p113 = pneg %p107
      %p114 = scmp.eq.s32.totalorder %s39, 3
      %p115 = por %p113, %p114
      %p116 = scmp.ne.s32.totalorder %s108, %s111
      %p117 = scmp.eq.s32.totalorder %s39, 0
      %p118 = por %p116, %p117
      %p119 = scmp.ne.s32.totalorder %s108, %s111
      %p120 = scmp.eq.s32.totalorder %s44, 3
      %p121 = por %p119, %p120
      %p122 = scmp.ne.s32.totalorder %s111, %s112
      %p123 = scmp.eq.s32.totalorder %s44, 0
      %p124 = por %p122, %p123
      %p125 = scmp.ne.s32.totalorder %s111, %s112
      %p126 = scmp.eq.s32.totalorder %s45, 3
      %p127 = por %p125, %p126
      %p129 = scmp.ne.s32.totalorder %s112, %s128
      %p130 = scmp.eq.s32.totalorder %s45, 0
      %p131 = por %p129, %p130
      %s132 = ssub.s32 %s46, %s58
      %p133 = scmp.eq.s32.totalorder %s132, 0
      %s135 = sadd.s32 %s134, 1
      %s136 = scalar_select %p133, %s134, %s135
      %p139 = pneg %p133
      %p140 = scmp.eq.s32.totalorder %s39, 3
      %p141 = por %p139, %p140
      %p142 = scmp.ne.s32.totalorder %s134, %s137
      %p143 = scmp.eq.s32.totalorder %s39, 0
      %p144 = por %p142, %p143
      %p145 = scmp.ne.s32.totalorder %s134, %s137
      %p146 = scmp.eq.s32.totalorder %s44, 3
      %p147 = por %p145, %p146
      %p148 = scmp.ne.s32.totalorder %s137, %s138
      %p149 = scmp.eq.s32.totalorder %s44, 0
      %p150 = por %p148, %p149
      %p151 = scmp.ne.s32.totalorder %s137, %s138
      %p152 = scmp.eq.s32.totalorder %s45, 3
      %p153 = por %p151, %p152
      %p155 = scmp.ne.s32.totalorder %s138, %s154
      %p156 = scmp.eq.s32.totalorder %s45, 0
      %p157 = por %p155, %p156
      %s158 = ssub.s32 %s46, %s58
      %p159 = scmp.eq.s32.totalorder %s158, 0
      %s161 = sadd.s32 %s160, 1
      %s162 = scalar_select %p159, %s160, %s161
      %p165 = pneg %p159
      %p166 = scmp.eq.s32.totalorder %s39, 3
      %p167 = por %p165, %p166
      %p168 = scmp.ne.s32.totalorder %s160, %s163
      %p169 = scmp.eq.s32.totalorder %s39, 0
      %p170 = por %p168, %p169
      %p171 = scmp.ne.s32.totalorder %s160, %s163
      %p172 = scmp.eq.s32.totalorder %s44, 3
      %p173 = por %p171, %p172
      %p174 = scmp.ne.s32.totalorder %s163, %s164
      %p175 = scmp.eq.s32.totalorder %s44, 0
      %p176 = por %p174, %p175
      %p177 = scmp.ne.s32.totalorder %s163, %s164
      %p178 = scmp.eq.s32.totalorder %s45, 3
      %p179 = por %p177, %p178
      %p181 = scmp.ne.s32.totalorder %s164, %s180
      %p182 = scmp.eq.s32.totalorder %s45, 0
      %p183 = por %p181, %p182
      %s184 = ssub.s32 %s46, %s58
      %p185 = scmp.eq.s32.totalorder %s184, 0
      %s187 = sadd.s32 %s186, 1
      %s188 = scalar_select %p185, %s186, %s187
      %p191 = pneg %p185
      %p192 = scmp.eq.s32.totalorder %s39, 3
      %p193 = por %p191, %p192
      %p194 = scmp.ne.s32.totalorder %s186, %s189
      %p195 = scmp.eq.s32.totalorder %s39, 0
      %p196 = por %p194, %p195
      %p197 = scmp.ne.s32.totalorder %s186, %s189
      %p198 = scmp.eq.s32.totalorder %s44, 3
      %p199 = por %p197, %p198
      %p200 = scmp.ne.s32.totalorder %s189, %s190
      %p201 = scmp.eq.s32.totalorder %s44, 0
      %p202 = por %p200, %p201
      %p203 = scmp.ne.s32.totalorder %s189, %s190
      %p204 = scmp.eq.s32.totalorder %s45, 3
      %p205 = por %p203, %p204
      %p207 = scmp.ne.s32.totalorder %s190, %s206
      %p208 = scmp.eq.s32.totalorder %s45, 0
      %p209 = por %p207, %p208
      %s210 = ssub.s32 %s46, %s58
      %p211 = scmp.eq.s32.totalorder %s210, 0
      %s213 = sadd.s32 %s212, 1
      %s214 = scalar_select %p211, %s212, %s213
      %p217 = pneg %p211
      %p218 = scmp.eq.s32.totalorder %s39, 3
      %p219 = por %p217, %p218
      %p220 = scmp.ne.s32.totalorder %s212, %s215
      %p221 = scmp.eq.s32.totalorder %s39, 0
      %p222 = por %p220, %p221
      %p223 = scmp.ne.s32.totalorder %s212, %s215
      %p224 = scmp.eq.s32.totalorder %s44, 3
      %p225 = por %p223, %p224
      %p226 = scmp.ne.s32.totalorder %s215, %s216
      %p227 = scmp.eq.s32.totalorder %s44, 0
      %p228 = por %p226, %p227
      %p229 = scmp.ne.s32.totalorder %s215, %s216
      %p230 = scmp.eq.s32.totalorder %s45, 3
      %p231 = por %p229, %p230
      %p233 = scmp.ne.s32.totalorder %s216, %s232
      %p234 = scmp.eq.s32.totalorder %s45, 0
      %p235 = por %p233, %p234
      %s236 = ssub.s32 %s46, %s58
      %p237 = scmp.eq.s32.totalorder %s236, 0
      %s239 = sadd.s32 %s238, 1
      %s240 = scalar_select %p237, %s238, %s239
      %p243 = pneg %p237
      %p244 = scmp.eq.s32.totalorder %s39, 3
      %p245 = por %p243, %p244
      %p246 = scmp.ne.s32.totalorder %s238, %s241
      %p247 = scmp.eq.s32.totalorder %s39, 0
      %p248 = por %p246, %p247
      %p249 = scmp.ne.s32.totalorder %s238, %s241
      %p250 = scmp.eq.s32.totalorder %s44, 3
      %p251 = por %p249, %p250
      %p252 = scmp.ne.s32.totalorder %s241, %s242
      %p253 = scmp.eq.s32.totalorder %s44, 0
      %p254 = por %p252, %p253
      %p255 = scmp.ne.s32.totalorder %s241, %s242
      %p256 = scmp.eq.s32.totalorder %s45, 3
      %p257 = por %p255, %p256
      %p259 = scmp.ne.s32.totalorder %s242, %s258
      %p260 = scmp.eq.s32.totalorder %s45, 0
      %p261 = por %p259, %p260
      %s262 = ssub.s32 %s46, %s58
      %p263 = scmp.eq.s32.totalorder %s262, 0
      %s265 = sadd.s32 %s264, 1
      %s266 = scalar_select %p263, %s264, %s265
      %p269 = pneg %p263
      %p270 = scmp.eq.s32.totalorder %s39, 3
      %p271 = por %p269, %p270
      %p272 = scmp.ne.s32.totalorder %s264, %s267
      %p273 = scmp.eq.s32.totalorder %s39, 0
      %p274 = por %p272, %p273
      %p275 = scmp.ne.s32.totalorder %s264, %s267
      %p276 = scmp.eq.s32.totalorder %s44, 3
      %p277 = por %p275, %p276
      %p278 = scmp.ne.s32.totalorder %s267, %s268
      %p279 = scmp.eq.s32.totalorder %s44, 0
      %p280 = por %p278, %p279
      %p281 = scmp.ne.s32.totalorder %s267, %s268
      %p282 = scmp.eq.s32.totalorder %s45, 3
      %p283 = por %p281, %p282
      %p285 = scmp.ne.s32.totalorder %s268, %s284
      %p286 = scmp.eq.s32.totalorder %s45, 0
      %p287 = por %p285, %p286
      %s288 = ssub.s32 %s46, %s58
      %p289 = scmp.eq.s32.totalorder %s288, 0
      %s291 = sadd.s32 %s290, 1
      %s292 = scalar_select %p289, %s290, %s291
      %p295 = pneg %p289
      %p296 = scmp.eq.s32.totalorder %s39, 3
      %p297 = por %p295, %p296
      %p298 = scmp.ne.s32.totalorder %s290, %s293
      %p299 = scmp.eq.s32.totalorder %s39, 0
      %p300 = por %p298, %p299
      %p301 = scmp.ne.s32.totalorder %s290, %s293
      %p302 = scmp.eq.s32.totalorder %s44, 3
      %p303 = por %p301, %p302
      %p304 = scmp.ne.s32.totalorder %s293, %s294
      %p305 = scmp.eq.s32.totalorder %s44, 0
      %p306 = por %p304, %p305
      %p307 = scmp.ne.s32.totalorder %s293, %s294
      %p308 = scmp.eq.s32.totalorder %s45, 3
      %p309 = por %p307, %p308
      %p311 = scmp.ne.s32.totalorder %s294, %s310
      %p312 = scmp.eq.s32.totalorder %s45, 0
      %p313 = por %p311, %p312
      %s314 = ssub.s32 %s46, %s58
      %p315 = scmp.eq.s32.totalorder %s314, 0
      %s317 = sadd.s32 %s316, 1
      %s318 = scalar_select %p315, %s316, %s317
      %p321 = pneg %p315
      %p322 = scmp.eq.s32.totalorder %s39, 3
      %p323 = por %p321, %p322
      %p324 = scmp.ne.s32.totalorder %s316, %s319
      %p325 = scmp.eq.s32.totalorder %s39, 0
      %p326 = por %p324, %p325
      %p327 = scmp.ne.s32.totalorder %s316, %s319
      %p328 = scmp.eq.s32.totalorder %s44, 3
      %p329 = por %p327, %p328
      %p330 = scmp.ne.s32.totalorder %s319, %s320
      %p331 = scmp.eq.s32.totalorder %s44, 0
      %p332 = por %p330, %p331
      %p333 = scmp.ne.s32.totalorder %s319, %s320
      %p334 = scmp.eq.s32.totalorder %s45, 3
      %p335 = por %p333, %p334
      %p337 = scmp.ne.s32.totalorder %s320, %s336
      %p338 = scmp.eq.s32.totalorder %s45, 0
      %p339 = por %p337, %p338
      %s340 = ssub.s32 %s46, %s58
      %s341 = ssub.s32 %s47, %s54
      %s342 = sor.u32 %s340, %s341
      %p343 = scmp.eq.s32.totalorder %s342, 0
      %s345 = sadd.s32 %s344, 1
      %s346 = scalar_select %p343, %s344, %s345
      %p349 = pneg %p343
      %p350 = scmp.eq.s32.totalorder %s39, 3
      %p351 = por %p349, %p350
      %p352 = scmp.ne.s32.totalorder %s344, %s347
      %p353 = scmp.eq.s32.totalorder %s39, 0
      %p354 = por %p352, %p353
      %p355 = scmp.ne.s32.totalorder %s344, %s347
      %p356 = scmp.eq.s32.totalorder %s44, 3
      %p357 = por %p355, %p356
      %p358 = scmp.ne.s32.totalorder %s347, %s348
      %p359 = scmp.eq.s32.totalorder %s44, 0
      %p360 = por %p358, %p359
      %p361 = scmp.ne.s32.totalorder %s347, %s348
      %p362 = scmp.eq.s32.totalorder %s45, 3
      %p363 = por %p361, %p362
      %p365 = scmp.ne.s32.totalorder %s348, %s364
      %p366 = scmp.eq.s32.totalorder %s45, 0
      %p367 = por %p365, %p366
      %s368 = ssub.s32 %s46, %s58
      %s369 = ssub.s32 %s47, %s54
      %s370 = sor.u32 %s368, %s369
      %p371 = scmp.eq.s32.totalorder %s370, 0
      %s373 = sadd.s32 %s372, 1
      %s374 = scalar_select %p371, %s372, %s373
      %p377 = pneg %p371
      %p378 = scmp.eq.s32.totalorder %s39, 3
      %p379 = por %p377, %p378
      %p380 = scmp.ne.s32.totalorder %s372, %s375
      %p381 = scmp.eq.s32.totalorder %s39, 0
      %p382 = por %p380, %p381
      %p383 = scmp.ne.s32.totalorder %s372, %s375
      %p384 = scmp.eq.s32.totalorder %s44, 3
      %p385 = por %p383, %p384
      %p386 = scmp.ne.s32.totalorder %s375, %s376
      %p387 = scmp.eq.s32.totalorder %s44, 0
      %p388 = por %p386, %p387
      %p389 = scmp.ne.s32.totalorder %s375, %s376
      %p390 = scmp.eq.s32.totalorder %s45, 3
      %p391 = por %p389, %p390
      %p393 = scmp.ne.s32.totalorder %s376, %s392
      %p394 = scmp.eq.s32.totalorder %s45, 0
      %p395 = por %p393, %p394
      %s396 = ssub.s32 %s46, %s58
      %s397 = ssub.s32 %s47, %s54
      %s398 = sor.u32 %s396, %s397
      %p399 = scmp.eq.s32.totalorder %s398, 0
      %s401 = sadd.s32 %s400, 1
      %s402 = scalar_select %p399, %s400, %s401
      %p405 = pneg %p399
      %p406 = scmp.eq.s32.totalorder %s39, 3
      %p407 = por %p405, %p406
      %p408 = scmp.ne.s32.totalorder %s400, %s403
      %p409 = scmp.eq.s32.totalorder %s39, 0
      %p410 = por %p408, %p409
      %p411 = scmp.ne.s32.totalorder %s400, %s403
      %p412 = scmp.eq.s32.totalorder %s44, 3
      %p413 = por %p411, %p412
      %p414 = scmp.ne.s32.totalorder %s403, %s404
      %p415 = scmp.eq.s32.totalorder %s44, 0
      %p416 = por %p414, %p415
      %p417 = scmp.ne.s32.totalorder %s403, %s404
      %p418 = scmp.eq.s32.totalorder %s45, 3
      %p419 = por %p417, %p418
      %p421 = scmp.ne.s32.totalorder %s404, %s420
      %p422 = scmp.eq.s32.totalorder %s45, 0
      %p423 = por %p421, %p422
      %s424 = ssub.s32 %s46, %s58
      %s425 = ssub.s32 %s47, %s54
      %s426 = sor.u32 %s424, %s425
      %p427 = scmp.eq.s32.totalorder %s426, 0
      %s429 = sadd.s32 %s428, 1
      %s430 = scalar_select %p427, %s428, %s429
      %p433 = pneg %p427
      %p434 = scmp.eq.s32.totalorder %s39, 3
      %p435 = por %p433, %p434
      %p436 = scmp.ne.s32.totalorder %s428, %s431
      %p437 = scmp.eq.s32.totalorder %s39, 0
      %p438 = por %p436, %p437
      %p439 = scmp.ne.s32.totalorder %s428, %s431
      %p440 = scmp.eq.s32.totalorder %s44, 3
      %p441 = por %p439, %p440
      %p442 = scmp.ne.s32.totalorder %s431, %s432
      %p443 = scmp.eq.s32.totalorder %s44, 0
      %p444 = por %p442, %p443
      %p445 = scmp.ne.s32.totalorder %s431, %s432
      %p446 = scmp.eq.s32.totalorder %s45, 3
      %p447 = por %p445, %p446
      %p449 = scmp.ne.s32.totalorder %s432, %s448
      %p450 = scmp.eq.s32.totalorder %s45, 0
      %p451 = por %p449, %p450
      %s452 = ssub.s32 %s46, %s58
      %p453 = scmp.eq.s32.totalorder %s452, 0
      %s455 = sadd.s32 %s454, 1
      %s456 = scalar_select %p453, %s454, %s455
      %p459 = pneg %p453
      %p460 = scmp.eq.s32.totalorder %s39, 3
      %p461 = por %p459, %p460
      %p462 = scmp.ne.s32.totalorder %s454, %s457
      %p463 = scmp.eq.s32.totalorder %s39, 0
      %p464 = por %p462, %p463
      %p465 = scmp.ne.s32.totalorder %s454, %s457
      %p466 = scmp.eq.s32.totalorder %s44, 3
      %p467 = por %p465, %p466
      %p468 = scmp.ne.s32.totalorder %s457, %s458
      %p469 = scmp.eq.s32.totalorder %s44, 0
      %p470 = por %p468, %p469
      %p471 = scmp.ne.s32.totalorder %s457, %s458
      %p472 = scmp.eq.s32.totalorder %s45, 3
      %p473 = por %p471, %p472
      %p475 = scmp.ne.s32.totalorder %s458, %s474
      %p476 = scmp.eq.s32.totalorder %s45, 0
      %p477 = por %p475, %p476
      %s478 = ssub.s32 %s46, %s58
      %p479 = scmp.eq.s32.totalorder %s478, 0
      %s481 = sadd.s32 %s480, 1
      %s482 = scalar_select %p479, %s480, %s481
      %p485 = pneg %p479
      %p486 = scmp.eq.s32.totalorder %s39, 3
      %p487 = por %p485, %p486
      %p488 = scmp.ne.s32.totalorder %s480, %s483
      %p489 = scmp.eq.s32.totalorder %s39, 0
      %p490 = por %p488, %p489
      %p491 = scmp.ne.s32.totalorder %s480, %s483
      %p492 = scmp.eq.s32.totalorder %s44, 3
      %p493 = por %p491, %p492
      %p494 = scmp.ne.s32.totalorder %s483, %s484
      %p495 = scmp.eq.s32.totalorder %s44, 0
      %p496 = por %p494, %p495
      %p497 = scmp.ne.s32.totalorder %s483, %s484
      %p498 = scmp.eq.s32.totalorder %s45, 3
      %p499 = por %p497, %p498
      %p501 = scmp.ne.s32.totalorder %s484, %s500
      %p502 = scmp.eq.s32.totalorder %s45, 0
      %p503 = por %p501, %p502
      %s505 = sadd.s32 %s504, 1
      %p508 = scmp.eq.s32.totalorder %s39, 3
      %p509 = scmp.ne.s32.totalorder %s504, %s506
      %p510 = scmp.eq.s32.totalorder %s39, 0
      %p511 = por %p509, %p510
      %p512 = scmp.ne.s32.totalorder %s504, %s506
      %p513 = scmp.eq.s32.totalorder %s44, 3
      %p514 = por %p512, %p513
      %p515 = scmp.ne.s32.totalorder %s506, %s507
      %p516 = scmp.eq.s32.totalorder %s44, 0
      %p517 = por %p515, %p516
      %p518 = scmp.ne.s32.totalorder %s506, %s507
      %p519 = scmp.eq.s32.totalorder %s45, 3
      %p520 = por %p518, %p519
      %p522 = scmp.ne.s32.totalorder %s507, %s521
      %p523 = scmp.eq.s32.totalorder %s45, 0
      %p524 = por %p522, %p523
      %s526 = sadd.s32 %s525, 1
      %p529 = scmp.eq.s32.totalorder %s39, 3
      %p530 = scmp.ne.s32.totalorder %s525, %s527
      %p531 = scmp.eq.s32.totalorder %s39, 0
      %p532 = por %p530, %p531
      %p533 = scmp.ne.s32.totalorder %s525, %s527
      %p534 = scmp.eq.s32.totalorder %s44, 3
      %p535 = por %p533, %p534
      %p536 = scmp.ne.s32.totalorder %s527, %s528
      %p537 = scmp.eq.s32.totalorder %s44, 0
      %p538 = por %p536, %p537
      %p539 = scmp.ne.s32.totalorder %s527, %s528
      %p540 = scmp.eq.s32.totalorder %s45, 3
      %p541 = por %p539, %p540
      %p543 = scmp.ne.s32.totalorder %s528, %s542
      %p544 = scmp.eq.s32.totalorder %s45, 0
      %p545 = por %p543, %p544
      %s547 = sadd.s32 %s546, 1
      %p550 = scmp.eq.s32.totalorder %s39, 3
      %p551 = scmp.ne.s32.totalorder %s546, %s548
      %p552 = scmp.eq.s32.totalorder %s39, 0
      %p553 = por %p551, %p552
      %p554 = scmp.ne.s32.totalorder %s546, %s548
      %p555 = scmp.eq.s32.totalorder %s44, 3
      %p556 = por %p554, %p555
      %p557 = scmp.ne.s32.totalorder %s548, %s549
      %p558 = scmp.eq.s32.totalorder %s44, 0
      %p559 = por %p557, %p558
      %p560 = scmp.ne.s32.totalorder %s548, %s549
      %p561 = scmp.eq.s32.totalorder %s45, 3
      %p562 = por %p560, %p561
      %p564 = scmp.ne.s32.totalorder %s549, %s563
      %p565 = scmp.eq.s32.totalorder %s45, 0
      %p566 = por %p564, %p565
      %p567 = scmp.le.s32.totalorder 1, %s39
      %p568 = scmp.lt.s32.totalorder %s39, 5
      %p569 = pnand %p567, %p568
      %p570 = pneg %p569
      // Predicated region
      $region9: #{tpu_custom_call.1} parent=5 // pred_check
        _
      $region10: #{tpu_custom_call.1} parent=5 // pred_check_branch
        %572 = sbr.rel (%p569) target = $region12
      $region11: #{tpu_custom_call.1} parent=5 // pred_region
        %s573 = ssub.s32 %s39, 1
        // Predicated region
        $region13: #{tpu_custom_call.1} parent=11 // pred_check
          %p574 = pneg %p72
        $region14: #{tpu_custom_call.1} parent=11 // pred_check_branch
          %576 = sbr.rel (%p574) target = $region16
        $region15: #{tpu_custom_call.1} parent=11 // pred_region
          %s578 = ssub.s32 2560, 2560
          %579 = vsyncadd [#allocation7], %s578
          %s580 = sshll.u32 [#allocation6], 4
          %s581 = int_to_ptr.vmem [resolvable:$true] %s580
          %586 = dma.hbm_to_vmem [thread:$0]  %s0, 2560, %s581, [#allocation7], 128, 128, 8
        $region16: #{tpu_custom_call.1} parent=11 // pred_fallthru
          _
        // Predicated region
        $region17: #{tpu_custom_call.1} parent=11 // pred_check
          %p587 = pneg %p517
        $region18: #{tpu_custom_call.1} parent=11 // pred_check_branch
          %589 = sbr.rel (%p587) target = $region20
        $region19: #{tpu_custom_call.1} parent=11 // pred_region
          _
        $region20: #{tpu_custom_call.1} parent=11 // pred_fallthru
          _
        // Predicated region
        $region21: #{tpu_custom_call.1} parent=11 // pred_check
          %p590 = pneg %p538
        $region22: #{tpu_custom_call.1} parent=11 // pred_check_branch
          %592 = sbr.rel (%p590) target = $region24
        $region23: #{tpu_custom_call.1} parent=11 // pred_region
          _
        $region24: #{tpu_custom_call.1} parent=11 // pred_fallthru
          _
      $region12: #{tpu_custom_call.1} parent=5 // pred_fallthru
        _
      %p593 = scmp.lt.s32.totalorder %s39, 4
      // Predicated region
      $region25: #{tpu_custom_call.1} parent=5 // pred_check
        %p594 = pneg %p593
      $region26: #{tpu_custom_call.1} parent=5 // pred_check_branch
        %596 = sbr.rel (%p594) target = $region28
      $region27: #{tpu_custom_call.1} parent=5 // pred_region
        // Predicated region
        $region29: #{tpu_custom_call.1} parent=27 // pred_check
          %p597 = pneg %p92
        $region30: #{tpu_custom_call.1} parent=27 // pred_check_branch
          %599 = sbr.rel (%p597) target = $region32
        $region31: #{tpu_custom_call.1} parent=27 // pred_region
          %p600 = scmp.lt.s32.totalorder %s46, 1
          %s601 = scalar_select %p600, %s46, 1
          %s602 = scalar_lea.vmem %s1, %s601
        $region32: #{tpu_custom_call.1} parent=27 // pred_fallthru
          _
        // Predicated region
        $region33: #{tpu_custom_call.1} parent=27 // pred_check
          %p603 = pneg %p118
        $region34: #{tpu_custom_call.1} parent=27 // pred_check_branch
          %605 = sbr.rel (%p603) target = $region36
        $region35: #{tpu_custom_call.1} parent=27 // pred_region
          %s606 = sand.u32 %s39, 1
          %s607 = scalar_lea.sflag [#allocation10], %s606
          %s608 = sand.u32 %s108, 1
          %s609 = scalar_lea.vmem [#allocation9], %s608
          %s611 = ssub.s32 16, 16
          %612 = vsyncadd %s607, %s611
          %s613 = smul.addr %s46, 16
          %s614 = scalar_lea.hbm %s2, %s613
          %s616 = sshll.u32 %s609, 4
          %s617 = int_to_ptr.vmem [resolvable:$true] %s616
          %619 = dma.hbm_to_vmem [thread:$0]  %s614, 16, %s617, %s607
        $region36: #{tpu_custom_call.1} parent=27 // pred_fallthru
          _
        // Predicated region
        $region37: #{tpu_custom_call.1} parent=27 // pred_check
          %p620 = pneg %p144
        $region38: #{tpu_custom_call.1} parent=27 // pred_check_branch
          %622 = sbr.rel (%p620) target = $region40
        $region39: #{tpu_custom_call.1} parent=27 // pred_region
          %s623 = sand.u32 %s39, 1
          %s624 = scalar_lea.sflag [#allocation10], %s623
          %s625 = sand.u32 %s134, 1
          %s626 = smul.addr %s625, 96
          %s627 = scalar_lea.vmem [#allocation11], %s626
          %s629 = ssub.s32 1536, 1536
          %630 = vsyncadd %s624, %s629
          %s631 = smul.addr %s46, 12
          %s632 = smul.addr %s631, 128
          %s633 = scalar_lea.hbm %s3, %s632
          %s634 = sshll.u32 %s627, 4
          %s635 = int_to_ptr.vmem [resolvable:$true] %s634
          %640 = dma.hbm_to_vmem [thread:$0]  %s633, 1536, %s635, %s624, 384, 384, 24
        $region40: #{tpu_custom_call.1} parent=27 // pred_fallthru
          _
        // Predicated region
        $region41: #{tpu_custom_call.1} parent=27 // pred_check
          %p641 = pneg %p170
        $region42: #{tpu_custom_call.1} parent=27 // pred_check_branch
          %643 = sbr.rel (%p641) target = $region44
        $region43: #{tpu_custom_call.1} parent=27 // pred_region
          %s644 = sand.u32 %s39, 1
          %s645 = scalar_lea.sflag [#allocation13], %s644
          %s646 = sand.u32 %s160, 1
          %s647 = smul.addr %s646, 3
          %s648 = scalar_lea.vmem [#allocation12], %s647
          %s650 = ssub.s32 48, 48
          %651 = vsyncadd %s645, %s650
          %s652 = smul.addr %s46, 3
          %s653 = smul.addr %s652, 16
          %s654 = scalar_lea.hbm %s4, %s653
          %s656 = sshll.u32 %s648, 4
          %s657 = int_to_ptr.vmem [resolvable:$true] %s656
          %659 = dma.hbm_to_vmem [thread:$0]  %s654, 48, %s657, %s645
        $region44: #{tpu_custom_call.1} parent=27 // pred_fallthru
          _
        // Predicated region
        $region45: #{tpu_custom_call.1} parent=27 // pred_check
          %p660 = pneg %p196
        $region46: #{tpu_custom_call.1} parent=27 // pred_check_branch
          %662 = sbr.rel (%p660) target = $region48
        $region47: #{tpu_custom_call.1} parent=27 // pred_region
          %s663 = sand.u32 %s39, 1
          %s664 = scalar_lea.sflag [#allocation13], %s663
          %s665 = sand.u32 %s186, 1
          %s666 = smul.addr %s665, 3
          %s667 = scalar_lea.vmem [#allocation14], %s666
          %s669 = ssub.s32 48, 48
          %670 = vsyncadd %s664, %s669
          %s671 = smul.addr %s46, 3
          %s672 = smul.addr %s671, 16
          %s673 = scalar_lea.hbm %s5, %s672
          %s675 = sshll.u32 %s667, 4
          %s676 = int_to_ptr.vmem [resolvable:$true] %s675
          %678 = dma.hbm_to_vmem [thread:$0]  %s673, 48, %s676, %s664
        $region48: #{tpu_custom_call.1} parent=27 // pred_fallthru
          _
        // Predicated region
        $region49: #{tpu_custom_call.1} parent=27 // pred_check
          %p679 = pneg %p222
        $region50: #{tpu_custom_call.1} parent=27 // pred_check_branch
          %681 = sbr.rel (%p679) target = $region52
        $region51: #{tpu_custom_call.1} parent=27 // pred_region
          %s682 = sand.u32 %s39, 1
          %s683 = scalar_lea.sflag [#allocation16], %s682
          %s684 = sand.u32 %s212, 1
          %s685 = smul.addr %s684, 32
          %s686 = scalar_lea.vmem [#allocation15], %s685
          %s688 = ssub.s32 512, 512
          %689 = vsyncadd %s683, %s688
          %s690 = smul.addr %s46, 4
          %s691 = smul.addr %s690, 128
          %s692 = scalar_lea.hbm %s6, %s691
          %s693 = sshll.u32 %s686, 4
          %s694 = int_to_ptr.vmem [resolvable:$true] %s693
          %699 = dma.hbm_to_vmem [thread:$0]  %s692, 512, %s694, %s683, 128, 128, 8
        $region52: #{tpu_custom_call.1} parent=27 // pred_fallthru
          _
        // Predicated region
        $region53: #{tpu_custom_call.1} parent=27 // pred_check
          %p700 = pneg %p248
        $region54: #{tpu_custom_call.1} parent=27 // pred_check_branch
          %702 = sbr.rel (%p700) target = $region56
        $region55: #{tpu_custom_call.1} parent=27 // pred_region
          %p703 = scmp.lt.s32.totalorder %s46, 1
          %s704 = scalar_select %p703, %s46, 1
          %s705 = scalar_lea.vmem %s7, %s704
        $region56: #{tpu_custom_call.1} parent=27 // pred_fallthru
          _
        // Predicated region
        $region57: #{tpu_custom_call.1} parent=27 // pred_check
          %p706 = pneg %p274
        $region58: #{tpu_custom_call.1} parent=27 // pred_check_branch
          %708 = sbr.rel (%p706) target = $region60
        $region59: #{tpu_custom_call.1} parent=27 // pred_region
          %p709 = scmp.lt.s32.totalorder %s46, 1
          %s710 = scalar_select %p709, %s46, 1
          %s711 = scalar_lea.vmem %s8, %s710
        $region60: #{tpu_custom_call.1} parent=27 // pred_fallthru
          _
        // Predicated region
        $region61: #{tpu_custom_call.1} parent=27 // pred_check
          %p712 = pneg %p300
        $region62: #{tpu_custom_call.1} parent=27 // pred_check_branch
          %714 = sbr.rel (%p712) target = $region64
        $region63: #{tpu_custom_call.1} parent=27 // pred_region
          %p715 = scmp.lt.s32.totalorder %s46, 1
          %s716 = scalar_select %p715, %s46, 1
          %s717 = scalar_lea.vmem %s9, %s716
        $region64: #{tpu_custom_call.1} parent=27 // pred_fallthru
          _
        // Predicated region
        $region65: #{tpu_custom_call.1} parent=27 // pred_check
          %p718 = pneg %p326
        $region66: #{tpu_custom_call.1} parent=27 // pred_check_branch
          %720 = sbr.rel (%p718) target = $region68
        $region67: #{tpu_custom_call.1} parent=27 // pred_region
          %p721 = scmp.lt.s32.totalorder %s46, 1
          %s722 = scalar_select %p721, %s46, 1
          %s723 = scalar_lea.vmem %s10, %s722
        $region68: #{tpu_custom_call.1} parent=27 // pred_fallthru
          _
        // Predicated region
        $region69: #{tpu_custom_call.1} parent=27 // pred_check
          %p724 = pneg %p354
        $region70: #{tpu_custom_call.1} parent=27 // pred_check_branch
          %726 = sbr.rel (%p724) target = $region72
        $region71: #{tpu_custom_call.1} parent=27 // pred_region
          %s727 = sand.u32 %s39, 1
          %s728 = scalar_lea.sflag [#allocation16], %s727
          %s729 = sand.u32 %s344, 1
          %s730 = smul.addr %s729, 64
          %s731 = scalar_lea.vmem [#allocation17], %s730
          %s732 = smul.u32 2, %s47
          %s734 = ssub.s32 1024, 1024
          %735 = vsyncadd %s728, %s734
          %s736 = smul.addr %s46, 16
          %s737 = sadd.s32 %s732, %s736
          %s738 = smul.addr %s737, 128
          %s739 = scalar_lea.hbm %s11, %s738
          %s740 = sshll.u32 %s731, 4
          %s741 = int_to_ptr.vmem [resolvable:$true] %s740
          %746 = dma.hbm_to_vmem [thread:$0]  %s739, 1024, %s741, %s728, 512, 256, 16
        $region72: #{tpu_custom_call.1} parent=27 // pred_fallthru
          _
        // Predicated region
        $region73: #{tpu_custom_call.1} parent=27 // pred_check
          %p747 = pneg %p382
        $region74: #{tpu_custom_call.1} parent=27 // pred_check_branch
          %749 = sbr.rel (%p747) target = $region76
        $region75: #{tpu_custom_call.1} parent=27 // pred_region
          %s750 = smul.u32 2, %s47
          %p751 = scmp.lt.s32.totalorder %s46, 1
          %s752 = scalar_select %p751, %s46, 1
          %p753 = scmp.lt.s32.totalorder %s750, 3
          %s754 = scalar_select %p753, %s750, 3
          %s755 = smul.addr %s752, 4
          %s756 = sadd.s32 %s754, %s755
          %s757 = scalar_lea.vmem %s12, %s756
          %s758 = smul.u32 2, %s47
        $region76: #{tpu_custom_call.1} parent=27 // pred_fallthru
          _
        // Predicated region
        $region77: #{tpu_custom_call.1} parent=27 // pred_check
          %p759 = pneg %p410
        $region78: #{tpu_custom_call.1} parent=27 // pred_check_branch
          %761 = sbr.rel (%p759) target = $region80
        $region79: #{tpu_custom_call.1} parent=27 // pred_region
          %s762 = smul.u32 2, %s47
          %p763 = scmp.lt.s32.totalorder %s46, 1
          %s764 = scalar_select %p763, %s46, 1
          %p765 = scmp.lt.s32.totalorder %s762, 3
          %s766 = scalar_select %p765, %s762, 3
          %s767 = smul.addr %s764, 4
          %s768 = sadd.s32 %s766, %s767
          %s769 = scalar_lea.vmem %s13, %s768
          %s770 = smul.u32 2, %s47
        $region80: #{tpu_custom_call.1} parent=27 // pred_fallthru
          _
        // Predicated region
        $region81: #{tpu_custom_call.1} parent=27 // pred_check
          %p771 = pneg %p438
        $region82: #{tpu_custom_call.1} parent=27 // pred_check_branch
          %773 = sbr.rel (%p771) target = $region84
        $region83: #{tpu_custom_call.1} parent=27 // pred_region
          %s774 = sand.u32 %s428, 1
          %s775 = scalar_lea.sflag [#allocation19], %s774
          %s776 = sand.u32 %s428, 1
          %s777 = smul.addr %s776, 64
          %s778 = scalar_lea.vmem [#allocation18], %s777
          %s779 = smul.u32 8, %s47
          %s781 = ssub.s32 1024, 1024
          %782 = vsyncadd %s775, %s781
          %s783 = smul.addr %s46, 16
          %s784 = sadd.s32 %s779, %s783
          %s785 = smul.addr %s784, 128
          %s786 = scalar_lea.hbm %s14, %s785
          %s787 = sshll.u32 %s778, 4
          %s788 = int_to_ptr.vmem [resolvable:$true] %s787
          %793 = dma.hbm_to_vmem [thread:$0]  %s786, 1024, %s788, %s775, 128, 128, 8
        $region84: #{tpu_custom_call.1} parent=27 // pred_fallthru
          _
        // Predicated region
        $region85: #{tpu_custom_call.1} parent=27 // pred_check
          %p794 = pneg %p464
        $region86: #{tpu_custom_call.1} parent=27 // pred_check_branch
          %796 = sbr.rel (%p794) target = $region88
        $region87: #{tpu_custom_call.1} parent=27 // pred_region
          %p797 = scmp.lt.s32.totalorder %s46, 1
          %s798 = scalar_select %p797, %s46, 1
          %s799 = scalar_lea.vmem %s15, %s798
        $region88: #{tpu_custom_call.1} parent=27 // pred_fallthru
          _
        // Predicated region
        $region89: #{tpu_custom_call.1} parent=27 // pred_check
          %p800 = pneg %p490
        $region90: #{tpu_custom_call.1} parent=27 // pred_check_branch
          %802 = sbr.rel (%p800) target = $region92
        $region91: #{tpu_custom_call.1} parent=27 // pred_region
          %p803 = scmp.lt.s32.totalorder %s46, 1
          %s804 = scalar_select %p803, %s46, 1
          %s805 = scalar_lea.vmem %s16, %s804
        $region92: #{tpu_custom_call.1} parent=27 // pred_fallthru
          _
      $region28: #{tpu_custom_call.1} parent=5 // pred_fallthru
        _
      %p806 = scmp.le.s32.totalorder 1, %s39
      %p807 = scmp.lt.s32.totalorder %s39, 5
      %p808 = pnand %p806, %p807
      %p809 = pneg %p808
      // Predicated region
      $region93: #{tpu_custom_call.1} parent=5 // pred_check
        _
      $region94: #{tpu_custom_call.1} parent=5 // pred_check_branch
        %811 = sbr.rel (%p808) target = $region96
      $region95: #{tpu_custom_call.1} parent=5 // pred_region
        %s812 = ssub.s32 %s39, 1
        // Predicated region
        $region97: #{tpu_custom_call.1} parent=95 // pred_check
          %p813 = pneg %p72
        $region98: #{tpu_custom_call.1} parent=95 // pred_check_branch
          %815 = sbr.rel (%p813) target = $region100
        $region99: #{tpu_custom_call.1} parent=95 // pred_region
          %816 = dma.done [#allocation7], 2560
        $region100: #{tpu_custom_call.1} parent=95 // pred_fallthru
          _
        %s817 = sand.u32 %s44, 1
        %s818 = scalar_lea.sflag [#allocation10], %s817
        %s819 = sand.u32 %s111, 1
        %s820 = scalar_lea.vmem [#allocation9], %s819
        // Predicated region
        $region101: #{tpu_custom_call.1} parent=95 // pred_check
          %p821 = pneg %p124
        $region102: #{tpu_custom_call.1} parent=95 // pred_check_branch
          %823 = sbr.rel (%p821) target = $region104
        $region103: #{tpu_custom_call.1} parent=95 // pred_region
          %824 = dma.done %s818, 16
        $region104: #{tpu_custom_call.1} parent=95 // pred_fallthru
          _
        %s825 = sand.u32 %s44, 1
        %s826 = scalar_lea.sflag [#allocation10], %s825
        %s827 = sand.u32 %s137, 1
        %s828 = smul.addr %s827, 96
        %s829 = scalar_lea.vmem [#allocation11], %s828
        // Predicated region
        $region105: #{tpu_custom_call.1} parent=95 // pred_check
          %p830 = pneg %p150
        $region106: #{tpu_custom_call.1} parent=95 // pred_check_branch
          %832 = sbr.rel (%p830) target = $region108
        $region107: #{tpu_custom_call.1} parent=95 // pred_region
          %833 = dma.done %s826, 1536
        $region108: #{tpu_custom_call.1} parent=95 // pred_fallthru
          _
        %s834 = sand.u32 %s44, 1
        %s835 = scalar_lea.sflag [#allocation13], %s834
        %s836 = sand.u32 %s163, 1
        %s837 = smul.addr %s836, 3
        %s838 = scalar_lea.vmem [#allocation12], %s837
        // Predicated region
        $region109: #{tpu_custom_call.1} parent=95 // pred_check
          %p839 = pneg %p176
        $region110: #{tpu_custom_call.1} parent=95 // pred_check_branch
          %841 = sbr.rel (%p839) target = $region112
        $region111: #{tpu_custom_call.1} parent=95 // pred_region
          %842 = dma.done %s835, 48
        $region112: #{tpu_custom_call.1} parent=95 // pred_fallthru
          _
        %s843 = sand.u32 %s44, 1
        %s844 = scalar_lea.sflag [#allocation13], %s843
        %s845 = sand.u32 %s189, 1
        %s846 = smul.addr %s845, 3
        %s847 = scalar_lea.vmem [#allocation14], %s846
        // Predicated region
        $region113: #{tpu_custom_call.1} parent=95 // pred_check
          %p848 = pneg %p202
        $region114: #{tpu_custom_call.1} parent=95 // pred_check_branch
          %850 = sbr.rel (%p848) target = $region116
        $region115: #{tpu_custom_call.1} parent=95 // pred_region
          %851 = dma.done %s844, 48
        $region116: #{tpu_custom_call.1} parent=95 // pred_fallthru
          _
        %s852 = sand.u32 %s44, 1
        %s853 = scalar_lea.sflag [#allocation16], %s852
        %s854 = sand.u32 %s215, 1
        %s855 = smul.addr %s854, 32
        %s856 = scalar_lea.vmem [#allocation15], %s855
        // Predicated region
        $region117: #{tpu_custom_call.1} parent=95 // pred_check
          %p857 = pneg %p228
        $region118: #{tpu_custom_call.1} parent=95 // pred_check_branch
          %859 = sbr.rel (%p857) target = $region120
        $region119: #{tpu_custom_call.1} parent=95 // pred_region
          %860 = dma.done %s853, 512
        $region120: #{tpu_custom_call.1} parent=95 // pred_fallthru
          _
        %s861 = sand.u32 %s44, 1
        %s862 = scalar_lea.sflag [#allocation16], %s861
        %s863 = sand.u32 %s347, 1
        %s864 = smul.addr %s863, 64
        %s865 = scalar_lea.vmem [#allocation17], %s864
        // Predicated region
        $region121: #{tpu_custom_call.1} parent=95 // pred_check
          %p866 = pneg %p360
        $region122: #{tpu_custom_call.1} parent=95 // pred_check_branch
          %868 = sbr.rel (%p866) target = $region124
        $region123: #{tpu_custom_call.1} parent=95 // pred_region
          %869 = dma.done %s862, 1024
        $region124: #{tpu_custom_call.1} parent=95 // pred_fallthru
          _
        %s870 = sand.u32 %s431, 1
        %s871 = scalar_lea.sflag [#allocation19], %s870
        %s872 = sand.u32 %s431, 1
        %s873 = smul.addr %s872, 64
        %s874 = scalar_lea.vmem [#allocation18], %s873
        // Predicated region
        $region125: #{tpu_custom_call.1} parent=95 // pred_check
          %p875 = pneg %p444
        $region126: #{tpu_custom_call.1} parent=95 // pred_check_branch
          %877 = sbr.rel (%p875) target = $region128
        $region127: #{tpu_custom_call.1} parent=95 // pred_region
          %878 = dma.done %s871, 1024
        $region128: #{tpu_custom_call.1} parent=95 // pred_fallthru
          _
        %p879 = pneg %p72
        %p880 = pneg %p69
        %p881 = scmp.lt.s32.totalorder %s48, 1
        %s882 = scalar_select %p881, %s48, 1
        %s883 = scalar_lea.vmem %s1, %s882
        %p884 = pneg %p98
        %p885 = pneg %p95
        %s886 = sand.u32 %s44, 1
        %s887 = scalar_lea.sflag [#allocation10], %s886
        %s888 = sand.u32 %s111, 1
        %s889 = scalar_lea.vmem [#allocation9], %s888
        %p890 = pneg %p124
        %p891 = pneg %p121
        %s892 = sand.u32 %s44, 1
        %s893 = scalar_lea.sflag [#allocation10], %s892
        %s894 = sand.u32 %s137, 1
        %s895 = smul.addr %s894, 96
        %s896 = scalar_lea.vmem [#allocation11], %s895
        %p897 = pneg %p150
        %p898 = pneg %p147
        %s899 = sand.u32 %s44, 1
        %s900 = scalar_lea.sflag [#allocation13], %s899
        %s901 = sand.u32 %s163, 1
        %s902 = smul.addr %s901, 3
        %s903 = scalar_lea.vmem [#allocation12], %s902
        %p904 = pneg %p176
        %p905 = pneg %p173
        %s906 = sand.u32 %s44, 1
        %s907 = scalar_lea.sflag [#allocation13], %s906
        %s908 = sand.u32 %s189, 1
        %s909 = smul.addr %s908, 3
        %s910 = scalar_lea.vmem [#allocation14], %s909
        %p911 = pneg %p202
        %p912 = pneg %p199
        %s913 = sand.u32 %s44, 1
        %s914 = scalar_lea.sflag [#allocation16], %s913
        %s915 = sand.u32 %s215, 1
        %s916 = smul.addr %s915, 32
        %s917 = scalar_lea.vmem [#allocation15], %s916
        %p918 = pneg %p228
        %p919 = pneg %p225
        %p920 = scmp.lt.s32.totalorder %s48, 1
        %s921 = scalar_select %p920, %s48, 1
        %s922 = scalar_lea.vmem %s7, %s921
        %p923 = pneg %p254
        %p924 = pneg %p251
        %p925 = scmp.lt.s32.totalorder %s48, 1
        %s926 = scalar_select %p925, %s48, 1
        %s927 = scalar_lea.vmem %s8, %s926
        %p928 = pneg %p280
        %p929 = pneg %p277
        %p930 = scmp.lt.s32.totalorder %s48, 1
        %s931 = scalar_select %p930, %s48, 1
        %s932 = scalar_lea.vmem %s9, %s931
        %p933 = pneg %p306
        %p934 = pneg %p303
        %p935 = scmp.lt.s32.totalorder %s48, 1
        %s936 = scalar_select %p935, %s48, 1
        %s937 = scalar_lea.vmem %s10, %s936
        %p938 = pneg %p332
        %p939 = pneg %p329
        %s940 = sand.u32 %s44, 1
        %s941 = scalar_lea.sflag [#allocation16], %s940
        %s942 = sand.u32 %s347, 1
        %s943 = smul.addr %s942, 64
        %s944 = scalar_lea.vmem [#allocation17], %s943
        %p945 = pneg %p360
        %p946 = pneg %p357
        %s947 = smul.u32 2, %s49
        %p948 = scmp.lt.s32.totalorder %s48, 1
        %s949 = scalar_select %p948, %s48, 1
        %p950 = scmp.lt.s32.totalorder %s947, 3
        %s951 = scalar_select %p950, %s947, 3
        %s952 = smul.addr %s949, 4
        %s953 = sadd.s32 %s951, %s952
        %s954 = scalar_lea.vmem %s12, %s953
        %p955 = pneg %p388
        %p956 = pneg %p385
        %s957 = smul.u32 2, %s49
        %p958 = scmp.lt.s32.totalorder %s48, 1
        %s959 = scalar_select %p958, %s48, 1
        %p960 = scmp.lt.s32.totalorder %s957, 3
        %s961 = scalar_select %p960, %s957, 3
        %s962 = smul.addr %s959, 4
        %s963 = sadd.s32 %s961, %s962
        %s964 = scalar_lea.vmem %s13, %s963
        %p965 = pneg %p416
        %p966 = pneg %p413
        %s967 = sand.u32 %s431, 1
        %s968 = scalar_lea.sflag [#allocation19], %s967
        %s969 = sand.u32 %s431, 1
        %s970 = smul.addr %s969, 64
        %s971 = scalar_lea.vmem [#allocation18], %s970
        %p972 = pneg %p444
        %p973 = pneg %p441
        %p974 = scmp.lt.s32.totalorder %s48, 1
        %s975 = scalar_select %p974, %s48, 1
        %s976 = scalar_lea.vmem %s15, %s975
        %p977 = pneg %p470
        %p978 = pneg %p467
        %p979 = scmp.lt.s32.totalorder %s48, 1
        %s980 = scalar_select %p979, %s48, 1
        %s981 = scalar_lea.vmem %s16, %s980
        %p982 = pneg %p496
        %p983 = pneg %p493
        %p984 = pneg %p517
        %p985 = pneg %p514
        %p986 = pneg %p538
        %p987 = pneg %p535
        %p988 = pneg %p559
        %p989 = pneg %p556
        %p990 = scmp.lt.s32.totalorder %s48, 1
        %s991 = scalar_select %p990, %s48, 1
        %s992 = scalar_lea.vmem %s1, %s991
        %p993 = scmp.lt.s32.totalorder %s48, 1
        %s994 = scalar_select %p993, %s48, 1
        %s995 = scalar_lea.vmem %s7, %s994
        %p996 = scmp.lt.s32.totalorder %s48, 1
        %s997 = scalar_select %p996, %s48, 1
        %s998 = scalar_lea.vmem %s8, %s997
        %p999 = scmp.lt.s32.totalorder %s48, 1
        %s1000 = scalar_select %p999, %s48, 1
        %s1001 = scalar_lea.vmem %s9, %s1000
        %p1002 = scmp.lt.s32.totalorder %s48, 1
        %s1003 = scalar_select %p1002, %s48, 1
        %s1004 = scalar_lea.vmem %s10, %s1003
        %s1005 = smul.u32 2, %s49
        %s1006 = smul.u32 2, %s49
        %p1007 = scmp.lt.s32.totalorder %s48, 1
        %s1008 = scalar_select %p1007, %s48, 1
        %p1009 = scmp.lt.s32.totalorder %s1006, 3
        %s1010 = scalar_select %p1009, %s1006, 3
        %s1011 = smul.addr %s1008, 4
        %s1012 = sadd.s32 %s1010, %s1011
        %s1013 = scalar_lea.vmem %s12, %s1012
        %s1014 = smul.u32 2, %s49
        %s1015 = smul.u32 2, %s49
        %p1016 = scmp.lt.s32.totalorder %s48, 1
        %s1017 = scalar_select %p1016, %s48, 1
        %p1018 = scmp.lt.s32.totalorder %s1015, 3
        %s1019 = scalar_select %p1018, %s1015, 3
        %s1020 = smul.addr %s1017, 4
        %s1021 = sadd.s32 %s1019, %s1020
        %s1022 = scalar_lea.vmem %s13, %s1021
        %s1023 = smul.u32 2, %s49
        %s1024 = smul.u32 8, %s49
        %p1025 = scmp.lt.s32.totalorder %s48, 1
        %s1026 = scalar_select %p1025, %s48, 1
        %s1027 = scalar_lea.vmem %s15, %s1026
        %p1028 = scmp.lt.s32.totalorder %s48, 1
        %s1029 = scalar_select %p1028, %s48, 1
        %s1030 = scalar_lea.vmem %s16, %s1029
        %p1032 = scmp.eq.s32.totalorder %s48, 0
        %p1033 = scmp.eq.s32.totalorder %s49, 0
        %p1034 = pnand %p1032, %p1033
        %p1035 = pneg %p1034
        // Predicated region
        $region129: #{tpu_custom_call.1} parent=95 // pred_check
          _
        $region130: #{tpu_custom_call.1} parent=95 // pred_check_branch
          %1037 = sbr.rel (%p1034) target = $region132
        $region131: #{tpu_custom_call.1} parent=95 // pred_region
          %v1038 = vld [vmem:[#allocation6] sm:$0xff]
          %v1039 = vld [vmem:[#allocation6 + $0x8] sm:$0xff]
          %v1040 = vld [vmem:[#allocation6 + $0x10] sm:$0xff]
          %v1041 = vld [vmem:[#allocation6 + $0x18] sm:$0xff]
          %v1042 = vld [vmem:[#allocation6 + $0x20] sm:$0xff]
          %v1043 = vld [vmem:[#allocation6 + $0x28] sm:$0xff]
          %v1044 = vld [vmem:[#allocation6 + $0x30] sm:$0xff]
          %v1045 = vld [vmem:[#allocation6 + $0x38] sm:$0xff]
          %v1046 = vld [vmem:[#allocation6 + $0x40] sm:$0xff]
          %v1047 = vld [vmem:[#allocation6 + $0x48] sm:$0xff]
          %v1048 = vld [vmem:[#allocation6 + $0x50] sm:$0xff]
          %v1049 = vld [vmem:[#allocation6 + $0x58] sm:$0xff]
          %v1050 = vld [vmem:[#allocation6 + $0x60] sm:$0xff]
          %v1051 = vld [vmem:[#allocation6 + $0x68] sm:$0xff]
          %v1052 = vld [vmem:[#allocation6 + $0x70] sm:$0xff]
          %v1053 = vld [vmem:[#allocation6 + $0x78] sm:$0xff]
          %v1054 = vld [vmem:[#allocation6 + $0x80] sm:$0xff]
          %v1055 = vld [vmem:[#allocation6 + $0x88] sm:$0xff]
          %v1056 = vld [vmem:[#allocation6 + $0x90] sm:$0xff]
          %v1057 = vld [vmem:[#allocation6 + $0x98] sm:$0xff]
          %1058 = vst [vmem:[#allocation2] sm:$0xff] %v1038
          %1059 = vst [vmem:[#allocation2 + $0x8] sm:$0xff] %v1039
          %1060 = vst [vmem:[#allocation2 + $0x10] sm:$0xff] %v1040
          %1061 = vst [vmem:[#allocation2 + $0x18] sm:$0xff] %v1041
          %1062 = vst [vmem:[#allocation2 + $0x20] sm:$0xff] %v1042
          %1063 = vst [vmem:[#allocation2 + $0x28] sm:$0xff] %v1043
          %1064 = vst [vmem:[#allocation2 + $0x30] sm:$0xff] %v1044
          %1065 = vst [vmem:[#allocation2 + $0x38] sm:$0xff] %v1045
          %1066 = vst [vmem:[#allocation2 + $0x40] sm:$0xff] %v1046
          %1067 = vst [vmem:[#allocation2 + $0x48] sm:$0xff] %v1047
          %1068 = vst [vmem:[#allocation2 + $0x50] sm:$0xff] %v1048
          %1069 = vst [vmem:[#allocation2 + $0x58] sm:$0xff] %v1049
          %1070 = vst [vmem:[#allocation2 + $0x60] sm:$0xff] %v1050
          %1071 = vst [vmem:[#allocation2 + $0x68] sm:$0xff] %v1051
          %1072 = vst [vmem:[#allocation2 + $0x70] sm:$0xff] %v1052
          %1073 = vst [vmem:[#allocation2 + $0x78] sm:$0xff] %v1053
          %1074 = vst [vmem:[#allocation2 + $0x80] sm:$0xff] %v1054
          %1075 = vst [vmem:[#allocation2 + $0x88] sm:$0xff] %v1055
          %1076 = vst [vmem:[#allocation2 + $0x90] sm:$0xff] %v1056
          %1077 = vst [vmem:[#allocation2 + $0x98] sm:$0xff] %v1057
          %v1078 = vlaneseq
          %v1079 = vshrl.u32 %v1078, 7
          %v1080 = vadd.s32 %v1079, 8
          %v1081 = vadd.s32 %v1079, 16
          %v1082 = vadd.s32 %v1079, 24
          %v1083 = vadd.s32 %v1079, 32
          %v1084 = vadd.s32 %v1079, 40
          %v1085 = vadd.s32 %v1079, 48
          %v1086 = vadd.s32 %v1079, 56
          %v1087 = vadd.s32 %v1079, 64
          %v1088 = vadd.s32 %v1079, 72
          %v1089 = vlaneseq
          %v1090 = vand.u32 %v1089, 127
          %vm1091 = vcmp.gt.s32.totalorder %v1090, %v1079
          %vm1092 = vcmp.gt.s32.totalorder %v1090, %v1080
          %vm1093 = vcmp.gt.s32.totalorder %v1090, %v1081
          %vm1094 = vcmp.gt.s32.totalorder %v1090, %v1082
          %vm1095 = vcmp.gt.s32.totalorder %v1090, %v1083
          %vm1096 = vcmp.gt.s32.totalorder %v1090, %v1084
          %vm1097 = vcmp.gt.s32.totalorder %v1090, %v1085
          %vm1098 = vcmp.gt.s32.totalorder %v1090, %v1086
          %vm1099 = vcmp.gt.s32.totalorder %v1090, %v1087
          %vm1100 = vcmp.gt.s32.totalorder %v1090, %v1088
          %v1101 = vsel %vm1091, -1e+30, 0.0
          %v1102 = vsel %vm1092, -1e+30, 0.0
          %v1103 = vsel %vm1093, -1e+30, 0.0
          %v1104 = vsel %vm1094, -1e+30, 0.0
          %v1105 = vsel %vm1095, -1e+30, 0.0
          %v1106 = vsel %vm1096, -1e+30, 0.0
          %v1107 = vsel %vm1097, -1e+30, 0.0
          %v1108 = vsel %vm1098, -1e+30, 0.0
          %v1109 = vsel %vm1099, -1e+30, 0.0
          %v1110 = vsel %vm1100, -1e+30, 0.0
          %vm1111 = vcmask 654336
          %1112 = vst.msk [vmem:[#allocation5] sm:$0xff] %vm1111, %v1101
          %1113 = vst.msk [vmem:[#allocation5 + $0x8] sm:$0xff] %vm1111, %v1102
          %1114 = vst.msk [vmem:[#allocation5 + $0x10] sm:$0xff] %vm1111, %v1103
          %1115 = vst.msk [vmem:[#allocation5 + $0x18] sm:$0xff] %vm1111, %v1104
          %1116 = vst.msk [vmem:[#allocation5 + $0x20] sm:$0xff] %vm1111, %v1105
          %1117 = vst.msk [vmem:[#allocation5 + $0x28] sm:$0xff] %vm1111, %v1106
          %1118 = vst.msk [vmem:[#allocation5 + $0x30] sm:$0xff] %vm1111, %v1107
          %1119 = vst.msk [vmem:[#allocation5 + $0x38] sm:$0xff] %vm1111, %v1108
          %1120 = vst.msk [vmem:[#allocation5 + $0x40] sm:$0xff] %vm1111, %v1109
          %1121 = vst.msk [vmem:[#allocation5 + $0x48] sm:$0xff] %vm1111, %v1110
        $region132: #{tpu_custom_call.1} parent=95 // pred_fallthru
          _
        // Predicated region
        $region133: #{tpu_custom_call.1} parent=95 // pred_check
          %p1122 = pneg %p1033
        $region134: #{tpu_custom_call.1} parent=95 // pred_check_branch
          %1124 = sbr.rel (%p1122) target = $region136
        $region135: #{tpu_custom_call.1} parent=95 // pred_region
          %v1125 = vld [vmem:[#allocation2] sm:$0xff]
          %v1126 = vld [vmem:[#allocation2 + $0x8] sm:$0xff]
          %v1127 = vld [vmem:[#allocation2 + $0x10] sm:$0xff]
          %v1128 = vld [vmem:[#allocation2 + $0x18] sm:$0xff]
          %v1129 = vld [vmem:[#allocation2 + $0x20] sm:$0xff]
          %v1130 = vld [vmem:[#allocation2 + $0x28] sm:$0xff]
          %v1131 = vld [vmem:[#allocation2 + $0x30] sm:$0xff]
          %v1132 = vld [vmem:[#allocation2 + $0x38] sm:$0xff]
          %v1133 = vld [vmem:[#allocation2 + $0x40] sm:$0xff]
          %v1134 = vld [vmem:[#allocation2 + $0x48] sm:$0xff]
          %v1135 = vld [vmem:[#allocation2 + $0x50] sm:$0xff]
          %v1136 = vld [vmem:[#allocation2 + $0x58] sm:$0xff]
          %v1137 = vld [vmem:[#allocation2 + $0x60] sm:$0xff]
          %v1138 = vld [vmem:[#allocation2 + $0x68] sm:$0xff]
          %v1139 = vld [vmem:[#allocation2 + $0x70] sm:$0xff]
          %v1140 = vld [vmem:[#allocation2 + $0x78] sm:$0xff]
          %v1141 = vld [vmem:[#allocation2 + $0x80] sm:$0xff]
          %v1142 = vld [vmem:[#allocation2 + $0x88] sm:$0xff]
          %v1143 = vld [vmem:[#allocation2 + $0x90] sm:$0xff]
          %v1144 = vld [vmem:[#allocation2 + $0x98] sm:$0xff]
          %v1145 = vld [vmem:[%s992] sm:$0x1]
          %v1146 = vld [vmem:[%s820] sm:$0x1]
          %1147 = vadd.xlane.f32.xlu0 %v1125
          %v1148 = vpop.xlane.xlu0 %1147
          %1149 = vadd.xlane.f32.xlu0 %v1126
          %v1150 = vpop.xlane.xlu0 %1149
          %1151 = vadd.xlane.f32.xlu0 %v1127
          %v1152 = vpop.xlane.xlu0 %1151
          %1153 = vadd.xlane.f32.xlu0 %v1128
          %v1154 = vpop.xlane.xlu0 %1153
          %1155 = vadd.xlane.f32.xlu0 %v1129
          %v1156 = vpop.xlane.xlu0 %1155
          %1157 = vadd.xlane.f32.xlu0 %v1130
          %v1158 = vpop.xlane.xlu0 %1157
          %1159 = vadd.xlane.f32.xlu0 %v1131
          %v1160 = vpop.xlane.xlu0 %1159
          %1161 = vadd.xlane.f32.xlu0 %v1132
          %v1162 = vpop.xlane.xlu0 %1161
          %1163 = vadd.xlane.f32.xlu0 %v1133
          %v1164 = vpop.xlane.xlu0 %1163
          %1165 = vadd.xlane.f32.xlu0 %v1134
          %v1166 = vpop.xlane.xlu0 %1165
          %1167 = vadd.xlane.f32.xlu0 %v1135
          %v1168 = vpop.xlane.xlu0 %1167
          %1169 = vadd.xlane.f32.xlu0 %v1136
          %v1170 = vpop.xlane.xlu0 %1169
          %1171 = vadd.xlane.f32.xlu0 %v1137
          %v1172 = vpop.xlane.xlu0 %1171
          %1173 = vadd.xlane.f32.xlu0 %v1138
          %v1174 = vpop.xlane.xlu0 %1173
          %1175 = vadd.xlane.f32.xlu0 %v1139
          %v1176 = vpop.xlane.xlu0 %1175
          %1177 = vadd.xlane.f32.xlu0 %v1140
          %v1178 = vpop.xlane.xlu0 %1177
          %1179 = vadd.xlane.f32.xlu0 %v1141
          %v1180 = vpop.xlane.xlu0 %1179
          %1181 = vadd.xlane.f32.xlu0 %v1142
          %v1182 = vpop.xlane.xlu0 %1181
          %1183 = vadd.xlane.f32.xlu0 %v1143
          %v1184 = vpop.xlane.xlu0 %1183
          %1185 = vadd.xlane.f32.xlu0 %v1144
          %v1186 = vpop.xlane.xlu0 %1185
          %v1187 = vrcp.pop 128.0
          %v1188 = vmul.f32 %v1148, %v1187
          %v1189 = vmul.f32 %v1150, %v1187
          %v1190 = vmul.f32 %v1152, %v1187
          %v1191 = vmul.f32 %v1154, %v1187
          %v1192 = vmul.f32 %v1156, %v1187
          %v1193 = vmul.f32 %v1158, %v1187
          %v1194 = vmul.f32 %v1160, %v1187
          %v1195 = vmul.f32 %v1162, %v1187
          %v1196 = vmul.f32 %v1164, %v1187
          %v1197 = vmul.f32 %v1166, %v1187
          %v1198 = vmul.f32 %v1168, %v1187
          %v1199 = vmul.f32 %v1170, %v1187
          %v1200 = vmul.f32 %v1172, %v1187
          %v1201 = vmul.f32 %v1174, %v1187
          %v1202 = vmul.f32 %v1176, %v1187
          %v1203 = vmul.f32 %v1178, %v1187
          %v1204 = vmul.f32 %v1180, %v1187
          %v1205 = vmul.f32 %v1182, %v1187
          %v1206 = vmul.f32 %v1184, %v1187
          %v1207 = vmul.f32 %v1186, %v1187
          %v1208 = vsub.f32 %v1125, %v1188
          %v1209 = vsub.f32 %v1126, %v1189
          %v1210 = vsub.f32 %v1127, %v1190
          %v1211 = vsub.f32 %v1128, %v1191
          %v1212 = vsub.f32 %v1129, %v1192
          %v1213 = vsub.f32 %v1130, %v1193
          %v1214 = vsub.f32 %v1131, %v1194
          %v1215 = vsub.f32 %v1132, %v1195
          %v1216 = vsub.f32 %v1133, %v1196
          %v1217 = vsub.f32 %v1134, %v1197
          %v1218 = vsub.f32 %v1135, %v1198
          %v1219 = vsub.f32 %v1136, %v1199
          %v1220 = vsub.f32 %v1137, %v1200
          %v1221 = vsub.f32 %v1138, %v1201
          %v1222 = vsub.f32 %v1139, %v1202
          %v1223 = vsub.f32 %v1140, %v1203
          %v1224 = vsub.f32 %v1141, %v1204
          %v1225 = vsub.f32 %v1142, %v1205
          %v1226 = vsub.f32 %v1143, %v1206
          %v1227 = vsub.f32 %v1144, %v1207
          %v1228 = vmul.f32 %v1208, %v1208
          %v1229 = vmul.f32 %v1209, %v1209
          %v1230 = vmul.f32 %v1210, %v1210
          %v1231 = vmul.f32 %v1211, %v1211
          %v1232 = vmul.f32 %v1212, %v1212
          %v1233 = vmul.f32 %v1213, %v1213
          %v1234 = vmul.f32 %v1214, %v1214
          %v1235 = vmul.f32 %v1215, %v1215
          %v1236 = vmul.f32 %v1216, %v1216
          %v1237 = vmul.f32 %v1217, %v1217
          %v1238 = vmul.f32 %v1218, %v1218
          %v1239 = vmul.f32 %v1219, %v1219
          %v1240 = vmul.f32 %v1220, %v1220
          %v1241 = vmul.f32 %v1221, %v1221
          %v1242 = vmul.f32 %v1222, %v1222
          %v1243 = vmul.f32 %v1223, %v1223
          %v1244 = vmul.f32 %v1224, %v1224
          %v1245 = vmul.f32 %v1225, %v1225
          %v1246 = vmul.f32 %v1226, %v1226
          %v1247 = vmul.f32 %v1227, %v1227
          %1248 = vadd.xlane.f32.xlu0 %v1228
          %v1249 = vpop.xlane.xlu0 %1248
          %1250 = vadd.xlane.f32.xlu0 %v1229
          %v1251 = vpop.xlane.xlu0 %1250
          %1252 = vadd.xlane.f32.xlu0 %v1230
          %v1253 = vpop.xlane.xlu0 %1252
          %1254 = vadd.xlane.f32.xlu0 %v1231
          %v1255 = vpop.xlane.xlu0 %1254
          %1256 = vadd.xlane.f32.xlu0 %v1232
          %v1257 = vpop.xlane.xlu0 %1256
          %1258 = vadd.xlane.f32.xlu0 %v1233
          %v1259 = vpop.xlane.xlu0 %1258
          %1260 = vadd.xlane.f32.xlu0 %v1234
          %v1261 = vpop.xlane.xlu0 %1260
          %1262 = vadd.xlane.f32.xlu0 %v1235
          %v1263 = vpop.xlane.xlu0 %1262
          %1264 = vadd.xlane.f32.xlu0 %v1236
          %v1265 = vpop.xlane.xlu0 %1264
          %1266 = vadd.xlane.f32.xlu0 %v1237
          %v1267 = vpop.xlane.xlu0 %1266
          %1268 = vadd.xlane.f32.xlu0 %v1238
          %v1269 = vpop.xlane.xlu0 %1268
          %1270 = vadd.xlane.f32.xlu0 %v1239
          %v1271 = vpop.xlane.xlu0 %1270
          %1272 = vadd.xlane.f32.xlu0 %v1240
          %v1273 = vpop.xlane.xlu0 %1272
          %1274 = vadd.xlane.f32.xlu0 %v1241
          %v1275 = vpop.xlane.xlu0 %1274
          %1276 = vadd.xlane.f32.xlu0 %v1242
          %v1277 = vpop.xlane.xlu0 %1276
          %1278 = vadd.xlane.f32.xlu0 %v1243
          %v1279 = vpop.xlane.xlu0 %1278
          %1280 = vadd.xlane.f32.xlu0 %v1244
          %v1281 = vpop.xlane.xlu0 %1280
          %1282 = vadd.xlane.f32.xlu0 %v1245
          %v1283 = vpop.xlane.xlu0 %1282
          %1284 = vadd.xlane.f32.xlu0 %v1246
          %v1285 = vpop.xlane.xlu0 %1284
          %1286 = vadd.xlane.f32.xlu0 %v1247
          %v1287 = vpop.xlane.xlu0 %1286
          %v1288 = vmul.f32 %v1249, %v1187
          %v1289 = vmul.f32 %v1251, %v1187
          %v1290 = vmul.f32 %v1253, %v1187
          %v1291 = vmul.f32 %v1255, %v1187
          %v1292 = vmul.f32 %v1257, %v1187
          %v1293 = vmul.f32 %v1259, %v1187
          %v1294 = vmul.f32 %v1261, %v1187
          %v1295 = vmul.f32 %v1263, %v1187
          %v1296 = vmul.f32 %v1265, %v1187
          %v1297 = vmul.f32 %v1267, %v1187
          %v1298 = vmul.f32 %v1269, %v1187
          %v1299 = vmul.f32 %v1271, %v1187
          %v1300 = vmul.f32 %v1273, %v1187
          %v1301 = vmul.f32 %v1275, %v1187
          %v1302 = vmul.f32 %v1277, %v1187
          %v1303 = vmul.f32 %v1279, %v1187
          %v1304 = vmul.f32 %v1281, %v1187
          %v1305 = vmul.f32 %v1283, %v1187
          %v1306 = vmul.f32 %v1285, %v1187
          %v1307 = vmul.f32 %v1287, %v1187
          %v1308 = vadd.f32 %v1288, 1e-05
          %v1309 = vadd.f32 %v1289, 1e-05
          %v1310 = vadd.f32 %v1290, 1e-05
          %v1311 = vadd.f32 %v1291, 1e-05
          %v1312 = vadd.f32 %v1292, 1e-05
          %v1313 = vadd.f32 %v1293, 1e-05
          %v1314 = vadd.f32 %v1294, 1e-05
          %v1315 = vadd.f32 %v1295, 1e-05
          %v1316 = vadd.f32 %v1296, 1e-05
          %v1317 = vadd.f32 %v1297, 1e-05
          %v1318 = vadd.f32 %v1298, 1e-05
          %v1319 = vadd.f32 %v1299, 1e-05
          %v1320 = vadd.f32 %v1300, 1e-05
          %v1321 = vadd.f32 %v1301, 1e-05
          %v1322 = vadd.f32 %v1302, 1e-05
          %v1323 = vadd.f32 %v1303, 1e-05
          %v1324 = vadd.f32 %v1304, 1e-05
          %v1325 = vadd.f32 %v1305, 1e-05
          %v1326 = vadd.f32 %v1306, 1e-05
          %v1327 = vadd.f32 %v1307, 1e-05
          %v1328 = vrsqrt.pop %v1308
          %v1329 = vrsqrt.pop %v1309
          %v1330 = vrsqrt.pop %v1310
          %v1331 = vrsqrt.pop %v1311
          %v1332 = vrsqrt.pop %v1312
          %v1333 = vrsqrt.pop %v1313
          %v1334 = vrsqrt.pop %v1314
          %v1335 = vrsqrt.pop %v1315
          %v1336 = vrsqrt.pop %v1316
          %v1337 = vrsqrt.pop %v1317
          %v1338 = vrsqrt.pop %v1318
          %v1339 = vrsqrt.pop %v1319
          %v1340 = vrsqrt.pop %v1320
          %v1341 = vrsqrt.pop %v1321
          %v1342 = vrsqrt.pop %v1322
          %v1343 = vrsqrt.pop %v1323
          %v1344 = vrsqrt.pop %v1324
          %v1345 = vrsqrt.pop %v1325
          %v1346 = vrsqrt.pop %v1326
          %v1347 = vrsqrt.pop %v1327
          %v1348 = vmul.f32 %v1208, %v1328
          %v1349 = vmul.f32 %v1209, %v1329
          %v1350 = vmul.f32 %v1210, %v1330
          %v1351 = vmul.f32 %v1211, %v1331
          %v1352 = vmul.f32 %v1212, %v1332
          %v1353 = vmul.f32 %v1213, %v1333
          %v1354 = vmul.f32 %v1214, %v1334
          %v1355 = vmul.f32 %v1215, %v1335
          %v1356 = vmul.f32 %v1216, %v1336
          %v1357 = vmul.f32 %v1217, %v1337
          %v1358 = vmul.f32 %v1218, %v1338
          %v1359 = vmul.f32 %v1219, %v1339
          %v1360 = vmul.f32 %v1220, %v1340
          %v1361 = vmul.f32 %v1221, %v1341
          %v1362 = vmul.f32 %v1222, %v1342
          %v1363 = vmul.f32 %v1223, %v1343
          %v1364 = vmul.f32 %v1224, %v1344
          %v1365 = vmul.f32 %v1225, %v1345
          %v1366 = vmul.f32 %v1226, %v1346
          %v1367 = vmul.f32 %v1227, %v1347
          %v1369 = vlaneseq
          %v1370 = vshrl.u32 %v1369, 7
          %v1371 = vsub.s32 0, %v1370
          %v1372 = vrot.slane %v1145, %v1371
          %v1374 = vmul.f32 %v1348, %v1372
          %v1375 = vmul.f32 %v1349, %v1372
          %v1376 = vmul.f32 %v1350, %v1372
          %v1377 = vmul.f32 %v1351, %v1372
          %v1378 = vmul.f32 %v1352, %v1372
          %v1379 = vmul.f32 %v1353, %v1372
          %v1380 = vmul.f32 %v1354, %v1372
          %v1381 = vmul.f32 %v1355, %v1372
          %v1382 = vmul.f32 %v1356, %v1372
          %v1383 = vmul.f32 %v1357, %v1372
          %v1384 = vmul.f32 %v1358, %v1372
          %v1385 = vmul.f32 %v1359, %v1372
          %v1386 = vmul.f32 %v1360, %v1372
          %v1387 = vmul.f32 %v1361, %v1372
          %v1388 = vmul.f32 %v1362, %v1372
          %v1389 = vmul.f32 %v1363, %v1372
          %v1390 = vmul.f32 %v1364, %v1372
          %v1391 = vmul.f32 %v1365, %v1372
          %v1392 = vmul.f32 %v1366, %v1372
          %v1393 = vmul.f32 %v1367, %v1372
          %v1395 = vlaneseq
          %v1396 = vshrl.u32 %v1395, 7
          %v1397 = vsub.s32 0, %v1396
          %v1398 = vrot.slane %v1146, %v1397
          %v1400 = vadd.f32 %v1374, %v1398
          %v1401 = vadd.f32 %v1375, %v1398
          %v1402 = vadd.f32 %v1376, %v1398
          %v1403 = vadd.f32 %v1377, %v1398
          %v1404 = vadd.f32 %v1378, %v1398
          %v1405 = vadd.f32 %v1379, %v1398
          %v1406 = vadd.f32 %v1380, %v1398
          %v1407 = vadd.f32 %v1381, %v1398
          %v1408 = vadd.f32 %v1382, %v1398
          %v1409 = vadd.f32 %v1383, %v1398
          %v1410 = vadd.f32 %v1384, %v1398
          %v1411 = vadd.f32 %v1385, %v1398
          %v1412 = vadd.f32 %v1386, %v1398
          %v1413 = vadd.f32 %v1387, %v1398
          %v1414 = vadd.f32 %v1388, %v1398
          %v1415 = vadd.f32 %v1389, %v1398
          %v1416 = vadd.f32 %v1390, %v1398
          %v1417 = vadd.f32 %v1391, %v1398
          %v1418 = vadd.f32 %v1392, %v1398
          %v1419 = vadd.f32 %v1393, %v1398
          %v1420 = vpack.c.bf16 %v1401, %v1400
          %v1421 = vpack.c.bf16 %v1403, %v1402
          %v1422 = vpack.c.bf16 %v1405, %v1404
          %v1423 = vpack.c.bf16 %v1407, %v1406
          %v1424 = vpack.c.bf16 %v1409, %v1408
          %v1425 = vpack.c.bf16 %v1411, %v1410
          %v1426 = vpack.c.bf16 %v1413, %v1412
          %v1427 = vpack.c.bf16 %v1415, %v1414
          %v1428 = vpack.c.bf16 %v1417, %v1416
          %v1429 = vpack.c.bf16 %v1419, %v1418
          %v1430 = vld [vmem:[%s829] sm:$0xff]
          %v1431 = vld [vmem:[%s829 + $0x18] sm:$0xff]
          %v1432 = vld [vmem:[%s829 + $0x30] sm:$0xff]
          %v1433 = vld [vmem:[%s829 + $0x48] sm:$0xff]
          %v1434 = vunpack.c.l.s8.bf16 %v1430
          %v1435 = vunpack.c.h.s8.bf16 %v1430
          %v1436 = vunpack.c.l.s8.bf16 %v1431
          %v1437 = vunpack.c.h.s8.bf16 %v1431
          %v1438 = vunpack.c.l.s8.bf16 %v1432
          %v1439 = vunpack.c.h.s8.bf16 %v1432
          %v1440 = vunpack.c.l.s8.bf16 %v1433
          %v1441 = vunpack.c.h.s8.bf16 %v1433
          %1442 = vmatprep.subr.bf16.mxu0 0
          %1443 = vmatpush1.bf16.msra.mxu0 %v1434
          %1444 = vmatprep.subr.bf16.mxu0 0
          %1445 = vmatpush1.bf16.msra.mxu0 %v1435
          %1446 = vmatprep.subr.bf16.mxu0 0
          %1447 = vmatpush1.bf16.msra.mxu0 %v1436
          %1448 = vmatprep.subr.bf16.mxu0 0
          %1449 = vmatpush1.bf16.msra.mxu0 %v1437
          %1450 = vmatprep.subr.bf16.mxu0 0
          %1451 = vmatpush1.bf16.msra.mxu0 %v1438
          %1452 = vmatprep.subr.bf16.mxu0 0
          %1453 = vmatpush1.bf16.msra.mxu0 %v1439
          %1454 = vmatprep.subr.bf16.mxu0 0
          %1455 = vmatpush1.bf16.msra.mxu0 %v1440
          %1456 = vmatprep.subr.bf16.mxu0 0
          %1457 = vmatpush1.bf16.msra.mxu0 %v1441
          %1458 = vmatprep.subr.bf16.mxu0 0
          %1459 = vmatpush1.bf16.msra.mxu0 0
          %1460 = vmatprep.subr.bf16.mxu0 0
          %1461 = vmatpush1.bf16.msra.mxu0 0
          %1462 = vmatprep.subr.bf16.mxu0 0
          %1463 = vmatpush1.bf16.msra.mxu0 0
          %1464 = vmatprep.subr.bf16.mxu0 0
          %1465 = vmatpush1.bf16.msra.mxu0 0
          %1466 = vmatprep.subr.bf16.mxu0 0
          %1467 = vmatpush1.bf16.msra.mxu0 0
          %1468 = vmatprep.subr.bf16.mxu0 0
          %1469 = vmatpush1.bf16.msra.mxu0 0
          %1470 = vmatprep.subr.bf16.mxu0 0
          %1471 = vmatpush1.bf16.msra.mxu0 0
          %1472 = vmatprep.subr.bf16.mxu0 0
          %1473 = vmatpush1.bf16.msra.mxu0 0
          %1474 = vmatprep.mubr.bf16.mxu0 0
          %1475 = vmatmul.mubr.bf16.gmra.mrb[0].mxu0 %v1420
          %v1476 = vpop.f32.mrb[0].mxu0
          %v1477 = vadd.f32 0.0, %v1476
          %v1478 = vpop.f32.mrb[0].mxu0
          %v1479 = vpop.f32.mrb[0].mxu0
          %v1480 = vadd.f32 0.0, %v1479
          %v1481 = vpop.f32.mrb[0].mxu0
          %1482 = vmatprep.mubr.bf16.mxu0 0
          %1483 = vmatmul.mubr.bf16.gmra.mrb[0].mxu0 %v1421
          %v1484 = vpop.f32.mrb[0].mxu0
          %v1485 = vadd.f32 0.0, %v1484
          %v1486 = vpop.f32.mrb[0].mxu0
          %v1487 = vpop.f32.mrb[0].mxu0
          %v1488 = vadd.f32 0.0, %v1487
          %v1489 = vpop.f32.mrb[0].mxu0
          %1490 = vmatprep.mubr.bf16.mxu0 0
          %1491 = vmatmul.mubr.bf16.gmra.mrb[0].mxu0 %v1422
          %v1492 = vpop.f32.mrb[0].mxu0
          %v1493 = vadd.f32 0.0, %v1492
          %v1494 = vpop.f32.mrb[0].mxu0
          %v1495 = vpop.f32.mrb[0].mxu0
          %v1496 = vadd.f32 0.0, %v1495
          %v1497 = vpop.f32.mrb[0].mxu0
          %1498 = vmatprep.mubr.bf16.mxu0 0
          %1499 = vmatmul.mubr.bf16.gmra.mrb[0].mxu0 %v1423
          %v1500 = vpop.f32.mrb[0].mxu0
          %v1501 = vadd.f32 0.0, %v1500
          %v1502 = vpop.f32.mrb[0].mxu0
          %v1503 = vpop.f32.mrb[0].mxu0
          %v1504 = vadd.f32 0.0, %v1503
          %v1505 = vpop.f32.mrb[0].mxu0
          %1506 = vmatprep.mubr.bf16.mxu0 0
          %1507 = vmatmul.mubr.bf16.gmra.mrb[0].mxu0 %v1424
          %v1508 = vpop.f32.mrb[0].mxu0
          %v1509 = vadd.f32 0.0, %v1508
          %v1510 = vpop.f32.mrb[0].mxu0
          %v1511 = vpop.f32.mrb[0].mxu0
          %v1512 = vadd.f32 0.0, %v1511
          %v1513 = vpop.f32.mrb[0].mxu0
          %1514 = vmatprep.mubr.bf16.mxu0 0
          %1515 = vmatmul.mubr.bf16.gmra.mrb[0].mxu0 %v1425
          %v1516 = vpop.f32.mrb[0].mxu0
          %v1517 = vadd.f32 0.0, %v1516
          %v1518 = vpop.f32.mrb[0].mxu0
          %v1519 = vpop.f32.mrb[0].mxu0
          %v1520 = vadd.f32 0.0, %v1519
          %v1521 = vpop.f32.mrb[0].mxu0
          %1522 = vmatprep.mubr.bf16.mxu0 0
          %1523 = vmatmul.mubr.bf16.gmra.mrb[0].mxu0 %v1426
          %v1524 = vpop.f32.mrb[0].mxu0
          %v1525 = vadd.f32 0.0, %v1524
          %v1526 = vpop.f32.mrb[0].mxu0
          %v1527 = vpop.f32.mrb[0].mxu0
          %v1528 = vadd.f32 0.0, %v1527
          %v1529 = vpop.f32.mrb[0].mxu0
          %1530 = vmatprep.mubr.bf16.mxu0 0
          %1531 = vmatmul.mubr.bf16.gmra.mrb[0].mxu0 %v1427
          %v1532 = vpop.f32.mrb[0].mxu0
          %v1533 = vadd.f32 0.0, %v1532
          %v1534 = vpop.f32.mrb[0].mxu0
          %v1535 = vpop.f32.mrb[0].mxu0
          %v1536 = vadd.f32 0.0, %v1535
          %v1537 = vpop.f32.mrb[0].mxu0
          %1538 = vmatprep.mubr.bf16.mxu0 0
          %1539 = vmatmul.mubr.bf16.gmra.mrb[0].mxu0 %v1428
          %v1540 = vpop.f32.mrb[0].mxu0
          %v1541 = vadd.f32 0.0, %v1540
          %v1542 = vpop.f32.mrb[0].mxu0
          %v1543 = vpop.f32.mrb[0].mxu0
          %v1544 = vadd.f32 0.0, %v1543
          %v1545 = vpop.f32.mrb[0].mxu0
          %1546 = vmatprep.mubr.bf16.mxu0 0
          %1547 = vmatmul.mubr.bf16.gmra.mrb[0].mxu0 %v1429
          %v1548 = vpop.f32.mrb[0].mxu0
          %v1549 = vadd.f32 0.0, %v1548
          %v1550 = vpop.f32.mrb[0].mxu0
          %v1551 = vpop.f32.mrb[0].mxu0
          %v1552 = vadd.f32 0.0, %v1551
          %v1553 = vpop.f32.mrb[0].mxu0
          %1554 = vdwg.mxu0
          %v1555 = vld [vmem:[%s838] sm:$0x1]
          %v1557 = vlaneseq
          %v1558 = vshrl.u32 %v1557, 7
          %v1559 = vsub.s32 0, %v1558
          %v1560 = vrot.slane %v1555, %v1559
          %v1562 = vmul.f32 %v1477, %v1560
          %v1563 = vmul.f32 %v1480, %v1560
          %v1564 = vmul.f32 %v1485, %v1560
          %v1565 = vmul.f32 %v1488, %v1560
          %v1566 = vmul.f32 %v1493, %v1560
          %v1567 = vmul.f32 %v1496, %v1560
          %v1568 = vmul.f32 %v1501, %v1560
          %v1569 = vmul.f32 %v1504, %v1560
          %v1570 = vmul.f32 %v1509, %v1560
          %v1571 = vmul.f32 %v1512, %v1560
          %v1572 = vmul.f32 %v1517, %v1560
          %v1573 = vmul.f32 %v1520, %v1560
          %v1574 = vmul.f32 %v1525, %v1560
          %v1575 = vmul.f32 %v1528, %v1560
          %v1576 = vmul.f32 %v1533, %v1560
          %v1577 = vmul.f32 %v1536, %v1560
          %v1578 = vmul.f32 %v1541, %v1560
          %v1579 = vmul.f32 %v1544, %v1560
          %v1580 = vmul.f32 %v1549, %v1560
          %v1581 = vmul.f32 %v1552, %v1560
          %v1582 = vld [vmem:[%s847] sm:$0x1]
          %v1584 = vlaneseq
          %v1585 = vshrl.u32 %v1584, 7
          %v1586 = vsub.s32 0, %v1585
          %v1587 = vrot.slane %v1582, %v1586
          %v1589 = vadd.f32 %v1562, %v1587
          %v1590 = vadd.f32 %v1563, %v1587
          %v1591 = vadd.f32 %v1564, %v1587
          %v1592 = vadd.f32 %v1565, %v1587
          %v1593 = vadd.f32 %v1566, %v1587
          %v1594 = vadd.f32 %v1567, %v1587
          %v1595 = vadd.f32 %v1568, %v1587
          %v1596 = vadd.f32 %v1569, %v1587
          %v1597 = vadd.f32 %v1570, %v1587
          %v1598 = vadd.f32 %v1571, %v1587
          %v1599 = vadd.f32 %v1572, %v1587
          %v1600 = vadd.f32 %v1573, %v1587
          %v1601 = vadd.f32 %v1574, %v1587
          %v1602 = vadd.f32 %v1575, %v1587
          %v1603 = vadd.f32 %v1576, %v1587
          %v1604 = vadd.f32 %v1577, %v1587
          %v1605 = vadd.f32 %v1578, %v1587
          %v1606 = vadd.f32 %v1579, %v1587
          %v1607 = vadd.f32 %v1580, %v1587
          %v1608 = vadd.f32 %v1581, %v1587
          %v1609 = vld [vmem:[%s829 + $0x8] sm:$0xff]
          %v1610 = vld [vmem:[%s829 + $0x20] sm:$0xff]
          %v1611 = vld [vmem:[%s829 + $0x38] sm:$0xff]
          %v1612 = vld [vmem:[%s829 + $0x50] sm:$0xff]
          %v1613 = vunpack.c.l.s8.bf16 %v1609
          %v1614 = vunpack.c.h.s8.bf16 %v1609
          %v1615 = vunpack.c.l.s8.bf16 %v1610
          %v1616 = vunpack.c.h.s8.bf16 %v1610
          %v1617 = vunpack.c.l.s8.bf16 %v1611
          %v1618 = vunpack.c.h.s8.bf16 %v1611
          %v1619 = vunpack.c.l.s8.bf16 %v1612
          %v1620 = vunpack.c.h.s8.bf16 %v1612
          %1621 = vmatprep.subr.bf16.mxu0 0
          %1622 = vmatpush1.bf16.msra.mxu0 %v1613
          %1623 = vmatprep.subr.bf16.mxu0 0
          %1624 = vmatpush1.bf16.msra.mxu0 %v1614
          %1625 = vmatprep.subr.bf16.mxu0 0
          %1626 = vmatpush1.bf16.msra.mxu0 %v1615
          %1627 = vmatprep.subr.bf16.mxu0 0
          %1628 = vmatpush1.bf16.msra.mxu0 %v1616
          %1629 = vmatprep.subr.bf16.mxu0 0
          %1630 = vmatpush1.bf16.msra.mxu0 %v1617
          %1631 = vmatprep.subr.bf16.mxu0 0
          %1632 = vmatpush1.bf16.msra.mxu0 %v1618
          %1633 = vmatprep.subr.bf16.mxu0 0
          %1634 = vmatpush1.bf16.msra.mxu0 %v1619
          %1635 = vmatprep.subr.bf16.mxu0 0
          %1636 = vmatpush1.bf16.msra.mxu0 %v1620
          %1637 = vmatprep.subr.bf16.mxu0 0
          %1638 = vmatpush1.bf16.msra.mxu0 0
          %1639 = vmatprep.subr.bf16.mxu0 0
          %1640 = vmatpush1.bf16.msra.mxu0 0
          %1641 = vmatprep.subr.bf16.mxu0 0
          %1642 = vmatpush1.bf16.msra.mxu0 0
          %1643 = vmatprep.subr.bf16.mxu0 0
          %1644 = vmatpush1.bf16.msra.mxu0 0
          %1645 = vmatprep.subr.bf16.mxu0 0
          %1646 = vmatpush1.bf16.msra.mxu0 0
          %1647 = vmatprep.subr.bf16.mxu0 0
          %1648 = vmatpush1.bf16.msra.mxu0 0
          %1649 = vmatprep.subr.bf16.mxu0 0
          %1650 = vmatpush1.bf16.msra.mxu0 0
          %1651 = vmatprep.subr.bf16.mxu0 0
          %1652 = vmatpush1.bf16.msra.mxu0 0
          %1653 = vmatprep.mubr.bf16.mxu0 0
          %1654 = vmatmul.mubr.bf16.gmra.mrb[0].mxu0 %v1420
          %v1655 = vpop.f32.mrb[0].mxu0
          %v1656 = vadd.f32 0.0, %v1655
          %v1657 = vpop.f32.mrb[0].mxu0
          %v1658 = vpop.f32.mrb[0].mxu0
          %v1659 = vadd.f32 0.0, %v1658
          %v1660 = vpop.f32.mrb[0].mxu0
          %1661 = vmatprep.mubr.bf16.mxu0 0
          %1662 = vmatmul.mubr.bf16.gmra.mrb[0].mxu0 %v1421
          %v1663 = vpop.f32.mrb[0].mxu0
          %v1664 = vadd.f32 0.0, %v1663
          %v1665 = vpop.f32.mrb[0].mxu0
          %v1666 = vpop.f32.mrb[0].mxu0
          %v1667 = vadd.f32 0.0, %v1666
          %v1668 = vpop.f32.mrb[0].mxu0
          %1669 = vmatprep.mubr.bf16.mxu0 0
          %1670 = vmatmul.mubr.bf16.gmra.mrb[0].mxu0 %v1422
          %v1671 = vpop.f32.mrb[0].mxu0
          %v1672 = vadd.f32 0.0, %v1671
          %v1673 = vpop.f32.mrb[0].mxu0
          %v1674 = vpop.f32.mrb[0].mxu0
          %v1675 = vadd.f32 0.0, %v1674
          %v1676 = vpop.f32.mrb[0].mxu0
          %1677 = vmatprep.mubr.bf16.mxu0 0
          %1678 = vmatmul.mubr.bf16.gmra.mrb[0].mxu0 %v1423
          %v1679 = vpop.f32.mrb[0].mxu0
          %v1680 = vadd.f32 0.0, %v1679
          %v1681 = vpop.f32.mrb[0].mxu0
          %v1682 = vpop.f32.mrb[0].mxu0
          %v1683 = vadd.f32 0.0, %v1682
          %v1684 = vpop.f32.mrb[0].mxu0
          %1685 = vmatprep.mubr.bf16.mxu0 0
          %1686 = vmatmul.mubr.bf16.gmra.mrb[0].mxu0 %v1424
          %v1687 = vpop.f32.mrb[0].mxu0
          %v1688 = vadd.f32 0.0, %v1687
          %v1689 = vpop.f32.mrb[0].mxu0
          %v1690 = vpop.f32.mrb[0].mxu0
          %v1691 = vadd.f32 0.0, %v1690
          %v1692 = vpop.f32.mrb[0].mxu0
          %1693 = vmatprep.mubr.bf16.mxu0 0
          %1694 = vmatmul.mubr.bf16.gmra.mrb[0].mxu0 %v1425
          %v1695 = vpop.f32.mrb[0].mxu0
          %v1696 = vadd.f32 0.0, %v1695
          %v1697 = vpop.f32.mrb[0].mxu0
          %v1698 = vpop.f32.mrb[0].mxu0
          %v1699 = vadd.f32 0.0, %v1698
          %v1700 = vpop.f32.mrb[0].mxu0
          %1701 = vmatprep.mubr.bf16.mxu0 0
          %1702 = vmatmul.mubr.bf16.gmra.mrb[0].mxu0 %v1426
          %v1703 = vpop.f32.mrb[0].mxu0
          %v1704 = vadd.f32 0.0, %v1703
          %v1705 = vpop.f32.mrb[0].mxu0
          %v1706 = vpop.f32.mrb[0].mxu0
          %v1707 = vadd.f32 0.0, %v1706
          %v1708 = vpop.f32.mrb[0].mxu0
          %1709 = vmatprep.mubr.bf16.mxu0 0
          %1710 = vmatmul.mubr.bf16.gmra.mrb[0].mxu0 %v1427
          %v1711 = vpop.f32.mrb[0].mxu0
          %v1712 = vadd.f32 0.0, %v1711
          %v1713 = vpop.f32.mrb[0].mxu0
          %v1714 = vpop.f32.mrb[0].mxu0
          %v1715 = vadd.f32 0.0, %v1714
          %v1716 = vpop.f32.mrb[0].mxu0
          %1717 = vmatprep.mubr.bf16.mxu0 0
          %1718 = vmatmul.mubr.bf16.gmra.mrb[0].mxu0 %v1428
          %v1719 = vpop.f32.mrb[0].mxu0
          %v1720 = vadd.f32 0.0, %v1719
          %v1721 = vpop.f32.mrb[0].mxu0
          %v1722 = vpop.f32.mrb[0].mxu0
          %v1723 = vadd.f32 0.0, %v1722
          %v1724 = vpop.f32.mrb[0].mxu0
          %1725 = vmatprep.mubr.bf16.mxu0 0
          %1726 = vmatmul.mubr.bf16.gmra.mrb[0].mxu0 %v1429
          %v1727 = vpop.f32.mrb[0].mxu0
          %v1728 = vadd.f32 0.0, %v1727
          %v1729 = vpop.f32.mrb[0].mxu0
          %v1730 = vpop.f32.mrb[0].mxu0
          %v1731 = vadd.f32 0.0, %v1730
          %v1732 = vpop.f32.mrb[0].mxu0
          %1733 = vdwg.mxu0
          %v1734 = vld [vmem:[%s838 + $0x1] sm:$0x1]
          %v1736 = vlaneseq
          %v1737 = vshrl.u32 %v1736, 7
          %v1738 = vsub.s32 0, %v1737
          %v1739 = vrot.slane %v1734, %v1738
          %v1741 = vmul.f32 %v1656, %v1739
          %v1742 = vmul.f32 %v1659, %v1739
          %v1743 = vmul.f32 %v1664, %v1739
          %v1744 = vmul.f32 %v1667, %v1739
          %v1745 = vmul.f32 %v1672, %v1739
          %v1746 = vmul.f32 %v1675, %v1739
          %v1747 = vmul.f32 %v1680, %v1739
          %v1748 = vmul.f32 %v1683, %v1739
          %v1749 = vmul.f32 %v1688, %v1739
          %v1750 = vmul.f32 %v1691, %v1739
          %v1751 = vmul.f32 %v1696, %v1739
          %v1752 = vmul.f32 %v1699, %v1739
          %v1753 = vmul.f32 %v1704, %v1739
          %v1754 = vmul.f32 %v1707, %v1739
          %v1755 = vmul.f32 %v1712, %v1739
          %v1756 = vmul.f32 %v1715, %v1739
          %v1757 = vmul.f32 %v1720, %v1739
          %v1758 = vmul.f32 %v1723, %v1739
          %v1759 = vmul.f32 %v1728, %v1739
          %v1760 = vmul.f32 %v1731, %v1739
          %v1761 = vld [vmem:[%s847 + $0x1] sm:$0x1]
          %v1763 = vlaneseq
          %v1764 = vshrl.u32 %v1763, 7
          %v1765 = vsub.s32 0, %v1764
          %v1766 = vrot.slane %v1761, %v1765
          %v1768 = vadd.f32 %v1741, %v1766
          %v1769 = vadd.f32 %v1742, %v1766
          %v1770 = vadd.f32 %v1743, %v1766
          %v1771 = vadd.f32 %v1744, %v1766
          %v1772 = vadd.f32 %v1745, %v1766
          %v1773 = vadd.f32 %v1746, %v1766
          %v1774 = vadd.f32 %v1747, %v1766
          %v1775 = vadd.f32 %v1748, %v1766
          %v1776 = vadd.f32 %v1749, %v1766
          %v1777 = vadd.f32 %v1750, %v1766
          %v1778 = vadd.f32 %v1751, %v1766
          %v1779 = vadd.f32 %v1752, %v1766
          %v1780 = vadd.f32 %v1753, %v1766
          %v1781 = vadd.f32 %v1754, %v1766
          %v1782 = vadd.f32 %v1755, %v1766
          %v1783 = vadd.f32 %v1756, %v1766
          %v1784 = vadd.f32 %v1757, %v1766
          %v1785 = vadd.f32 %v1758, %v1766
          %v1786 = vadd.f32 %v1759, %v1766
          %v1787 = vadd.f32 %v1760, %v1766
          %v1788 = vld [vmem:[%s829 + $0x10] sm:$0xff]
          %v1789 = vld [vmem:[%s829 + $0x28] sm:$0xff]
          %v1790 = vld [vmem:[%s829 + $0x40] sm:$0xff]
          %v1791 = vld [vmem:[%s829 + $0x58] sm:$0xff]
          %v1792 = vunpack.c.l.s8.bf16 %v1788
          %v1793 = vunpack.c.h.s8.bf16 %v1788
          %v1794 = vunpack.c.l.s8.bf16 %v1789
          %v1795 = vunpack.c.h.s8.bf16 %v1789
          %v1796 = vunpack.c.l.s8.bf16 %v1790
          %v1797 = vunpack.c.h.s8.bf16 %v1790
          %v1798 = vunpack.c.l.s8.bf16 %v1791
          %v1799 = vunpack.c.h.s8.bf16 %v1791
          %1800 = vmatprep.subr.bf16.mxu0 0
          %1801 = vmatpush1.bf16.msra.mxu0 %v1792
          %1802 = vmatprep.subr.bf16.mxu0 0
          %1803 = vmatpush1.bf16.msra.mxu0 %v1793
          %1804 = vmatprep.subr.bf16.mxu0 0
          %1805 = vmatpush1.bf16.msra.mxu0 %v1794
          %1806 = vmatprep.subr.bf16.mxu0 0
          %1807 = vmatpush1.bf16.msra.mxu0 %v1795
          %1808 = vmatprep.subr.bf16.mxu0 0
          %1809 = vmatpush1.bf16.msra.mxu0 %v1796
          %1810 = vmatprep.subr.bf16.mxu0 0
          %1811 = vmatpush1.bf16.msra.mxu0 %v1797
          %1812 = vmatprep.subr.bf16.mxu0 0
          %1813 = vmatpush1.bf16.msra.mxu0 %v1798
          %1814 = vmatprep.subr.bf16.mxu0 0
          %1815 = vmatpush1.bf16.msra.mxu0 %v1799
          %1816 = vmatprep.subr.bf16.mxu0 0
          %1817 = vmatpush1.bf16.msra.mxu0 0
          %1818 = vmatprep.subr.bf16.mxu0 0
          %1819 = vmatpush1.bf16.msra.mxu0 0
          %1820 = vmatprep.subr.bf16.mxu0 0
          %1821 = vmatpush1.bf16.msra.mxu0 0
          %1822 = vmatprep.subr.bf16.mxu0 0
          %1823 = vmatpush1.bf16.msra.mxu0 0
          %1824 = vmatprep.subr.bf16.mxu0 0
          %1825 = vmatpush1.bf16.msra.mxu0 0
          %1826 = vmatprep.subr.bf16.mxu0 0
          %1827 = vmatpush1.bf16.msra.mxu0 0
          %1828 = vmatprep.subr.bf16.mxu0 0
          %1829 = vmatpush1.bf16.msra.mxu0 0
          %1830 = vmatprep.subr.bf16.mxu0 0
          %1831 = vmatpush1.bf16.msra.mxu0 0
          %1832 = vmatprep.mubr.bf16.mxu0 0
          %1833 = vmatmul.mubr.bf16.gmra.mrb[0].mxu0 %v1420
          %v1834 = vpop.f32.mrb[0].mxu0
          %v1835 = vadd.f32 0.0, %v1834
          %v1836 = vpop.f32.mrb[0].mxu0
          %v1837 = vpop.f32.mrb[0].mxu0
          %v1838 = vadd.f32 0.0, %v1837
          %v1839 = vpop.f32.mrb[0].mxu0
          %1840 = vmatprep.mubr.bf16.mxu0 0
          %1841 = vmatmul.mubr.bf16.gmra.mrb[0].mxu0 %v1421
          %v1842 = vpop.f32.mrb[0].mxu0
          %v1843 = vadd.f32 0.0, %v1842
          %v1844 = vpop.f32.mrb[0].mxu0
          %v1845 = vpop.f32.mrb[0].mxu0
          %v1846 = vadd.f32 0.0, %v1845
          %v1847 = vpop.f32.mrb[0].mxu0
          %1848 = vmatprep.mubr.bf16.mxu0 0
          %1849 = vmatmul.mubr.bf16.gmra.mrb[0].mxu0 %v1422
          %v1850 = vpop.f32.mrb[0].mxu0
          %v1851 = vadd.f32 0.0, %v1850
          %v1852 = vpop.f32.mrb[0].mxu0
          %v1853 = vpop.f32.mrb[0].mxu0
          %v1854 = vadd.f32 0.0, %v1853
          %v1855 = vpop.f32.mrb[0].mxu0
          %1856 = vmatprep.mubr.bf16.mxu0 0
          %1857 = vmatmul.mubr.bf16.gmra.mrb[0].mxu0 %v1423
          %v1858 = vpop.f32.mrb[0].mxu0
          %v1859 = vadd.f32 0.0, %v1858
          %v1860 = vpop.f32.mrb[0].mxu0
          %v1861 = vpop.f32.mrb[0].mxu0
          %v1862 = vadd.f32 0.0, %v1861
          %v1863 = vpop.f32.mrb[0].mxu0
          %1864 = vmatprep.mubr.bf16.mxu0 0
          %1865 = vmatmul.mubr.bf16.gmra.mrb[0].mxu0 %v1424
          %v1866 = vpop.f32.mrb[0].mxu0
          %v1867 = vadd.f32 0.0, %v1866
          %v1868 = vpop.f32.mrb[0].mxu0
          %v1869 = vpop.f32.mrb[0].mxu0
          %v1870 = vadd.f32 0.0, %v1869
          %v1871 = vpop.f32.mrb[0].mxu0
          %1872 = vmatprep.mubr.bf16.mxu0 0
          %1873 = vmatmul.mubr.bf16.gmra.mrb[0].mxu0 %v1425
          %v1874 = vpop.f32.mrb[0].mxu0
          %v1875 = vadd.f32 0.0, %v1874
          %v1876 = vpop.f32.mrb[0].mxu0
          %v1877 = vpop.f32.mrb[0].mxu0
          %v1878 = vadd.f32 0.0, %v1877
          %v1879 = vpop.f32.mrb[0].mxu0
          %1880 = vmatprep.mubr.bf16.mxu0 0
          %1881 = vmatmul.mubr.bf16.gmra.mrb[0].mxu0 %v1426
          %v1882 = vpop.f32.mrb[0].mxu0
          %v1883 = vadd.f32 0.0, %v1882
          %v1884 = vpop.f32.mrb[0].mxu0
          %v1885 = vpop.f32.mrb[0].mxu0
          %v1886 = vadd.f32 0.0, %v1885
          %v1887 = vpop.f32.mrb[0].mxu0
          %1888 = vmatprep.mubr.bf16.mxu0 0
          %1889 = vmatmul.mubr.bf16.gmra.mrb[0].mxu0 %v1427
          %v1890 = vpop.f32.mrb[0].mxu0
          %v1891 = vadd.f32 0.0, %v1890
          %v1892 = vpop.f32.mrb[0].mxu0
          %v1893 = vpop.f32.mrb[0].mxu0
          %v1894 = vadd.f32 0.0, %v1893
          %v1895 = vpop.f32.mrb[0].mxu0
          %1896 = vmatprep.mubr.bf16.mxu0 0
          %1897 = vmatmul.mubr.bf16.gmra.mrb[0].mxu0 %v1428
          %v1898 = vpop.f32.mrb[0].mxu0
          %v1899 = vadd.f32 0.0, %v1898
          %v1900 = vpop.f32.mrb[0].mxu0
          %v1901 = vpop.f32.mrb[0].mxu0
          %v1902 = vadd.f32 0.0, %v1901
          %v1903 = vpop.f32.mrb[0].mxu0
          %1904 = vmatprep.mubr.bf16.mxu0 0
          %1905 = vmatmul.mubr.bf16.gmra.mrb[0].mxu0 %v1429
          %v1906 = vpop.f32.mrb[0].mxu0
          %v1907 = vadd.f32 0.0, %v1906
          %v1908 = vpop.f32.mrb[0].mxu0
          %v1909 = vpop.f32.mrb[0].mxu0
          %v1910 = vadd.f32 0.0, %v1909
          %v1911 = vpop.f32.mrb[0].mxu0
          %1912 = vdwg.mxu0
          %v1913 = vld [vmem:[%s838 + $0x2] sm:$0x1]
          %v1915 = vlaneseq
          %v1916 = vshrl.u32 %v1915, 7
          %v1917 = vsub.s32 0, %v1916
          %v1918 = vrot.slane %v1913, %v1917
          %v1920 = vmul.f32 %v1835, %v1918
          %v1921 = vmul.f32 %v1838, %v1918
          %v1922 = vmul.f32 %v1843, %v1918
          %v1923 = vmul.f32 %v1846, %v1918
          %v1924 = vmul.f32 %v1851, %v1918
          %v1925 = vmul.f32 %v1854, %v1918
          %v1926 = vmul.f32 %v1859, %v1918
          %v1927 = vmul.f32 %v1862, %v1918
          %v1928 = vmul.f32 %v1867, %v1918
          %v1929 = vmul.f32 %v1870, %v1918
          %v1930 = vmul.f32 %v1875, %v1918
          %v1931 = vmul.f32 %v1878, %v1918
          %v1932 = vmul.f32 %v1883, %v1918
          %v1933 = vmul.f32 %v1886, %v1918
          %v1934 = vmul.f32 %v1891, %v1918
          %v1935 = vmul.f32 %v1894, %v1918
          %v1936 = vmul.f32 %v1899, %v1918
          %v1937 = vmul.f32 %v1902, %v1918
          %v1938 = vmul.f32 %v1907, %v1918
          %v1939 = vmul.f32 %v1910, %v1918
          %v1940 = vld [vmem:[%s847 + $0x2] sm:$0x1]
          %v1942 = vlaneseq
          %v1943 = vshrl.u32 %v1942, 7
          %v1944 = vsub.s32 0, %v1943
          %v1945 = vrot.slane %v1940, %v1944
          %v1947 = vadd.f32 %v1920, %v1945
          %v1948 = vadd.f32 %v1921, %v1945
          %v1949 = vadd.f32 %v1922, %v1945
          %v1950 = vadd.f32 %v1923, %v1945
          %v1951 = vadd.f32 %v1924, %v1945
          %v1952 = vadd.f32 %v1925, %v1945
          %v1953 = vadd.f32 %v1926, %v1945
          %v1954 = vadd.f32 %v1927, %v1945
          %v1955 = vadd.f32 %v1928, %v1945
          %v1956 = vadd.f32 %v1929, %v1945
          %v1957 = vadd.f32 %v1930, %v1945
          %v1958 = vadd.f32 %v1931, %v1945
          %v1959 = vadd.f32 %v1932, %v1945
          %v1960 = vadd.f32 %v1933, %v1945
          %v1961 = vadd.f32 %v1934, %v1945
          %v1962 = vadd.f32 %v1935, %v1945
          %v1963 = vadd.f32 %v1936, %v1945
          %v1964 = vadd.f32 %v1937, %v1945
          %v1965 = vadd.f32 %v1938, %v1945
          %v1966 = vadd.f32 %v1939, %v1945
          %v1967 = vld [vmem:[#allocation5] sm:$0xff]
          %v1968 = vld [vmem:[#allocation5 + $0x8] sm:$0xff]
          %v1969 = vld [vmem:[#allocation5 + $0x10] sm:$0xff]
          %v1970 = vld [vmem:[#allocation5 + $0x18] sm:$0xff]
          %v1971 = vld [vmem:[#allocation5 + $0x20] sm:$0xff]
          %v1972 = vld [vmem:[#allocation5 + $0x28] sm:$0xff]
          %v1973 = vld [vmem:[#allocation5 + $0x30] sm:$0xff]
          %v1974 = vld [vmem:[#allocation5 + $0x38] sm:$0xff]
          %v1975 = vld [vmem:[#allocation5 + $0x40] sm:$0xff]
          %v1976 = vld [vmem:[#allocation5 + $0x48] sm:$0xff]
          %vm1977 = vcmask 261120
          %v1979 = vsel %vm1977, %v1589, 0
          %v1982 = vsel %vm1977, %v1590, 0
          %v1985 = vsel %vm1977, %v1591, 0
          %v1988 = vsel %vm1977, %v1592, 0
          %v1991 = vsel %vm1977, %v1593, 0
          %v1994 = vsel %vm1977, %v1594, 0
          %v1997 = vsel %vm1977, %v1595, 0
          %v2000 = vsel %vm1977, %v1596, 0
          %v2003 = vsel %vm1977, %v1597, 0
          %v2006 = vsel %vm1977, %v1598, 0
          %v2009 = vsel %vm1977, %v1768, 0
          %v2012 = vsel %vm1977, %v1769, 0
          %v2015 = vsel %vm1977, %v1770, 0
          %v2018 = vsel %vm1977, %v1771, 0
          %v2021 = vsel %vm1977, %v1772, 0
          %v2024 = vsel %vm1977, %v1773, 0
          %v2027 = vsel %vm1977, %v1774, 0
          %v2030 = vsel %vm1977, %v1775, 0
          %v2033 = vsel %vm1977, %v1776, 0
          %v2036 = vsel %vm1977, %v1777, 0
          %2038 = vmatprep.subr.mxu0 0.0
          %2039 = vmatpush1.xpose.msra.mxu0 %v2009
          %2040 = vmatprep.subr.mxu0 0.0
          %2041 = vmatpush1.xpose.msra.mxu0 %v2012
          %2042 = vmatprep.subr.mxu0 0.0
          %2043 = vmatpush1.xpose.msra.mxu0 %v2015
          %2044 = vmatprep.subr.mxu0 0.0
          %2045 = vmatpush1.xpose.msra.mxu0 %v2018
          %2046 = vmatprep.subr.mxu0 0.0
          %2047 = vmatpush1.xpose.msra.mxu0 %v2021
          %2048 = vmatprep.subr.mxu0 0.0
          %2049 = vmatpush1.xpose.msra.mxu0 %v2024
          %2050 = vmatprep.subr.mxu0 0.0
          %2051 = vmatpush1.xpose.msra.mxu0 %v2027
          %2052 = vmatprep.subr.mxu0 0.0
          %2053 = vmatpush1.xpose.msra.mxu0 %v2030
          %2054 = vmatprep.subr.mxu0 0.0
          %2055 = vmatpush1.xpose.msra.mxu0 %v2033
          %2056 = vmatprep.subr.mxu0 0.0
          %2057 = vmatpush1.xpose.msra.mxu0 %v2036
          %2058 = vmatprep.subr.mxu0 0.0
          %2059 = vmatpush1.xpose.msra.mxu0 0.0
          %2060 = vmatprep.subr.mxu0 0.0
          %2061 = vmatpush1.xpose.msra.mxu0 0.0
          %2062 = vmatprep.subr.mxu0 0.0
          %2063 = vmatpush1.xpose.msra.mxu0 0.0
          %2064 = vmatprep.subr.mxu0 0.0
          %2065 = vmatpush1.xpose.msra.mxu0 0.0
          %2066 = vmatprep.subr.mxu0 0.0
          %2067 = vmatpush1.xpose.msra.mxu0 0.0
          %2068 = vmatprep.subr.mxu0 0.0
          %2069 = vmatpush1.xpose.msra.mxu0 0.0
          %2070 = vmatprep.subr.mxu0 0.0
          %2071 = vmatpush1.xpose.msra.mxu0 0.0
          %2072 = vmatprep.subr.mxu0 0.0
          %2073 = vmatpush1.xpose.msra.mxu0 0.0
          %2074 = vmatprep.subr.mxu0 0.0
          %2075 = vmatpush1.xpose.msra.mxu0 0.0
          %2076 = vmatprep.subr.mxu0 0.0
          %2077 = vmatpush1.xpose.msra.mxu0 0.0
          %2078 = vmatprep.subr.mxu0 0.0
          %2079 = vmatpush1.xpose.msra.mxu0 0.0
          %2080 = vmatprep.subr.mxu0 0.0
          %2081 = vmatpush1.xpose.msra.mxu0 0.0
          %2082 = vmatprep.subr.mxu0 0.0
          %2083 = vmatpush1.xpose.msra.mxu0 0.0
          %2084 = vmatprep.subr.mxu0 0.0
          %2085 = vmatpush1.xpose.msra.mxu0 0.0
          %2086 = vmatprep.subr.mxu0 0.0
          %2087 = vmatpush1.xpose.msra.mxu0 0.0
          %2088 = vmatprep.subr.mxu0 0.0
          %2089 = vmatpush1.xpose.msra.mxu0 0.0
          %2090 = vmatprep.subr.mxu0 0.0
          %2091 = vmatpush1.xpose.msra.mxu0 0.0
          %2092 = vmatprep.subr.mxu0 0.0
          %2093 = vmatpush1.xpose.msra.mxu0 0.0
          %2094 = vmatprep.subr.mxu0 0.0
          %2095 = vmatpush1.xpose.msra.mxu0 0.0
          %2096 = vmatprep.subr.mxu0 0.0
          %2097 = vmatpush1.xpose.msra.mxu0 0.0
          %2098 = vmatprep.subr.mxu0 0.0
          %2099 = vmatpush1.xpose.msra.mxu0 0.0
          %2100 = vmatprep.subr.mxu0 0.0
          %2101 = vmatpush1.xpose.msra.mxu0 0.0
          %2102 = vmatprep.mubr.f32.mxu0 0.0
          %2103 = vmatmul.mubr.f32.gmra.mrb[0].mxu0 %v1979
          %v2104 = vpop.f32.mrb[0].mxu0
          %v2105 = vadd.f32 %v1967, %v2104
          %v2106 = vpop.f32.mrb[0].mxu0
          %2107 = vmatprep.mubr.f32.mxu0 0.0
          %2108 = vmatmul.mubr.f32.gmra.mrb[0].mxu0 %v1982
          %v2109 = vpop.f32.mrb[0].mxu0
          %v2110 = vadd.f32 %v1968, %v2109
          %v2111 = vpop.f32.mrb[0].mxu0
          %2112 = vmatprep.mubr.f32.mxu0 0.0
          %2113 = vmatmul.mubr.f32.gmra.mrb[0].mxu0 %v1985
          %v2114 = vpop.f32.mrb[0].mxu0
          %v2115 = vadd.f32 %v1969, %v2114
          %v2116 = vpop.f32.mrb[0].mxu0
          %2117 = vmatprep.mubr.f32.mxu0 0.0
          %2118 = vmatmul.mubr.f32.gmra.mrb[0].mxu0 %v1988
          %v2119 = vpop.f32.mrb[0].mxu0
          %v2120 = vadd.f32 %v1970, %v2119
          %v2121 = vpop.f32.mrb[0].mxu0
          %2122 = vmatprep.mubr.f32.mxu0 0.0
          %2123 = vmatmul.mubr.f32.gmra.mrb[0].mxu0 %v1991
          %v2124 = vpop.f32.mrb[0].mxu0
          %v2125 = vadd.f32 %v1971, %v2124
          %v2126 = vpop.f32.mrb[0].mxu0
          %2127 = vmatprep.mubr.f32.mxu0 0.0
          %2128 = vmatmul.mubr.f32.gmra.mrb[0].mxu0 %v1994
          %v2129 = vpop.f32.mrb[0].mxu0
          %v2130 = vadd.f32 %v1972, %v2129
          %v2131 = vpop.f32.mrb[0].mxu0
          %2132 = vmatprep.mubr.f32.mxu0 0.0
          %2133 = vmatmul.mubr.f32.gmra.mrb[0].mxu0 %v1997
          %v2134 = vpop.f32.mrb[0].mxu0
          %v2135 = vadd.f32 %v1973, %v2134
          %v2136 = vpop.f32.mrb[0].mxu0
          %2137 = vmatprep.mubr.f32.mxu0 0.0
          %2138 = vmatmul.mubr.f32.gmra.mrb[0].mxu0 %v2000
          %v2139 = vpop.f32.mrb[0].mxu0
          %v2140 = vadd.f32 %v1974, %v2139
          %v2141 = vpop.f32.mrb[0].mxu0
          %2142 = vmatprep.mubr.f32.mxu0 0.0
          %2143 = vmatmul.mubr.f32.gmra.mrb[0].mxu0 %v2003
          %v2144 = vpop.f32.mrb[0].mxu0
          %v2145 = vadd.f32 %v1975, %v2144
          %v2146 = vpop.f32.mrb[0].mxu0
          %2147 = vmatprep.mubr.f32.mxu0 0.0
          %2148 = vmatmul.mubr.f32.gmra.mrb[0].mxu0 %v2006
          %v2149 = vpop.f32.mrb[0].mxu0
          %v2150 = vadd.f32 %v1976, %v2149
          %v2151 = vpop.f32.mrb[0].mxu0
          %2152 = vdwg.mxu0
          %v2154 = vsel %vm1977, %v1599, 0
          %v2157 = vsel %vm1977, %v1600, 0
          %v2160 = vsel %vm1977, %v1601, 0
          %v2163 = vsel %vm1977, %v1602, 0
          %v2166 = vsel %vm1977, %v1603, 0
          %v2169 = vsel %vm1977, %v1604, 0
          %v2172 = vsel %vm1977, %v1605, 0
          %v2175 = vsel %vm1977, %v1606, 0
          %v2178 = vsel %vm1977, %v1607, 0
          %v2181 = vsel %vm1977, %v1608, 0
          %v2184 = vsel %vm1977, %v1778, 0
          %v2187 = vsel %vm1977, %v1779, 0
          %v2190 = vsel %vm1977, %v1780, 0
          %v2193 = vsel %vm1977, %v1781, 0
          %v2196 = vsel %vm1977, %v1782, 0
          %v2199 = vsel %vm1977, %v1783, 0
          %v2202 = vsel %vm1977, %v1784, 0
          %v2205 = vsel %vm1977, %v1785, 0
          %v2208 = vsel %vm1977, %v1786, 0
          %v2211 = vsel %vm1977, %v1787, 0
          %2213 = vmatprep.subr.mxu0 0.0
          %2214 = vmatpush1.xpose.msra.mxu0 %v2184
          %2215 = vmatprep.subr.mxu0 0.0
          %2216 = vmatpush1.xpose.msra.mxu0 %v2187
          %2217 = vmatprep.subr.mxu0 0.0
          %2218 = vmatpush1.xpose.msra.mxu0 %v2190
          %2219 = vmatprep.subr.mxu0 0.0
          %2220 = vmatpush1.xpose.msra.mxu0 %v2193
          %2221 = vmatprep.subr.mxu0 0.0
          %2222 = vmatpush1.xpose.msra.mxu0 %v2196
          %2223 = vmatprep.subr.mxu0 0.0
          %2224 = vmatpush1.xpose.msra.mxu0 %v2199
          %2225 = vmatprep.subr.mxu0 0.0
          %2226 = vmatpush1.xpose.msra.mxu0 %v2202
          %2227 = vmatprep.subr.mxu0 0.0
          %2228 = vmatpush1.xpose.msra.mxu0 %v2205
          %2229 = vmatprep.subr.mxu0 0.0
          %2230 = vmatpush1.xpose.msra.mxu0 %v2208
          %2231 = vmatprep.subr.mxu0 0.0
          %2232 = vmatpush1.xpose.msra.mxu0 %v2211
          %2233 = vmatprep.subr.mxu0 0.0
          %2234 = vmatpush1.xpose.msra.mxu0 0.0
          %2235 = vmatprep.subr.mxu0 0.0
          %2236 = vmatpush1.xpose.msra.mxu0 0.0
          %2237 = vmatprep.subr.mxu0 0.0
          %2238 = vmatpush1.xpose.msra.mxu0 0.0
          %2239 = vmatprep.subr.mxu0 0.0
          %2240 = vmatpush1.xpose.msra.mxu0 0.0
          %2241 = vmatprep.subr.mxu0 0.0
          %2242 = vmatpush1.xpose.msra.mxu0 0.0
          %2243 = vmatprep.subr.mxu0 0.0
          %2244 = vmatpush1.xpose.msra.mxu0 0.0
          %2245 = vmatprep.subr.mxu0 0.0
          %2246 = vmatpush1.xpose.msra.mxu0 0.0
          %2247 = vmatprep.subr.mxu0 0.0
          %2248 = vmatpush1.xpose.msra.mxu0 0.0
          %2249 = vmatprep.subr.mxu0 0.0
          %2250 = vmatpush1.xpose.msra.mxu0 0.0
          %2251 = vmatprep.subr.mxu0 0.0
          %2252 = vmatpush1.xpose.msra.mxu0 0.0
          %2253 = vmatprep.subr.mxu0 0.0
          %2254 = vmatpush1.xpose.msra.mxu0 0.0
          %2255 = vmatprep.subr.mxu0 0.0
          %2256 = vmatpush1.xpose.msra.mxu0 0.0
          %2257 = vmatprep.subr.mxu0 0.0
          %2258 = vmatpush1.xpose.msra.mxu0 0.0
          %2259 = vmatprep.subr.mxu0 0.0
          %2260 = vmatpush1.xpose.msra.mxu0 0.0
          %2261 = vmatprep.subr.mxu0 0.0
          %2262 = vmatpush1.xpose.msra.mxu0 0.0
          %2263 = vmatprep.subr.mxu0 0.0
          %2264 = vmatpush1.xpose.msra.mxu0 0.0
          %2265 = vmatprep.subr.mxu0 0.0
          %2266 = vmatpush1.xpose.msra.mxu0 0.0
          %2267 = vmatprep.subr.mxu0 0.0
          %2268 = vmatpush1.xpose.msra.mxu0 0.0
          %2269 = vmatprep.subr.mxu0 0.0
          %2270 = vmatpush1.xpose.msra.mxu0 0.0
          %2271 = vmatprep.subr.mxu0 0.0
          %2272 = vmatpush1.xpose.msra.mxu0 0.0
          %2273 = vmatprep.subr.mxu0 0.0
          %2274 = vmatpush1.xpose.msra.mxu0 0.0
          %2275 = vmatprep.subr.mxu0 0.0
          %2276 = vmatpush1.xpose.msra.mxu0 0.0
          %2277 = vmatprep.mubr.f32.mxu0 0.0
          %2278 = vmatmul.mubr.f32.gmra.mrb[0].mxu0 %v2154
          %v2279 = vpop.f32.mrb[0].mxu0
          %v2280 = vadd.f32 %v1967, %v2279
          %v2281 = vpop.f32.mrb[0].mxu0
          %2282 = vmatprep.mubr.f32.mxu0 0.0
          %2283 = vmatmul.mubr.f32.gmra.mrb[0].mxu0 %v2157
          %v2284 = vpop.f32.mrb[0].mxu0
          %v2285 = vadd.f32 %v1968, %v2284
          %v2286 = vpop.f32.mrb[0].mxu0
          %2287 = vmatprep.mubr.f32.mxu0 0.0
          %2288 = vmatmul.mubr.f32.gmra.mrb[0].mxu0 %v2160
          %v2289 = vpop.f32.mrb[0].mxu0
          %v2290 = vadd.f32 %v1969, %v2289
          %v2291 = vpop.f32.mrb[0].mxu0
          %2292 = vmatprep.mubr.f32.mxu0 0.0
          %2293 = vmatmul.mubr.f32.gmra.mrb[0].mxu0 %v2163
          %v2294 = vpop.f32.mrb[0].mxu0
          %v2295 = vadd.f32 %v1970, %v2294
          %v2296 = vpop.f32.mrb[0].mxu0
          %2297 = vmatprep.mubr.f32.mxu0 0.0
          %2298 = vmatmul.mubr.f32.gmra.mrb[0].mxu0 %v2166
          %v2299 = vpop.f32.mrb[0].mxu0
          %v2300 = vadd.f32 %v1971, %v2299
          %v2301 = vpop.f32.mrb[0].mxu0
          %2302 = vmatprep.mubr.f32.mxu0 0.0
          %2303 = vmatmul.mubr.f32.gmra.mrb[0].mxu0 %v2169
          %v2304 = vpop.f32.mrb[0].mxu0
          %v2305 = vadd.f32 %v1972, %v2304
          %v2306 = vpop.f32.mrb[0].mxu0
          %2307 = vmatprep.mubr.f32.mxu0 0.0
          %2308 = vmatmul.mubr.f32.gmra.mrb[0].mxu0 %v2172
          %v2309 = vpop.f32.mrb[0].mxu0
          %v2310 = vadd.f32 %v1973, %v2309
          %v2311 = vpop.f32.mrb[0].mxu0
          %2312 = vmatprep.mubr.f32.mxu0 0.0
          %2313 = vmatmul.mubr.f32.gmra.mrb[0].mxu0 %v2175
          %v2314 = vpop.f32.mrb[0].mxu0
          %v2315 = vadd.f32 %v1974, %v2314
          %v2316 = vpop.f32.mrb[0].mxu0
          %2317 = vmatprep.mubr.f32.mxu0 0.0
          %2318 = vmatmul.mubr.f32.gmra.mrb[0].mxu0 %v2178
          %v2319 = vpop.f32.mrb[0].mxu0
          %v2320 = vadd.f32 %v1975, %v2319
          %v2321 = vpop.f32.mrb[0].mxu0
          %2322 = vmatprep.mubr.f32.mxu0 0.0
          %2323 = vmatmul.mubr.f32.gmra.mrb[0].mxu0 %v2181
          %v2324 = vpop.f32.mrb[0].mxu0
          %v2325 = vadd.f32 %v1976, %v2324
          %v2326 = vpop.f32.mrb[0].mxu0
          %2327 = vdwg.mxu0
          %vm2328 = vcmask 654336
          %v2329 = vsel %vm2328, %v2105, -inf
          %2330 = vmax.xlane.f32.xlu0 %v2329
          %v2331 = vpop.xlane.xlu0 %2330
          %v2332 = vsel %vm2328, %v2110, -inf
          %2333 = vmax.xlane.f32.xlu0 %v2332
          %v2334 = vpop.xlane.xlu0 %2333
          %v2335 = vsel %vm2328, %v2115, -inf
          %2336 = vmax.xlane.f32.xlu0 %v2335
          %v2337 = vpop.xlane.xlu0 %2336
          %v2338 = vsel %vm2328, %v2120, -inf
          %2339 = vmax.xlane.f32.xlu0 %v2338
          %v2340 = vpop.xlane.xlu0 %2339
          %v2341 = vsel %vm2328, %v2125, -inf
          %2342 = vmax.xlane.f32.xlu0 %v2341
          %v2343 = vpop.xlane.xlu0 %2342
          %v2344 = vsel %vm2328, %v2130, -inf
          %2345 = vmax.xlane.f32.xlu0 %v2344
          %v2346 = vpop.xlane.xlu0 %2345
          %v2347 = vsel %vm2328, %v2135, -inf
          %2348 = vmax.xlane.f32.xlu0 %v2347
          %v2349 = vpop.xlane.xlu0 %2348
          %v2350 = vsel %vm2328, %v2140, -inf
          %2351 = vmax.xlane.f32.xlu0 %v2350
          %v2352 = vpop.xlane.xlu0 %2351
          %v2353 = vsel %vm2328, %v2145, -inf
          %2354 = vmax.xlane.f32.xlu0 %v2353
          %v2355 = vpop.xlane.xlu0 %2354
          %v2356 = vsel %vm2328, %v2150, -inf
          %2357 = vmax.xlane.f32.xlu0 %v2356
          %v2358 = vpop.xlane.xlu0 %2357
          %v2359 = vsel %vm2328, %v2280, -inf
          %2360 = vmax.xlane.f32.xlu0 %v2359
          %v2361 = vpop.xlane.xlu0 %2360
          %v2362 = vsel %vm2328, %v2285, -inf
          %2363 = vmax.xlane.f32.xlu0 %v2362
          %v2364 = vpop.xlane.xlu0 %2363
          %v2365 = vsel %vm2328, %v2290, -inf
          %2366 = vmax.xlane.f32.xlu0 %v2365
          %v2367 = vpop.xlane.xlu0 %2366
          %v2368 = vsel %vm2328, %v2295, -inf
          %2369 = vmax.xlane.f32.xlu0 %v2368
          %v2370 = vpop.xlane.xlu0 %2369
          %v2371 = vsel %vm2328, %v2300, -inf
          %2372 = vmax.xlane.f32.xlu0 %v2371
          %v2373 = vpop.xlane.xlu0 %2372
          %v2374 = vsel %vm2328, %v2305, -inf
          %2375 = vmax.xlane.f32.xlu0 %v2374
          %v2376 = vpop.xlane.xlu0 %2375
          %v2377 = vsel %vm2328, %v2310, -inf
          %2378 = vmax.xlane.f32.xlu0 %v2377
          %v2379 = vpop.xlane.xlu0 %2378
          %v2380 = vsel %vm2328, %v2315, -inf
          %2381 = vmax.xlane.f32.xlu0 %v2380
          %v2382 = vpop.xlane.xlu0 %2381
          %v2383 = vsel %vm2328, %v2320, -inf
          %2384 = vmax.xlane.f32.xlu0 %v2383
          %v2385 = vpop.xlane.xlu0 %2384
          %v2386 = vsel %vm2328, %v2325, -inf
          %2387 = vmax.xlane.f32.xlu0 %v2386
          %v2388 = vpop.xlane.xlu0 %2387
          %v2389 = vsub.f32 %v2105, %v2331
          %v2390 = vsub.f32 %v2110, %v2334
          %v2391 = vsub.f32 %v2115, %v2337
          %v2392 = vsub.f32 %v2120, %v2340
          %v2393 = vsub.f32 %v2125, %v2343
          %v2394 = vsub.f32 %v2130, %v2346
          %v2395 = vsub.f32 %v2135, %v2349
          %v2396 = vsub.f32 %v2140, %v2352
          %v2397 = vsub.f32 %v2145, %v2355
          %v2398 = vsub.f32 %v2150, %v2358
          %v2399 = vsub.f32 %v2280, %v2361
          %v2400 = vsub.f32 %v2285, %v2364
          %v2401 = vsub.f32 %v2290, %v2367
          %v2402 = vsub.f32 %v2295, %v2370
          %v2403 = vsub.f32 %v2300, %v2373
          %v2404 = vsub.f32 %v2305, %v2376
          %v2405 = vsub.f32 %v2310, %v2379
          %v2406 = vsub.f32 %v2315, %v2382
          %v2407 = vsub.f32 %v2320, %v2385
          %v2408 = vsub.f32 %v2325, %v2388
          %v2409 = vmul.f32 %v2389, 1.442695
          %v2410 = vpow.pop %v2409
          %v2411 = vmul.f32 %v2390, 1.442695
          %v2412 = vpow.pop %v2411
          %v2413 = vmul.f32 %v2391, 1.442695
          %v2414 = vpow.pop %v2413
          %v2415 = vmul.f32 %v2392, 1.442695
          %v2416 = vpow.pop %v2415
          %v2417 = vmul.f32 %v2393, 1.442695
          %v2418 = vpow.pop %v2417
          %v2419 = vmul.f32 %v2394, 1.442695
          %v2420 = vpow.pop %v2419
          %v2421 = vmul.f32 %v2395, 1.442695
          %v2422 = vpow.pop %v2421
          %v2423 = vmul.f32 %v2396, 1.442695
          %v2424 = vpow.pop %v2423
          %v2425 = vmul.f32 %v2397, 1.442695
          %v2426 = vpow.pop %v2425
          %v2427 = vmul.f32 %v2398, 1.442695
          %v2428 = vpow.pop %v2427
          %v2429 = vmul.f32 %v2399, 1.442695
          %v2430 = vpow.pop %v2429
          %v2431 = vmul.f32 %v2400, 1.442695
          %v2432 = vpow.pop %v2431
          %v2433 = vmul.f32 %v2401, 1.442695
          %v2434 = vpow.pop %v2433
          %v2435 = vmul.f32 %v2402, 1.442695
          %v2436 = vpow.pop %v2435
          %v2437 = vmul.f32 %v2403, 1.442695
          %v2438 = vpow.pop %v2437
          %v2439 = vmul.f32 %v2404, 1.442695
          %v2440 = vpow.pop %v2439
          %v2441 = vmul.f32 %v2405, 1.442695
          %v2442 = vpow.pop %v2441
          %v2443 = vmul.f32 %v2406, 1.442695
          %v2444 = vpow.pop %v2443
          %v2445 = vmul.f32 %v2407, 1.442695
          %v2446 = vpow.pop %v2445
          %v2447 = vmul.f32 %v2408, 1.442695
          %v2448 = vpow.pop %v2447
          %v2449 = vsel %vm2328, %v2410, 0.0
          %2450 = vadd.xlane.f32.xlu0 %v2449
          %v2451 = vpop.xlane.xlu0 %2450
          %v2452 = vsel %vm2328, %v2412, 0.0
          %2453 = vadd.xlane.f32.xlu0 %v2452
          %v2454 = vpop.xlane.xlu0 %2453
          %v2455 = vsel %vm2328, %v2414, 0.0
          %2456 = vadd.xlane.f32.xlu0 %v2455
          %v2457 = vpop.xlane.xlu0 %2456
          %v2458 = vsel %vm2328, %v2416, 0.0
          %2459 = vadd.xlane.f32.xlu0 %v2458
          %v2460 = vpop.xlane.xlu0 %2459
          %v2461 = vsel %vm2328, %v2418, 0.0
          %2462 = vadd.xlane.f32.xlu0 %v2461
          %v2463 = vpop.xlane.xlu0 %2462
          %v2464 = vsel %vm2328, %v2420, 0.0
          %2465 = vadd.xlane.f32.xlu0 %v2464
          %v2466 = vpop.xlane.xlu0 %2465
          %v2467 = vsel %vm2328, %v2422, 0.0
          %2468 = vadd.xlane.f32.xlu0 %v2467
          %v2469 = vpop.xlane.xlu0 %2468
          %v2470 = vsel %vm2328, %v2424, 0.0
          %2471 = vadd.xlane.f32.xlu0 %v2470
          %v2472 = vpop.xlane.xlu0 %2471
          %v2473 = vsel %vm2328, %v2426, 0.0
          %2474 = vadd.xlane.f32.xlu0 %v2473
          %v2475 = vpop.xlane.xlu0 %2474
          %v2476 = vsel %vm2328, %v2428, 0.0
          %2477 = vadd.xlane.f32.xlu0 %v2476
          %v2478 = vpop.xlane.xlu0 %2477
          %v2479 = vsel %vm2328, %v2430, 0.0
          %2480 = vadd.xlane.f32.xlu0 %v2479
          %v2481 = vpop.xlane.xlu0 %2480
          %v2482 = vsel %vm2328, %v2432, 0.0
          %2483 = vadd.xlane.f32.xlu0 %v2482
          %v2484 = vpop.xlane.xlu0 %2483
          %v2485 = vsel %vm2328, %v2434, 0.0
          %2486 = vadd.xlane.f32.xlu0 %v2485
          %v2487 = vpop.xlane.xlu0 %2486
          %v2488 = vsel %vm2328, %v2436, 0.0
          %2489 = vadd.xlane.f32.xlu0 %v2488
          %v2490 = vpop.xlane.xlu0 %2489
          %v2491 = vsel %vm2328, %v2438, 0.0
          %2492 = vadd.xlane.f32.xlu0 %v2491
          %v2493 = vpop.xlane.xlu0 %2492
          %v2494 = vsel %vm2328, %v2440, 0.0
          %2495 = vadd.xlane.f32.xlu0 %v2494
          %v2496 = vpop.xlane.xlu0 %2495
          %v2497 = vsel %vm2328, %v2442, 0.0
          %2498 = vadd.xlane.f32.xlu0 %v2497
          %v2499 = vpop.xlane.xlu0 %2498
          %v2500 = vsel %vm2328, %v2444, 0.0
          %2501 = vadd.xlane.f32.xlu0 %v2500
          %v2502 = vpop.xlane.xlu0 %2501
          %v2503 = vsel %vm2328, %v2446, 0.0
          %2504 = vadd.xlane.f32.xlu0 %v2503
          %v2505 = vpop.xlane.xlu0 %2504
          %v2506 = vsel %vm2328, %v2448, 0.0
          %2507 = vadd.xlane.f32.xlu0 %v2506
          %v2508 = vpop.xlane.xlu0 %2507
          %v2509 = vrcp.pop %v2451
          %v2510 = vrcp.pop %v2454
          %v2511 = vrcp.pop %v2457
          %v2512 = vrcp.pop %v2460
          %v2513 = vrcp.pop %v2463
          %v2514 = vrcp.pop %v2466
          %v2515 = vrcp.pop %v2469
          %v2516 = vrcp.pop %v2472
          %v2517 = vrcp.pop %v2475
          %v2518 = vrcp.pop %v2478
          %v2519 = vrcp.pop %v2481
          %v2520 = vrcp.pop %v2484
          %v2521 = vrcp.pop %v2487
          %v2522 = vrcp.pop %v2490
          %v2523 = vrcp.pop %v2493
          %v2524 = vrcp.pop %v2496
          %v2525 = vrcp.pop %v2499
          %v2526 = vrcp.pop %v2502
          %v2527 = vrcp.pop %v2505
          %v2528 = vrcp.pop %v2508
          %v2529 = vmul.f32 %v2410, %v2509
          %v2530 = vmul.f32 %v2412, %v2510
          %v2531 = vmul.f32 %v2414, %v2511
          %v2532 = vmul.f32 %v2416, %v2512
          %v2533 = vmul.f32 %v2418, %v2513
          %v2534 = vmul.f32 %v2420, %v2514
          %v2535 = vmul.f32 %v2422, %v2515
          %v2536 = vmul.f32 %v2424, %v2516
          %v2537 = vmul.f32 %v2426, %v2517
          %v2538 = vmul.f32 %v2428, %v2518
          %v2539 = vmul.f32 %v2430, %v2519
          %v2540 = vmul.f32 %v2432, %v2520
          %v2541 = vmul.f32 %v2434, %v2521
          %v2542 = vmul.f32 %v2436, %v2522
          %v2543 = vmul.f32 %v2438, %v2523
          %v2544 = vmul.f32 %v2440, %v2524
          %v2545 = vmul.f32 %v2442, %v2525
          %v2546 = vmul.f32 %v2444, %v2526
          %v2547 = vmul.f32 %v2446, %v2527
          %v2548 = vmul.f32 %v2448, %v2528
          %v2550 = vsel %vm2328, %v2529, 0
          %v2553 = vsel %vm2328, %v2530, 0
          %v2556 = vsel %vm2328, %v2531, 0
          %v2559 = vsel %vm2328, %v2532, 0
          %v2562 = vsel %vm2328, %v2533, 0
          %v2565 = vsel %vm2328, %v2534, 0
          %v2568 = vsel %vm2328, %v2535, 0
          %v2571 = vsel %vm2328, %v2536, 0
          %v2574 = vsel %vm2328, %v2537, 0
          %v2577 = vsel %vm2328, %v2538, 0
          %2579 = vmatprep.subr.mxu0 0.0
          %2580 = vmatpush1.msra.mxu0 %v1947
          %2581 = vmatprep.subr.mxu0 0.0
          %2582 = vmatpush1.msra.mxu0 %v1948
          %2583 = vmatprep.subr.mxu0 0.0
          %2584 = vmatpush1.msra.mxu0 %v1949
          %2585 = vmatprep.subr.mxu0 0.0
          %2586 = vmatpush1.msra.mxu0 %v1950
          %2587 = vmatprep.subr.mxu0 0.0
          %2588 = vmatpush1.msra.mxu0 %v1951
          %2589 = vmatprep.subr.mxu0 0.0
          %2590 = vmatpush1.msra.mxu0 %v1952
          %2591 = vmatprep.subr.mxu0 0.0
          %2592 = vmatpush1.msra.mxu0 %v1953
          %2593 = vmatprep.subr.mxu0 0.0
          %2594 = vmatpush1.msra.mxu0 %v1954
          %2595 = vmatprep.subr.mxu0 0.0
          %2596 = vmatpush1.msra.mxu0 %v1955
          %2597 = vmatprep.subr.mxu0 0.0
          %2598 = vmatpush1.msra.mxu0 %v1956
          %2599 = vmatprep.subr.mxu0 0.0
          %2600 = vmatpush1.msra.mxu0 0.0
          %2601 = vmatprep.subr.mxu0 0.0
          %2602 = vmatpush1.msra.mxu0 0.0
          %2603 = vmatprep.subr.mxu0 0.0
          %2604 = vmatpush1.msra.mxu0 0.0
          %2605 = vmatprep.subr.mxu0 0.0
          %2606 = vmatpush1.msra.mxu0 0.0
          %2607 = vmatprep.subr.mxu0 0.0
          %2608 = vmatpush1.msra.mxu0 0.0
          %2609 = vmatprep.subr.mxu0 0.0
          %2610 = vmatpush1.msra.mxu0 0.0
          %2611 = vmatprep.subr.mxu0 0.0
          %2612 = vmatpush1.msra.mxu0 0.0
          %2613 = vmatprep.subr.mxu0 0.0
          %2614 = vmatpush1.msra.mxu0 0.0
          %2615 = vmatprep.subr.mxu0 0.0
          %2616 = vmatpush1.msra.mxu0 0.0
          %2617 = vmatprep.subr.mxu0 0.0
          %2618 = vmatpush1.msra.mxu0 0.0
          %2619 = vmatprep.subr.mxu0 0.0
          %2620 = vmatpush1.msra.mxu0 0.0
          %2621 = vmatprep.subr.mxu0 0.0
          %2622 = vmatpush1.msra.mxu0 0.0
          %2623 = vmatprep.subr.mxu0 0.0
          %2624 = vmatpush1.msra.mxu0 0.0
          %2625 = vmatprep.subr.mxu0 0.0
          %2626 = vmatpush1.msra.mxu0 0.0
          %2627 = vmatprep.subr.mxu0 0.0
          %2628 = vmatpush1.msra.mxu0 0.0
          %2629 = vmatprep.subr.mxu0 0.0
          %2630 = vmatpush1.msra.mxu0 0.0
          %2631 = vmatprep.subr.mxu0 0.0
          %2632 = vmatpush1.msra.mxu0 0.0
          %2633 = vmatprep.subr.mxu0 0.0
          %2634 = vmatpush1.msra.mxu0 0.0
          %2635 = vmatprep.subr.mxu0 0.0
          %2636 = vmatpush1.msra.mxu0 0.0
          %2637 = vmatprep.subr.mxu0 0.0
          %2638 = vmatpush1.msra.mxu0 0.0
          %2639 = vmatprep.subr.mxu0 0.0
          %2640 = vmatpush1.msra.mxu0 0.0
          %2641 = vmatprep.subr.mxu0 0.0
          %2642 = vmatpush1.msra.mxu0 0.0
          %2643 = vmatprep.mubr.f32.mxu0 0.0
          %2644 = vmatmul.mubr.f32.gmra.mrb[0].mxu0 %v2550
          %v2645 = vpop.f32.mrb[0].mxu0
          %v2646 = vadd.f32 0.0, %v2645
          %v2647 = vpop.f32.mrb[0].mxu0
          %2648 = vmatprep.mubr.f32.mxu0 0.0
          %2649 = vmatmul.mubr.f32.gmra.mrb[0].mxu0 %v2553
          %v2650 = vpop.f32.mrb[0].mxu0
          %v2651 = vadd.f32 0.0, %v2650
          %v2652 = vpop.f32.mrb[0].mxu0
          %2653 = vmatprep.mubr.f32.mxu0 0.0
          %2654 = vmatmul.mubr.f32.gmra.mrb[0].mxu0 %v2556
          %v2655 = vpop.f32.mrb[0].mxu0
          %v2656 = vadd.f32 0.0, %v2655
          %v2657 = vpop.f32.mrb[0].mxu0
          %2658 = vmatprep.mubr.f32.mxu0 0.0
          %2659 = vmatmul.mubr.f32.gmra.mrb[0].mxu0 %v2559
          %v2660 = vpop.f32.mrb[0].mxu0
          %v2661 = vadd.f32 0.0, %v2660
          %v2662 = vpop.f32.mrb[0].mxu0
          %2663 = vmatprep.mubr.f32.mxu0 0.0
          %2664 = vmatmul.mubr.f32.gmra.mrb[0].mxu0 %v2562
          %v2665 = vpop.f32.mrb[0].mxu0
          %v2666 = vadd.f32 0.0, %v2665
          %v2667 = vpop.f32.mrb[0].mxu0
          %2668 = vmatprep.mubr.f32.mxu0 0.0
          %2669 = vmatmul.mubr.f32.gmra.mrb[0].mxu0 %v2565
          %v2670 = vpop.f32.mrb[0].mxu0
          %v2671 = vadd.f32 0.0, %v2670
          %v2672 = vpop.f32.mrb[0].mxu0
          %2673 = vmatprep.mubr.f32.mxu0 0.0
          %2674 = vmatmul.mubr.f32.gmra.mrb[0].mxu0 %v2568
          %v2675 = vpop.f32.mrb[0].mxu0
          %v2676 = vadd.f32 0.0, %v2675
          %v2677 = vpop.f32.mrb[0].mxu0
          %2678 = vmatprep.mubr.f32.mxu0 0.0
          %2679 = vmatmul.mubr.f32.gmra.mrb[0].mxu0 %v2571
          %v2680 = vpop.f32.mrb[0].mxu0
          %v2681 = vadd.f32 0.0, %v2680
          %v2682 = vpop.f32.mrb[0].mxu0
          %2683 = vmatprep.mubr.f32.mxu0 0.0
          %2684 = vmatmul.mubr.f32.gmra.mrb[0].mxu0 %v2574
          %v2685 = vpop.f32.mrb[0].mxu0
          %v2686 = vadd.f32 0.0, %v2685
          %v2687 = vpop.f32.mrb[0].mxu0
          %2688 = vmatprep.mubr.f32.mxu0 0.0
          %2689 = vmatmul.mubr.f32.gmra.mrb[0].mxu0 %v2577
          %v2690 = vpop.f32.mrb[0].mxu0
          %v2691 = vadd.f32 0.0, %v2690
          %v2692 = vpop.f32.mrb[0].mxu0
          %2693 = vdwg.mxu0
          %v2695 = vsel %vm2328, %v2539, 0
          %v2698 = vsel %vm2328, %v2540, 0
          %v2701 = vsel %vm2328, %v2541, 0
          %v2704 = vsel %vm2328, %v2542, 0
          %v2707 = vsel %vm2328, %v2543, 0
          %v2710 = vsel %vm2328, %v2544, 0
          %v2713 = vsel %vm2328, %v2545, 0
          %v2716 = vsel %vm2328, %v2546, 0
          %v2719 = vsel %vm2328, %v2547, 0
          %v2722 = vsel %vm2328, %v2548, 0
          %2724 = vmatprep.subr.mxu0 0.0
          %2725 = vmatpush1.msra.mxu0 %v1957
          %2726 = vmatprep.subr.mxu0 0.0
          %2727 = vmatpush1.msra.mxu0 %v1958
          %2728 = vmatprep.subr.mxu0 0.0
          %2729 = vmatpush1.msra.mxu0 %v1959
          %2730 = vmatprep.subr.mxu0 0.0
          %2731 = vmatpush1.msra.mxu0 %v1960
          %2732 = vmatprep.subr.mxu0 0.0
          %2733 = vmatpush1.msra.mxu0 %v1961
          %2734 = vmatprep.subr.mxu0 0.0
          %2735 = vmatpush1.msra.mxu0 %v1962
          %2736 = vmatprep.subr.mxu0 0.0
          %2737 = vmatpush1.msra.mxu0 %v1963
          %2738 = vmatprep.subr.mxu0 0.0
          %2739 = vmatpush1.msra.mxu0 %v1964
          %2740 = vmatprep.subr.mxu0 0.0
          %2741 = vmatpush1.msra.mxu0 %v1965
          %2742 = vmatprep.subr.mxu0 0.0
          %2743 = vmatpush1.msra.mxu0 %v1966
          %2744 = vmatprep.subr.mxu0 0.0
          %2745 = vmatpush1.msra.mxu0 0.0
          %2746 = vmatprep.subr.mxu0 0.0
          %2747 = vmatpush1.msra.mxu0 0.0
          %2748 = vmatprep.subr.mxu0 0.0
          %2749 = vmatpush1.msra.mxu0 0.0
          %2750 = vmatprep.subr.mxu0 0.0
          %2751 = vmatpush1.msra.mxu0 0.0
          %2752 = vmatprep.subr.mxu0 0.0
          %2753 = vmatpush1.msra.mxu0 0.0
          %2754 = vmatprep.subr.mxu0 0.0
          %2755 = vmatpush1.msra.mxu0 0.0
          %2756 = vmatprep.subr.mxu0 0.0
          %2757 = vmatpush1.msra.mxu0 0.0
          %2758 = vmatprep.subr.mxu0 0.0
          %2759 = vmatpush1.msra.mxu0 0.0
          %2760 = vmatprep.subr.mxu0 0.0
          %2761 = vmatpush1.msra.mxu0 0.0
          %2762 = vmatprep.subr.mxu0 0.0
          %2763 = vmatpush1.msra.mxu0 0.0
          %2764 = vmatprep.subr.mxu0 0.0
          %2765 = vmatpush1.msra.mxu0 0.0
          %2766 = vmatprep.subr.mxu0 0.0
          %2767 = vmatpush1.msra.mxu0 0.0
          %2768 = vmatprep.subr.mxu0 0.0
          %2769 = vmatpush1.msra.mxu0 0.0
          %2770 = vmatprep.subr.mxu0 0.0
          %2771 = vmatpush1.msra.mxu0 0.0
          %2772 = vmatprep.subr.mxu0 0.0
          %2773 = vmatpush1.msra.mxu0 0.0
          %2774 = vmatprep.subr.mxu0 0.0
          %2775 = vmatpush1.msra.mxu0 0.0
          %2776 = vmatprep.subr.mxu0 0.0
          %2777 = vmatpush1.msra.mxu0 0.0
          %2778 = vmatprep.subr.mxu0 0.0
          %2779 = vmatpush1.msra.mxu0 0.0
          %2780 = vmatprep.subr.mxu0 0.0
          %2781 = vmatpush1.msra.mxu0 0.0
          %2782 = vmatprep.subr.mxu0 0.0
          %2783 = vmatpush1.msra.mxu0 0.0
          %2784 = vmatprep.subr.mxu0 0.0
          %2785 = vmatpush1.msra.mxu0 0.0
          %2786 = vmatprep.subr.mxu0 0.0
          %2787 = vmatpush1.msra.mxu0 0.0
          %2788 = vmatprep.mubr.f32.mxu0 0.0
          %2789 = vmatmul.mubr.f32.gmra.mrb[0].mxu0 %v2695
          %v2790 = vpop.f32.mrb[0].mxu0
          %v2791 = vadd.f32 0.0, %v2790
          %v2792 = vpop.f32.mrb[0].mxu0
          %2793 = vmatprep.mubr.f32.mxu0 0.0
          %2794 = vmatmul.mubr.f32.gmra.mrb[0].mxu0 %v2698
          %v2795 = vpop.f32.mrb[0].mxu0
          %v2796 = vadd.f32 0.0, %v2795
          %v2797 = vpop.f32.mrb[0].mxu0
          %2798 = vmatprep.mubr.f32.mxu0 0.0
          %2799 = vmatmul.mubr.f32.gmra.mrb[0].mxu0 %v2701
          %v2800 = vpop.f32.mrb[0].mxu0
          %v2801 = vadd.f32 0.0, %v2800
          %v2802 = vpop.f32.mrb[0].mxu0
          %2803 = vmatprep.mubr.f32.mxu0 0.0
          %2804 = vmatmul.mubr.f32.gmra.mrb[0].mxu0 %v2704
          %v2805 = vpop.f32.mrb[0].mxu0
          %v2806 = vadd.f32 0.0, %v2805
          %v2807 = vpop.f32.mrb[0].mxu0
          %2808 = vmatprep.mubr.f32.mxu0 0.0
          %2809 = vmatmul.mubr.f32.gmra.mrb[0].mxu0 %v2707
          %v2810 = vpop.f32.mrb[0].mxu0
          %v2811 = vadd.f32 0.0, %v2810
          %v2812 = vpop.f32.mrb[0].mxu0
          %2813 = vmatprep.mubr.f32.mxu0 0.0
          %2814 = vmatmul.mubr.f32.gmra.mrb[0].mxu0 %v2710
          %v2815 = vpop.f32.mrb[0].mxu0
          %v2816 = vadd.f32 0.0, %v2815
          %v2817 = vpop.f32.mrb[0].mxu0
          %2818 = vmatprep.mubr.f32.mxu0 0.0
          %2819 = vmatmul.mubr.f32.gmra.mrb[0].mxu0 %v2713
          %v2820 = vpop.f32.mrb[0].mxu0
          %v2821 = vadd.f32 0.0, %v2820
          %v2822 = vpop.f32.mrb[0].mxu0
          %2823 = vmatprep.mubr.f32.mxu0 0.0
          %2824 = vmatmul.mubr.f32.gmra.mrb[0].mxu0 %v2716
          %v2825 = vpop.f32.mrb[0].mxu0
          %v2826 = vadd.f32 0.0, %v2825
          %v2827 = vpop.f32.mrb[0].mxu0
          %2828 = vmatprep.mubr.f32.mxu0 0.0
          %2829 = vmatmul.mubr.f32.gmra.mrb[0].mxu0 %v2719
          %v2830 = vpop.f32.mrb[0].mxu0
          %v2831 = vadd.f32 0.0, %v2830
          %v2832 = vpop.f32.mrb[0].mxu0
          %2833 = vmatprep.mubr.f32.mxu0 0.0
          %2834 = vmatmul.mubr.f32.gmra.mrb[0].mxu0 %v2722
          %v2835 = vpop.f32.mrb[0].mxu0
          %v2836 = vadd.f32 0.0, %v2835
          %v2837 = vpop.f32.mrb[0].mxu0
          %2838 = vdwg.mxu0
          %v2839 = vpack.c.bf16 %v2651, %v2646
          %v2840 = vpack.c.bf16 %v2661, %v2656
          %v2841 = vpack.c.bf16 %v2671, %v2666
          %v2842 = vpack.c.bf16 %v2681, %v2676
          %v2843 = vpack.c.bf16 %v2691, %v2686
          %v2844 = vpack.c.bf16 %v2796, %v2791
          %v2845 = vpack.c.bf16 %v2806, %v2801
          %v2846 = vpack.c.bf16 %v2816, %v2811
          %v2847 = vpack.c.bf16 %v2826, %v2821
          %v2848 = vpack.c.bf16 %v2836, %v2831
          %2849 = vst.msk [vmem:[#allocation4] sm:$0xff] %vm1977, %v2839
          %2850 = vst.msk [vmem:[#allocation4 + $0x8] sm:$0xff] %vm1977, %v2840
          %2851 = vst.msk [vmem:[#allocation4 + $0x10] sm:$0xff] %vm1977, %v2841
          %2852 = vst.msk [vmem:[#allocation4 + $0x18] sm:$0xff] %vm1977, %v2842
          %2853 = vst.msk [vmem:[#allocation4 + $0x20] sm:$0xff] %vm1977, %v2843
          %2854 = vst.msk [vmem:[#allocation4 + $0x28] sm:$0xff] %vm1977, %v2844
          %2855 = vst.msk [vmem:[#allocation4 + $0x30] sm:$0xff] %vm1977, %v2845
          %2856 = vst.msk [vmem:[#allocation4 + $0x38] sm:$0xff] %vm1977, %v2846
          %2857 = vst.msk [vmem:[#allocation4 + $0x40] sm:$0xff] %vm1977, %v2847
          %2858 = vst.msk [vmem:[#allocation4 + $0x48] sm:$0xff] %vm1977, %v2848
          %2859 = vrot.lane.b32.xlu0 %v1589, 96
          %v2860 = vpop.permute.xlu0 %2859
          %2861 = vrot.lane.b32.xlu0 %v1590, 96
          %v2862 = vpop.permute.xlu0 %2861
          %2863 = vrot.lane.b32.xlu0 %v1591, 96
          %v2864 = vpop.permute.xlu0 %2863
          %2865 = vrot.lane.b32.xlu0 %v1592, 96
          %v2866 = vpop.permute.xlu0 %2865
          %2867 = vrot.lane.b32.xlu0 %v1593, 96
          %v2868 = vpop.permute.xlu0 %2867
          %2869 = vrot.lane.b32.xlu0 %v1594, 96
          %v2870 = vpop.permute.xlu0 %2869
          %2871 = vrot.lane.b32.xlu0 %v1595, 96
          %v2872 = vpop.permute.xlu0 %2871
          %2873 = vrot.lane.b32.xlu0 %v1596, 96
          %v2874 = vpop.permute.xlu0 %2873
          %2875 = vrot.lane.b32.xlu0 %v1597, 96
          %v2876 = vpop.permute.xlu0 %2875
          %2877 = vrot.lane.b32.xlu0 %v1598, 96
          %v2878 = vpop.permute.xlu0 %2877
          %2879 = vrot.lane.b32.xlu0 %v1768, 96
          %v2880 = vpop.permute.xlu0 %2879
          %2881 = vrot.lane.b32.xlu0 %v1769, 96
          %v2882 = vpop.permute.xlu0 %2881
          %2883 = vrot.lane.b32.xlu0 %v1770, 96
          %v2884 = vpop.permute.xlu0 %2883
          %2885 = vrot.lane.b32.xlu0 %v1771, 96
          %v2886 = vpop.permute.xlu0 %2885
          %2887 = vrot.lane.b32.xlu0 %v1772, 96
          %v2888 = vpop.permute.xlu0 %2887
          %2889 = vrot.lane.b32.xlu0 %v1773, 96
          %v2890 = vpop.permute.xlu0 %2889
          %2891 = vrot.lane.b32.xlu0 %v1774, 96
          %v2892 = vpop.permute.xlu0 %2891
          %2893 = vrot.lane.b32.xlu0 %v1775, 96
          %v2894 = vpop.permute.xlu0 %2893
          %2895 = vrot.lane.b32.xlu0 %v1776, 96
          %v2896 = vpop.permute.xlu0 %2895
          %2897 = vrot.lane.b32.xlu0 %v1777, 96
          %v2898 = vpop.permute.xlu0 %2897
          %v2899 = vsel %vm1977, %v2860, 0
          %v2901 = vsel %vm1977, %v2862, 0
          %v2903 = vsel %vm1977, %v2864, 0
          %v2905 = vsel %vm1977, %v2866, 0
          %v2907 = vsel %vm1977, %v2868, 0
          %v2909 = vsel %vm1977, %v2870, 0
          %v2911 = vsel %vm1977, %v2872, 0
          %v2913 = vsel %vm1977, %v2874, 0
          %v2915 = vsel %vm1977, %v2876, 0
          %v2917 = vsel %vm1977, %v2878, 0
          %v2919 = vsel %vm1977, %v2880, 0
          %v2921 = vsel %vm1977, %v2882, 0
          %v2923 = vsel %vm1977, %v2884, 0
          %v2925 = vsel %vm1977, %v2886, 0
          %v2927 = vsel %vm1977, %v2888, 0
          %v2929 = vsel %vm1977, %v2890, 0
          %v2931 = vsel %vm1977, %v2892, 0
          %v2933 = vsel %vm1977, %v2894, 0
          %v2935 = vsel %vm1977, %v2896, 0
          %v2937 = vsel %vm1977, %v2898, 0
          %2939 = vmatprep.subr.mxu0 0.0
          %2940 = vmatpush1.xpose.msra.mxu0 %v2919
          %2941 = vmatprep.subr.mxu0 0.0
          %2942 = vmatpush1.xpose.msra.mxu0 %v2921
          %2943 = vmatprep.subr.mxu0 0.0
          %2944 = vmatpush1.xpose.msra.mxu0 %v2923
          %2945 = vmatprep.subr.mxu0 0.0
          %2946 = vmatpush1.xpose.msra.mxu0 %v2925
          %2947 = vmatprep.subr.mxu0 0.0
          %2948 = vmatpush1.xpose.msra.mxu0 %v2927
          %2949 = vmatprep.subr.mxu0 0.0
          %2950 = vmatpush1.xpose.msra.mxu0 %v2929
          %2951 = vmatprep.subr.mxu0 0.0
          %2952 = vmatpush1.xpose.msra.mxu0 %v2931
          %2953 = vmatprep.subr.mxu0 0.0
          %2954 = vmatpush1.xpose.msra.mxu0 %v2933
          %2955 = vmatprep.subr.mxu0 0.0
          %2956 = vmatpush1.xpose.msra.mxu0 %v2935
          %2957 = vmatprep.subr.mxu0 0.0
          %2958 = vmatpush1.xpose.msra.mxu0 %v2937
          %2959 = vmatprep.subr.mxu0 0.0
          %2960 = vmatpush1.xpose.msra.mxu0 0.0
          %2961 = vmatprep.subr.mxu0 0.0
          %2962 = vmatpush1.xpose.msra.mxu0 0.0
          %2963 = vmatprep.subr.mxu0 0.0
          %2964 = vmatpush1.xpose.msra.mxu0 0.0
          %2965 = vmatprep.subr.mxu0 0.0
          %2966 = vmatpush1.xpose.msra.mxu0 0.0
          %2967 = vmatprep.subr.mxu0 0.0
          %2968 = vmatpush1.xpose.msra.mxu0 0.0
          %2969 = vmatprep.subr.mxu0 0.0
          %2970 = vmatpush1.xpose.msra.mxu0 0.0
          %2971 = vmatprep.subr.mxu0 0.0
          %2972 = vmatpush1.xpose.msra.mxu0 0.0
          %2973 = vmatprep.subr.mxu0 0.0
          %2974 = vmatpush1.xpose.msra.mxu0 0.0
          %2975 = vmatprep.subr.mxu0 0.0
          %2976 = vmatpush1.xpose.msra.mxu0 0.0
          %2977 = vmatprep.subr.mxu0 0.0
          %2978 = vmatpush1.xpose.msra.mxu0 0.0
          %2979 = vmatprep.subr.mxu0 0.0
          %2980 = vmatpush1.xpose.msra.mxu0 0.0
          %2981 = vmatprep.subr.mxu0 0.0
          %2982 = vmatpush1.xpose.msra.mxu0 0.0
          %2983 = vmatprep.subr.mxu0 0.0
          %2984 = vmatpush1.xpose.msra.mxu0 0.0
          %2985 = vmatprep.subr.mxu0 0.0
          %2986 = vmatpush1.xpose.msra.mxu0 0.0
          %2987 = vmatprep.subr.mxu0 0.0
          %2988 = vmatpush1.xpose.msra.mxu0 0.0
          %2989 = vmatprep.subr.mxu0 0.0
          %2990 = vmatpush1.xpose.msra.mxu0 0.0
          %2991 = vmatprep.subr.mxu0 0.0
          %2992 = vmatpush1.xpose.msra.mxu0 0.0
          %2993 = vmatprep.subr.mxu0 0.0
          %2994 = vmatpush1.xpose.msra.mxu0 0.0
          %2995 = vmatprep.subr.mxu0 0.0
          %2996 = vmatpush1.xpose.msra.mxu0 0.0
          %2997 = vmatprep.subr.mxu0 0.0
          %2998 = vmatpush1.xpose.msra.mxu0 0.0
          %2999 = vmatprep.subr.mxu0 0.0
          %3000 = vmatpush1.xpose.msra.mxu0 0.0
          %3001 = vmatprep.subr.mxu0 0.0
          %3002 = vmatpush1.xpose.msra.mxu0 0.0
          %3003 = vmatprep.mubr.f32.mxu0 0.0
          %3004 = vmatmul.mubr.f32.gmra.mrb[0].mxu0 %v2899
          %v3005 = vpop.f32.mrb[0].mxu0
          %v3006 = vadd.f32 %v1967, %v3005
          %v3007 = vpop.f32.mrb[0].mxu0
          %3008 = vmatprep.mubr.f32.mxu0 0.0
          %3009 = vmatmul.mubr.f32.gmra.mrb[0].mxu0 %v2901
          %v3010 = vpop.f32.mrb[0].mxu0
          %v3011 = vadd.f32 %v1968, %v3010
          %v3012 = vpop.f32.mrb[0].mxu0
          %3013 = vmatprep.mubr.f32.mxu0 0.0
          %3014 = vmatmul.mubr.f32.gmra.mrb[0].mxu0 %v2903
          %v3015 = vpop.f32.mrb[0].mxu0
          %v3016 = vadd.f32 %v1969, %v3015
          %v3017 = vpop.f32.mrb[0].mxu0
          %3018 = vmatprep.mubr.f32.mxu0 0.0
          %3019 = vmatmul.mubr.f32.gmra.mrb[0].mxu0 %v2905
          %v3020 = vpop.f32.mrb[0].mxu0
          %v3021 = vadd.f32 %v1970, %v3020
          %v3022 = vpop.f32.mrb[0].mxu0
          %3023 = vmatprep.mubr.f32.mxu0 0.0
          %3024 = vmatmul.mubr.f32.gmra.mrb[0].mxu0 %v2907
          %v3025 = vpop.f32.mrb[0].mxu0
          %v3026 = vadd.f32 %v1971, %v3025
          %v3027 = vpop.f32.mrb[0].mxu0
          %3028 = vmatprep.mubr.f32.mxu0 0.0
          %3029 = vmatmul.mubr.f32.gmra.mrb[0].mxu0 %v2909
          %v3030 = vpop.f32.mrb[0].mxu0
          %v3031 = vadd.f32 %v1972, %v3030
          %v3032 = vpop.f32.mrb[0].mxu0
          %3033 = vmatprep.mubr.f32.mxu0 0.0
          %3034 = vmatmul.mubr.f32.gmra.mrb[0].mxu0 %v2911
          %v3035 = vpop.f32.mrb[0].mxu0
          %v3036 = vadd.f32 %v1973, %v3035
          %v3037 = vpop.f32.mrb[0].mxu0
          %3038 = vmatprep.mubr.f32.mxu0 0.0
          %3039 = vmatmul.mubr.f32.gmra.mrb[0].mxu0 %v2913
          %v3040 = vpop.f32.mrb[0].mxu0
          %v3041 = vadd.f32 %v1974, %v3040
          %v3042 = vpop.f32.mrb[0].mxu0
          %3043 = vmatprep.mubr.f32.mxu0 0.0
          %3044 = vmatmul.mubr.f32.gmra.mrb[0].mxu0 %v2915
          %v3045 = vpop.f32.mrb[0].mxu0
          %v3046 = vadd.f32 %v1975, %v3045
          %v3047 = vpop.f32.mrb[0].mxu0
          %3048 = vmatprep.mubr.f32.mxu0 0.0
          %3049 = vmatmul.mubr.f32.gmra.mrb[0].mxu0 %v2917
          %v3050 = vpop.f32.mrb[0].mxu0
          %v3051 = vadd.f32 %v1976, %v3050
          %v3052 = vpop.f32.mrb[0].mxu0
          %3053 = vdwg.mxu0
          %3054 = vrot.lane.b32.xlu0 %v1599, 96
          %v3055 = vpop.permute.xlu0 %3054
          %3056 = vrot.lane.b32.xlu0 %v1600, 96
          %v3057 = vpop.permute.xlu0 %3056
          %3058 = vrot.lane.b32.xlu0 %v1601, 96
          %v3059 = vpop.permute.xlu0 %3058
          %3060 = vrot.lane.b32.xlu0 %v1602, 96
          %v3061 = vpop.permute.xlu0 %3060
          %3062 = vrot.lane.b32.xlu0 %v1603, 96
          %v3063 = vpop.permute.xlu0 %3062
          %3064 = vrot.lane.b32.xlu0 %v1604, 96
          %v3065 = vpop.permute.xlu0 %3064
          %3066 = vrot.lane.b32.xlu0 %v1605, 96
          %v3067 = vpop.permute.xlu0 %3066
          %3068 = vrot.lane.b32.xlu0 %v1606, 96
          %v3069 = vpop.permute.xlu0 %3068
          %3070 = vrot.lane.b32.xlu0 %v1607, 96
          %v3071 = vpop.permute.xlu0 %3070
          %3072 = vrot.lane.b32.xlu0 %v1608, 96
          %v3073 = vpop.permute.xlu0 %3072
          %3074 = vrot.lane.b32.xlu0 %v1778, 96
          %v3075 = vpop.permute.xlu0 %3074
          %3076 = vrot.lane.b32.xlu0 %v1779, 96
          %v3077 = vpop.permute.xlu0 %3076
          %3078 = vrot.lane.b32.xlu0 %v1780, 96
          %v3079 = vpop.permute.xlu0 %3078
          %3080 = vrot.lane.b32.xlu0 %v1781, 96
          %v3081 = vpop.permute.xlu0 %3080
          %3082 = vrot.lane.b32.xlu0 %v1782, 96
          %v3083 = vpop.permute.xlu0 %3082
          %3084 = vrot.lane.b32.xlu0 %v1783, 96
          %v3085 = vpop.permute.xlu0 %3084
          %3086 = vrot.lane.b32.xlu0 %v1784, 96
          %v3087 = vpop.permute.xlu0 %3086
          %3088 = vrot.lane.b32.xlu0 %v1785, 96
          %v3089 = vpop.permute.xlu0 %3088
          %3090 = vrot.lane.b32.xlu0 %v1786, 96
          %v3091 = vpop.permute.xlu0 %3090
          %3092 = vrot.lane.b32.xlu0 %v1787, 96
          %v3093 = vpop.permute.xlu0 %3092
          %v3094 = vsel %vm1977, %v3055, 0
          %v3096 = vsel %vm1977, %v3057, 0
          %v3098 = vsel %vm1977, %v3059, 0
          %v3100 = vsel %vm1977, %v3061, 0
          %v3102 = vsel %vm1977, %v3063, 0
          %v3104 = vsel %vm1977, %v3065, 0
          %v3106 = vsel %vm1977, %v3067, 0
          %v3108 = vsel %vm1977, %v3069, 0
          %v3110 = vsel %vm1977, %v3071, 0
          %v3112 = vsel %vm1977, %v3073, 0
          %v3114 = vsel %vm1977, %v3075, 0
          %v3116 = vsel %vm1977, %v3077, 0
          %v3118 = vsel %vm1977, %v3079, 0
          %v3120 = vsel %vm1977, %v3081, 0
          %v3122 = vsel %vm1977, %v3083, 0
          %v3124 = vsel %vm1977, %v3085, 0
          %v3126 = vsel %vm1977, %v3087, 0
          %v3128 = vsel %vm1977, %v3089, 0
          %v3130 = vsel %vm1977, %v3091, 0
          %v3132 = vsel %vm1977, %v3093, 0
          %3134 = vmatprep.subr.mxu0 0.0
          %3135 = vmatpush1.xpose.msra.mxu0 %v3114
          %3136 = vmatprep.subr.mxu0 0.0
          %3137 = vmatpush1.xpose.msra.mxu0 %v3116
          %3138 = vmatprep.subr.mxu0 0.0
          %3139 = vmatpush1.xpose.msra.mxu0 %v3118
          %3140 = vmatprep.subr.mxu0 0.0
          %3141 = vmatpush1.xpose.msra.mxu0 %v3120
          %3142 = vmatprep.subr.mxu0 0.0
          %3143 = vmatpush1.xpose.msra.mxu0 %v3122
          %3144 = vmatprep.subr.mxu0 0.0
          %3145 = vmatpush1.xpose.msra.mxu0 %v3124
          %3146 = vmatprep.subr.mxu0 0.0
          %3147 = vmatpush1.xpose.msra.mxu0 %v3126
          %3148 = vmatprep.subr.mxu0 0.0
          %3149 = vmatpush1.xpose.msra.mxu0 %v3128
          %3150 = vmatprep.subr.mxu0 0.0
          %3151 = vmatpush1.xpose.msra.mxu0 %v3130
          %3152 = vmatprep.subr.mxu0 0.0
          %3153 = vmatpush1.xpose.msra.mxu0 %v3132
          %3154 = vmatprep.subr.mxu0 0.0
          %3155 = vmatpush1.xpose.msra.mxu0 0.0
          %3156 = vmatprep.subr.mxu0 0.0
          %3157 = vmatpush1.xpose.msra.mxu0 0.0
          %3158 = vmatprep.subr.mxu0 0.0
          %3159 = vmatpush1.xpose.msra.mxu0 0.0
          %3160 = vmatprep.subr.mxu0 0.0
          %3161 = vmatpush1.xpose.msra.mxu0 0.0
          %3162 = vmatprep.subr.mxu0 0.0
          %3163 = vmatpush1.xpose.msra.mxu0 0.0
          %3164 = vmatprep.subr.mxu0 0.0
          %3165 = vmatpush1.xpose.msra.mxu0 0.0
          %3166 = vmatprep.subr.mxu0 0.0
          %3167 = vmatpush1.xpose.msra.mxu0 0.0
          %3168 = vmatprep.subr.mxu0 0.0
          %3169 = vmatpush1.xpose.msra.mxu0 0.0
          %3170 = vmatprep.subr.mxu0 0.0
          %3171 = vmatpush1.xpose.msra.mxu0 0.0
          %3172 = vmatprep.subr.mxu0 0.0
          %3173 = vmatpush1.xpose.msra.mxu0 0.0
          %3174 = vmatprep.subr.mxu0 0.0
          %3175 = vmatpush1.xpose.msra.mxu0 0.0
          %3176 = vmatprep.subr.mxu0 0.0
          %3177 = vmatpush1.xpose.msra.mxu0 0.0
          %3178 = vmatprep.subr.mxu0 0.0
          %3179 = vmatpush1.xpose.msra.mxu0 0.0
          %3180 = vmatprep.subr.mxu0 0.0
          %3181 = vmatpush1.xpose.msra.mxu0 0.0
          %3182 = vmatprep.subr.mxu0 0.0
          %3183 = vmatpush1.xpose.msra.mxu0 0.0
          %3184 = vmatprep.subr.mxu0 0.0
          %3185 = vmatpush1.xpose.msra.mxu0 0.0
          %3186 = vmatprep.subr.mxu0 0.0
          %3187 = vmatpush1.xpose.msra.mxu0 0.0
          %3188 = vmatprep.subr.mxu0 0.0
          %3189 = vmatpush1.xpose.msra.mxu0 0.0
          %3190 = vmatprep.subr.mxu0 0.0
          %3191 = vmatpush1.xpose.msra.mxu0 0.0
          %3192 = vmatprep.subr.mxu0 0.0
          %3193 = vmatpush1.xpose.msra.mxu0 0.0
          %3194 = vmatprep.subr.mxu0 0.0
          %3195 = vmatpush1.xpose.msra.mxu0 0.0
          %3196 = vmatprep.subr.mxu0 0.0
          %3197 = vmatpush1.xpose.msra.mxu0 0.0
          %3198 = vmatprep.mubr.f32.mxu0 0.0
          %3199 = vmatmul.mubr.f32.gmra.mrb[0].mxu0 %v3094
          %v3200 = vpop.f32.mrb[0].mxu0
          %v3201 = vadd.f32 %v1967, %v3200
          %v3202 = vpop.f32.mrb[0].mxu0
          %3203 = vmatprep.mubr.f32.mxu0 0.0
          %3204 = vmatmul.mubr.f32.gmra.mrb[0].mxu0 %v3096
          %v3205 = vpop.f32.mrb[0].mxu0
          %v3206 = vadd.f32 %v1968, %v3205
          %v3207 = vpop.f32.mrb[0].mxu0
          %3208 = vmatprep.mubr.f32.mxu0 0.0
          %3209 = vmatmul.mubr.f32.gmra.mrb[0].mxu0 %v3098
          %v3210 = vpop.f32.mrb[0].mxu0
          %v3211 = vadd.f32 %v1969, %v3210
          %v3212 = vpop.f32.mrb[0].mxu0
          %3213 = vmatprep.mubr.f32.mxu0 0.0
          %3214 = vmatmul.mubr.f32.gmra.mrb[0].mxu0 %v3100
          %v3215 = vpop.f32.mrb[0].mxu0
          %v3216 = vadd.f32 %v1970, %v3215
          %v3217 = vpop.f32.mrb[0].mxu0
          %3218 = vmatprep.mubr.f32.mxu0 0.0
          %3219 = vmatmul.mubr.f32.gmra.mrb[0].mxu0 %v3102
          %v3220 = vpop.f32.mrb[0].mxu0
          %v3221 = vadd.f32 %v1971, %v3220
          %v3222 = vpop.f32.mrb[0].mxu0
          %3223 = vmatprep.mubr.f32.mxu0 0.0
          %3224 = vmatmul.mubr.f32.gmra.mrb[0].mxu0 %v3104
          %v3225 = vpop.f32.mrb[0].mxu0
          %v3226 = vadd.f32 %v1972, %v3225
          %v3227 = vpop.f32.mrb[0].mxu0
          %3228 = vmatprep.mubr.f32.mxu0 0.0
          %3229 = vmatmul.mubr.f32.gmra.mrb[0].mxu0 %v3106
          %v3230 = vpop.f32.mrb[0].mxu0
          %v3231 = vadd.f32 %v1973, %v3230
          %v3232 = vpop.f32.mrb[0].mxu0
          %3233 = vmatprep.mubr.f32.mxu0 0.0
          %3234 = vmatmul.mubr.f32.gmra.mrb[0].mxu0 %v3108
          %v3235 = vpop.f32.mrb[0].mxu0
          %v3236 = vadd.f32 %v1974, %v3235
          %v3237 = vpop.f32.mrb[0].mxu0
          %3238 = vmatprep.mubr.f32.mxu0 0.0
          %3239 = vmatmul.mubr.f32.gmra.mrb[0].mxu0 %v3110
          %v3240 = vpop.f32.mrb[0].mxu0
          %v3241 = vadd.f32 %v1975, %v3240
          %v3242 = vpop.f32.mrb[0].mxu0
          %3243 = vmatprep.mubr.f32.mxu0 0.0
          %3244 = vmatmul.mubr.f32.gmra.mrb[0].mxu0 %v3112
          %v3245 = vpop.f32.mrb[0].mxu0
          %v3246 = vadd.f32 %v1976, %v3245
          %v3247 = vpop.f32.mrb[0].mxu0
          %3248 = vdwg.mxu0
          %v3249 = vsel %vm2328, %v3006, -inf
          %3250 = vmax.xlane.f32.xlu0 %v3249
          %v3251 = vpop.xlane.xlu0 %3250
          %v3252 = vsel %vm2328, %v3011, -inf
          %3253 = vmax.xlane.f32.xlu0 %v3252
          %v3254 = vpop.xlane.xlu0 %3253
          %v3255 = vsel %vm2328, %v3016, -inf
          %3256 = vmax.xlane.f32.xlu0 %v3255
          %v3257 = vpop.xlane.xlu0 %3256
          %v3258 = vsel %vm2328, %v3021, -inf
          %3259 = vmax.xlane.f32.xlu0 %v3258
          %v3260 = vpop.xlane.xlu0 %3259
          %v3261 = vsel %vm2328, %v3026, -inf
          %3262 = vmax.xlane.f32.xlu0 %v3261
          %v3263 = vpop.xlane.xlu0 %3262
          %v3264 = vsel %vm2328, %v3031, -inf
          %3265 = vmax.xlane.f32.xlu0 %v3264
          %v3266 = vpop.xlane.xlu0 %3265
          %v3267 = vsel %vm2328, %v3036, -inf
          %3268 = vmax.xlane.f32.xlu0 %v3267
          %v3269 = vpop.xlane.xlu0 %3268
          %v3270 = vsel %vm2328, %v3041, -inf
          %3271 = vmax.xlane.f32.xlu0 %v3270
          %v3272 = vpop.xlane.xlu0 %3271
          %v3273 = vsel %vm2328, %v3046, -inf
          %3274 = vmax.xlane.f32.xlu0 %v3273
          %v3275 = vpop.xlane.xlu0 %3274
          %v3276 = vsel %vm2328, %v3051, -inf
          %3277 = vmax.xlane.f32.xlu0 %v3276
          %v3278 = vpop.xlane.xlu0 %3277
          %v3279 = vsel %vm2328, %v3201, -inf
          %3280 = vmax.xlane.f32.xlu0 %v3279
          %v3281 = vpop.xlane.xlu0 %3280
          %v3282 = vsel %vm2328, %v3206, -inf
          %3283 = vmax.xlane.f32.xlu0 %v3282
          %v3284 = vpop.xlane.xlu0 %3283
          %v3285 = vsel %vm2328, %v3211, -inf
          %3286 = vmax.xlane.f32.xlu0 %v3285
          %v3287 = vpop.xlane.xlu0 %3286
          %v3288 = vsel %vm2328, %v3216, -inf
          %3289 = vmax.xlane.f32.xlu0 %v3288
          %v3290 = vpop.xlane.xlu0 %3289
          %v3291 = vsel %vm2328, %v3221, -inf
          %3292 = vmax.xlane.f32.xlu0 %v3291
          %v3293 = vpop.xlane.xlu0 %3292
          %v3294 = vsel %vm2328, %v3226, -inf
          %3295 = vmax.xlane.f32.xlu0 %v3294
          %v3296 = vpop.xlane.xlu0 %3295
          %v3297 = vsel %vm2328, %v3231, -inf
          %3298 = vmax.xlane.f32.xlu0 %v3297
          %v3299 = vpop.xlane.xlu0 %3298
          %v3300 = vsel %vm2328, %v3236, -inf
          %3301 = vmax.xlane.f32.xlu0 %v3300
          %v3302 = vpop.xlane.xlu0 %3301
          %v3303 = vsel %vm2328, %v3241, -inf
          %3304 = vmax.xlane.f32.xlu0 %v3303
          %v3305 = vpop.xlane.xlu0 %3304
          %v3306 = vsel %vm2328, %v3246, -inf
          %3307 = vmax.xlane.f32.xlu0 %v3306
          %v3308 = vpop.xlane.xlu0 %3307
          %v3309 = vsub.f32 %v3006, %v3251
          %v3310 = vsub.f32 %v3011, %v3254
          %v3311 = vsub.f32 %v3016, %v3257
          %v3312 = vsub.f32 %v3021, %v3260
          %v3313 = vsub.f32 %v3026, %v3263
          %v3314 = vsub.f32 %v3031, %v3266
          %v3315 = vsub.f32 %v3036, %v3269
          %v3316 = vsub.f32 %v3041, %v3272
          %v3317 = vsub.f32 %v3046, %v3275
          %v3318 = vsub.f32 %v3051, %v3278
          %v3319 = vsub.f32 %v3201, %v3281
          %v3320 = vsub.f32 %v3206, %v3284
          %v3321 = vsub.f32 %v3211, %v3287
          %v3322 = vsub.f32 %v3216, %v3290
          %v3323 = vsub.f32 %v3221, %v3293
          %v3324 = vsub.f32 %v3226, %v3296
          %v3325 = vsub.f32 %v3231, %v3299
          %v3326 = vsub.f32 %v3236, %v3302
          %v3327 = vsub.f32 %v3241, %v3305
          %v3328 = vsub.f32 %v3246, %v3308
          %v3329 = vmul.f32 %v3309, 1.442695
          %v3330 = vpow.pop %v3329
          %v3331 = vmul.f32 %v3310, 1.442695
          %v3332 = vpow.pop %v3331
          %v3333 = vmul.f32 %v3311, 1.442695
          %v3334 = vpow.pop %v3333
          %v3335 = vmul.f32 %v3312, 1.442695
          %v3336 = vpow.pop %v3335
          %v3337 = vmul.f32 %v3313, 1.442695
          %v3338 = vpow.pop %v3337
          %v3339 = vmul.f32 %v3314, 1.442695
          %v3340 = vpow.pop %v3339
          %v3341 = vmul.f32 %v3315, 1.442695
          %v3342 = vpow.pop %v3341
          %v3343 = vmul.f32 %v3316, 1.442695
          %v3344 = vpow.pop %v3343
          %v3345 = vmul.f32 %v3317, 1.442695
          %v3346 = vpow.pop %v3345
          %v3347 = vmul.f32 %v3318, 1.442695
          %v3348 = vpow.pop %v3347
          %v3349 = vmul.f32 %v3319, 1.442695
          %v3350 = vpow.pop %v3349
          %v3351 = vmul.f32 %v3320, 1.442695
          %v3352 = vpow.pop %v3351
          %v3353 = vmul.f32 %v3321, 1.442695
          %v3354 = vpow.pop %v3353
          %v3355 = vmul.f32 %v3322, 1.442695
          %v3356 = vpow.pop %v3355
          %v3357 = vmul.f32 %v3323, 1.442695
          %v3358 = vpow.pop %v3357
          %v3359 = vmul.f32 %v3324, 1.442695
          %v3360 = vpow.pop %v3359
          %v3361 = vmul.f32 %v3325, 1.442695
          %v3362 = vpow.pop %v3361
          %v3363 = vmul.f32 %v3326, 1.442695
          %v3364 = vpow.pop %v3363
          %v3365 = vmul.f32 %v3327, 1.442695
          %v3366 = vpow.pop %v3365
          %v3367 = vmul.f32 %v3328, 1.442695
          %v3368 = vpow.pop %v3367
          %v3369 = vsel %vm2328, %v3330, 0.0
          %3370 = vadd.xlane.f32.xlu0 %v3369
          %v3371 = vpop.xlane.xlu0 %3370
          %v3372 = vsel %vm2328, %v3332, 0.0
          %3373 = vadd.xlane.f32.xlu0 %v3372
          %v3374 = vpop.xlane.xlu0 %3373
          %v3375 = vsel %vm2328, %v3334, 0.0
          %3376 = vadd.xlane.f32.xlu0 %v3375
          %v3377 = vpop.xlane.xlu0 %3376
          %v3378 = vsel %vm2328, %v3336, 0.0
          %3379 = vadd.xlane.f32.xlu0 %v3378
          %v3380 = vpop.xlane.xlu0 %3379
          %v3381 = vsel %vm2328, %v3338, 0.0
          %3382 = vadd.xlane.f32.xlu0 %v3381
          %v3383 = vpop.xlane.xlu0 %3382
          %v3384 = vsel %vm2328, %v3340, 0.0
          %3385 = vadd.xlane.f32.xlu0 %v3384
          %v3386 = vpop.xlane.xlu0 %3385
          %v3387 = vsel %vm2328, %v3342, 0.0
          %3388 = vadd.xlane.f32.xlu0 %v3387
          %v3389 = vpop.xlane.xlu0 %3388
          %v3390 = vsel %vm2328, %v3344, 0.0
          %3391 = vadd.xlane.f32.xlu0 %v3390
          %v3392 = vpop.xlane.xlu0 %3391
          %v3393 = vsel %vm2328, %v3346, 0.0
          %3394 = vadd.xlane.f32.xlu0 %v3393
          %v3395 = vpop.xlane.xlu0 %3394
          %v3396 = vsel %vm2328, %v3348, 0.0
          %3397 = vadd.xlane.f32.xlu0 %v3396
          %v3398 = vpop.xlane.xlu0 %3397
          %v3399 = vsel %vm2328, %v3350, 0.0
          %3400 = vadd.xlane.f32.xlu0 %v3399
          %v3401 = vpop.xlane.xlu0 %3400
          %v3402 = vsel %vm2328, %v3352, 0.0
          %3403 = vadd.xlane.f32.xlu0 %v3402
          %v3404 = vpop.xlane.xlu0 %3403
          %v3405 = vsel %vm2328, %v3354, 0.0
          %3406 = vadd.xlane.f32.xlu0 %v3405
          %v3407 = vpop.xlane.xlu0 %3406
          %v3408 = vsel %vm2328, %v3356, 0.0
          %3409 = vadd.xlane.f32.xlu0 %v3408
          %v3410 = vpop.xlane.xlu0 %3409
          %v3411 = vsel %vm2328, %v3358, 0.0
          %3412 = vadd.xlane.f32.xlu0 %v3411
          %v3413 = vpop.xlane.xlu0 %3412
          %v3414 = vsel %vm2328, %v3360, 0.0
          %3415 = vadd.xlane.f32.xlu0 %v3414
          %v3416 = vpop.xlane.xlu0 %3415
          %v3417 = vsel %vm2328, %v3362, 0.0
          %3418 = vadd.xlane.f32.xlu0 %v3417
          %v3419 = vpop.xlane.xlu0 %3418
          %v3420 = vsel %vm2328, %v3364, 0.0
          %3421 = vadd.xlane.f32.xlu0 %v3420
          %v3422 = vpop.xlane.xlu0 %3421
          %v3423 = vsel %vm2328, %v3366, 0.0
          %3424 = vadd.xlane.f32.xlu0 %v3423
          %v3425 = vpop.xlane.xlu0 %3424
          %v3426 = vsel %vm2328, %v3368, 0.0
          %3427 = vadd.xlane.f32.xlu0 %v3426
          %v3428 = vpop.xlane.xlu0 %3427
          %v3429 = vrcp.pop %v3371
          %v3430 = vrcp.pop %v3374
          %v3431 = vrcp.pop %v3377
          %v3432 = vrcp.pop %v3380
          %v3433 = vrcp.pop %v3383
          %v3434 = vrcp.pop %v3386
          %v3435 = vrcp.pop %v3389
          %v3436 = vrcp.pop %v3392
          %v3437 = vrcp.pop %v3395
          %v3438 = vrcp.pop %v3398
          %v3439 = vrcp.pop %v3401
          %v3440 = vrcp.pop %v3404
          %v3441 = vrcp.pop %v3407
          %v3442 = vrcp.pop %v3410
          %v3443 = vrcp.pop %v3413
          %v3444 = vrcp.pop %v3416
          %v3445 = vrcp.pop %v3419
          %v3446 = vrcp.pop %v3422
          %v3447 = vrcp.pop %v3425
          %v3448 = vrcp.pop %v3428
          %v3449 = vmul.f32 %v3330, %v3429
          %v3450 = vmul.f32 %v3332, %v3430
          %v3451 = vmul.f32 %v3334, %v3431
          %v3452 = vmul.f32 %v3336, %v3432
          %v3453 = vmul.f32 %v3338, %v3433
          %v3454 = vmul.f32 %v3340, %v3434
          %v3455 = vmul.f32 %v3342, %v3435
          %v3456 = vmul.f32 %v3344, %v3436
          %v3457 = vmul.f32 %v3346, %v3437
          %v3458 = vmul.f32 %v3348, %v3438
          %v3459 = vmul.f32 %v3350, %v3439
          %v3460 = vmul.f32 %v3352, %v3440
          %v3461 = vmul.f32 %v3354, %v3441
          %v3462 = vmul.f32 %v3356, %v3442
          %v3463 = vmul.f32 %v3358, %v3443
          %v3464 = vmul.f32 %v3360, %v3444
          %v3465 = vmul.f32 %v3362, %v3445
          %v3466 = vmul.f32 %v3364, %v3446
          %v3467 = vmul.f32 %v3366, %v3447
          %v3468 = vmul.f32 %v3368, %v3448
          %3479 = vrot.lane.b32.xlu0 %v1947, 96
          %v3480 = vpop.permute.xlu0 %3479
          %3481 = vrot.lane.b32.xlu0 %v1948, 96
          %v3482 = vpop.permute.xlu0 %3481
          %3483 = vrot.lane.b32.xlu0 %v1949, 96
          %v3484 = vpop.permute.xlu0 %3483
          %3485 = vrot.lane.b32.xlu0 %v1950, 96
          %v3486 = vpop.permute.xlu0 %3485
          %3487 = vrot.lane.b32.xlu0 %v1951, 96
          %v3488 = vpop.permute.xlu0 %3487
          %3489 = vrot.lane.b32.xlu0 %v1952, 96
          %v3490 = vpop.permute.xlu0 %3489
          %3491 = vrot.lane.b32.xlu0 %v1953, 96
          %v3492 = vpop.permute.xlu0 %3491
          %3493 = vrot.lane.b32.xlu0 %v1954, 96
          %v3494 = vpop.permute.xlu0 %3493
          %3495 = vrot.lane.b32.xlu0 %v1955, 96
          %v3496 = vpop.permute.xlu0 %3495
          %3497 = vrot.lane.b32.xlu0 %v1956, 96
          %v3498 = vpop.permute.xlu0 %3497
          %v3510 = vsel %vm2328, %v3449, 0
          %v3513 = vsel %vm2328, %v3450, 0
          %v3516 = vsel %vm2328, %v3451, 0
          %v3519 = vsel %vm2328, %v3452, 0
          %v3522 = vsel %vm2328, %v3453, 0
          %v3525 = vsel %vm2328, %v3454, 0
          %v3528 = vsel %vm2328, %v3455, 0
          %v3531 = vsel %vm2328, %v3456, 0
          %v3534 = vsel %vm2328, %v3457, 0
          %v3537 = vsel %vm2328, %v3458, 0
          %3539 = vmatprep.subr.mxu0 0.0
          %3540 = vmatpush1.msra.mxu0 %v3480
          %3541 = vmatprep.subr.mxu0 0.0
          %3542 = vmatpush1.msra.mxu0 %v3482
          %3543 = vmatprep.subr.mxu0 0.0
          %3544 = vmatpush1.msra.mxu0 %v3484
          %3545 = vmatprep.subr.mxu0 0.0
          %3546 = vmatpush1.msra.mxu0 %v3486
          %3547 = vmatprep.subr.mxu0 0.0
          %3548 = vmatpush1.msra.mxu0 %v3488
          %3549 = vmatprep.subr.mxu0 0.0
          %3550 = vmatpush1.msra.mxu0 %v3490
          %3551 = vmatprep.subr.mxu0 0.0
          %3552 = vmatpush1.msra.mxu0 %v3492
          %3553 = vmatprep.subr.mxu0 0.0
          %3554 = vmatpush1.msra.mxu0 %v3494
          %3555 = vmatprep.subr.mxu0 0.0
          %3556 = vmatpush1.msra.mxu0 %v3496
          %3557 = vmatprep.subr.mxu0 0.0
          %3558 = vmatpush1.msra.mxu0 %v3498
          %3559 = vmatprep.subr.mxu0 0.0
          %3560 = vmatpush1.msra.mxu0 0.0
          %3561 = vmatprep.subr.mxu0 0.0
          %3562 = vmatpush1.msra.mxu0 0.0
          %3563 = vmatprep.subr.mxu0 0.0
          %3564 = vmatpush1.msra.mxu0 0.0
          %3565 = vmatprep.subr.mxu0 0.0
          %3566 = vmatpush1.msra.mxu0 0.0
          %3567 = vmatprep.subr.mxu0 0.0
          %3568 = vmatpush1.msra.mxu0 0.0
          %3569 = vmatprep.subr.mxu0 0.0
          %3570 = vmatpush1.msra.mxu0 0.0
          %3571 = vmatprep.subr.mxu0 0.0
          %3572 = vmatpush1.msra.mxu0 0.0
          %3573 = vmatprep.subr.mxu0 0.0
          %3574 = vmatpush1.msra.mxu0 0.0
          %3575 = vmatprep.subr.mxu0 0.0
          %3576 = vmatpush1.msra.mxu0 0.0
          %3577 = vmatprep.subr.mxu0 0.0
          %3578 = vmatpush1.msra.mxu0 0.0
          %3579 = vmatprep.subr.mxu0 0.0
          %3580 = vmatpush1.msra.mxu0 0.0
          %3581 = vmatprep.subr.mxu0 0.0
          %3582 = vmatpush1.msra.mxu0 0.0
          %3583 = vmatprep.subr.mxu0 0.0
          %3584 = vmatpush1.msra.mxu0 0.0
          %3585 = vmatprep.subr.mxu0 0.0
          %3586 = vmatpush1.msra.mxu0 0.0
          %3587 = vmatprep.subr.mxu0 0.0
          %3588 = vmatpush1.msra.mxu0 0.0
          %3589 = vmatprep.subr.mxu0 0.0
          %3590 = vmatpush1.msra.mxu0 0.0
          %3591 = vmatprep.subr.mxu0 0.0
          %3592 = vmatpush1.msra.mxu0 0.0
          %3593 = vmatprep.subr.mxu0 0.0
          %3594 = vmatpush1.msra.mxu0 0.0
          %3595 = vmatprep.subr.mxu0 0.0
          %3596 = vmatpush1.msra.mxu0 0.0
          %3597 = vmatprep.subr.mxu0 0.0
          %3598 = vmatpush1.msra.mxu0 0.0
          %3599 = vmatprep.subr.mxu0 0.0
          %3600 = vmatpush1.msra.mxu0 0.0
          %3601 = vmatprep.subr.mxu0 0.0
          %3602 = vmatpush1.msra.mxu0 0.0
          %3603 = vmatprep.mubr.f32.mxu0 0.0
          %3604 = vmatmul.mubr.f32.gmra.mrb[0].mxu0 %v3510
          %v3605 = vpop.f32.mrb[0].mxu0
          %v3606 = vadd.f32 0.0, %v3605
          %v3607 = vpop.f32.mrb[0].mxu0
          %3608 = vmatprep.mubr.f32.mxu0 0.0
          %3609 = vmatmul.mubr.f32.gmra.mrb[0].mxu0 %v3513
          %v3610 = vpop.f32.mrb[0].mxu0
          %v3611 = vadd.f32 0.0, %v3610
          %v3612 = vpop.f32.mrb[0].mxu0
          %3613 = vmatprep.mubr.f32.mxu0 0.0
          %3614 = vmatmul.mubr.f32.gmra.mrb[0].mxu0 %v3516
          %v3615 = vpop.f32.mrb[0].mxu0
          %v3616 = vadd.f32 0.0, %v3615
          %v3617 = vpop.f32.mrb[0].mxu0
          %3618 = vmatprep.mubr.f32.mxu0 0.0
          %3619 = vmatmul.mubr.f32.gmra.mrb[0].mxu0 %v3519
          %v3620 = vpop.f32.mrb[0].mxu0
          %v3621 = vadd.f32 0.0, %v3620
          %v3622 = vpop.f32.mrb[0].mxu0
          %3623 = vmatprep.mubr.f32.mxu0 0.0
          %3624 = vmatmul.mubr.f32.gmra.mrb[0].mxu0 %v3522
          %v3625 = vpop.f32.mrb[0].mxu0
          %v3626 = vadd.f32 0.0, %v3625
          %v3627 = vpop.f32.mrb[0].mxu0
          %3628 = vmatprep.mubr.f32.mxu0 0.0
          %3629 = vmatmul.mubr.f32.gmra.mrb[0].mxu0 %v3525
          %v3630 = vpop.f32.mrb[0].mxu0
          %v3631 = vadd.f32 0.0, %v3630
          %v3632 = vpop.f32.mrb[0].mxu0
          %3633 = vmatprep.mubr.f32.mxu0 0.0
          %3634 = vmatmul.mubr.f32.gmra.mrb[0].mxu0 %v3528
          %v3635 = vpop.f32.mrb[0].mxu0
          %v3636 = vadd.f32 0.0, %v3635
          %v3637 = vpop.f32.mrb[0].mxu0
          %3638 = vmatprep.mubr.f32.mxu0 0.0
          %3639 = vmatmul.mubr.f32.gmra.mrb[0].mxu0 %v3531
          %v3640 = vpop.f32.mrb[0].mxu0
          %v3641 = vadd.f32 0.0, %v3640
          %v3642 = vpop.f32.mrb[0].mxu0
          %3643 = vmatprep.mubr.f32.mxu0 0.0
          %3644 = vmatmul.mubr.f32.gmra.mrb[0].mxu0 %v3534
          %v3645 = vpop.f32.mrb[0].mxu0
          %v3646 = vadd.f32 0.0, %v3645
          %v3647 = vpop.f32.mrb[0].mxu0
          %3648 = vmatprep.mubr.f32.mxu0 0.0
          %3649 = vmatmul.mubr.f32.gmra.mrb[0].mxu0 %v3537
          %v3650 = vpop.f32.mrb[0].mxu0
          %v3651 = vadd.f32 0.0, %v3650
          %v3652 = vpop.f32.mrb[0].mxu0
          %3653 = vdwg.mxu0
          %3664 = vrot.lane.b32.xlu0 %v1957, 96
          %v3665 = vpop.permute.xlu0 %3664
          %3666 = vrot.lane.b32.xlu0 %v1958, 96
          %v3667 = vpop.permute.xlu0 %3666
          %3668 = vrot.lane.b32.xlu0 %v1959, 96
          %v3669 = vpop.permute.xlu0 %3668
          %3670 = vrot.lane.b32.xlu0 %v1960, 96
          %v3671 = vpop.permute.xlu0 %3670
          %3672 = vrot.lane.b32.xlu0 %v1961, 96
          %v3673 = vpop.permute.xlu0 %3672
          %3674 = vrot.lane.b32.xlu0 %v1962, 96
          %v3675 = vpop.permute.xlu0 %3674
          %3676 = vrot.lane.b32.xlu0 %v1963, 96
          %v3677 = vpop.permute.xlu0 %3676
          %3678 = vrot.lane.b32.xlu0 %v1964, 96
          %v3679 = vpop.permute.xlu0 %3678
          %3680 = vrot.lane.b32.xlu0 %v1965, 96
          %v3681 = vpop.permute.xlu0 %3680
          %3682 = vrot.lane.b32.xlu0 %v1966, 96
          %v3683 = vpop.permute.xlu0 %3682
          %v3695 = vsel %vm2328, %v3459, 0
          %v3698 = vsel %vm2328, %v3460, 0
          %v3701 = vsel %vm2328, %v3461, 0
          %v3704 = vsel %vm2328, %v3462, 0
          %v3707 = vsel %vm2328, %v3463, 0
          %v3710 = vsel %vm2328, %v3464, 0
          %v3713 = vsel %vm2328, %v3465, 0
          %v3716 = vsel %vm2328, %v3466, 0
          %v3719 = vsel %vm2328, %v3467, 0
          %v3722 = vsel %vm2328, %v3468, 0
          %3724 = vmatprep.subr.mxu0 0.0
          %3725 = vmatpush1.msra.mxu0 %v3665
          %3726 = vmatprep.subr.mxu0 0.0
          %3727 = vmatpush1.msra.mxu0 %v3667
          %3728 = vmatprep.subr.mxu0 0.0
          %3729 = vmatpush1.msra.mxu0 %v3669
          %3730 = vmatprep.subr.mxu0 0.0
          %3731 = vmatpush1.msra.mxu0 %v3671
          %3732 = vmatprep.subr.mxu0 0.0
          %3733 = vmatpush1.msra.mxu0 %v3673
          %3734 = vmatprep.subr.mxu0 0.0
          %3735 = vmatpush1.msra.mxu0 %v3675
          %3736 = vmatprep.subr.mxu0 0.0
          %3737 = vmatpush1.msra.mxu0 %v3677
          %3738 = vmatprep.subr.mxu0 0.0
          %3739 = vmatpush1.msra.mxu0 %v3679
          %3740 = vmatprep.subr.mxu0 0.0
          %3741 = vmatpush1.msra.mxu0 %v3681
          %3742 = vmatprep.subr.mxu0 0.0
          %3743 = vmatpush1.msra.mxu0 %v3683
          %3744 = vmatprep.subr.mxu0 0.0
          %3745 = vmatpush1.msra.mxu0 0.0
          %3746 = vmatprep.subr.mxu0 0.0
          %3747 = vmatpush1.msra.mxu0 0.0
          %3748 = vmatprep.subr.mxu0 0.0
          %3749 = vmatpush1.msra.mxu0 0.0
          %3750 = vmatprep.subr.mxu0 0.0
          %3751 = vmatpush1.msra.mxu0 0.0
          %3752 = vmatprep.subr.mxu0 0.0
          %3753 = vmatpush1.msra.mxu0 0.0
          %3754 = vmatprep.subr.mxu0 0.0
          %3755 = vmatpush1.msra.mxu0 0.0
          %3756 = vmatprep.subr.mxu0 0.0
          %3757 = vmatpush1.msra.mxu0 0.0
          %3758 = vmatprep.subr.mxu0 0.0
          %3759 = vmatpush1.msra.mxu0 0.0
          %3760 = vmatprep.subr.mxu0 0.0
          %3761 = vmatpush1.msra.mxu0 0.0
          %3762 = vmatprep.subr.mxu0 0.0
          %3763 = vmatpush1.msra.mxu0 0.0
          %3764 = vmatprep.subr.mxu0 0.0
          %3765 = vmatpush1.msra.mxu0 0.0
          %3766 = vmatprep.subr.mxu0 0.0
          %3767 = vmatpush1.msra.mxu0 0.0
          %3768 = vmatprep.subr.mxu0 0.0
          %3769 = vmatpush1.msra.mxu0 0.0
          %3770 = vmatprep.subr.mxu0 0.0
          %3771 = vmatpush1.msra.mxu0 0.0
          %3772 = vmatprep.subr.mxu0 0.0
          %3773 = vmatpush1.msra.mxu0 0.0
          %3774 = vmatprep.subr.mxu0 0.0
          %3775 = vmatpush1.msra.mxu0 0.0
          %3776 = vmatprep.subr.mxu0 0.0
          %3777 = vmatpush1.msra.mxu0 0.0
          %3778 = vmatprep.subr.mxu0 0.0
          %3779 = vmatpush1.msra.mxu0 0.0
          %3780 = vmatprep.subr.mxu0 0.0
          %3781 = vmatpush1.msra.mxu0 0.0
          %3782 = vmatprep.subr.mxu0 0.0
          %3783 = vmatpush1.msra.mxu0 0.0
          %3784 = vmatprep.subr.mxu0 0.0
          %3785 = vmatpush1.msra.mxu0 0.0
          %3786 = vmatprep.subr.mxu0 0.0
          %3787 = vmatpush1.msra.mxu0 0.0
          %3788 = vmatprep.mubr.f32.mxu0 0.0
          %3789 = vmatmul.mubr.f32.gmra.mrb[0].mxu0 %v3695
          %v3790 = vpop.f32.mrb[0].mxu0
          %v3791 = vadd.f32 0.0, %v3790
          %v3792 = vpop.f32.mrb[0].mxu0
          %3793 = vmatprep.mubr.f32.mxu0 0.0
          %3794 = vmatmul.mubr.f32.gmra.mrb[0].mxu0 %v3698
          %v3795 = vpop.f32.mrb[0].mxu0
          %v3796 = vadd.f32 0.0, %v3795
          %v3797 = vpop.f32.mrb[0].mxu0
          %3798 = vmatprep.mubr.f32.mxu0 0.0
          %3799 = vmatmul.mubr.f32.gmra.mrb[0].mxu0 %v3701
          %v3800 = vpop.f32.mrb[0].mxu0
          %v3801 = vadd.f32 0.0, %v3800
          %v3802 = vpop.f32.mrb[0].mxu0
          %3803 = vmatprep.mubr.f32.mxu0 0.0
          %3804 = vmatmul.mubr.f32.gmra.mrb[0].mxu0 %v3704
          %v3805 = vpop.f32.mrb[0].mxu0
          %v3806 = vadd.f32 0.0, %v3805
          %v3807 = vpop.f32.mrb[0].mxu0
          %3808 = vmatprep.mubr.f32.mxu0 0.0
          %3809 = vmatmul.mubr.f32.gmra.mrb[0].mxu0 %v3707
          %v3810 = vpop.f32.mrb[0].mxu0
          %v3811 = vadd.f32 0.0, %v3810
          %v3812 = vpop.f32.mrb[0].mxu0
          %3813 = vmatprep.mubr.f32.mxu0 0.0
          %3814 = vmatmul.mubr.f32.gmra.mrb[0].mxu0 %v3710
          %v3815 = vpop.f32.mrb[0].mxu0
          %v3816 = vadd.f32 0.0, %v3815
          %v3817 = vpop.f32.mrb[0].mxu0
          %3818 = vmatprep.mubr.f32.mxu0 0.0
          %3819 = vmatmul.mubr.f32.gmra.mrb[0].mxu0 %v3713
          %v3820 = vpop.f32.mrb[0].mxu0
          %v3821 = vadd.f32 0.0, %v3820
          %v3822 = vpop.f32.mrb[0].mxu0
          %3823 = vmatprep.mubr.f32.mxu0 0.0
          %3824 = vmatmul.mubr.f32.gmra.mrb[0].mxu0 %v3716
          %v3825 = vpop.f32.mrb[0].mxu0
          %v3826 = vadd.f32 0.0, %v3825
          %v3827 = vpop.f32.mrb[0].mxu0
          %3828 = vmatprep.mubr.f32.mxu0 0.0
          %3829 = vmatmul.mubr.f32.gmra.mrb[0].mxu0 %v3719
          %v3830 = vpop.f32.mrb[0].mxu0
          %v3831 = vadd.f32 0.0, %v3830
          %v3832 = vpop.f32.mrb[0].mxu0
          %3833 = vmatprep.mubr.f32.mxu0 0.0
          %3834 = vmatmul.mubr.f32.gmra.mrb[0].mxu0 %v3722
          %v3835 = vpop.f32.mrb[0].mxu0
          %v3836 = vadd.f32 0.0, %v3835
          %v3837 = vpop.f32.mrb[0].mxu0
          %3838 = vdwg.mxu0
          %v3839 = vpack.c.bf16 %v3611, %v3606
          %v3840 = vpack.c.bf16 %v3621, %v3616
          %v3841 = vpack.c.bf16 %v3631, %v3626
          %v3842 = vpack.c.bf16 %v3641, %v3636
          %v3843 = vpack.c.bf16 %v3651, %v3646
          %v3844 = vpack.c.bf16 %v3796, %v3791
          %v3845 = vpack.c.bf16 %v3806, %v3801
          %v3846 = vpack.c.bf16 %v3816, %v3811
          %v3847 = vpack.c.bf16 %v3826, %v3821
          %v3848 = vpack.c.bf16 %v3836, %v3831
          %3859 = vrot.lane.b32.xlu0 %v3839, 32
          %v3860 = vpop.permute.xlu0 %3859
          %3861 = vrot.lane.b32.xlu0 %v3840, 32
          %v3862 = vpop.permute.xlu0 %3861
          %3863 = vrot.lane.b32.xlu0 %v3841, 32
          %v3864 = vpop.permute.xlu0 %3863
          %3865 = vrot.lane.b32.xlu0 %v3842, 32
          %v3866 = vpop.permute.xlu0 %3865
          %3867 = vrot.lane.b32.xlu0 %v3843, 32
          %v3868 = vpop.permute.xlu0 %3867
          %3869 = vrot.lane.b32.xlu0 %v3844, 32
          %v3870 = vpop.permute.xlu0 %3869
          %3871 = vrot.lane.b32.xlu0 %v3845, 32
          %v3872 = vpop.permute.xlu0 %3871
          %3873 = vrot.lane.b32.xlu0 %v3846, 32
          %v3874 = vpop.permute.xlu0 %3873
          %3875 = vrot.lane.b32.xlu0 %v3847, 32
          %v3876 = vpop.permute.xlu0 %3875
          %3877 = vrot.lane.b32.xlu0 %v3848, 32
          %v3878 = vpop.permute.xlu0 %3877
          %vm3889 = vcmask 523520
          %3890 = vst.msk [vmem:[#allocation4] sm:$0xff] %vm3889, %v3860
          %3891 = vst.msk [vmem:[#allocation4 + $0x8] sm:$0xff] %vm3889, %v3862
          %3892 = vst.msk [vmem:[#allocation4 + $0x10] sm:$0xff] %vm3889, %v3864
          %3893 = vst.msk [vmem:[#allocation4 + $0x18] sm:$0xff] %vm3889, %v3866
          %3894 = vst.msk [vmem:[#allocation4 + $0x20] sm:$0xff] %vm3889, %v3868
          %3895 = vst.msk [vmem:[#allocation4 + $0x28] sm:$0xff] %vm3889, %v3870
          %3896 = vst.msk [vmem:[#allocation4 + $0x30] sm:$0xff] %vm3889, %v3872
          %3897 = vst.msk [vmem:[#allocation4 + $0x38] sm:$0xff] %vm3889, %v3874
          %3898 = vst.msk [vmem:[#allocation4 + $0x40] sm:$0xff] %vm3889, %v3876
          %3899 = vst.msk [vmem:[#allocation4 + $0x48] sm:$0xff] %vm3889, %v3878
          %3900 = vrot.lane.b32.xlu0 %v1589, 64
          %v3901 = vpop.permute.xlu0 %3900
          %3902 = vrot.lane.b32.xlu0 %v1590, 64
          %v3903 = vpop.permute.xlu0 %3902
          %3904 = vrot.lane.b32.xlu0 %v1591, 64
          %v3905 = vpop.permute.xlu0 %3904
          %3906 = vrot.lane.b32.xlu0 %v1592, 64
          %v3907 = vpop.permute.xlu0 %3906
          %3908 = vrot.lane.b32.xlu0 %v1593, 64
          %v3909 = vpop.permute.xlu0 %3908
          %3910 = vrot.lane.b32.xlu0 %v1594, 64
          %v3911 = vpop.permute.xlu0 %3910
          %3912 = vrot.lane.b32.xlu0 %v1595, 64
          %v3913 = vpop.permute.xlu0 %3912
          %3914 = vrot.lane.b32.xlu0 %v1596, 64
          %v3915 = vpop.permute.xlu0 %3914
          %3916 = vrot.lane.b32.xlu0 %v1597, 64
          %v3917 = vpop.permute.xlu0 %3916
          %3918 = vrot.lane.b32.xlu0 %v1598, 64
          %v3919 = vpop.permute.xlu0 %3918
          %3920 = vrot.lane.b32.xlu0 %v1768, 64
          %v3921 = vpop.permute.xlu0 %3920
          %3922 = vrot.lane.b32.xlu0 %v1769, 64
          %v3923 = vpop.permute.xlu0 %3922
          %3924 = vrot.lane.b32.xlu0 %v1770, 64
          %v3925 = vpop.permute.xlu0 %3924
          %3926 = vrot.lane.b32.xlu0 %v1771, 64
          %v3927 = vpop.permute.xlu0 %3926
          %3928 = vrot.lane.b32.xlu0 %v1772, 64
          %v3929 = vpop.permute.xlu0 %3928
          %3930 = vrot.lane.b32.xlu0 %v1773, 64
          %v3931 = vpop.permute.xlu0 %3930
          %3932 = vrot.lane.b32.xlu0 %v1774, 64
          %v3933 = vpop.permute.xlu0 %3932
          %3934 = vrot.lane.b32.xlu0 %v1775, 64
          %v3935 = vpop.permute.xlu0 %3934
          %3936 = vrot.lane.b32.xlu0 %v1776, 64
          %v3937 = vpop.permute.xlu0 %3936
          %3938 = vrot.lane.b32.xlu0 %v1777, 64
          %v3939 = vpop.permute.xlu0 %3938
          %v3940 = vsel %vm1977, %v3901, 0
          %v3942 = vsel %vm1977, %v3903, 0
          %v3944 = vsel %vm1977, %v3905, 0
          %v3946 = vsel %vm1977, %v3907, 0
          %v3948 = vsel %vm1977, %v3909, 0
          %v3950 = vsel %vm1977, %v3911, 0
          %v3952 = vsel %vm1977, %v3913, 0
          %v3954 = vsel %vm1977, %v3915, 0
          %v3956 = vsel %vm1977, %v3917, 0
          %v3958 = vsel %vm1977, %v3919, 0
          %v3960 = vsel %vm1977, %v3921, 0
          %v3962 = vsel %vm1977, %v3923, 0
          %v3964 = vsel %vm1977, %v3925, 0
          %v3966 = vsel %vm1977, %v3927, 0
          %v3968 = vsel %vm1977, %v3929, 0
          %v3970 = vsel %vm1977, %v3931, 0
          %v3972 = vsel %vm1977, %v3933, 0
          %v3974 = vsel %vm1977, %v3935, 0
          %v3976 = vsel %vm1977, %v3937, 0
          %v3978 = vsel %vm1977, %v3939, 0
          %3980 = vmatprep.subr.mxu0 0.0
          %3981 = vmatpush1.xpose.msra.mxu0 %v3960
          %3982 = vmatprep.subr.mxu0 0.0
          %3983 = vmatpush1.xpose.msra.mxu0 %v3962
          %3984 = vmatprep.subr.mxu0 0.0
          %3985 = vmatpush1.xpose.msra.mxu0 %v3964
          %3986 = vmatprep.subr.mxu0 0.0
          %3987 = vmatpush1.xpose.msra.mxu0 %v3966
          %3988 = vmatprep.subr.mxu0 0.0
          %3989 = vmatpush1.xpose.msra.mxu0 %v3968
          %3990 = vmatprep.subr.mxu0 0.0
          %3991 = vmatpush1.xpose.msra.mxu0 %v3970
          %3992 = vmatprep.subr.mxu0 0.0
          %3993 = vmatpush1.xpose.msra.mxu0 %v3972
          %3994 = vmatprep.subr.mxu0 0.0
          %3995 = vmatpush1.xpose.msra.mxu0 %v3974
          %3996 = vmatprep.subr.mxu0 0.0
          %3997 = vmatpush1.xpose.msra.mxu0 %v3976
          %3998 = vmatprep.subr.mxu0 0.0
          %3999 = vmatpush1.xpose.msra.mxu0 %v3978
          %4000 = vmatprep.subr.mxu0 0.0
          %4001 = vmatpush1.xpose.msra.mxu0 0.0
          %4002 = vmatprep.subr.mxu0 0.0
          %4003 = vmatpush1.xpose.msra.mxu0 0.0
          %4004 = vmatprep.subr.mxu0 0.0
          %4005 = vmatpush1.xpose.msra.mxu0 0.0
          %4006 = vmatprep.subr.mxu0 0.0
          %4007 = vmatpush1.xpose.msra.mxu0 0.0
          %4008 = vmatprep.subr.mxu0 0.0
          %4009 = vmatpush1.xpose.msra.mxu0 0.0
          %4010 = vmatprep.subr.mxu0 0.0
          %4011 = vmatpush1.xpose.msra.mxu0 0.0
          %4012 = vmatprep.subr.mxu0 0.0
          %4013 = vmatpush1.xpose.msra.mxu0 0.0
          %4014 = vmatprep.subr.mxu0 0.0
          %4015 = vmatpush1.xpose.msra.mxu0 0.0
          %4016 = vmatprep.subr.mxu0 0.0
          %4017 = vmatpush1.xpose.msra.mxu0 0.0
          %4018 = vmatprep.subr.mxu0 0.0
          %4019 = vmatpush1.xpose.msra.mxu0 0.0
          %4020 = vmatprep.subr.mxu0 0.0
          %4021 = vmatpush1.xpose.msra.mxu0 0.0
          %4022 = vmatprep.subr.mxu0 0.0
          %4023 = vmatpush1.xpose.msra.mxu0 0.0
          %4024 = vmatprep.subr.mxu0 0.0
          %4025 = vmatpush1.xpose.msra.mxu0 0.0
          %4026 = vmatprep.subr.mxu0 0.0
          %4027 = vmatpush1.xpose.msra.mxu0 0.0
          %4028 = vmatprep.subr.mxu0 0.0
          %4029 = vmatpush1.xpose.msra.mxu0 0.0
          %4030 = vmatprep.subr.mxu0 0.0
          %4031 = vmatpush1.xpose.msra.mxu0 0.0
          %4032 = vmatprep.subr.mxu0 0.0
          %4033 = vmatpush1.xpose.msra.mxu0 0.0
          %4034 = vmatprep.subr.mxu0 0.0
          %4035 = vmatpush1.xpose.msra.mxu0 0.0
          %4036 = vmatprep.subr.mxu0 0.0
          %4037 = vmatpush1.xpose.msra.mxu0 0.0
          %4038 = vmatprep.subr.mxu0 0.0
          %4039 = vmatpush1.xpose.msra.mxu0 0.0
          %4040 = vmatprep.subr.mxu0 0.0
          %4041 = vmatpush1.xpose.msra.mxu0 0.0
          %4042 = vmatprep.subr.mxu0 0.0
          %4043 = vmatpush1.xpose.msra.mxu0 0.0
          %4044 = vmatprep.mubr.f32.mxu0 0.0
          %4045 = vmatmul.mubr.f32.gmra.mrb[0].mxu0 %v3940
          %v4046 = vpop.f32.mrb[0].mxu0
          %v4047 = vadd.f32 %v1967, %v4046
          %v4048 = vpop.f32.mrb[0].mxu0
          %4049 = vmatprep.mubr.f32.mxu0 0.0
          %4050 = vmatmul.mubr.f32.gmra.mrb[0].mxu0 %v3942
          %v4051 = vpop.f32.mrb[0].mxu0
          %v4052 = vadd.f32 %v1968, %v4051
          %v4053 = vpop.f32.mrb[0].mxu0
          %4054 = vmatprep.mubr.f32.mxu0 0.0
          %4055 = vmatmul.mubr.f32.gmra.mrb[0].mxu0 %v3944
          %v4056 = vpop.f32.mrb[0].mxu0
          %v4057 = vadd.f32 %v1969, %v4056
          %v4058 = vpop.f32.mrb[0].mxu0
          %4059 = vmatprep.mubr.f32.mxu0 0.0
          %4060 = vmatmul.mubr.f32.gmra.mrb[0].mxu0 %v3946
          %v4061 = vpop.f32.mrb[0].mxu0
          %v4062 = vadd.f32 %v1970, %v4061
          %v4063 = vpop.f32.mrb[0].mxu0
          %4064 = vmatprep.mubr.f32.mxu0 0.0
          %4065 = vmatmul.mubr.f32.gmra.mrb[0].mxu0 %v3948
          %v4066 = vpop.f32.mrb[0].mxu0
          %v4067 = vadd.f32 %v1971, %v4066
          %v4068 = vpop.f32.mrb[0].mxu0
          %4069 = vmatprep.mubr.f32.mxu0 0.0
          %4070 = vmatmul.mubr.f32.gmra.mrb[0].mxu0 %v3950
          %v4071 = vpop.f32.mrb[0].mxu0
          %v4072 = vadd.f32 %v1972, %v4071
          %v4073 = vpop.f32.mrb[0].mxu0
          %4074 = vmatprep.mubr.f32.mxu0 0.0
          %4075 = vmatmul.mubr.f32.gmra.mrb[0].mxu0 %v3952
          %v4076 = vpop.f32.mrb[0].mxu0
          %v4077 = vadd.f32 %v1973, %v4076
          %v4078 = vpop.f32.mrb[0].mxu0
          %4079 = vmatprep.mubr.f32.mxu0 0.0
          %4080 = vmatmul.mubr.f32.gmra.mrb[0].mxu0 %v3954
          %v4081 = vpop.f32.mrb[0].mxu0
          %v4082 = vadd.f32 %v1974, %v4081
          %v4083 = vpop.f32.mrb[0].mxu0
          %4084 = vmatprep.mubr.f32.mxu0 0.0
          %4085 = vmatmul.mubr.f32.gmra.mrb[0].mxu0 %v3956
          %v4086 = vpop.f32.mrb[0].mxu0
          %v4087 = vadd.f32 %v1975, %v4086
          %v4088 = vpop.f32.mrb[0].mxu0
          %4089 = vmatprep.mubr.f32.mxu0 0.0
          %4090 = vmatmul.mubr.f32.gmra.mrb[0].mxu0 %v3958
          %v4091 = vpop.f32.mrb[0].mxu0
          %v4092 = vadd.f32 %v1976, %v4091
          %v4093 = vpop.f32.mrb[0].mxu0
          %4094 = vdwg.mxu0
          %4095 = vrot.lane.b32.xlu0 %v1599, 64
          %v4096 = vpop.permute.xlu0 %4095
          %4097 = vrot.lane.b32.xlu0 %v1600, 64
          %v4098 = vpop.permute.xlu0 %4097
          %4099 = vrot.lane.b32.xlu0 %v1601, 64
          %v4100 = vpop.permute.xlu0 %4099
          %4101 = vrot.lane.b32.xlu0 %v1602, 64
          %v4102 = vpop.permute.xlu0 %4101
          %4103 = vrot.lane.b32.xlu0 %v1603, 64
          %v4104 = vpop.permute.xlu0 %4103
          %4105 = vrot.lane.b32.xlu0 %v1604, 64
          %v4106 = vpop.permute.xlu0 %4105
          %4107 = vrot.lane.b32.xlu0 %v1605, 64
          %v4108 = vpop.permute.xlu0 %4107
          %4109 = vrot.lane.b32.xlu0 %v1606, 64
          %v4110 = vpop.permute.xlu0 %4109
          %4111 = vrot.lane.b32.xlu0 %v1607, 64
          %v4112 = vpop.permute.xlu0 %4111
          %4113 = vrot.lane.b32.xlu0 %v1608, 64
          %v4114 = vpop.permute.xlu0 %4113
          %4115 = vrot.lane.b32.xlu0 %v1778, 64
          %v4116 = vpop.permute.xlu0 %4115
          %4117 = vrot.lane.b32.xlu0 %v1779, 64
          %v4118 = vpop.permute.xlu0 %4117
          %4119 = vrot.lane.b32.xlu0 %v1780, 64
          %v4120 = vpop.permute.xlu0 %4119
          %4121 = vrot.lane.b32.xlu0 %v1781, 64
          %v4122 = vpop.permute.xlu0 %4121
          %4123 = vrot.lane.b32.xlu0 %v1782, 64
          %v4124 = vpop.permute.xlu0 %4123
          %4125 = vrot.lane.b32.xlu0 %v1783, 64
          %v4126 = vpop.permute.xlu0 %4125
          %4127 = vrot.lane.b32.xlu0 %v1784, 64
          %v4128 = vpop.permute.xlu0 %4127
          %4129 = vrot.lane.b32.xlu0 %v1785, 64
          %v4130 = vpop.permute.xlu0 %4129
          %4131 = vrot.lane.b32.xlu0 %v1786, 64
          %v4132 = vpop.permute.xlu0 %4131
          %4133 = vrot.lane.b32.xlu0 %v1787, 64
          %v4134 = vpop.permute.xlu0 %4133
          %v4135 = vsel %vm1977, %v4096, 0
          %v4137 = vsel %vm1977, %v4098, 0
          %v4139 = vsel %vm1977, %v4100, 0
          %v4141 = vsel %vm1977, %v4102, 0
          %v4143 = vsel %vm1977, %v4104, 0
          %v4145 = vsel %vm1977, %v4106, 0
          %v4147 = vsel %vm1977, %v4108, 0
          %v4149 = vsel %vm1977, %v4110, 0
          %v4151 = vsel %vm1977, %v4112, 0
          %v4153 = vsel %vm1977, %v4114, 0
          %v4155 = vsel %vm1977, %v4116, 0
          %v4157 = vsel %vm1977, %v4118, 0
          %v4159 = vsel %vm1977, %v4120, 0
          %v4161 = vsel %vm1977, %v4122, 0
          %v4163 = vsel %vm1977, %v4124, 0
          %v4165 = vsel %vm1977, %v4126, 0
          %v4167 = vsel %vm1977, %v4128, 0
          %v4169 = vsel %vm1977, %v4130, 0
          %v4171 = vsel %vm1977, %v4132, 0
          %v4173 = vsel %vm1977, %v4134, 0
          %4175 = vmatprep.subr.mxu0 0.0
          %4176 = vmatpush1.xpose.msra.mxu0 %v4155
          %4177 = vmatprep.subr.mxu0 0.0
          %4178 = vmatpush1.xpose.msra.mxu0 %v4157
          %4179 = vmatprep.subr.mxu0 0.0
          %4180 = vmatpush1.xpose.msra.mxu0 %v4159
          %4181 = vmatprep.subr.mxu0 0.0
          %4182 = vmatpush1.xpose.msra.mxu0 %v4161
          %4183 = vmatprep.subr.mxu0 0.0
          %4184 = vmatpush1.xpose.msra.mxu0 %v4163
          %4185 = vmatprep.subr.mxu0 0.0
          %4186 = vmatpush1.xpose.msra.mxu0 %v4165
          %4187 = vmatprep.subr.mxu0 0.0
          %4188 = vmatpush1.xpose.msra.mxu0 %v4167
          %4189 = vmatprep.subr.mxu0 0.0
          %4190 = vmatpush1.xpose.msra.mxu0 %v4169
          %4191 = vmatprep.subr.mxu0 0.0
          %4192 = vmatpush1.xpose.msra.mxu0 %v4171
          %4193 = vmatprep.subr.mxu0 0.0
          %4194 = vmatpush1.xpose.msra.mxu0 %v4173
          %4195 = vmatprep.subr.mxu0 0.0
          %4196 = vmatpush1.xpose.msra.mxu0 0.0
          %4197 = vmatprep.subr.mxu0 0.0
          %4198 = vmatpush1.xpose.msra.mxu0 0.0
          %4199 = vmatprep.subr.mxu0 0.0
          %4200 = vmatpush1.xpose.msra.mxu0 0.0
          %4201 = vmatprep.subr.mxu0 0.0
          %4202 = vmatpush1.xpose.msra.mxu0 0.0
          %4203 = vmatprep.subr.mxu0 0.0
          %4204 = vmatpush1.xpose.msra.mxu0 0.0
          %4205 = vmatprep.subr.mxu0 0.0
          %4206 = vmatpush1.xpose.msra.mxu0 0.0
          %4207 = vmatprep.subr.mxu0 0.0
          %4208 = vmatpush1.xpose.msra.mxu0 0.0
          %4209 = vmatprep.subr.mxu0 0.0
          %4210 = vmatpush1.xpose.msra.mxu0 0.0
          %4211 = vmatprep.subr.mxu0 0.0
          %4212 = vmatpush1.xpose.msra.mxu0 0.0
          %4213 = vmatprep.subr.mxu0 0.0
          %4214 = vmatpush1.xpose.msra.mxu0 0.0
          %4215 = vmatprep.subr.mxu0 0.0
          %4216 = vmatpush1.xpose.msra.mxu0 0.0
          %4217 = vmatprep.subr.mxu0 0.0
          %4218 = vmatpush1.xpose.msra.mxu0 0.0
          %4219 = vmatprep.subr.mxu0 0.0
          %4220 = vmatpush1.xpose.msra.mxu0 0.0
          %4221 = vmatprep.subr.mxu0 0.0
          %4222 = vmatpush1.xpose.msra.mxu0 0.0
          %4223 = vmatprep.subr.mxu0 0.0
          %4224 = vmatpush1.xpose.msra.mxu0 0.0
          %4225 = vmatprep.subr.mxu0 0.0
          %4226 = vmatpush1.xpose.msra.mxu0 0.0
          %4227 = vmatprep.subr.mxu0 0.0
          %4228 = vmatpush1.xpose.msra.mxu0 0.0
          %4229 = vmatprep.subr.mxu0 0.0
          %4230 = vmatpush1.xpose.msra.mxu0 0.0
          %4231 = vmatprep.subr.mxu0 0.0
          %4232 = vmatpush1.xpose.msra.mxu0 0.0
          %4233 = vmatprep.subr.mxu0 0.0
          %4234 = vmatpush1.xpose.msra.mxu0 0.0
          %4235 = vmatprep.subr.mxu0 0.0
          %4236 = vmatpush1.xpose.msra.mxu0 0.0
          %4237 = vmatprep.subr.mxu0 0.0
          %4238 = vmatpush1.xpose.msra.mxu0 0.0
          %4239 = vmatprep.mubr.f32.mxu0 0.0
          %4240 = vmatmul.mubr.f32.gmra.mrb[0].mxu0 %v4135
          %v4241 = vpop.f32.mrb[0].mxu0
          %v4242 = vadd.f32 %v1967, %v4241
          %v4243 = vpop.f32.mrb[0].mxu0
          %4244 = vmatprep.mubr.f32.mxu0 0.0
          %4245 = vmatmul.mubr.f32.gmra.mrb[0].mxu0 %v4137
          %v4246 = vpop.f32.mrb[0].mxu0
          %v4247 = vadd.f32 %v1968, %v4246
          %v4248 = vpop.f32.mrb[0].mxu0
          %4249 = vmatprep.mubr.f32.mxu0 0.0
          %4250 = vmatmul.mubr.f32.gmra.mrb[0].mxu0 %v4139
          %v4251 = vpop.f32.mrb[0].mxu0
          %v4252 = vadd.f32 %v1969, %v4251
          %v4253 = vpop.f32.mrb[0].mxu0
          %4254 = vmatprep.mubr.f32.mxu0 0.0
          %4255 = vmatmul.mubr.f32.gmra.mrb[0].mxu0 %v4141
          %v4256 = vpop.f32.mrb[0].mxu0
          %v4257 = vadd.f32 %v1970, %v4256
          %v4258 = vpop.f32.mrb[0].mxu0
          %4259 = vmatprep.mubr.f32.mxu0 0.0
          %4260 = vmatmul.mubr.f32.gmra.mrb[0].mxu0 %v4143
          %v4261 = vpop.f32.mrb[0].mxu0
          %v4262 = vadd.f32 %v1971, %v4261
          %v4263 = vpop.f32.mrb[0].mxu0
          %4264 = vmatprep.mubr.f32.mxu0 0.0
          %4265 = vmatmul.mubr.f32.gmra.mrb[0].mxu0 %v4145
          %v4266 = vpop.f32.mrb[0].mxu0
          %v4267 = vadd.f32 %v1972, %v4266
          %v4268 = vpop.f32.mrb[0].mxu0
          %4269 = vmatprep.mubr.f32.mxu0 0.0
          %4270 = vmatmul.mubr.f32.gmra.mrb[0].mxu0 %v4147
          %v4271 = vpop.f32.mrb[0].mxu0
          %v4272 = vadd.f32 %v1973, %v4271
          %v4273 = vpop.f32.mrb[0].mxu0
          %4274 = vmatprep.mubr.f32.mxu0 0.0
          %4275 = vmatmul.mubr.f32.gmra.mrb[0].mxu0 %v4149
          %v4276 = vpop.f32.mrb[0].mxu0
          %v4277 = vadd.f32 %v1974, %v4276
          %v4278 = vpop.f32.mrb[0].mxu0
          %4279 = vmatprep.mubr.f32.mxu0 0.0
          %4280 = vmatmul.mubr.f32.gmra.mrb[0].mxu0 %v4151
          %v4281 = vpop.f32.mrb[0].mxu0
          %v4282 = vadd.f32 %v1975, %v4281
          %v4283 = vpop.f32.mrb[0].mxu0
          %4284 = vmatprep.mubr.f32.mxu0 0.0
          %4285 = vmatmul.mubr.f32.gmra.mrb[0].mxu0 %v4153
          %v4286 = vpop.f32.mrb[0].mxu0
          %v4287 = vadd.f32 %v1976, %v4286
          %v4288 = vpop.f32.mrb[0].mxu0
          %4289 = vdwg.mxu0
          %v4290 = vsel %vm2328, %v4047, -inf
          %4291 = vmax.xlane.f32.xlu0 %v4290
          %v4292 = vpop.xlane.xlu0 %4291
          %v4293 = vsel %vm2328, %v4052, -inf
          %4294 = vmax.xlane.f32.xlu0 %v4293
          %v4295 = vpop.xlane.xlu0 %4294
          %v4296 = vsel %vm2328, %v4057, -inf
          %4297 = vmax.xlane.f32.xlu0 %v4296
          %v4298 = vpop.xlane.xlu0 %4297
          %v4299 = vsel %vm2328, %v4062, -inf
          %4300 = vmax.xlane.f32.xlu0 %v4299
          %v4301 = vpop.xlane.xlu0 %4300
          %v4302 = vsel %vm2328, %v4067, -inf
          %4303 = vmax.xlane.f32.xlu0 %v4302
          %v4304 = vpop.xlane.xlu0 %4303
          %v4305 = vsel %vm2328, %v4072, -inf
          %4306 = vmax.xlane.f32.xlu0 %v4305
          %v4307 = vpop.xlane.xlu0 %4306
          %v4308 = vsel %vm2328, %v4077, -inf
          %4309 = vmax.xlane.f32.xlu0 %v4308
          %v4310 = vpop.xlane.xlu0 %4309
          %v4311 = vsel %vm2328, %v4082, -inf
          %4312 = vmax.xlane.f32.xlu0 %v4311
          %v4313 = vpop.xlane.xlu0 %4312
          %v4314 = vsel %vm2328, %v4087, -inf
          %4315 = vmax.xlane.f32.xlu0 %v4314
          %v4316 = vpop.xlane.xlu0 %4315
          %v4317 = vsel %vm2328, %v4092, -inf
          %4318 = vmax.xlane.f32.xlu0 %v4317
          %v4319 = vpop.xlane.xlu0 %4318
          %v4320 = vsel %vm2328, %v4242, -inf
          %4321 = vmax.xlane.f32.xlu0 %v4320
          %v4322 = vpop.xlane.xlu0 %4321
          %v4323 = vsel %vm2328, %v4247, -inf
          %4324 = vmax.xlane.f32.xlu0 %v4323
          %v4325 = vpop.xlane.xlu0 %4324
          %v4326 = vsel %vm2328, %v4252, -inf
          %4327 = vmax.xlane.f32.xlu0 %v4326
          %v4328 = vpop.xlane.xlu0 %4327
          %v4329 = vsel %vm2328, %v4257, -inf
          %4330 = vmax.xlane.f32.xlu0 %v4329
          %v4331 = vpop.xlane.xlu0 %4330
          %v4332 = vsel %vm2328, %v4262, -inf
          %4333 = vmax.xlane.f32.xlu0 %v4332
          %v4334 = vpop.xlane.xlu0 %4333
          %v4335 = vsel %vm2328, %v4267, -inf
          %4336 = vmax.xlane.f32.xlu0 %v4335
          %v4337 = vpop.xlane.xlu0 %4336
          %v4338 = vsel %vm2328, %v4272, -inf
          %4339 = vmax.xlane.f32.xlu0 %v4338
          %v4340 = vpop.xlane.xlu0 %4339
          %v4341 = vsel %vm2328, %v4277, -inf
          %4342 = vmax.xlane.f32.xlu0 %v4341
          %v4343 = vpop.xlane.xlu0 %4342
          %v4344 = vsel %vm2328, %v4282, -inf
          %4345 = vmax.xlane.f32.xlu0 %v4344
          %v4346 = vpop.xlane.xlu0 %4345
          %v4347 = vsel %vm2328, %v4287, -inf
          %4348 = vmax.xlane.f32.xlu0 %v4347
          %v4349 = vpop.xlane.xlu0 %4348
          %v4350 = vsub.f32 %v4047, %v4292
          %v4351 = vsub.f32 %v4052, %v4295
          %v4352 = vsub.f32 %v4057, %v4298
          %v4353 = vsub.f32 %v4062, %v4301
          %v4354 = vsub.f32 %v4067, %v4304
          %v4355 = vsub.f32 %v4072, %v4307
          %v4356 = vsub.f32 %v4077, %v4310
          %v4357 = vsub.f32 %v4082, %v4313
          %v4358 = vsub.f32 %v4087, %v4316
          %v4359 = vsub.f32 %v4092, %v4319
          %v4360 = vsub.f32 %v4242, %v4322
          %v4361 = vsub.f32 %v4247, %v4325
          %v4362 = vsub.f32 %v4252, %v4328
          %v4363 = vsub.f32 %v4257, %v4331
          %v4364 = vsub.f32 %v4262, %v4334
          %v4365 = vsub.f32 %v4267, %v4337
          %v4366 = vsub.f32 %v4272, %v4340
          %v4367 = vsub.f32 %v4277, %v4343
          %v4368 = vsub.f32 %v4282, %v4346
          %v4369 = vsub.f32 %v4287, %v4349
          %v4370 = vmul.f32 %v4350, 1.442695
          %v4371 = vpow.pop %v4370
          %v4372 = vmul.f32 %v4351, 1.442695
          %v4373 = vpow.pop %v4372
          %v4374 = vmul.f32 %v4352, 1.442695
          %v4375 = vpow.pop %v4374
          %v4376 = vmul.f32 %v4353, 1.442695
          %v4377 = vpow.pop %v4376
          %v4378 = vmul.f32 %v4354, 1.442695
          %v4379 = vpow.pop %v4378
          %v4380 = vmul.f32 %v4355, 1.442695
          %v4381 = vpow.pop %v4380
          %v4382 = vmul.f32 %v4356, 1.442695
          %v4383 = vpow.pop %v4382
          %v4384 = vmul.f32 %v4357, 1.442695
          %v4385 = vpow.pop %v4384
          %v4386 = vmul.f32 %v4358, 1.442695
          %v4387 = vpow.pop %v4386
          %v4388 = vmul.f32 %v4359, 1.442695
          %v4389 = vpow.pop %v4388
          %v4390 = vmul.f32 %v4360, 1.442695
          %v4391 = vpow.pop %v4390
          %v4392 = vmul.f32 %v4361, 1.442695
          %v4393 = vpow.pop %v4392
          %v4394 = vmul.f32 %v4362, 1.442695
          %v4395 = vpow.pop %v4394
          %v4396 = vmul.f32 %v4363, 1.442695
          %v4397 = vpow.pop %v4396
          %v4398 = vmul.f32 %v4364, 1.442695
          %v4399 = vpow.pop %v4398
          %v4400 = vmul.f32 %v4365, 1.442695
          %v4401 = vpow.pop %v4400
          %v4402 = vmul.f32 %v4366, 1.442695
          %v4403 = vpow.pop %v4402
          %v4404 = vmul.f32 %v4367, 1.442695
          %v4405 = vpow.pop %v4404
          %v4406 = vmul.f32 %v4368, 1.442695
          %v4407 = vpow.pop %v4406
          %v4408 = vmul.f32 %v4369, 1.442695
          %v4409 = vpow.pop %v4408
          %v4410 = vsel %vm2328, %v4371, 0.0
          %4411 = vadd.xlane.f32.xlu0 %v4410
          %v4412 = vpop.xlane.xlu0 %4411
          %v4413 = vsel %vm2328, %v4373, 0.0
          %4414 = vadd.xlane.f32.xlu0 %v4413
          %v4415 = vpop.xlane.xlu0 %4414
          %v4416 = vsel %vm2328, %v4375, 0.0
          %4417 = vadd.xlane.f32.xlu0 %v4416
          %v4418 = vpop.xlane.xlu0 %4417
          %v4419 = vsel %vm2328, %v4377, 0.0
          %4420 = vadd.xlane.f32.xlu0 %v4419
          %v4421 = vpop.xlane.xlu0 %4420
          %v4422 = vsel %vm2328, %v4379, 0.0
          %4423 = vadd.xlane.f32.xlu0 %v4422
          %v4424 = vpop.xlane.xlu0 %4423
          %v4425 = vsel %vm2328, %v4381, 0.0
          %4426 = vadd.xlane.f32.xlu0 %v4425
          %v4427 = vpop.xlane.xlu0 %4426
          %v4428 = vsel %vm2328, %v4383, 0.0
          %4429 = vadd.xlane.f32.xlu0 %v4428
          %v4430 = vpop.xlane.xlu0 %4429
          %v4431 = vsel %vm2328, %v4385, 0.0
          %4432 = vadd.xlane.f32.xlu0 %v4431
          %v4433 = vpop.xlane.xlu0 %4432
          %v4434 = vsel %vm2328, %v4387, 0.0
          %4435 = vadd.xlane.f32.xlu0 %v4434
          %v4436 = vpop.xlane.xlu0 %4435
          %v4437 = vsel %vm2328, %v4389, 0.0
          %4438 = vadd.xlane.f32.xlu0 %v4437
          %v4439 = vpop.xlane.xlu0 %4438
          %v4440 = vsel %vm2328, %v4391, 0.0
          %4441 = vadd.xlane.f32.xlu0 %v4440
          %v4442 = vpop.xlane.xlu0 %4441
          %v4443 = vsel %vm2328, %v4393, 0.0
          %4444 = vadd.xlane.f32.xlu0 %v4443
          %v4445 = vpop.xlane.xlu0 %4444
          %v4446 = vsel %vm2328, %v4395, 0.0
          %4447 = vadd.xlane.f32.xlu0 %v4446
          %v4448 = vpop.xlane.xlu0 %4447
          %v4449 = vsel %vm2328, %v4397, 0.0
          %4450 = vadd.xlane.f32.xlu0 %v4449
          %v4451 = vpop.xlane.xlu0 %4450
          %v4452 = vsel %vm2328, %v4399, 0.0
          %4453 = vadd.xlane.f32.xlu0 %v4452
          %v4454 = vpop.xlane.xlu0 %4453
          %v4455 = vsel %vm2328, %v4401, 0.0
          %4456 = vadd.xlane.f32.xlu0 %v4455
          %v4457 = vpop.xlane.xlu0 %4456
          %v4458 = vsel %vm2328, %v4403, 0.0
          %4459 = vadd.xlane.f32.xlu0 %v4458
          %v4460 = vpop.xlane.xlu0 %4459
          %v4461 = vsel %vm2328, %v4405, 0.0
          %4462 = vadd.xlane.f32.xlu0 %v4461
          %v4463 = vpop.xlane.xlu0 %4462
          %v4464 = vsel %vm2328, %v4407, 0.0
          %4465 = vadd.xlane.f32.xlu0 %v4464
          %v4466 = vpop.xlane.xlu0 %4465
          %v4467 = vsel %vm2328, %v4409, 0.0
          %4468 = vadd.xlane.f32.xlu0 %v4467
          %v4469 = vpop.xlane.xlu0 %4468
          %v4470 = vrcp.pop %v4412
          %v4471 = vrcp.pop %v4415
          %v4472 = vrcp.pop %v4418
          %v4473 = vrcp.pop %v4421
          %v4474 = vrcp.pop %v4424
          %v4475 = vrcp.pop %v4427
          %v4476 = vrcp.pop %v4430
          %v4477 = vrcp.pop %v4433
          %v4478 = vrcp.pop %v4436
          %v4479 = vrcp.pop %v4439
          %v4480 = vrcp.pop %v4442
          %v4481 = vrcp.pop %v4445
          %v4482 = vrcp.pop %v4448
          %v4483 = vrcp.pop %v4451
          %v4484 = vrcp.pop %v4454
          %v4485 = vrcp.pop %v4457
          %v4486 = vrcp.pop %v4460
          %v4487 = vrcp.pop %v4463
          %v4488 = vrcp.pop %v4466
          %v4489 = vrcp.pop %v4469
          %v4490 = vmul.f32 %v4371, %v4470
          %v4491 = vmul.f32 %v4373, %v4471
          %v4492 = vmul.f32 %v4375, %v4472
          %v4493 = vmul.f32 %v4377, %v4473
          %v4494 = vmul.f32 %v4379, %v4474
          %v4495 = vmul.f32 %v4381, %v4475
          %v4496 = vmul.f32 %v4383, %v4476
          %v4497 = vmul.f32 %v4385, %v4477
          %v4498 = vmul.f32 %v4387, %v4478
          %v4499 = vmul.f32 %v4389, %v4479
          %v4500 = vmul.f32 %v4391, %v4480
          %v4501 = vmul.f32 %v4393, %v4481
          %v4502 = vmul.f32 %v4395, %v4482
          %v4503 = vmul.f32 %v4397, %v4483
          %v4504 = vmul.f32 %v4399, %v4484
          %v4505 = vmul.f32 %v4401, %v4485
          %v4506 = vmul.f32 %v4403, %v4486
          %v4507 = vmul.f32 %v4405, %v4487
          %v4508 = vmul.f32 %v4407, %v4488
          %v4509 = vmul.f32 %v4409, %v4489
          %4510 = vrot.lane.b32.xlu0 %v1947, 64
          %v4511 = vpop.permute.xlu0 %4510
          %4512 = vrot.lane.b32.xlu0 %v1948, 64
          %v4513 = vpop.permute.xlu0 %4512
          %4514 = vrot.lane.b32.xlu0 %v1949, 64
          %v4515 = vpop.permute.xlu0 %4514
          %4516 = vrot.lane.b32.xlu0 %v1950, 64
          %v4517 = vpop.permute.xlu0 %4516
          %4518 = vrot.lane.b32.xlu0 %v1951, 64
          %v4519 = vpop.permute.xlu0 %4518
          %4520 = vrot.lane.b32.xlu0 %v1952, 64
          %v4521 = vpop.permute.xlu0 %4520
          %4522 = vrot.lane.b32.xlu0 %v1953, 64
          %v4523 = vpop.permute.xlu0 %4522
          %4524 = vrot.lane.b32.xlu0 %v1954, 64
          %v4525 = vpop.permute.xlu0 %4524
          %4526 = vrot.lane.b32.xlu0 %v1955, 64
          %v4527 = vpop.permute.xlu0 %4526
          %4528 = vrot.lane.b32.xlu0 %v1956, 64
          %v4529 = vpop.permute.xlu0 %4528
          %v4541 = vsel %vm2328, %v4490, 0
          %v4544 = vsel %vm2328, %v4491, 0
          %v4547 = vsel %vm2328, %v4492, 0
          %v4550 = vsel %vm2328, %v4493, 0
          %v4553 = vsel %vm2328, %v4494, 0
          %v4556 = vsel %vm2328, %v4495, 0
          %v4559 = vsel %vm2328, %v4496, 0
          %v4562 = vsel %vm2328, %v4497, 0
          %v4565 = vsel %vm2328, %v4498, 0
          %v4568 = vsel %vm2328, %v4499, 0
          %4570 = vmatprep.subr.mxu0 0.0
          %4571 = vmatpush1.msra.mxu0 %v4511
          %4572 = vmatprep.subr.mxu0 0.0
          %4573 = vmatpush1.msra.mxu0 %v4513
          %4574 = vmatprep.subr.mxu0 0.0
          %4575 = vmatpush1.msra.mxu0 %v4515
          %4576 = vmatprep.subr.mxu0 0.0
          %4577 = vmatpush1.msra.mxu0 %v4517
          %4578 = vmatprep.subr.mxu0 0.0
          %4579 = vmatpush1.msra.mxu0 %v4519
          %4580 = vmatprep.subr.mxu0 0.0
          %4581 = vmatpush1.msra.mxu0 %v4521
          %4582 = vmatprep.subr.mxu0 0.0
          %4583 = vmatpush1.msra.mxu0 %v4523
          %4584 = vmatprep.subr.mxu0 0.0
          %4585 = vmatpush1.msra.mxu0 %v4525
          %4586 = vmatprep.subr.mxu0 0.0
          %4587 = vmatpush1.msra.mxu0 %v4527
          %4588 = vmatprep.subr.mxu0 0.0
          %4589 = vmatpush1.msra.mxu0 %v4529
          %4590 = vmatprep.subr.mxu0 0.0
          %4591 = vmatpush1.msra.mxu0 0.0
          %4592 = vmatprep.subr.mxu0 0.0
          %4593 = vmatpush1.msra.mxu0 0.0
          %4594 = vmatprep.subr.mxu0 0.0
          %4595 = vmatpush1.msra.mxu0 0.0
          %4596 = vmatprep.subr.mxu0 0.0
          %4597 = vmatpush1.msra.mxu0 0.0
          %4598 = vmatprep.subr.mxu0 0.0
          %4599 = vmatpush1.msra.mxu0 0.0
          %4600 = vmatprep.subr.mxu0 0.0
          %4601 = vmatpush1.msra.mxu0 0.0
          %4602 = vmatprep.subr.mxu0 0.0
          %4603 = vmatpush1.msra.mxu0 0.0
          %4604 = vmatprep.subr.mxu0 0.0
          %4605 = vmatpush1.msra.mxu0 0.0
          %4606 = vmatprep.subr.mxu0 0.0
          %4607 = vmatpush1.msra.mxu0 0.0
          %4608 = vmatprep.subr.mxu0 0.0
          %4609 = vmatpush1.msra.mxu0 0.0
          %4610 = vmatprep.subr.mxu0 0.0
          %4611 = vmatpush1.msra.mxu0 0.0
          %4612 = vmatprep.subr.mxu0 0.0
          %4613 = vmatpush1.msra.mxu0 0.0
          %4614 = vmatprep.subr.mxu0 0.0
          %4615 = vmatpush1.msra.mxu0 0.0
          %4616 = vmatprep.subr.mxu0 0.0
          %4617 = vmatpush1.msra.mxu0 0.0
          %4618 = vmatprep.subr.mxu0 0.0
          %4619 = vmatpush1.msra.mxu0 0.0
          %4620 = vmatprep.subr.mxu0 0.0
          %4621 = vmatpush1.msra.mxu0 0.0
          %4622 = vmatprep.subr.mxu0 0.0
          %4623 = vmatpush1.msra.mxu0 0.0
          %4624 = vmatprep.subr.mxu0 0.0
          %4625 = vmatpush1.msra.mxu0 0.0
          %4626 = vmatprep.subr.mxu0 0.0
          %4627 = vmatpush1.msra.mxu0 0.0
          %4628 = vmatprep.subr.mxu0 0.0
          %4629 = vmatpush1.msra.mxu0 0.0
          %4630 = vmatprep.subr.mxu0 0.0
          %4631 = vmatpush1.msra.mxu0 0.0
          %4632 = vmatprep.subr.mxu0 0.0
          %4633 = vmatpush1.msra.mxu0 0.0
          %4634 = vmatprep.mubr.f32.mxu0 0.0
          %4635 = vmatmul.mubr.f32.gmra.mrb[0].mxu0 %v4541
          %v4636 = vpop.f32.mrb[0].mxu0
          %v4637 = vadd.f32 0.0, %v4636
          %v4638 = vpop.f32.mrb[0].mxu0
          %4639 = vmatprep.mubr.f32.mxu0 0.0
          %4640 = vmatmul.mubr.f32.gmra.mrb[0].mxu0 %v4544
          %v4641 = vpop.f32.mrb[0].mxu0
          %v4642 = vadd.f32 0.0, %v4641
          %v4643 = vpop.f32.mrb[0].mxu0
          %4644 = vmatprep.mubr.f32.mxu0 0.0
          %4645 = vmatmul.mubr.f32.gmra.mrb[0].mxu0 %v4547
          %v4646 = vpop.f32.mrb[0].mxu0
          %v4647 = vadd.f32 0.0, %v4646
          %v4648 = vpop.f32.mrb[0].mxu0
          %4649 = vmatprep.mubr.f32.mxu0 0.0
          %4650 = vmatmul.mubr.f32.gmra.mrb[0].mxu0 %v4550
          %v4651 = vpop.f32.mrb[0].mxu0
          %v4652 = vadd.f32 0.0, %v4651
          %v4653 = vpop.f32.mrb[0].mxu0
          %4654 = vmatprep.mubr.f32.mxu0 0.0
          %4655 = vmatmul.mubr.f32.gmra.mrb[0].mxu0 %v4553
          %v4656 = vpop.f32.mrb[0].mxu0
          %v4657 = vadd.f32 0.0, %v4656
          %v4658 = vpop.f32.mrb[0].mxu0
          %4659 = vmatprep.mubr.f32.mxu0 0.0
          %4660 = vmatmul.mubr.f32.gmra.mrb[0].mxu0 %v4556
          %v4661 = vpop.f32.mrb[0].mxu0
          %v4662 = vadd.f32 0.0, %v4661
          %v4663 = vpop.f32.mrb[0].mxu0
          %4664 = vmatprep.mubr.f32.mxu0 0.0
          %4665 = vmatmul.mubr.f32.gmra.mrb[0].mxu0 %v4559
          %v4666 = vpop.f32.mrb[0].mxu0
          %v4667 = vadd.f32 0.0, %v4666
          %v4668 = vpop.f32.mrb[0].mxu0
          %4669 = vmatprep.mubr.f32.mxu0 0.0
          %4670 = vmatmul.mubr.f32.gmra.mrb[0].mxu0 %v4562
          %v4671 = vpop.f32.mrb[0].mxu0
          %v4672 = vadd.f32 0.0, %v4671
          %v4673 = vpop.f32.mrb[0].mxu0
          %4674 = vmatprep.mubr.f32.mxu0 0.0
          %4675 = vmatmul.mubr.f32.gmra.mrb[0].mxu0 %v4565
          %v4676 = vpop.f32.mrb[0].mxu0
          %v4677 = vadd.f32 0.0, %v4676
          %v4678 = vpop.f32.mrb[0].mxu0
          %4679 = vmatprep.mubr.f32.mxu0 0.0
          %4680 = vmatmul.mubr.f32.gmra.mrb[0].mxu0 %v4568
          %v4681 = vpop.f32.mrb[0].mxu0
          %v4682 = vadd.f32 0.0, %v4681
          %v4683 = vpop.f32.mrb[0].mxu0
          %4684 = vdwg.mxu0
          %4685 = vrot.lane.b32.xlu0 %v1957, 64
          %v4686 = vpop.permute.xlu0 %4685
          %4687 = vrot.lane.b32.xlu0 %v1958, 64
          %v4688 = vpop.permute.xlu0 %4687
          %4689 = vrot.lane.b32.xlu0 %v1959, 64
          %v4690 = vpop.permute.xlu0 %4689
          %4691 = vrot.lane.b32.xlu0 %v1960, 64
          %v4692 = vpop.permute.xlu0 %4691
          %4693 = vrot.lane.b32.xlu0 %v1961, 64
          %v4694 = vpop.permute.xlu0 %4693
          %4695 = vrot.lane.b32.xlu0 %v1962, 64
          %v4696 = vpop.permute.xlu0 %4695
          %4697 = vrot.lane.b32.xlu0 %v1963, 64
          %v4698 = vpop.permute.xlu0 %4697
          %4699 = vrot.lane.b32.xlu0 %v1964, 64
          %v4700 = vpop.permute.xlu0 %4699
          %4701 = vrot.lane.b32.xlu0 %v1965, 64
          %v4702 = vpop.permute.xlu0 %4701
          %4703 = vrot.lane.b32.xlu0 %v1966, 64
          %v4704 = vpop.permute.xlu0 %4703
          %v4716 = vsel %vm2328, %v4500, 0
          %v4719 = vsel %vm2328, %v4501, 0
          %v4722 = vsel %vm2328, %v4502, 0
          %v4725 = vsel %vm2328, %v4503, 0
          %v4728 = vsel %vm2328, %v4504, 0
          %v4731 = vsel %vm2328, %v4505, 0
          %v4734 = vsel %vm2328, %v4506, 0
          %v4737 = vsel %vm2328, %v4507, 0
          %v4740 = vsel %vm2328, %v4508, 0
          %v4743 = vsel %vm2328, %v4509, 0
          %4745 = vmatprep.subr.mxu0 0.0
          %4746 = vmatpush1.msra.mxu0 %v4686
          %4747 = vmatprep.subr.mxu0 0.0
          %4748 = vmatpush1.msra.mxu0 %v4688
          %4749 = vmatprep.subr.mxu0 0.0
          %4750 = vmatpush1.msra.mxu0 %v4690
          %4751 = vmatprep.subr.mxu0 0.0
          %4752 = vmatpush1.msra.mxu0 %v4692
          %4753 = vmatprep.subr.mxu0 0.0
          %4754 = vmatpush1.msra.mxu0 %v4694
          %4755 = vmatprep.subr.mxu0 0.0
          %4756 = vmatpush1.msra.mxu0 %v4696
          %4757 = vmatprep.subr.mxu0 0.0
          %4758 = vmatpush1.msra.mxu0 %v4698
          %4759 = vmatprep.subr.mxu0 0.0
          %4760 = vmatpush1.msra.mxu0 %v4700
          %4761 = vmatprep.subr.mxu0 0.0
          %4762 = vmatpush1.msra.mxu0 %v4702
          %4763 = vmatprep.subr.mxu0 0.0
          %4764 = vmatpush1.msra.mxu0 %v4704
          %4765 = vmatprep.subr.mxu0 0.0
          %4766 = vmatpush1.msra.mxu0 0.0
          %4767 = vmatprep.subr.mxu0 0.0
          %4768 = vmatpush1.msra.mxu0 0.0
          %4769 = vmatprep.subr.mxu0 0.0
          %4770 = vmatpush1.msra.mxu0 0.0
          %4771 = vmatprep.subr.mxu0 0.0
          %4772 = vmatpush1.msra.mxu0 0.0
          %4773 = vmatprep.subr.mxu0 0.0
          %4774 = vmatpush1.msra.mxu0 0.0
          %4775 = vmatprep.subr.mxu0 0.0
          %4776 = vmatpush1.msra.mxu0 0.0
          %4777 = vmatprep.subr.mxu0 0.0
          %4778 = vmatpush1.msra.mxu0 0.0
          %4779 = vmatprep.subr.mxu0 0.0
          %4780 = vmatpush1.msra.mxu0 0.0
          %4781 = vmatprep.subr.mxu0 0.0
          %4782 = vmatpush1.msra.mxu0 0.0
          %4783 = vmatprep.subr.mxu0 0.0
          %4784 = vmatpush1.msra.mxu0 0.0
          %4785 = vmatprep.subr.mxu0 0.0
          %4786 = vmatpush1.msra.mxu0 0.0
          %4787 = vmatprep.subr.mxu0 0.0
          %4788 = vmatpush1.msra.mxu0 0.0
          %4789 = vmatprep.subr.mxu0 0.0
          %4790 = vmatpush1.msra.mxu0 0.0
          %4791 = vmatprep.subr.mxu0 0.0
          %4792 = vmatpush1.msra.mxu0 0.0
          %4793 = vmatprep.subr.mxu0 0.0
          %4794 = vmatpush1.msra.mxu0 0.0
          %4795 = vmatprep.subr.mxu0 0.0
          %4796 = vmatpush1.msra.mxu0 0.0
          %4797 = vmatprep.subr.mxu0 0.0
          %4798 = vmatpush1.msra.mxu0 0.0
          %4799 = vmatprep.subr.mxu0 0.0
          %4800 = vmatpush1.msra.mxu0 0.0
          %4801 = vmatprep.subr.mxu0 0.0
          %4802 = vmatpush1.msra.mxu0 0.0
          %4803 = vmatprep.subr.mxu0 0.0
          %4804 = vmatpush1.msra.mxu0 0.0
          %4805 = vmatprep.subr.mxu0 0.0
          %4806 = vmatpush1.msra.mxu0 0.0
          %4807 = vmatprep.subr.mxu0 0.0
          %4808 = vmatpush1.msra.mxu0 0.0
          %4809 = vmatprep.mubr.f32.mxu0 0.0
          %4810 = vmatmul.mubr.f32.gmra.mrb[0].mxu0 %v4716
          %v4811 = vpop.f32.mrb[0].mxu0
          %v4812 = vadd.f32 0.0, %v4811
          %v4813 = vpop.f32.mrb[0].mxu0
          %4814 = vmatprep.mubr.f32.mxu0 0.0
          %4815 = vmatmul.mubr.f32.gmra.mrb[0].mxu0 %v4719
          %v4816 = vpop.f32.mrb[0].mxu0
          %v4817 = vadd.f32 0.0, %v4816
          %v4818 = vpop.f32.mrb[0].mxu0
          %4819 = vmatprep.mubr.f32.mxu0 0.0
          %4820 = vmatmul.mubr.f32.gmra.mrb[0].mxu0 %v4722
          %v4821 = vpop.f32.mrb[0].mxu0
          %v4822 = vadd.f32 0.0, %v4821
          %v4823 = vpop.f32.mrb[0].mxu0
          %4824 = vmatprep.mubr.f32.mxu0 0.0
          %4825 = vmatmul.mubr.f32.gmra.mrb[0].mxu0 %v4725
          %v4826 = vpop.f32.mrb[0].mxu0
          %v4827 = vadd.f32 0.0, %v4826
          %v4828 = vpop.f32.mrb[0].mxu0
          %4829 = vmatprep.mubr.f32.mxu0 0.0
          %4830 = vmatmul.mubr.f32.gmra.mrb[0].mxu0 %v4728
          %v4831 = vpop.f32.mrb[0].mxu0
          %v4832 = vadd.f32 0.0, %v4831
          %v4833 = vpop.f32.mrb[0].mxu0
          %4834 = vmatprep.mubr.f32.mxu0 0.0
          %4835 = vmatmul.mubr.f32.gmra.mrb[0].mxu0 %v4731
          %v4836 = vpop.f32.mrb[0].mxu0
          %v4837 = vadd.f32 0.0, %v4836
          %v4838 = vpop.f32.mrb[0].mxu0
          %4839 = vmatprep.mubr.f32.mxu0 0.0
          %4840 = vmatmul.mubr.f32.gmra.mrb[0].mxu0 %v4734
          %v4841 = vpop.f32.mrb[0].mxu0
          %v4842 = vadd.f32 0.0, %v4841
          %v4843 = vpop.f32.mrb[0].mxu0
          %4844 = vmatprep.mubr.f32.mxu0 0.0
          %4845 = vmatmul.mubr.f32.gmra.mrb[0].mxu0 %v4737
          %v4846 = vpop.f32.mrb[0].mxu0
          %v4847 = vadd.f32 0.0, %v4846
          %v4848 = vpop.f32.mrb[0].mxu0
          %4849 = vmatprep.mubr.f32.mxu0 0.0
          %4850 = vmatmul.mubr.f32.gmra.mrb[0].mxu0 %v4740
          %v4851 = vpop.f32.mrb[0].mxu0
          %v4852 = vadd.f32 0.0, %v4851
          %v4853 = vpop.f32.mrb[0].mxu0
          %4854 = vmatprep.mubr.f32.mxu0 0.0
          %4855 = vmatmul.mubr.f32.gmra.mrb[0].mxu0 %v4743
          %v4856 = vpop.f32.mrb[0].mxu0
          %v4857 = vadd.f32 0.0, %v4856
          %v4858 = vpop.f32.mrb[0].mxu0
          %4859 = vdwg.mxu0
          %v4860 = vpack.c.bf16 %v4642, %v4637
          %v4861 = vpack.c.bf16 %v4652, %v4647
          %v4862 = vpack.c.bf16 %v4662, %v4657
          %v4863 = vpack.c.bf16 %v4672, %v4667
          %v4864 = vpack.c.bf16 %v4682, %v4677
          %v4865 = vpack.c.bf16 %v4817, %v4812
          %v4866 = vpack.c.bf16 %v4827, %v4822
          %v4867 = vpack.c.bf16 %v4837, %v4832
          %v4868 = vpack.c.bf16 %v4847, %v4842
          %v4869 = vpack.c.bf16 %v4857, %v4852
          %4880 = vrot.lane.b32.xlu0 %v4860, 64
          %v4881 = vpop.permute.xlu0 %4880
          %4882 = vrot.lane.b32.xlu0 %v4861, 64
          %v4883 = vpop.permute.xlu0 %4882
          %4884 = vrot.lane.b32.xlu0 %v4862, 64
          %v4885 = vpop.permute.xlu0 %4884
          %4886 = vrot.lane.b32.xlu0 %v4863, 64
          %v4887 = vpop.permute.xlu0 %4886
          %4888 = vrot.lane.b32.xlu0 %v4864, 64
          %v4889 = vpop.permute.xlu0 %4888
          %4890 = vrot.lane.b32.xlu0 %v4865, 64
          %v4891 = vpop.permute.xlu0 %4890
          %4892 = vrot.lane.b32.xlu0 %v4866, 64
          %v4893 = vpop.permute.xlu0 %4892
          %4894 = vrot.lane.b32.xlu0 %v4867, 64
          %v4895 = vpop.permute.xlu0 %4894
          %4896 = vrot.lane.b32.xlu0 %v4868, 64
          %v4897 = vpop.permute.xlu0 %4896
          %4898 = vrot.lane.b32.xlu0 %v4869, 64
          %v4899 = vpop.permute.xlu0 %4898
          %vm4910 = vcmask 785920
          %4911 = vst.msk [vmem:[#allocation4] sm:$0xff] %vm4910, %v4881
          %4912 = vst.msk [vmem:[#allocation4 + $0x8] sm:$0xff] %vm4910, %v4883
          %4913 = vst.msk [vmem:[#allocation4 + $0x10] sm:$0xff] %vm4910, %v4885
          %4914 = vst.msk [vmem:[#allocation4 + $0x18] sm:$0xff] %vm4910, %v4887
          %4915 = vst.msk [vmem:[#allocation4 + $0x20] sm:$0xff] %vm4910, %v4889
          %4916 = vst.msk [vmem:[#allocation4 + $0x28] sm:$0xff] %vm4910, %v4891
          %4917 = vst.msk [vmem:[#allocation4 + $0x30] sm:$0xff] %vm4910, %v4893
          %4918 = vst.msk [vmem:[#allocation4 + $0x38] sm:$0xff] %vm4910, %v4895
          %4919 = vst.msk [vmem:[#allocation4 + $0x40] sm:$0xff] %vm4910, %v4897
          %4920 = vst.msk [vmem:[#allocation4 + $0x48] sm:$0xff] %vm4910, %v4899
          %4921 = vrot.lane.b32.xlu0 %v1589, 32
          %v4922 = vpop.permute.xlu0 %4921
          %4923 = vrot.lane.b32.xlu0 %v1590, 32
          %v4924 = vpop.permute.xlu0 %4923
          %4925 = vrot.lane.b32.xlu0 %v1591, 32
          %v4926 = vpop.permute.xlu0 %4925
          %4927 = vrot.lane.b32.xlu0 %v1592, 32
          %v4928 = vpop.permute.xlu0 %4927
          %4929 = vrot.lane.b32.xlu0 %v1593, 32
          %v4930 = vpop.permute.xlu0 %4929
          %4931 = vrot.lane.b32.xlu0 %v1594, 32
          %v4932 = vpop.permute.xlu0 %4931
          %4933 = vrot.lane.b32.xlu0 %v1595, 32
          %v4934 = vpop.permute.xlu0 %4933
          %4935 = vrot.lane.b32.xlu0 %v1596, 32
          %v4936 = vpop.permute.xlu0 %4935
          %4937 = vrot.lane.b32.xlu0 %v1597, 32
          %v4938 = vpop.permute.xlu0 %4937
          %4939 = vrot.lane.b32.xlu0 %v1598, 32
          %v4940 = vpop.permute.xlu0 %4939
          %4941 = vrot.lane.b32.xlu0 %v1768, 32
          %v4942 = vpop.permute.xlu0 %4941
          %4943 = vrot.lane.b32.xlu0 %v1769, 32
          %v4944 = vpop.permute.xlu0 %4943
          %4945 = vrot.lane.b32.xlu0 %v1770, 32
          %v4946 = vpop.permute.xlu0 %4945
          %4947 = vrot.lane.b32.xlu0 %v1771, 32
          %v4948 = vpop.permute.xlu0 %4947
          %4949 = vrot.lane.b32.xlu0 %v1772, 32
          %v4950 = vpop.permute.xlu0 %4949
          %4951 = vrot.lane.b32.xlu0 %v1773, 32
          %v4952 = vpop.permute.xlu0 %4951
          %4953 = vrot.lane.b32.xlu0 %v1774, 32
          %v4954 = vpop.permute.xlu0 %4953
          %4955 = vrot.lane.b32.xlu0 %v1775, 32
          %v4956 = vpop.permute.xlu0 %4955
          %4957 = vrot.lane.b32.xlu0 %v1776, 32
          %v4958 = vpop.permute.xlu0 %4957
          %4959 = vrot.lane.b32.xlu0 %v1777, 32
          %v4960 = vpop.permute.xlu0 %4959
          %v4961 = vsel %vm1977, %v4922, 0
          %v4963 = vsel %vm1977, %v4924, 0
          %v4965 = vsel %vm1977, %v4926, 0
          %v4967 = vsel %vm1977, %v4928, 0
          %v4969 = vsel %vm1977, %v4930, 0
          %v4971 = vsel %vm1977, %v4932, 0
          %v4973 = vsel %vm1977, %v4934, 0
          %v4975 = vsel %vm1977, %v4936, 0
          %v4977 = vsel %vm1977, %v4938, 0
          %v4979 = vsel %vm1977, %v4940, 0
          %v4981 = vsel %vm1977, %v4942, 0
          %v4983 = vsel %vm1977, %v4944, 0
          %v4985 = vsel %vm1977, %v4946, 0
          %v4987 = vsel %vm1977, %v4948, 0
          %v4989 = vsel %vm1977, %v4950, 0
          %v4991 = vsel %vm1977, %v4952, 0
          %v4993 = vsel %vm1977, %v4954, 0
          %v4995 = vsel %vm1977, %v4956, 0
          %v4997 = vsel %vm1977, %v4958, 0
          %v4999 = vsel %vm1977, %v4960, 0
          %5001 = vmatprep.subr.mxu0 0.0
          %5002 = vmatpush1.xpose.msra.mxu0 %v4981
          %5003 = vmatprep.subr.mxu0 0.0
          %5004 = vmatpush1.xpose.msra.mxu0 %v4983
          %5005 = vmatprep.subr.mxu0 0.0
          %5006 = vmatpush1.xpose.msra.mxu0 %v4985
          %5007 = vmatprep.subr.mxu0 0.0
          %5008 = vmatpush1.xpose.msra.mxu0 %v4987
          %5009 = vmatprep.subr.mxu0 0.0
          %5010 = vmatpush1.xpose.msra.mxu0 %v4989
          %5011 = vmatprep.subr.mxu0 0.0
          %5012 = vmatpush1.xpose.msra.mxu0 %v4991
          %5013 = vmatprep.subr.mxu0 0.0
          %5014 = vmatpush1.xpose.msra.mxu0 %v4993
          %5015 = vmatprep.subr.mxu0 0.0
          %5016 = vmatpush1.xpose.msra.mxu0 %v4995
          %5017 = vmatprep.subr.mxu0 0.0
          %5018 = vmatpush1.xpose.msra.mxu0 %v4997
          %5019 = vmatprep.subr.mxu0 0.0
          %5020 = vmatpush1.xpose.msra.mxu0 %v4999
          %5021 = vmatprep.subr.mxu0 0.0
          %5022 = vmatpush1.xpose.msra.mxu0 0.0
          %5023 = vmatprep.subr.mxu0 0.0
          %5024 = vmatpush1.xpose.msra.mxu0 0.0
          %5025 = vmatprep.subr.mxu0 0.0
          %5026 = vmatpush1.xpose.msra.mxu0 0.0
          %5027 = vmatprep.subr.mxu0 0.0
          %5028 = vmatpush1.xpose.msra.mxu0 0.0
          %5029 = vmatprep.subr.mxu0 0.0
          %5030 = vmatpush1.xpose.msra.mxu0 0.0
          %5031 = vmatprep.subr.mxu0 0.0
          %5032 = vmatpush1.xpose.msra.mxu0 0.0
          %5033 = vmatprep.subr.mxu0 0.0
          %5034 = vmatpush1.xpose.msra.mxu0 0.0
          %5035 = vmatprep.subr.mxu0 0.0
          %5036 = vmatpush1.xpose.msra.mxu0 0.0
          %5037 = vmatprep.subr.mxu0 0.0
          %5038 = vmatpush1.xpose.msra.mxu0 0.0
          %5039 = vmatprep.subr.mxu0 0.0
          %5040 = vmatpush1.xpose.msra.mxu0 0.0
          %5041 = vmatprep.subr.mxu0 0.0
          %5042 = vmatpush1.xpose.msra.mxu0 0.0
          %5043 = vmatprep.subr.mxu0 0.0
          %5044 = vmatpush1.xpose.msra.mxu0 0.0
          %5045 = vmatprep.subr.mxu0 0.0
          %5046 = vmatpush1.xpose.msra.mxu0 0.0
          %5047 = vmatprep.subr.mxu0 0.0
          %5048 = vmatpush1.xpose.msra.mxu0 0.0
          %5049 = vmatprep.subr.mxu0 0.0
          %5050 = vmatpush1.xpose.msra.mxu0 0.0
          %5051 = vmatprep.subr.mxu0 0.0
          %5052 = vmatpush1.xpose.msra.mxu0 0.0
          %5053 = vmatprep.subr.mxu0 0.0
          %5054 = vmatpush1.xpose.msra.mxu0 0.0
          %5055 = vmatprep.subr.mxu0 0.0
          %5056 = vmatpush1.xpose.msra.mxu0 0.0
          %5057 = vmatprep.subr.mxu0 0.0
          %5058 = vmatpush1.xpose.msra.mxu0 0.0
          %5059 = vmatprep.subr.mxu0 0.0
          %5060 = vmatpush1.xpose.msra.mxu0 0.0
          %5061 = vmatprep.subr.mxu0 0.0
          %5062 = vmatpush1.xpose.msra.mxu0 0.0
          %5063 = vmatprep.subr.mxu0 0.0
          %5064 = vmatpush1.xpose.msra.mxu0 0.0
          %5065 = vmatprep.mubr.f32.mxu0 0.0
          %5066 = vmatmul.mubr.f32.gmra.mrb[0].mxu0 %v4961
          %v5067 = vpop.f32.mrb[0].mxu0
          %v5068 = vadd.f32 %v1967, %v5067
          %v5069 = vpop.f32.mrb[0].mxu0
          %5070 = vmatprep.mubr.f32.mxu0 0.0
          %5071 = vmatmul.mubr.f32.gmra.mrb[0].mxu0 %v4963
          %v5072 = vpop.f32.mrb[0].mxu0
          %v5073 = vadd.f32 %v1968, %v5072
          %v5074 = vpop.f32.mrb[0].mxu0
          %5075 = vmatprep.mubr.f32.mxu0 0.0
          %5076 = vmatmul.mubr.f32.gmra.mrb[0].mxu0 %v4965
          %v5077 = vpop.f32.mrb[0].mxu0
          %v5078 = vadd.f32 %v1969, %v5077
          %v5079 = vpop.f32.mrb[0].mxu0
          %5080 = vmatprep.mubr.f32.mxu0 0.0
          %5081 = vmatmul.mubr.f32.gmra.mrb[0].mxu0 %v4967
          %v5082 = vpop.f32.mrb[0].mxu0
          %v5083 = vadd.f32 %v1970, %v5082
          %v5084 = vpop.f32.mrb[0].mxu0
          %5085 = vmatprep.mubr.f32.mxu0 0.0
          %5086 = vmatmul.mubr.f32.gmra.mrb[0].mxu0 %v4969
          %v5087 = vpop.f32.mrb[0].mxu0
          %v5088 = vadd.f32 %v1971, %v5087
          %v5089 = vpop.f32.mrb[0].mxu0
          %5090 = vmatprep.mubr.f32.mxu0 0.0
          %5091 = vmatmul.mubr.f32.gmra.mrb[0].mxu0 %v4971
          %v5092 = vpop.f32.mrb[0].mxu0
          %v5093 = vadd.f32 %v1972, %v5092
          %v5094 = vpop.f32.mrb[0].mxu0
          %5095 = vmatprep.mubr.f32.mxu0 0.0
          %5096 = vmatmul.mubr.f32.gmra.mrb[0].mxu0 %v4973
          %v5097 = vpop.f32.mrb[0].mxu0
          %v5098 = vadd.f32 %v1973, %v5097
          %v5099 = vpop.f32.mrb[0].mxu0
          %5100 = vmatprep.mubr.f32.mxu0 0.0
          %5101 = vmatmul.mubr.f32.gmra.mrb[0].mxu0 %v4975
          %v5102 = vpop.f32.mrb[0].mxu0
          %v5103 = vadd.f32 %v1974, %v5102
          %v5104 = vpop.f32.mrb[0].mxu0
          %5105 = vmatprep.mubr.f32.mxu0 0.0
          %5106 = vmatmul.mubr.f32.gmra.mrb[0].mxu0 %v4977
          %v5107 = vpop.f32.mrb[0].mxu0
          %v5108 = vadd.f32 %v1975, %v5107
          %v5109 = vpop.f32.mrb[0].mxu0
          %5110 = vmatprep.mubr.f32.mxu0 0.0
          %5111 = vmatmul.mubr.f32.gmra.mrb[0].mxu0 %v4979
          %v5112 = vpop.f32.mrb[0].mxu0
          %v5113 = vadd.f32 %v1976, %v5112
          %v5114 = vpop.f32.mrb[0].mxu0
          %5115 = vdwg.mxu0
          %5116 = vrot.lane.b32.xlu0 %v1599, 32
          %v5117 = vpop.permute.xlu0 %5116
          %5118 = vrot.lane.b32.xlu0 %v1600, 32
          %v5119 = vpop.permute.xlu0 %5118
          %5120 = vrot.lane.b32.xlu0 %v1601, 32
          %v5121 = vpop.permute.xlu0 %5120
          %5122 = vrot.lane.b32.xlu0 %v1602, 32
          %v5123 = vpop.permute.xlu0 %5122
          %5124 = vrot.lane.b32.xlu0 %v1603, 32
          %v5125 = vpop.permute.xlu0 %5124
          %5126 = vrot.lane.b32.xlu0 %v1604, 32
          %v5127 = vpop.permute.xlu0 %5126
          %5128 = vrot.lane.b32.xlu0 %v1605, 32
          %v5129 = vpop.permute.xlu0 %5128
          %5130 = vrot.lane.b32.xlu0 %v1606, 32
          %v5131 = vpop.permute.xlu0 %5130
          %5132 = vrot.lane.b32.xlu0 %v1607, 32
          %v5133 = vpop.permute.xlu0 %5132
          %5134 = vrot.lane.b32.xlu0 %v1608, 32
          %v5135 = vpop.permute.xlu0 %5134
          %5136 = vrot.lane.b32.xlu0 %v1778, 32
          %v5137 = vpop.permute.xlu0 %5136
          %5138 = vrot.lane.b32.xlu0 %v1779, 32
          %v5139 = vpop.permute.xlu0 %5138
          %5140 = vrot.lane.b32.xlu0 %v1780, 32
          %v5141 = vpop.permute.xlu0 %5140
          %5142 = vrot.lane.b32.xlu0 %v1781, 32
          %v5143 = vpop.permute.xlu0 %5142
          %5144 = vrot.lane.b32.xlu0 %v1782, 32
          %v5145 = vpop.permute.xlu0 %5144
          %5146 = vrot.lane.b32.xlu0 %v1783, 32
          %v5147 = vpop.permute.xlu0 %5146
          %5148 = vrot.lane.b32.xlu0 %v1784, 32
          %v5149 = vpop.permute.xlu0 %5148
          %5150 = vrot.lane.b32.xlu0 %v1785, 32
          %v5151 = vpop.permute.xlu0 %5150
          %5152 = vrot.lane.b32.xlu0 %v1786, 32
          %v5153 = vpop.permute.xlu0 %5152
          %5154 = vrot.lane.b32.xlu0 %v1787, 32
          %v5155 = vpop.permute.xlu0 %5154
          %v5156 = vsel %vm1977, %v5117, 0
          %v5158 = vsel %vm1977, %v5119, 0
          %v5160 = vsel %vm1977, %v5121, 0
          %v5162 = vsel %vm1977, %v5123, 0
          %v5164 = vsel %vm1977, %v5125, 0
          %v5166 = vsel %vm1977, %v5127, 0
          %v5168 = vsel %vm1977, %v5129, 0
          %v5170 = vsel %vm1977, %v5131, 0
          %v5172 = vsel %vm1977, %v5133, 0
          %v5174 = vsel %vm1977, %v5135, 0
          %v5176 = vsel %vm1977, %v5137, 0
          %v5178 = vsel %vm1977, %v5139, 0
          %v5180 = vsel %vm1977, %v5141, 0
          %v5182 = vsel %vm1977, %v5143, 0
          %v5184 = vsel %vm1977, %v5145, 0
          %v5186 = vsel %vm1977, %v5147, 0
          %v5188 = vsel %vm1977, %v5149, 0
          %v5190 = vsel %vm1977, %v5151, 0
          %v5192 = vsel %vm1977, %v5153, 0
          %v5194 = vsel %vm1977, %v5155, 0
          %5196 = vmatprep.subr.mxu0 0.0
          %5197 = vmatpush1.xpose.msra.mxu0 %v5176
          %5198 = vmatprep.subr.mxu0 0.0
          %5199 = vmatpush1.xpose.msra.mxu0 %v5178
          %5200 = vmatprep.subr.mxu0 0.0
          %5201 = vmatpush1.xpose.msra.mxu0 %v5180
          %5202 = vmatprep.subr.mxu0 0.0
          %5203 = vmatpush1.xpose.msra.mxu0 %v5182
          %5204 = vmatprep.subr.mxu0 0.0
          %5205 = vmatpush1.xpose.msra.mxu0 %v5184
          %5206 = vmatprep.subr.mxu0 0.0
          %5207 = vmatpush1.xpose.msra.mxu0 %v5186
          %5208 = vmatprep.subr.mxu0 0.0
          %5209 = vmatpush1.xpose.msra.mxu0 %v5188
          %5210 = vmatprep.subr.mxu0 0.0
          %5211 = vmatpush1.xpose.msra.mxu0 %v5190
          %5212 = vmatprep.subr.mxu0 0.0
          %5213 = vmatpush1.xpose.msra.mxu0 %v5192
          %5214 = vmatprep.subr.mxu0 0.0
          %5215 = vmatpush1.xpose.msra.mxu0 %v5194
          %5216 = vmatprep.subr.mxu0 0.0
          %5217 = vmatpush1.xpose.msra.mxu0 0.0
          %5218 = vmatprep.subr.mxu0 0.0
          %5219 = vmatpush1.xpose.msra.mxu0 0.0
          %5220 = vmatprep.subr.mxu0 0.0
          %5221 = vmatpush1.xpose.msra.mxu0 0.0
          %5222 = vmatprep.subr.mxu0 0.0
          %5223 = vmatpush1.xpose.msra.mxu0 0.0
          %5224 = vmatprep.subr.mxu0 0.0
          %5225 = vmatpush1.xpose.msra.mxu0 0.0
          %5226 = vmatprep.subr.mxu0 0.0
          %5227 = vmatpush1.xpose.msra.mxu0 0.0
          %5228 = vmatprep.subr.mxu0 0.0
          %5229 = vmatpush1.xpose.msra.mxu0 0.0
          %5230 = vmatprep.subr.mxu0 0.0
          %5231 = vmatpush1.xpose.msra.mxu0 0.0
          %5232 = vmatprep.subr.mxu0 0.0
          %5233 = vmatpush1.xpose.msra.mxu0 0.0
          %5234 = vmatprep.subr.mxu0 0.0
          %5235 = vmatpush1.xpose.msra.mxu0 0.0
          %5236 = vmatprep.subr.mxu0 0.0
          %5237 = vmatpush1.xpose.msra.mxu0 0.0
          %5238 = vmatprep.subr.mxu0 0.0
          %5239 = vmatpush1.xpose.msra.mxu0 0.0
          %5240 = vmatprep.subr.mxu0 0.0
          %5241 = vmatpush1.xpose.msra.mxu0 0.0
          %5242 = vmatprep.subr.mxu0 0.0
          %5243 = vmatpush1.xpose.msra.mxu0 0.0
          %5244 = vmatprep.subr.mxu0 0.0
          %5245 = vmatpush1.xpose.msra.mxu0 0.0
          %5246 = vmatprep.subr.mxu0 0.0
          %5247 = vmatpush1.xpose.msra.mxu0 0.0
          %5248 = vmatprep.subr.mxu0 0.0
          %5249 = vmatpush1.xpose.msra.mxu0 0.0
          %5250 = vmatprep.subr.mxu0 0.0
          %5251 = vmatpush1.xpose.msra.mxu0 0.0
          %5252 = vmatprep.subr.mxu0 0.0
          %5253 = vmatpush1.xpose.msra.mxu0 0.0
          %5254 = vmatprep.subr.mxu0 0.0
          %5255 = vmatpush1.xpose.msra.mxu0 0.0
          %5256 = vmatprep.subr.mxu0 0.0
          %5257 = vmatpush1.xpose.msra.mxu0 0.0
          %5258 = vmatprep.subr.mxu0 0.0
          %5259 = vmatpush1.xpose.msra.mxu0 0.0
          %5260 = vmatprep.mubr.f32.mxu0 0.0
          %5261 = vmatmul.mubr.f32.gmra.mrb[0].mxu0 %v5156
          %v5262 = vpop.f32.mrb[0].mxu0
          %v5263 = vadd.f32 %v1967, %v5262
          %v5264 = vpop.f32.mrb[0].mxu0
          %5265 = vmatprep.mubr.f32.mxu0 0.0
          %5266 = vmatmul.mubr.f32.gmra.mrb[0].mxu0 %v5158
          %v5267 = vpop.f32.mrb[0].mxu0
          %v5268 = vadd.f32 %v1968, %v5267
          %v5269 = vpop.f32.mrb[0].mxu0
          %5270 = vmatprep.mubr.f32.mxu0 0.0
          %5271 = vmatmul.mubr.f32.gmra.mrb[0].mxu0 %v5160
          %v5272 = vpop.f32.mrb[0].mxu0
          %v5273 = vadd.f32 %v1969, %v5272
          %v5274 = vpop.f32.mrb[0].mxu0
          %5275 = vmatprep.mubr.f32.mxu0 0.0
          %5276 = vmatmul.mubr.f32.gmra.mrb[0].mxu0 %v5162
          %v5277 = vpop.f32.mrb[0].mxu0
          %v5278 = vadd.f32 %v1970, %v5277
          %v5279 = vpop.f32.mrb[0].mxu0
          %5280 = vmatprep.mubr.f32.mxu0 0.0
          %5281 = vmatmul.mubr.f32.gmra.mrb[0].mxu0 %v5164
          %v5282 = vpop.f32.mrb[0].mxu0
          %v5283 = vadd.f32 %v1971, %v5282
          %v5284 = vpop.f32.mrb[0].mxu0
          %5285 = vmatprep.mubr.f32.mxu0 0.0
          %5286 = vmatmul.mubr.f32.gmra.mrb[0].mxu0 %v5166
          %v5287 = vpop.f32.mrb[0].mxu0
          %v5288 = vadd.f32 %v1972, %v5287
          %v5289 = vpop.f32.mrb[0].mxu0
          %5290 = vmatprep.mubr.f32.mxu0 0.0
          %5291 = vmatmul.mubr.f32.gmra.mrb[0].mxu0 %v5168
          %v5292 = vpop.f32.mrb[0].mxu0
          %v5293 = vadd.f32 %v1973, %v5292
          %v5294 = vpop.f32.mrb[0].mxu0
          %5295 = vmatprep.mubr.f32.mxu0 0.0
          %5296 = vmatmul.mubr.f32.gmra.mrb[0].mxu0 %v5170
          %v5297 = vpop.f32.mrb[0].mxu0
          %v5298 = vadd.f32 %v1974, %v5297
          %v5299 = vpop.f32.mrb[0].mxu0
          %5300 = vmatprep.mubr.f32.mxu0 0.0
          %5301 = vmatmul.mubr.f32.gmra.mrb[0].mxu0 %v5172
          %v5302 = vpop.f32.mrb[0].mxu0
          %v5303 = vadd.f32 %v1975, %v5302
          %v5304 = vpop.f32.mrb[0].mxu0
          %5305 = vmatprep.mubr.f32.mxu0 0.0
          %5306 = vmatmul.mubr.f32.gmra.mrb[0].mxu0 %v5174
          %v5307 = vpop.f32.mrb[0].mxu0
          %v5308 = vadd.f32 %v1976, %v5307
          %v5309 = vpop.f32.mrb[0].mxu0
          %5310 = vdwg.mxu0
          %v5311 = vsel %vm2328, %v5068, -inf
          %5312 = vmax.xlane.f32.xlu0 %v5311
          %v5313 = vpop.xlane.xlu0 %5312
          %v5314 = vsel %vm2328, %v5073, -inf
          %5315 = vmax.xlane.f32.xlu0 %v5314
          %v5316 = vpop.xlane.xlu0 %5315
          %v5317 = vsel %vm2328, %v5078, -inf
          %5318 = vmax.xlane.f32.xlu0 %v5317
          %v5319 = vpop.xlane.xlu0 %5318
          %v5320 = vsel %vm2328, %v5083, -inf
          %5321 = vmax.xlane.f32.xlu0 %v5320
          %v5322 = vpop.xlane.xlu0 %5321
          %v5323 = vsel %vm2328, %v5088, -inf
          %5324 = vmax.xlane.f32.xlu0 %v5323
          %v5325 = vpop.xlane.xlu0 %5324
          %v5326 = vsel %vm2328, %v5093, -inf
          %5327 = vmax.xlane.f32.xlu0 %v5326
          %v5328 = vpop.xlane.xlu0 %5327
          %v5329 = vsel %vm2328, %v5098, -inf
          %5330 = vmax.xlane.f32.xlu0 %v5329
          %v5331 = vpop.xlane.xlu0 %5330
          %v5332 = vsel %vm2328, %v5103, -inf
          %5333 = vmax.xlane.f32.xlu0 %v5332
          %v5334 = vpop.xlane.xlu0 %5333
          %v5335 = vsel %vm2328, %v5108, -inf
          %5336 = vmax.xlane.f32.xlu0 %v5335
          %v5337 = vpop.xlane.xlu0 %5336
          %v5338 = vsel %vm2328, %v5113, -inf
          %5339 = vmax.xlane.f32.xlu0 %v5338
          %v5340 = vpop.xlane.xlu0 %5339
          %v5341 = vsel %vm2328, %v5263, -inf
          %5342 = vmax.xlane.f32.xlu0 %v5341
          %v5343 = vpop.xlane.xlu0 %5342
          %v5344 = vsel %vm2328, %v5268, -inf
          %5345 = vmax.xlane.f32.xlu0 %v5344
          %v5346 = vpop.xlane.xlu0 %5345
          %v5347 = vsel %vm2328, %v5273, -inf
          %5348 = vmax.xlane.f32.xlu0 %v5347
          %v5349 = vpop.xlane.xlu0 %5348
          %v5350 = vsel %vm2328, %v5278, -inf
          %5351 = vmax.xlane.f32.xlu0 %v5350
          %v5352 = vpop.xlane.xlu0 %5351
          %v5353 = vsel %vm2328, %v5283, -inf
          %5354 = vmax.xlane.f32.xlu0 %v5353
          %v5355 = vpop.xlane.xlu0 %5354
          %v5356 = vsel %vm2328, %v5288, -inf
          %5357 = vmax.xlane.f32.xlu0 %v5356
          %v5358 = vpop.xlane.xlu0 %5357
          %v5359 = vsel %vm2328, %v5293, -inf
          %5360 = vmax.xlane.f32.xlu0 %v5359
          %v5361 = vpop.xlane.xlu0 %5360
          %v5362 = vsel %vm2328, %v5298, -inf
          %5363 = vmax.xlane.f32.xlu0 %v5362
          %v5364 = vpop.xlane.xlu0 %5363
          %v5365 = vsel %vm2328, %v5303, -inf
          %5366 = vmax.xlane.f32.xlu0 %v5365
          %v5367 = vpop.xlane.xlu0 %5366
          %v5368 = vsel %vm2328, %v5308, -inf
          %5369 = vmax.xlane.f32.xlu0 %v5368
          %v5370 = vpop.xlane.xlu0 %5369
          %v5371 = vsub.f32 %v5068, %v5313
          %v5372 = vsub.f32 %v5073, %v5316
          %v5373 = vsub.f32 %v5078, %v5319
          %v5374 = vsub.f32 %v5083, %v5322
          %v5375 = vsub.f32 %v5088, %v5325
          %v5376 = vsub.f32 %v5093, %v5328
          %v5377 = vsub.f32 %v5098, %v5331
          %v5378 = vsub.f32 %v5103, %v5334
          %v5379 = vsub.f32 %v5108, %v5337
          %v5380 = vsub.f32 %v5113, %v5340
          %v5381 = vsub.f32 %v5263, %v5343
          %v5382 = vsub.f32 %v5268, %v5346
          %v5383 = vsub.f32 %v5273, %v5349
          %v5384 = vsub.f32 %v5278, %v5352
          %v5385 = vsub.f32 %v5283, %v5355
          %v5386 = vsub.f32 %v5288, %v5358
          %v5387 = vsub.f32 %v5293, %v5361
          %v5388 = vsub.f32 %v5298, %v5364
          %v5389 = vsub.f32 %v5303, %v5367
          %v5390 = vsub.f32 %v5308, %v5370
          %v5391 = vmul.f32 %v5371, 1.442695
          %v5392 = vpow.pop %v5391
          %v5393 = vmul.f32 %v5372, 1.442695
          %v5394 = vpow.pop %v5393
          %v5395 = vmul.f32 %v5373, 1.442695
          %v5396 = vpow.pop %v5395
          %v5397 = vmul.f32 %v5374, 1.442695
          %v5398 = vpow.pop %v5397
          %v5399 = vmul.f32 %v5375, 1.442695
          %v5400 = vpow.pop %v5399
          %v5401 = vmul.f32 %v5376, 1.442695
          %v5402 = vpow.pop %v5401
          %v5403 = vmul.f32 %v5377, 1.442695
          %v5404 = vpow.pop %v5403
          %v5405 = vmul.f32 %v5378, 1.442695
          %v5406 = vpow.pop %v5405
          %v5407 = vmul.f32 %v5379, 1.442695
          %v5408 = vpow.pop %v5407
          %v5409 = vmul.f32 %v5380, 1.442695
          %v5410 = vpow.pop %v5409
          %v5411 = vmul.f32 %v5381, 1.442695
          %v5412 = vpow.pop %v5411
          %v5413 = vmul.f32 %v5382, 1.442695
          %v5414 = vpow.pop %v5413
          %v5415 = vmul.f32 %v5383, 1.442695
          %v5416 = vpow.pop %v5415
          %v5417 = vmul.f32 %v5384, 1.442695
          %v5418 = vpow.pop %v5417
          %v5419 = vmul.f32 %v5385, 1.442695
          %v5420 = vpow.pop %v5419
          %v5421 = vmul.f32 %v5386, 1.442695
          %v5422 = vpow.pop %v5421
          %v5423 = vmul.f32 %v5387, 1.442695
          %v5424 = vpow.pop %v5423
          %v5425 = vmul.f32 %v5388, 1.442695
          %v5426 = vpow.pop %v5425
          %v5427 = vmul.f32 %v5389, 1.442695
          %v5428 = vpow.pop %v5427
          %v5429 = vmul.f32 %v5390, 1.442695
          %v5430 = vpow.pop %v5429
          %v5431 = vsel %vm2328, %v5392, 0.0
          %5432 = vadd.xlane.f32.xlu0 %v5431
          %v5433 = vpop.xlane.xlu0 %5432
          %v5434 = vsel %vm2328, %v5394, 0.0
          %5435 = vadd.xlane.f32.xlu0 %v5434
          %v5436 = vpop.xlane.xlu0 %5435
          %v5437 = vsel %vm2328, %v5396, 0.0
          %5438 = vadd.xlane.f32.xlu0 %v5437
          %v5439 = vpop.xlane.xlu0 %5438
          %v5440 = vsel %vm2328, %v5398, 0.0
          %5441 = vadd.xlane.f32.xlu0 %v5440
          %v5442 = vpop.xlane.xlu0 %5441
          %v5443 = vsel %vm2328, %v5400, 0.0
          %5444 = vadd.xlane.f32.xlu0 %v5443
          %v5445 = vpop.xlane.xlu0 %5444
          %v5446 = vsel %vm2328, %v5402, 0.0
          %5447 = vadd.xlane.f32.xlu0 %v5446
          %v5448 = vpop.xlane.xlu0 %5447
          %v5449 = vsel %vm2328, %v5404, 0.0
          %5450 = vadd.xlane.f32.xlu0 %v5449
          %v5451 = vpop.xlane.xlu0 %5450
          %v5452 = vsel %vm2328, %v5406, 0.0
          %5453 = vadd.xlane.f32.xlu0 %v5452
          %v5454 = vpop.xlane.xlu0 %5453
          %v5455 = vsel %vm2328, %v5408, 0.0
          %5456 = vadd.xlane.f32.xlu0 %v5455
          %v5457 = vpop.xlane.xlu0 %5456
          %v5458 = vsel %vm2328, %v5410, 0.0
          %5459 = vadd.xlane.f32.xlu0 %v5458
          %v5460 = vpop.xlane.xlu0 %5459
          %v5461 = vsel %vm2328, %v5412, 0.0
          %5462 = vadd.xlane.f32.xlu0 %v5461
          %v5463 = vpop.xlane.xlu0 %5462
          %v5464 = vsel %vm2328, %v5414, 0.0
          %5465 = vadd.xlane.f32.xlu0 %v5464
          %v5466 = vpop.xlane.xlu0 %5465
          %v5467 = vsel %vm2328, %v5416, 0.0
          %5468 = vadd.xlane.f32.xlu0 %v5467
          %v5469 = vpop.xlane.xlu0 %5468
          %v5470 = vsel %vm2328, %v5418, 0.0
          %5471 = vadd.xlane.f32.xlu0 %v5470
          %v5472 = vpop.xlane.xlu0 %5471
          %v5473 = vsel %vm2328, %v5420, 0.0
          %5474 = vadd.xlane.f32.xlu0 %v5473
          %v5475 = vpop.xlane.xlu0 %5474
          %v5476 = vsel %vm2328, %v5422, 0.0
          %5477 = vadd.xlane.f32.xlu0 %v5476
          %v5478 = vpop.xlane.xlu0 %5477
          %v5479 = vsel %vm2328, %v5424, 0.0
          %5480 = vadd.xlane.f32.xlu0 %v5479
          %v5481 = vpop.xlane.xlu0 %5480
          %v5482 = vsel %vm2328, %v5426, 0.0
          %5483 = vadd.xlane.f32.xlu0 %v5482
          %v5484 = vpop.xlane.xlu0 %5483
          %v5485 = vsel %vm2328, %v5428, 0.0
          %5486 = vadd.xlane.f32.xlu0 %v5485
          %v5487 = vpop.xlane.xlu0 %5486
          %v5488 = vsel %vm2328, %v5430, 0.0
          %5489 = vadd.xlane.f32.xlu0 %v5488
          %v5490 = vpop.xlane.xlu0 %5489
          %v5491 = vrcp.pop %v5433
          %v5492 = vrcp.pop %v5436
          %v5493 = vrcp.pop %v5439
          %v5494 = vrcp.pop %v5442
          %v5495 = vrcp.pop %v5445
          %v5496 = vrcp.pop %v5448
          %v5497 = vrcp.pop %v5451
          %v5498 = vrcp.pop %v5454
          %v5499 = vrcp.pop %v5457
          %v5500 = vrcp.pop %v5460
          %v5501 = vrcp.pop %v5463
          %v5502 = vrcp.pop %v5466
          %v5503 = vrcp.pop %v5469
          %v5504 = vrcp.pop %v5472
          %v5505 = vrcp.pop %v5475
          %v5506 = vrcp.pop %v5478
          %v5507 = vrcp.pop %v5481
          %v5508 = vrcp.pop %v5484
          %v5509 = vrcp.pop %v5487
          %v5510 = vrcp.pop %v5490
          %v5511 = vmul.f32 %v5392, %v5491
          %v5512 = vmul.f32 %v5394, %v5492
          %v5513 = vmul.f32 %v5396, %v5493
          %v5514 = vmul.f32 %v5398, %v5494
          %v5515 = vmul.f32 %v5400, %v5495
          %v5516 = vmul.f32 %v5402, %v5496
          %v5517 = vmul.f32 %v5404, %v5497
          %v5518 = vmul.f32 %v5406, %v5498
          %v5519 = vmul.f32 %v5408, %v5499
          %v5520 = vmul.f32 %v5410, %v5500
          %v5521 = vmul.f32 %v5412, %v5501
          %v5522 = vmul.f32 %v5414, %v5502
          %v5523 = vmul.f32 %v5416, %v5503
          %v5524 = vmul.f32 %v5418, %v5504
          %v5525 = vmul.f32 %v5420, %v5505
          %v5526 = vmul.f32 %v5422, %v5506
          %v5527 = vmul.f32 %v5424, %v5507
          %v5528 = vmul.f32 %v5426, %v5508
          %v5529 = vmul.f32 %v5428, %v5509
          %v5530 = vmul.f32 %v5430, %v5510
          %5531 = vrot.lane.b32.xlu0 %v1947, 32
          %v5532 = vpop.permute.xlu0 %5531
          %5533 = vrot.lane.b32.xlu0 %v1948, 32
          %v5534 = vpop.permute.xlu0 %5533
          %5535 = vrot.lane.b32.xlu0 %v1949, 32
          %v5536 = vpop.permute.xlu0 %5535
          %5537 = vrot.lane.b32.xlu0 %v1950, 32
          %v5538 = vpop.permute.xlu0 %5537
          %5539 = vrot.lane.b32.xlu0 %v1951, 32
          %v5540 = vpop.permute.xlu0 %5539
          %5541 = vrot.lane.b32.xlu0 %v1952, 32
          %v5542 = vpop.permute.xlu0 %5541
          %5543 = vrot.lane.b32.xlu0 %v1953, 32
          %v5544 = vpop.permute.xlu0 %5543
          %5545 = vrot.lane.b32.xlu0 %v1954, 32
          %v5546 = vpop.permute.xlu0 %5545
          %5547 = vrot.lane.b32.xlu0 %v1955, 32
          %v5548 = vpop.permute.xlu0 %5547
          %5549 = vrot.lane.b32.xlu0 %v1956, 32
          %v5550 = vpop.permute.xlu0 %5549
          %v5562 = vsel %vm2328, %v5511, 0
          %v5565 = vsel %vm2328, %v5512, 0
          %v5568 = vsel %vm2328, %v5513, 0
          %v5571 = vsel %vm2328, %v5514, 0
          %v5574 = vsel %vm2328, %v5515, 0
          %v5577 = vsel %vm2328, %v5516, 0
          %v5580 = vsel %vm2328, %v5517, 0
          %v5583 = vsel %vm2328, %v5518, 0
          %v5586 = vsel %vm2328, %v5519, 0
          %v5589 = vsel %vm2328, %v5520, 0
          %5591 = vmatprep.subr.mxu0 0.0
          %5592 = vmatpush1.msra.mxu0 %v5532
          %5593 = vmatprep.subr.mxu0 0.0
          %5594 = vmatpush1.msra.mxu0 %v5534
          %5595 = vmatprep.subr.mxu0 0.0
          %5596 = vmatpush1.msra.mxu0 %v5536
          %5597 = vmatprep.subr.mxu0 0.0
          %5598 = vmatpush1.msra.mxu0 %v5538
          %5599 = vmatprep.subr.mxu0 0.0
          %5600 = vmatpush1.msra.mxu0 %v5540
          %5601 = vmatprep.subr.mxu0 0.0
          %5602 = vmatpush1.msra.mxu0 %v5542
          %5603 = vmatprep.subr.mxu0 0.0
          %5604 = vmatpush1.msra.mxu0 %v5544
          %5605 = vmatprep.subr.mxu0 0.0
          %5606 = vmatpush1.msra.mxu0 %v5546
          %5607 = vmatprep.subr.mxu0 0.0
          %5608 = vmatpush1.msra.mxu0 %v5548
          %5609 = vmatprep.subr.mxu0 0.0
          %5610 = vmatpush1.msra.mxu0 %v5550
          %5611 = vmatprep.subr.mxu0 0.0
          %5612 = vmatpush1.msra.mxu0 0.0
          %5613 = vmatprep.subr.mxu0 0.0
          %5614 = vmatpush1.msra.mxu0 0.0
          %5615 = vmatprep.subr.mxu0 0.0
          %5616 = vmatpush1.msra.mxu0 0.0
          %5617 = vmatprep.subr.mxu0 0.0
          %5618 = vmatpush1.msra.mxu0 0.0
          %5619 = vmatprep.subr.mxu0 0.0
          %5620 = vmatpush1.msra.mxu0 0.0
          %5621 = vmatprep.subr.mxu0 0.0
          %5622 = vmatpush1.msra.mxu0 0.0
          %5623 = vmatprep.subr.mxu0 0.0
          %5624 = vmatpush1.msra.mxu0 0.0
          %5625 = vmatprep.subr.mxu0 0.0
          %5626 = vmatpush1.msra.mxu0 0.0
          %5627 = vmatprep.subr.mxu0 0.0
          %5628 = vmatpush1.msra.mxu0 0.0
          %5629 = vmatprep.subr.mxu0 0.0
          %5630 = vmatpush1.msra.mxu0 0.0
          %5631 = vmatprep.subr.mxu0 0.0
          %5632 = vmatpush1.msra.mxu0 0.0
          %5633 = vmatprep.subr.mxu0 0.0
          %5634 = vmatpush1.msra.mxu0 0.0
          %5635 = vmatprep.subr.mxu0 0.0
          %5636 = vmatpush1.msra.mxu0 0.0
          %5637 = vmatprep.subr.mxu0 0.0
          %5638 = vmatpush1.msra.mxu0 0.0
          %5639 = vmatprep.subr.mxu0 0.0
          %5640 = vmatpush1.msra.mxu0 0.0
          %5641 = vmatprep.subr.mxu0 0.0
          %5642 = vmatpush1.msra.mxu0 0.0
          %5643 = vmatprep.subr.mxu0 0.0
          %5644 = vmatpush1.msra.mxu0 0.0
          %5645 = vmatprep.subr.mxu0 0.0
          %5646 = vmatpush1.msra.mxu0 0.0
          %5647 = vmatprep.subr.mxu0 0.0
          %5648 = vmatpush1.msra.mxu0 0.0
          %5649 = vmatprep.subr.mxu0 0.0
          %5650 = vmatpush1.msra.mxu0 0.0
          %5651 = vmatprep.subr.mxu0 0.0
          %5652 = vmatpush1.msra.mxu0 0.0
          %5653 = vmatprep.subr.mxu0 0.0
          %5654 = vmatpush1.msra.mxu0 0.0
          %5655 = vmatprep.mubr.f32.mxu0 0.0
          %5656 = vmatmul.mubr.f32.gmra.mrb[0].mxu0 %v5562
          %v5657 = vpop.f32.mrb[0].mxu0
          %v5658 = vadd.f32 0.0, %v5657
          %v5659 = vpop.f32.mrb[0].mxu0
          %5660 = vmatprep.mubr.f32.mxu0 0.0
          %5661 = vmatmul.mubr.f32.gmra.mrb[0].mxu0 %v5565
          %v5662 = vpop.f32.mrb[0].mxu0
          %v5663 = vadd.f32 0.0, %v5662
          %v5664 = vpop.f32.mrb[0].mxu0
          %5665 = vmatprep.mubr.f32.mxu0 0.0
          %5666 = vmatmul.mubr.f32.gmra.mrb[0].mxu0 %v5568
          %v5667 = vpop.f32.mrb[0].mxu0
          %v5668 = vadd.f32 0.0, %v5667
          %v5669 = vpop.f32.mrb[0].mxu0
          %5670 = vmatprep.mubr.f32.mxu0 0.0
          %5671 = vmatmul.mubr.f32.gmra.mrb[0].mxu0 %v5571
          %v5672 = vpop.f32.mrb[0].mxu0
          %v5673 = vadd.f32 0.0, %v5672
          %v5674 = vpop.f32.mrb[0].mxu0
          %5675 = vmatprep.mubr.f32.mxu0 0.0
          %5676 = vmatmul.mubr.f32.gmra.mrb[0].mxu0 %v5574
          %v5677 = vpop.f32.mrb[0].mxu0
          %v5678 = vadd.f32 0.0, %v5677
          %v5679 = vpop.f32.mrb[0].mxu0
          %5680 = vmatprep.mubr.f32.mxu0 0.0
          %5681 = vmatmul.mubr.f32.gmra.mrb[0].mxu0 %v5577
          %v5682 = vpop.f32.mrb[0].mxu0
          %v5683 = vadd.f32 0.0, %v5682
          %v5684 = vpop.f32.mrb[0].mxu0
          %5685 = vmatprep.mubr.f32.mxu0 0.0
          %5686 = vmatmul.mubr.f32.gmra.mrb[0].mxu0 %v5580
          %v5687 = vpop.f32.mrb[0].mxu0
          %v5688 = vadd.f32 0.0, %v5687
          %v5689 = vpop.f32.mrb[0].mxu0
          %5690 = vmatprep.mubr.f32.mxu0 0.0
          %5691 = vmatmul.mubr.f32.gmra.mrb[0].mxu0 %v5583
          %v5692 = vpop.f32.mrb[0].mxu0
          %v5693 = vadd.f32 0.0, %v5692
          %v5694 = vpop.f32.mrb[0].mxu0
          %5695 = vmatprep.mubr.f32.mxu0 0.0
          %5696 = vmatmul.mubr.f32.gmra.mrb[0].mxu0 %v5586
          %v5697 = vpop.f32.mrb[0].mxu0
          %v5698 = vadd.f32 0.0, %v5697
          %v5699 = vpop.f32.mrb[0].mxu0
          %5700 = vmatprep.mubr.f32.mxu0 0.0
          %5701 = vmatmul.mubr.f32.gmra.mrb[0].mxu0 %v5589
          %v5702 = vpop.f32.mrb[0].mxu0
          %v5703 = vadd.f32 0.0, %v5702
          %v5704 = vpop.f32.mrb[0].mxu0
          %5705 = vdwg.mxu0
          %5706 = vrot.lane.b32.xlu0 %v1957, 32
          %v5707 = vpop.permute.xlu0 %5706
          %5708 = vrot.lane.b32.xlu0 %v1958, 32
          %v5709 = vpop.permute.xlu0 %5708
          %5710 = vrot.lane.b32.xlu0 %v1959, 32
          %v5711 = vpop.permute.xlu0 %5710
          %5712 = vrot.lane.b32.xlu0 %v1960, 32
          %v5713 = vpop.permute.xlu0 %5712
          %5714 = vrot.lane.b32.xlu0 %v1961, 32
          %v5715 = vpop.permute.xlu0 %5714
          %5716 = vrot.lane.b32.xlu0 %v1962, 32
          %v5717 = vpop.permute.xlu0 %5716
          %5718 = vrot.lane.b32.xlu0 %v1963, 32
          %v5719 = vpop.permute.xlu0 %5718
          %5720 = vrot.lane.b32.xlu0 %v1964, 32
          %v5721 = vpop.permute.xlu0 %5720
          %5722 = vrot.lane.b32.xlu0 %v1965, 32
          %v5723 = vpop.permute.xlu0 %5722
          %5724 = vrot.lane.b32.xlu0 %v1966, 32
          %v5725 = vpop.permute.xlu0 %5724
          %v5737 = vsel %vm2328, %v5521, 0
          %v5740 = vsel %vm2328, %v5522, 0
          %v5743 = vsel %vm2328, %v5523, 0
          %v5746 = vsel %vm2328, %v5524, 0
          %v5749 = vsel %vm2328, %v5525, 0
          %v5752 = vsel %vm2328, %v5526, 0
          %v5755 = vsel %vm2328, %v5527, 0
          %v5758 = vsel %vm2328, %v5528, 0
          %v5761 = vsel %vm2328, %v5529, 0
          %v5764 = vsel %vm2328, %v5530, 0
          %5766 = vmatprep.subr.mxu0 0.0
          %5767 = vmatpush1.msra.mxu0 %v5707
          %5768 = vmatprep.subr.mxu0 0.0
          %5769 = vmatpush1.msra.mxu0 %v5709
          %5770 = vmatprep.subr.mxu0 0.0
          %5771 = vmatpush1.msra.mxu0 %v5711
          %5772 = vmatprep.subr.mxu0 0.0
          %5773 = vmatpush1.msra.mxu0 %v5713
          %5774 = vmatprep.subr.mxu0 0.0
          %5775 = vmatpush1.msra.mxu0 %v5715
          %5776 = vmatprep.subr.mxu0 0.0
          %5777 = vmatpush1.msra.mxu0 %v5717
          %5778 = vmatprep.subr.mxu0 0.0
          %5779 = vmatpush1.msra.mxu0 %v5719
          %5780 = vmatprep.subr.mxu0 0.0
          %5781 = vmatpush1.msra.mxu0 %v5721
          %5782 = vmatprep.subr.mxu0 0.0
          %5783 = vmatpush1.msra.mxu0 %v5723
          %5784 = vmatprep.subr.mxu0 0.0
          %5785 = vmatpush1.msra.mxu0 %v5725
          %5786 = vmatprep.subr.mxu0 0.0
          %5787 = vmatpush1.msra.mxu0 0.0
          %5788 = vmatprep.subr.mxu0 0.0
          %5789 = vmatpush1.msra.mxu0 0.0
          %5790 = vmatprep.subr.mxu0 0.0
          %5791 = vmatpush1.msra.mxu0 0.0
          %5792 = vmatprep.subr.mxu0 0.0
          %5793 = vmatpush1.msra.mxu0 0.0
          %5794 = vmatprep.subr.mxu0 0.0
          %5795 = vmatpush1.msra.mxu0 0.0
          %5796 = vmatprep.subr.mxu0 0.0
          %5797 = vmatpush1.msra.mxu0 0.0
          %5798 = vmatprep.subr.mxu0 0.0
          %5799 = vmatpush1.msra.mxu0 0.0
          %5800 = vmatprep.subr.mxu0 0.0
          %5801 = vmatpush1.msra.mxu0 0.0
          %5802 = vmatprep.subr.mxu0 0.0
          %5803 = vmatpush1.msra.mxu0 0.0
          %5804 = vmatprep.subr.mxu0 0.0
          %5805 = vmatpush1.msra.mxu0 0.0
          %5806 = vmatprep.subr.mxu0 0.0
          %5807 = vmatpush1.msra.mxu0 0.0
          %5808 = vmatprep.subr.mxu0 0.0
          %5809 = vmatpush1.msra.mxu0 0.0
          %5810 = vmatprep.subr.mxu0 0.0
          %5811 = vmatpush1.msra.mxu0 0.0
          %5812 = vmatprep.subr.mxu0 0.0
          %5813 = vmatpush1.msra.mxu0 0.0
          %5814 = vmatprep.subr.mxu0 0.0
          %5815 = vmatpush1.msra.mxu0 0.0
          %5816 = vmatprep.subr.mxu0 0.0
          %5817 = vmatpush1.msra.mxu0 0.0
          %5818 = vmatprep.subr.mxu0 0.0
          %5819 = vmatpush1.msra.mxu0 0.0
          %5820 = vmatprep.subr.mxu0 0.0
          %5821 = vmatpush1.msra.mxu0 0.0
          %5822 = vmatprep.subr.mxu0 0.0
          %5823 = vmatpush1.msra.mxu0 0.0
          %5824 = vmatprep.subr.mxu0 0.0
          %5825 = vmatpush1.msra.mxu0 0.0
          %5826 = vmatprep.subr.mxu0 0.0
          %5827 = vmatpush1.msra.mxu0 0.0
          %5828 = vmatprep.subr.mxu0 0.0
          %5829 = vmatpush1.msra.mxu0 0.0
          %5830 = vmatprep.mubr.f32.mxu0 0.0
          %5831 = vmatmul.mubr.f32.gmra.mrb[0].mxu0 %v5737
          %v5832 = vpop.f32.mrb[0].mxu0
          %v5833 = vadd.f32 0.0, %v5832
          %v5834 = vpop.f32.mrb[0].mxu0
          %5835 = vmatprep.mubr.f32.mxu0 0.0
          %5836 = vmatmul.mubr.f32.gmra.mrb[0].mxu0 %v5740
          %v5837 = vpop.f32.mrb[0].mxu0
          %v5838 = vadd.f32 0.0, %v5837
          %v5839 = vpop.f32.mrb[0].mxu0
          %5840 = vmatprep.mubr.f32.mxu0 0.0
          %5841 = vmatmul.mubr.f32.gmra.mrb[0].mxu0 %v5743
          %v5842 = vpop.f32.mrb[0].mxu0
          %v5843 = vadd.f32 0.0, %v5842
          %v5844 = vpop.f32.mrb[0].mxu0
          %5845 = vmatprep.mubr.f32.mxu0 0.0
          %5846 = vmatmul.mubr.f32.gmra.mrb[0].mxu0 %v5746
          %v5847 = vpop.f32.mrb[0].mxu0
          %v5848 = vadd.f32 0.0, %v5847
          %v5849 = vpop.f32.mrb[0].mxu0
          %5850 = vmatprep.mubr.f32.mxu0 0.0
          %5851 = vmatmul.mubr.f32.gmra.mrb[0].mxu0 %v5749
          %v5852 = vpop.f32.mrb[0].mxu0
          %v5853 = vadd.f32 0.0, %v5852
          %v5854 = vpop.f32.mrb[0].mxu0
          %5855 = vmatprep.mubr.f32.mxu0 0.0
          %5856 = vmatmul.mubr.f32.gmra.mrb[0].mxu0 %v5752
          %v5857 = vpop.f32.mrb[0].mxu0
          %v5858 = vadd.f32 0.0, %v5857
          %v5859 = vpop.f32.mrb[0].mxu0
          %5860 = vmatprep.mubr.f32.mxu0 0.0
          %5861 = vmatmul.mubr.f32.gmra.mrb[0].mxu0 %v5755
          %v5862 = vpop.f32.mrb[0].mxu0
          %v5863 = vadd.f32 0.0, %v5862
          %v5864 = vpop.f32.mrb[0].mxu0
          %5865 = vmatprep.mubr.f32.mxu0 0.0
          %5866 = vmatmul.mubr.f32.gmra.mrb[0].mxu0 %v5758
          %v5867 = vpop.f32.mrb[0].mxu0
          %v5868 = vadd.f32 0.0, %v5867
          %v5869 = vpop.f32.mrb[0].mxu0
          %5870 = vmatprep.mubr.f32.mxu0 0.0
          %5871 = vmatmul.mubr.f32.gmra.mrb[0].mxu0 %v5761
          %v5872 = vpop.f32.mrb[0].mxu0
          %v5873 = vadd.f32 0.0, %v5872
          %v5874 = vpop.f32.mrb[0].mxu0
          %5875 = vmatprep.mubr.f32.mxu0 0.0
          %5876 = vmatmul.mubr.f32.gmra.mrb[0].mxu0 %v5764
          %v5877 = vpop.f32.mrb[0].mxu0
          %v5878 = vadd.f32 0.0, %v5877
          %v5879 = vpop.f32.mrb[0].mxu0
          %5880 = vdwg.mxu0
          %v5881 = vpack.c.bf16 %v5663, %v5658
          %v5882 = vpack.c.bf16 %v5673, %v5668
          %v5883 = vpack.c.bf16 %v5683, %v5678
          %v5884 = vpack.c.bf16 %v5693, %v5688
          %v5885 = vpack.c.bf16 %v5703, %v5698
          %v5886 = vpack.c.bf16 %v5838, %v5833
          %v5887 = vpack.c.bf16 %v5848, %v5843
          %v5888 = vpack.c.bf16 %v5858, %v5853
          %v5889 = vpack.c.bf16 %v5868, %v5863
          %v5890 = vpack.c.bf16 %v5878, %v5873
          %5901 = vrot.lane.b32.xlu0 %v5881, 96
          %v5902 = vpop.permute.xlu0 %5901
          %5903 = vrot.lane.b32.xlu0 %v5882, 96
          %v5904 = vpop.permute.xlu0 %5903
          %5905 = vrot.lane.b32.xlu0 %v5883, 96
          %v5906 = vpop.permute.xlu0 %5905
          %5907 = vrot.lane.b32.xlu0 %v5884, 96
          %v5908 = vpop.permute.xlu0 %5907
          %5909 = vrot.lane.b32.xlu0 %v5885, 96
          %v5910 = vpop.permute.xlu0 %5909
          %5911 = vrot.lane.b32.xlu0 %v5886, 96
          %v5912 = vpop.permute.xlu0 %5911
          %5913 = vrot.lane.b32.xlu0 %v5887, 96
          %v5914 = vpop.permute.xlu0 %5913
          %5915 = vrot.lane.b32.xlu0 %v5888, 96
          %v5916 = vpop.permute.xlu0 %5915
          %5917 = vrot.lane.b32.xlu0 %v5889, 96
          %v5918 = vpop.permute.xlu0 %5917
          %5919 = vrot.lane.b32.xlu0 %v5890, 96
          %v5920 = vpop.permute.xlu0 %5919
          %vm5931 = vcmask 1048320
          %5932 = vst.msk [vmem:[#allocation4] sm:$0xff] %vm5931, %v5902
          %5933 = vst.msk [vmem:[#allocation4 + $0x8] sm:$0xff] %vm5931, %v5904
          %5934 = vst.msk [vmem:[#allocation4 + $0x10] sm:$0xff] %vm5931, %v5906
          %5935 = vst.msk [vmem:[#allocation4 + $0x18] sm:$0xff] %vm5931, %v5908
          %5936 = vst.msk [vmem:[#allocation4 + $0x20] sm:$0xff] %vm5931, %v5910
          %5937 = vst.msk [vmem:[#allocation4 + $0x28] sm:$0xff] %vm5931, %v5912
          %5938 = vst.msk [vmem:[#allocation4 + $0x30] sm:$0xff] %vm5931, %v5914
          %5939 = vst.msk [vmem:[#allocation4 + $0x38] sm:$0xff] %vm5931, %v5916
          %5940 = vst.msk [vmem:[#allocation4 + $0x40] sm:$0xff] %vm5931, %v5918
          %5941 = vst.msk [vmem:[#allocation4 + $0x48] sm:$0xff] %vm5931, %v5920
          %v5942 = vld [vmem:[#allocation4] sm:$0xff]
          %v5943 = vld [vmem:[#allocation4 + $0x8] sm:$0xff]
          %v5944 = vld [vmem:[#allocation4 + $0x10] sm:$0xff]
          %v5945 = vld [vmem:[#allocation4 + $0x18] sm:$0xff]
          %v5946 = vld [vmem:[#allocation4 + $0x20] sm:$0xff]
          %v5947 = vld [vmem:[#allocation4 + $0x28] sm:$0xff]
          %v5948 = vld [vmem:[#allocation4 + $0x30] sm:$0xff]
          %v5949 = vld [vmem:[#allocation4 + $0x38] sm:$0xff]
          %v5950 = vld [vmem:[#allocation4 + $0x40] sm:$0xff]
          %v5951 = vld [vmem:[#allocation4 + $0x48] sm:$0xff]
          %v5952 = vld [vmem:[%s856] sm:$0xff]
          %v5953 = vld [vmem:[%s856 + $0x8] sm:$0xff]
          %v5954 = vld [vmem:[%s856 + $0x10] sm:$0xff]
          %v5955 = vld [vmem:[%s856 + $0x18] sm:$0xff]
          %v5956 = vunpack.c.l.s8.bf16 %v5952
          %v5957 = vunpack.c.h.s8.bf16 %v5952
          %v5958 = vunpack.c.l.s8.bf16 %v5953
          %v5959 = vunpack.c.h.s8.bf16 %v5953
          %v5960 = vunpack.c.l.s8.bf16 %v5954
          %v5961 = vunpack.c.h.s8.bf16 %v5954
          %v5962 = vunpack.c.l.s8.bf16 %v5955
          %v5963 = vunpack.c.h.s8.bf16 %v5955
          %5964 = vmatprep.subr.bf16.mxu0 0
          %5965 = vmatpush1.bf16.msra.mxu0 %v5956
          %5966 = vmatprep.subr.bf16.mxu0 0
          %5967 = vmatpush1.bf16.msra.mxu0 %v5957
          %5968 = vmatprep.subr.bf16.mxu0 0
          %5969 = vmatpush1.bf16.msra.mxu0 %v5958
          %5970 = vmatprep.subr.bf16.mxu0 0
          %5971 = vmatpush1.bf16.msra.mxu0 %v5959
          %5972 = vmatprep.subr.bf16.mxu0 0
          %5973 = vmatpush1.bf16.msra.mxu0 %v5960
          %5974 = vmatprep.subr.bf16.mxu0 0
          %5975 = vmatpush1.bf16.msra.mxu0 %v5961
          %5976 = vmatprep.subr.bf16.mxu0 0
          %5977 = vmatpush1.bf16.msra.mxu0 %v5962
          %5978 = vmatprep.subr.bf16.mxu0 0
          %5979 = vmatpush1.bf16.msra.mxu0 %v5963
          %5980 = vmatprep.subr.bf16.mxu0 0
          %5981 = vmatpush1.bf16.msra.mxu0 0
          %5982 = vmatprep.subr.bf16.mxu0 0
          %5983 = vmatpush1.bf16.msra.mxu0 0
          %5984 = vmatprep.subr.bf16.mxu0 0
          %5985 = vmatpush1.bf16.msra.mxu0 0
          %5986 = vmatprep.subr.bf16.mxu0 0
          %5987 = vmatpush1.bf16.msra.mxu0 0
          %5988 = vmatprep.subr.bf16.mxu0 0
          %5989 = vmatpush1.bf16.msra.mxu0 0
          %5990 = vmatprep.subr.bf16.mxu0 0
          %5991 = vmatpush1.bf16.msra.mxu0 0
          %5992 = vmatprep.subr.bf16.mxu0 0
          %5993 = vmatpush1.bf16.msra.mxu0 0
          %5994 = vmatprep.subr.bf16.mxu0 0
          %5995 = vmatpush1.bf16.msra.mxu0 0
          %5996 = vmatprep.mubr.bf16.mxu0 0
          %5997 = vmatmul.mubr.bf16.gmra.mrb[0].mxu0 %v5942
          %v5998 = vpop.f32.mrb[0].mxu0
          %v5999 = vadd.f32 0.0, %v5998
          %v6000 = vpop.f32.mrb[0].mxu0
          %v6001 = vpop.f32.mrb[0].mxu0
          %v6002 = vadd.f32 0.0, %v6001
          %v6003 = vpop.f32.mrb[0].mxu0
          %6004 = vmatprep.mubr.bf16.mxu0 0
          %6005 = vmatmul.mubr.bf16.gmra.mrb[0].mxu0 %v5943
          %v6006 = vpop.f32.mrb[0].mxu0
          %v6007 = vadd.f32 0.0, %v6006
          %v6008 = vpop.f32.mrb[0].mxu0
          %v6009 = vpop.f32.mrb[0].mxu0
          %v6010 = vadd.f32 0.0, %v6009
          %v6011 = vpop.f32.mrb[0].mxu0
          %6012 = vmatprep.mubr.bf16.mxu0 0
          %6013 = vmatmul.mubr.bf16.gmra.mrb[0].mxu0 %v5944
          %v6014 = vpop.f32.mrb[0].mxu0
          %v6015 = vadd.f32 0.0, %v6014
          %v6016 = vpop.f32.mrb[0].mxu0
          %v6017 = vpop.f32.mrb[0].mxu0
          %v6018 = vadd.f32 0.0, %v6017
          %v6019 = vpop.f32.mrb[0].mxu0
          %6020 = vmatprep.mubr.bf16.mxu0 0
          %6021 = vmatmul.mubr.bf16.gmra.mrb[0].mxu0 %v5945
          %v6022 = vpop.f32.mrb[0].mxu0
          %v6023 = vadd.f32 0.0, %v6022
          %v6024 = vpop.f32.mrb[0].mxu0
          %v6025 = vpop.f32.mrb[0].mxu0
          %v6026 = vadd.f32 0.0, %v6025
          %v6027 = vpop.f32.mrb[0].mxu0
          %6028 = vmatprep.mubr.bf16.mxu0 0
          %6029 = vmatmul.mubr.bf16.gmra.mrb[0].mxu0 %v5946
          %v6030 = vpop.f32.mrb[0].mxu0
          %v6031 = vadd.f32 0.0, %v6030
          %v6032 = vpop.f32.mrb[0].mxu0
          %v6033 = vpop.f32.mrb[0].mxu0
          %v6034 = vadd.f32 0.0, %v6033
          %v6035 = vpop.f32.mrb[0].mxu0
          %6036 = vmatprep.mubr.bf16.mxu0 0
          %6037 = vmatmul.mubr.bf16.gmra.mrb[0].mxu0 %v5947
          %v6038 = vpop.f32.mrb[0].mxu0
          %v6039 = vadd.f32 0.0, %v6038
          %v6040 = vpop.f32.mrb[0].mxu0
          %v6041 = vpop.f32.mrb[0].mxu0
          %v6042 = vadd.f32 0.0, %v6041
          %v6043 = vpop.f32.mrb[0].mxu0
          %6044 = vmatprep.mubr.bf16.mxu0 0
          %6045 = vmatmul.mubr.bf16.gmra.mrb[0].mxu0 %v5948
          %v6046 = vpop.f32.mrb[0].mxu0
          %v6047 = vadd.f32 0.0, %v6046
          %v6048 = vpop.f32.mrb[0].mxu0
          %v6049 = vpop.f32.mrb[0].mxu0
          %v6050 = vadd.f32 0.0, %v6049
          %v6051 = vpop.f32.mrb[0].mxu0
          %6052 = vmatprep.mubr.bf16.mxu0 0
          %6053 = vmatmul.mubr.bf16.gmra.mrb[0].mxu0 %v5949
          %v6054 = vpop.f32.mrb[0].mxu0
          %v6055 = vadd.f32 0.0, %v6054
          %v6056 = vpop.f32.mrb[0].mxu0
          %v6057 = vpop.f32.mrb[0].mxu0
          %v6058 = vadd.f32 0.0, %v6057
          %v6059 = vpop.f32.mrb[0].mxu0
          %6060 = vmatprep.mubr.bf16.mxu0 0
          %6061 = vmatmul.mubr.bf16.gmra.mrb[0].mxu0 %v5950
          %v6062 = vpop.f32.mrb[0].mxu0
          %v6063 = vadd.f32 0.0, %v6062
          %v6064 = vpop.f32.mrb[0].mxu0
          %v6065 = vpop.f32.mrb[0].mxu0
          %v6066 = vadd.f32 0.0, %v6065
          %v6067 = vpop.f32.mrb[0].mxu0
          %6068 = vmatprep.mubr.bf16.mxu0 0
          %6069 = vmatmul.mubr.bf16.gmra.mrb[0].mxu0 %v5951
          %v6070 = vpop.f32.mrb[0].mxu0
          %v6071 = vadd.f32 0.0, %v6070
          %v6072 = vpop.f32.mrb[0].mxu0
          %v6073 = vpop.f32.mrb[0].mxu0
          %v6074 = vadd.f32 0.0, %v6073
          %v6075 = vpop.f32.mrb[0].mxu0
          %6076 = vdwg.mxu0
          %v6077 = vld [vmem:[%s995] sm:$0x1]
          %v6079 = vlaneseq
          %v6080 = vshrl.u32 %v6079, 7
          %v6081 = vsub.s32 0, %v6080
          %v6082 = vrot.slane %v6077, %v6081
          %v6084 = vmul.f32 %v5999, %v6082
          %v6085 = vmul.f32 %v6002, %v6082
          %v6086 = vmul.f32 %v6007, %v6082
          %v6087 = vmul.f32 %v6010, %v6082
          %v6088 = vmul.f32 %v6015, %v6082
          %v6089 = vmul.f32 %v6018, %v6082
          %v6090 = vmul.f32 %v6023, %v6082
          %v6091 = vmul.f32 %v6026, %v6082
          %v6092 = vmul.f32 %v6031, %v6082
          %v6093 = vmul.f32 %v6034, %v6082
          %v6094 = vmul.f32 %v6039, %v6082
          %v6095 = vmul.f32 %v6042, %v6082
          %v6096 = vmul.f32 %v6047, %v6082
          %v6097 = vmul.f32 %v6050, %v6082
          %v6098 = vmul.f32 %v6055, %v6082
          %v6099 = vmul.f32 %v6058, %v6082
          %v6100 = vmul.f32 %v6063, %v6082
          %v6101 = vmul.f32 %v6066, %v6082
          %v6102 = vmul.f32 %v6071, %v6082
          %v6103 = vmul.f32 %v6074, %v6082
          %v6104 = vld [vmem:[%s998] sm:$0x1]
          %v6106 = vlaneseq
          %v6107 = vshrl.u32 %v6106, 7
          %v6108 = vsub.s32 0, %v6107
          %v6109 = vrot.slane %v6104, %v6108
          %v6111 = vadd.f32 %v6084, %v6109
          %v6112 = vadd.f32 %v6085, %v6109
          %v6113 = vadd.f32 %v6086, %v6109
          %v6114 = vadd.f32 %v6087, %v6109
          %v6115 = vadd.f32 %v6088, %v6109
          %v6116 = vadd.f32 %v6089, %v6109
          %v6117 = vadd.f32 %v6090, %v6109
          %v6118 = vadd.f32 %v6091, %v6109
          %v6119 = vadd.f32 %v6092, %v6109
          %v6120 = vadd.f32 %v6093, %v6109
          %v6121 = vadd.f32 %v6094, %v6109
          %v6122 = vadd.f32 %v6095, %v6109
          %v6123 = vadd.f32 %v6096, %v6109
          %v6124 = vadd.f32 %v6097, %v6109
          %v6125 = vadd.f32 %v6098, %v6109
          %v6126 = vadd.f32 %v6099, %v6109
          %v6127 = vadd.f32 %v6100, %v6109
          %v6128 = vadd.f32 %v6101, %v6109
          %v6129 = vadd.f32 %v6102, %v6109
          %v6130 = vadd.f32 %v6103, %v6109
          %v6131 = vadd.f32 %v1125, %v6111
          %v6132 = vadd.f32 %v1126, %v6112
          %v6133 = vadd.f32 %v1127, %v6113
          %v6134 = vadd.f32 %v1128, %v6114
          %v6135 = vadd.f32 %v1129, %v6115
          %v6136 = vadd.f32 %v1130, %v6116
          %v6137 = vadd.f32 %v1131, %v6117
          %v6138 = vadd.f32 %v1132, %v6118
          %v6139 = vadd.f32 %v1133, %v6119
          %v6140 = vadd.f32 %v1134, %v6120
          %v6141 = vadd.f32 %v1135, %v6121
          %v6142 = vadd.f32 %v1136, %v6122
          %v6143 = vadd.f32 %v1137, %v6123
          %v6144 = vadd.f32 %v1138, %v6124
          %v6145 = vadd.f32 %v1139, %v6125
          %v6146 = vadd.f32 %v1140, %v6126
          %v6147 = vadd.f32 %v1141, %v6127
          %v6148 = vadd.f32 %v1142, %v6128
          %v6149 = vadd.f32 %v1143, %v6129
          %v6150 = vadd.f32 %v1144, %v6130
          %6151 = vst [vmem:[#allocation2] sm:$0xff] %v6131
          %6152 = vst [vmem:[#allocation2 + $0x8] sm:$0xff] %v6132
          %6153 = vst [vmem:[#allocation2 + $0x10] sm:$0xff] %v6133
          %6154 = vst [vmem:[#allocation2 + $0x18] sm:$0xff] %v6134
          %6155 = vst [vmem:[#allocation2 + $0x20] sm:$0xff] %v6135
          %6156 = vst [vmem:[#allocation2 + $0x28] sm:$0xff] %v6136
          %6157 = vst [vmem:[#allocation2 + $0x30] sm:$0xff] %v6137
          %6158 = vst [vmem:[#allocation2 + $0x38] sm:$0xff] %v6138
          %6159 = vst [vmem:[#allocation2 + $0x40] sm:$0xff] %v6139
          %6160 = vst [vmem:[#allocation2 + $0x48] sm:$0xff] %v6140
          %6161 = vst [vmem:[#allocation2 + $0x50] sm:$0xff] %v6141
          %6162 = vst [vmem:[#allocation2 + $0x58] sm:$0xff] %v6142
          %6163 = vst [vmem:[#allocation2 + $0x60] sm:$0xff] %v6143
          %6164 = vst [vmem:[#allocation2 + $0x68] sm:$0xff] %v6144
          %6165 = vst [vmem:[#allocation2 + $0x70] sm:$0xff] %v6145
          %6166 = vst [vmem:[#allocation2 + $0x78] sm:$0xff] %v6146
          %6167 = vst [vmem:[#allocation2 + $0x80] sm:$0xff] %v6147
          %6168 = vst [vmem:[#allocation2 + $0x88] sm:$0xff] %v6148
          %6169 = vst [vmem:[#allocation2 + $0x90] sm:$0xff] %v6149
          %6170 = vst [vmem:[#allocation2 + $0x98] sm:$0xff] %v6150
          %v6171 = vld [vmem:[%s1001] sm:$0x1]
          %v6172 = vld [vmem:[%s1004] sm:$0x1]
          %6173 = vadd.xlane.f32.xlu0 %v6131
          %v6174 = vpop.xlane.xlu0 %6173
          %6175 = vadd.xlane.f32.xlu0 %v6132
          %v6176 = vpop.xlane.xlu0 %6175
          %6177 = vadd.xlane.f32.xlu0 %v6133
          %v6178 = vpop.xlane.xlu0 %6177
          %6179 = vadd.xlane.f32.xlu0 %v6134
          %v6180 = vpop.xlane.xlu0 %6179
          %6181 = vadd.xlane.f32.xlu0 %v6135
          %v6182 = vpop.xlane.xlu0 %6181
          %6183 = vadd.xlane.f32.xlu0 %v6136
          %v6184 = vpop.xlane.xlu0 %6183
          %6185 = vadd.xlane.f32.xlu0 %v6137
          %v6186 = vpop.xlane.xlu0 %6185
          %6187 = vadd.xlane.f32.xlu0 %v6138
          %v6188 = vpop.xlane.xlu0 %6187
          %6189 = vadd.xlane.f32.xlu0 %v6139
          %v6190 = vpop.xlane.xlu0 %6189
          %6191 = vadd.xlane.f32.xlu0 %v6140
          %v6192 = vpop.xlane.xlu0 %6191
          %6193 = vadd.xlane.f32.xlu0 %v6141
          %v6194 = vpop.xlane.xlu0 %6193
          %6195 = vadd.xlane.f32.xlu0 %v6142
          %v6196 = vpop.xlane.xlu0 %6195
          %6197 = vadd.xlane.f32.xlu0 %v6143
          %v6198 = vpop.xlane.xlu0 %6197
          %6199 = vadd.xlane.f32.xlu0 %v6144
          %v6200 = vpop.xlane.xlu0 %6199
          %6201 = vadd.xlane.f32.xlu0 %v6145
          %v6202 = vpop.xlane.xlu0 %6201
          %6203 = vadd.xlane.f32.xlu0 %v6146
          %v6204 = vpop.xlane.xlu0 %6203
          %6205 = vadd.xlane.f32.xlu0 %v6147
          %v6206 = vpop.xlane.xlu0 %6205
          %6207 = vadd.xlane.f32.xlu0 %v6148
          %v6208 = vpop.xlane.xlu0 %6207
          %6209 = vadd.xlane.f32.xlu0 %v6149
          %v6210 = vpop.xlane.xlu0 %6209
          %6211 = vadd.xlane.f32.xlu0 %v6150
          %v6212 = vpop.xlane.xlu0 %6211
          %v6213 = vmul.f32 %v6174, %v1187
          %v6214 = vmul.f32 %v6176, %v1187
          %v6215 = vmul.f32 %v6178, %v1187
          %v6216 = vmul.f32 %v6180, %v1187
          %v6217 = vmul.f32 %v6182, %v1187
          %v6218 = vmul.f32 %v6184, %v1187
          %v6219 = vmul.f32 %v6186, %v1187
          %v6220 = vmul.f32 %v6188, %v1187
          %v6221 = vmul.f32 %v6190, %v1187
          %v6222 = vmul.f32 %v6192, %v1187
          %v6223 = vmul.f32 %v6194, %v1187
          %v6224 = vmul.f32 %v6196, %v1187
          %v6225 = vmul.f32 %v6198, %v1187
          %v6226 = vmul.f32 %v6200, %v1187
          %v6227 = vmul.f32 %v6202, %v1187
          %v6228 = vmul.f32 %v6204, %v1187
          %v6229 = vmul.f32 %v6206, %v1187
          %v6230 = vmul.f32 %v6208, %v1187
          %v6231 = vmul.f32 %v6210, %v1187
          %v6232 = vmul.f32 %v6212, %v1187
          %v6233 = vsub.f32 %v6131, %v6213
          %v6234 = vsub.f32 %v6132, %v6214
          %v6235 = vsub.f32 %v6133, %v6215
          %v6236 = vsub.f32 %v6134, %v6216
          %v6237 = vsub.f32 %v6135, %v6217
          %v6238 = vsub.f32 %v6136, %v6218
          %v6239 = vsub.f32 %v6137, %v6219
          %v6240 = vsub.f32 %v6138, %v6220
          %v6241 = vsub.f32 %v6139, %v6221
          %v6242 = vsub.f32 %v6140, %v6222
          %v6243 = vsub.f32 %v6141, %v6223
          %v6244 = vsub.f32 %v6142, %v6224
          %v6245 = vsub.f32 %v6143, %v6225
          %v6246 = vsub.f32 %v6144, %v6226
          %v6247 = vsub.f32 %v6145, %v6227
          %v6248 = vsub.f32 %v6146, %v6228
          %v6249 = vsub.f32 %v6147, %v6229
          %v6250 = vsub.f32 %v6148, %v6230
          %v6251 = vsub.f32 %v6149, %v6231
          %v6252 = vsub.f32 %v6150, %v6232
          %v6253 = vmul.f32 %v6233, %v6233
          %v6254 = vmul.f32 %v6234, %v6234
          %v6255 = vmul.f32 %v6235, %v6235
          %v6256 = vmul.f32 %v6236, %v6236
          %v6257 = vmul.f32 %v6237, %v6237
          %v6258 = vmul.f32 %v6238, %v6238
          %v6259 = vmul.f32 %v6239, %v6239
          %v6260 = vmul.f32 %v6240, %v6240
          %v6261 = vmul.f32 %v6241, %v6241
          %v6262 = vmul.f32 %v6242, %v6242
          %v6263 = vmul.f32 %v6243, %v6243
          %v6264 = vmul.f32 %v6244, %v6244
          %v6265 = vmul.f32 %v6245, %v6245
          %v6266 = vmul.f32 %v6246, %v6246
          %v6267 = vmul.f32 %v6247, %v6247
          %v6268 = vmul.f32 %v6248, %v6248
          %v6269 = vmul.f32 %v6249, %v6249
          %v6270 = vmul.f32 %v6250, %v6250
          %v6271 = vmul.f32 %v6251, %v6251
          %v6272 = vmul.f32 %v6252, %v6252
          %6273 = vadd.xlane.f32.xlu0 %v6253
          %v6274 = vpop.xlane.xlu0 %6273
          %6275 = vadd.xlane.f32.xlu0 %v6254
          %v6276 = vpop.xlane.xlu0 %6275
          %6277 = vadd.xlane.f32.xlu0 %v6255
          %v6278 = vpop.xlane.xlu0 %6277
          %6279 = vadd.xlane.f32.xlu0 %v6256
          %v6280 = vpop.xlane.xlu0 %6279
          %6281 = vadd.xlane.f32.xlu0 %v6257
          %v6282 = vpop.xlane.xlu0 %6281
          %6283 = vadd.xlane.f32.xlu0 %v6258
          %v6284 = vpop.xlane.xlu0 %6283
          %6285 = vadd.xlane.f32.xlu0 %v6259
          %v6286 = vpop.xlane.xlu0 %6285
          %6287 = vadd.xlane.f32.xlu0 %v6260
          %v6288 = vpop.xlane.xlu0 %6287
          %6289 = vadd.xlane.f32.xlu0 %v6261
          %v6290 = vpop.xlane.xlu0 %6289
          %6291 = vadd.xlane.f32.xlu0 %v6262
          %v6292 = vpop.xlane.xlu0 %6291
          %6293 = vadd.xlane.f32.xlu0 %v6263
          %v6294 = vpop.xlane.xlu0 %6293
          %6295 = vadd.xlane.f32.xlu0 %v6264
          %v6296 = vpop.xlane.xlu0 %6295
          %6297 = vadd.xlane.f32.xlu0 %v6265
          %v6298 = vpop.xlane.xlu0 %6297
          %6299 = vadd.xlane.f32.xlu0 %v6266
          %v6300 = vpop.xlane.xlu0 %6299
          %6301 = vadd.xlane.f32.xlu0 %v6267
          %v6302 = vpop.xlane.xlu0 %6301
          %6303 = vadd.xlane.f32.xlu0 %v6268
          %v6304 = vpop.xlane.xlu0 %6303
          %6305 = vadd.xlane.f32.xlu0 %v6269
          %v6306 = vpop.xlane.xlu0 %6305
          %6307 = vadd.xlane.f32.xlu0 %v6270
          %v6308 = vpop.xlane.xlu0 %6307
          %6309 = vadd.xlane.f32.xlu0 %v6271
          %v6310 = vpop.xlane.xlu0 %6309
          %6311 = vadd.xlane.f32.xlu0 %v6272
          %v6312 = vpop.xlane.xlu0 %6311
          %v6313 = vmul.f32 %v6274, %v1187
          %v6314 = vmul.f32 %v6276, %v1187
          %v6315 = vmul.f32 %v6278, %v1187
          %v6316 = vmul.f32 %v6280, %v1187
          %v6317 = vmul.f32 %v6282, %v1187
          %v6318 = vmul.f32 %v6284, %v1187
          %v6319 = vmul.f32 %v6286, %v1187
          %v6320 = vmul.f32 %v6288, %v1187
          %v6321 = vmul.f32 %v6290, %v1187
          %v6322 = vmul.f32 %v6292, %v1187
          %v6323 = vmul.f32 %v6294, %v1187
          %v6324 = vmul.f32 %v6296, %v1187
          %v6325 = vmul.f32 %v6298, %v1187
          %v6326 = vmul.f32 %v6300, %v1187
          %v6327 = vmul.f32 %v6302, %v1187
          %v6328 = vmul.f32 %v6304, %v1187
          %v6329 = vmul.f32 %v6306, %v1187
          %v6330 = vmul.f32 %v6308, %v1187
          %v6331 = vmul.f32 %v6310, %v1187
          %v6332 = vmul.f32 %v6312, %v1187
          %v6333 = vadd.f32 %v6313, 1e-05
          %v6334 = vadd.f32 %v6314, 1e-05
          %v6335 = vadd.f32 %v6315, 1e-05
          %v6336 = vadd.f32 %v6316, 1e-05
          %v6337 = vadd.f32 %v6317, 1e-05
          %v6338 = vadd.f32 %v6318, 1e-05
          %v6339 = vadd.f32 %v6319, 1e-05
          %v6340 = vadd.f32 %v6320, 1e-05
          %v6341 = vadd.f32 %v6321, 1e-05
          %v6342 = vadd.f32 %v6322, 1e-05
          %v6343 = vadd.f32 %v6323, 1e-05
          %v6344 = vadd.f32 %v6324, 1e-05
          %v6345 = vadd.f32 %v6325, 1e-05
          %v6346 = vadd.f32 %v6326, 1e-05
          %v6347 = vadd.f32 %v6327, 1e-05
          %v6348 = vadd.f32 %v6328, 1e-05
          %v6349 = vadd.f32 %v6329, 1e-05
          %v6350 = vadd.f32 %v6330, 1e-05
          %v6351 = vadd.f32 %v6331, 1e-05
          %v6352 = vadd.f32 %v6332, 1e-05
          %v6353 = vrsqrt.pop %v6333
          %v6354 = vrsqrt.pop %v6334
          %v6355 = vrsqrt.pop %v6335
          %v6356 = vrsqrt.pop %v6336
          %v6357 = vrsqrt.pop %v6337
          %v6358 = vrsqrt.pop %v6338
          %v6359 = vrsqrt.pop %v6339
          %v6360 = vrsqrt.pop %v6340
          %v6361 = vrsqrt.pop %v6341
          %v6362 = vrsqrt.pop %v6342
          %v6363 = vrsqrt.pop %v6343
          %v6364 = vrsqrt.pop %v6344
          %v6365 = vrsqrt.pop %v6345
          %v6366 = vrsqrt.pop %v6346
          %v6367 = vrsqrt.pop %v6347
          %v6368 = vrsqrt.pop %v6348
          %v6369 = vrsqrt.pop %v6349
          %v6370 = vrsqrt.pop %v6350
          %v6371 = vrsqrt.pop %v6351
          %v6372 = vrsqrt.pop %v6352
          %v6373 = vmul.f32 %v6233, %v6353
          %v6374 = vmul.f32 %v6234, %v6354
          %v6375 = vmul.f32 %v6235, %v6355
          %v6376 = vmul.f32 %v6236, %v6356
          %v6377 = vmul.f32 %v6237, %v6357
          %v6378 = vmul.f32 %v6238, %v6358
          %v6379 = vmul.f32 %v6239, %v6359
          %v6380 = vmul.f32 %v6240, %v6360
          %v6381 = vmul.f32 %v6241, %v6361
          %v6382 = vmul.f32 %v6242, %v6362
          %v6383 = vmul.f32 %v6243, %v6363
          %v6384 = vmul.f32 %v6244, %v6364
          %v6385 = vmul.f32 %v6245, %v6365
          %v6386 = vmul.f32 %v6246, %v6366
          %v6387 = vmul.f32 %v6247, %v6367
          %v6388 = vmul.f32 %v6248, %v6368
          %v6389 = vmul.f32 %v6249, %v6369
          %v6390 = vmul.f32 %v6250, %v6370
          %v6391 = vmul.f32 %v6251, %v6371
          %v6392 = vmul.f32 %v6252, %v6372
          %v6394 = vlaneseq
          %v6395 = vshrl.u32 %v6394, 7
          %v6396 = vsub.s32 0, %v6395
          %v6397 = vrot.slane %v6171, %v6396
          %v6399 = vmul.f32 %v6373, %v6397
          %v6400 = vmul.f32 %v6374, %v6397
          %v6401 = vmul.f32 %v6375, %v6397
          %v6402 = vmul.f32 %v6376, %v6397
          %v6403 = vmul.f32 %v6377, %v6397
          %v6404 = vmul.f32 %v6378, %v6397
          %v6405 = vmul.f32 %v6379, %v6397
          %v6406 = vmul.f32 %v6380, %v6397
          %v6407 = vmul.f32 %v6381, %v6397
          %v6408 = vmul.f32 %v6382, %v6397
          %v6409 = vmul.f32 %v6383, %v6397
          %v6410 = vmul.f32 %v6384, %v6397
          %v6411 = vmul.f32 %v6385, %v6397
          %v6412 = vmul.f32 %v6386, %v6397
          %v6413 = vmul.f32 %v6387, %v6397
          %v6414 = vmul.f32 %v6388, %v6397
          %v6415 = vmul.f32 %v6389, %v6397
          %v6416 = vmul.f32 %v6390, %v6397
          %v6417 = vmul.f32 %v6391, %v6397
          %v6418 = vmul.f32 %v6392, %v6397
          %v6420 = vlaneseq
          %v6421 = vshrl.u32 %v6420, 7
          %v6422 = vsub.s32 0, %v6421
          %v6423 = vrot.slane %v6172, %v6422
          %v6425 = vadd.f32 %v6399, %v6423
          %v6426 = vadd.f32 %v6400, %v6423
          %v6427 = vadd.f32 %v6401, %v6423
          %v6428 = vadd.f32 %v6402, %v6423
          %v6429 = vadd.f32 %v6403, %v6423
          %v6430 = vadd.f32 %v6404, %v6423
          %v6431 = vadd.f32 %v6405, %v6423
          %v6432 = vadd.f32 %v6406, %v6423
          %v6433 = vadd.f32 %v6407, %v6423
          %v6434 = vadd.f32 %v6408, %v6423
          %v6435 = vadd.f32 %v6409, %v6423
          %v6436 = vadd.f32 %v6410, %v6423
          %v6437 = vadd.f32 %v6411, %v6423
          %v6438 = vadd.f32 %v6412, %v6423
          %v6439 = vadd.f32 %v6413, %v6423
          %v6440 = vadd.f32 %v6414, %v6423
          %v6441 = vadd.f32 %v6415, %v6423
          %v6442 = vadd.f32 %v6416, %v6423
          %v6443 = vadd.f32 %v6417, %v6423
          %v6444 = vadd.f32 %v6418, %v6423
          %v6445 = vpack.c.bf16 %v6426, %v6425
          %v6446 = vpack.c.bf16 %v6428, %v6427
          %v6447 = vpack.c.bf16 %v6430, %v6429
          %v6448 = vpack.c.bf16 %v6432, %v6431
          %v6449 = vpack.c.bf16 %v6434, %v6433
          %v6450 = vpack.c.bf16 %v6436, %v6435
          %v6451 = vpack.c.bf16 %v6438, %v6437
          %v6452 = vpack.c.bf16 %v6440, %v6439
          %v6453 = vpack.c.bf16 %v6442, %v6441
          %v6454 = vpack.c.bf16 %v6444, %v6443
          %6455 = vst [vmem:[#allocation3] sm:$0xff] %v6445
          %6456 = vst [vmem:[#allocation3 + $0x8] sm:$0xff] %v6446
          %6457 = vst [vmem:[#allocation3 + $0x10] sm:$0xff] %v6447
          %6458 = vst [vmem:[#allocation3 + $0x18] sm:$0xff] %v6448
          %6459 = vst [vmem:[#allocation3 + $0x20] sm:$0xff] %v6449
          %6460 = vst [vmem:[#allocation3 + $0x28] sm:$0xff] %v6450
          %6461 = vst [vmem:[#allocation3 + $0x30] sm:$0xff] %v6451
          %6462 = vst [vmem:[#allocation3 + $0x38] sm:$0xff] %v6452
          %6463 = vst [vmem:[#allocation3 + $0x40] sm:$0xff] %v6453
          %6464 = vst [vmem:[#allocation3 + $0x48] sm:$0xff] %v6454
        $region136: #{tpu_custom_call.1} parent=95 // pred_fallthru
          _
        %v6465 = vld [vmem:[#allocation3] sm:$0xff]
        %v6466 = vld [vmem:[#allocation3 + $0x8] sm:$0xff]
        %v6467 = vld [vmem:[#allocation3 + $0x10] sm:$0xff]
        %v6468 = vld [vmem:[#allocation3 + $0x18] sm:$0xff]
        %v6469 = vld [vmem:[#allocation3 + $0x20] sm:$0xff]
        %v6470 = vld [vmem:[#allocation3 + $0x28] sm:$0xff]
        %v6471 = vld [vmem:[#allocation3 + $0x30] sm:$0xff]
        %v6472 = vld [vmem:[#allocation3 + $0x38] sm:$0xff]
        %v6473 = vld [vmem:[#allocation3 + $0x40] sm:$0xff]
        %v6474 = vld [vmem:[#allocation3 + $0x48] sm:$0xff]
        %v6475 = vld [vmem:[%s865] sm:$0xff]
        %v6476 = vld [vmem:[%s865 + $0x8] sm:$0xff]
        %v6477 = vld [vmem:[%s865 + $0x10] sm:$0xff]
        %v6478 = vld [vmem:[%s865 + $0x18] sm:$0xff]
        %v6479 = vld [vmem:[%s865 + $0x20] sm:$0xff]
        %v6480 = vld [vmem:[%s865 + $0x28] sm:$0xff]
        %v6481 = vld [vmem:[%s865 + $0x30] sm:$0xff]
        %v6482 = vld [vmem:[%s865 + $0x38] sm:$0xff]
        %v6483 = vunpack.c.l.s8.bf16 %v6475
        %v6484 = vunpack.c.l.s8.bf16 %v6476
        %v6485 = vunpack.c.h.s8.bf16 %v6475
        %v6486 = vunpack.c.h.s8.bf16 %v6476
        %v6487 = vunpack.c.l.s8.bf16 %v6477
        %v6488 = vunpack.c.l.s8.bf16 %v6478
        %v6489 = vunpack.c.h.s8.bf16 %v6477
        %v6490 = vunpack.c.h.s8.bf16 %v6478
        %v6491 = vunpack.c.l.s8.bf16 %v6479
        %v6492 = vunpack.c.l.s8.bf16 %v6480
        %v6493 = vunpack.c.h.s8.bf16 %v6479
        %v6494 = vunpack.c.h.s8.bf16 %v6480
        %v6495 = vunpack.c.l.s8.bf16 %v6481
        %v6496 = vunpack.c.l.s8.bf16 %v6482
        %v6497 = vunpack.c.h.s8.bf16 %v6481
        %v6498 = vunpack.c.h.s8.bf16 %v6482
        %6499 = vmatprep.subr.bf16.mxu0 %v6484
        %6500 = vmatpush1.bf16.msra.mxu0 %v6483
        %6501 = vmatprep.subr.bf16.mxu0 %v6486
        %6502 = vmatpush1.bf16.msra.mxu0 %v6485
        %6503 = vmatprep.subr.bf16.mxu0 %v6488
        %6504 = vmatpush1.bf16.msra.mxu0 %v6487
        %6505 = vmatprep.subr.bf16.mxu0 %v6490
        %6506 = vmatpush1.bf16.msra.mxu0 %v6489
        %6507 = vmatprep.subr.bf16.mxu0 %v6492
        %6508 = vmatpush1.bf16.msra.mxu0 %v6491
        %6509 = vmatprep.subr.bf16.mxu0 %v6494
        %6510 = vmatpush1.bf16.msra.mxu0 %v6493
        %6511 = vmatprep.subr.bf16.mxu0 %v6496
        %6512 = vmatpush1.bf16.msra.mxu0 %v6495
        %6513 = vmatprep.subr.bf16.mxu0 %v6498
        %6514 = vmatpush1.bf16.msra.mxu0 %v6497
        %6515 = vmatprep.subr.bf16.mxu0 0
        %6516 = vmatpush1.bf16.msra.mxu0 0
        %6517 = vmatprep.subr.bf16.mxu0 0
        %6518 = vmatpush1.bf16.msra.mxu0 0
        %6519 = vmatprep.subr.bf16.mxu0 0
        %6520 = vmatpush1.bf16.msra.mxu0 0
        %6521 = vmatprep.subr.bf16.mxu0 0
        %6522 = vmatpush1.bf16.msra.mxu0 0
        %6523 = vmatprep.subr.bf16.mxu0 0
        %6524 = vmatpush1.bf16.msra.mxu0 0
        %6525 = vmatprep.subr.bf16.mxu0 0
        %6526 = vmatpush1.bf16.msra.mxu0 0
        %6527 = vmatprep.subr.bf16.mxu0 0
        %6528 = vmatpush1.bf16.msra.mxu0 0
        %6529 = vmatprep.subr.bf16.mxu0 0
        %6530 = vmatpush1.bf16.msra.mxu0 0
        %6531 = vmatprep.mubr.bf16.mxu0 0
        %6532 = vmatmul.mubr.bf16.gmra.mrb[0].mxu0 %v6465
        %v6533 = vpop.f32.mrb[0].mxu0
        %v6534 = vadd.f32 0.0, %v6533
        %v6535 = vpop.f32.mrb[0].mxu0
        %v6536 = vadd.f32 0.0, %v6535
        %v6537 = vpop.f32.mrb[0].mxu0
        %v6538 = vadd.f32 0.0, %v6537
        %v6539 = vpop.f32.mrb[0].mxu0
        %v6540 = vadd.f32 0.0, %v6539
        %6541 = vmatprep.mubr.bf16.mxu0 0
        %6542 = vmatmul.mubr.bf16.gmra.mrb[0].mxu0 %v6466
        %v6543 = vpop.f32.mrb[0].mxu0
        %v6544 = vadd.f32 0.0, %v6543
        %v6545 = vpop.f32.mrb[0].mxu0
        %v6546 = vadd.f32 0.0, %v6545
        %v6547 = vpop.f32.mrb[0].mxu0
        %v6548 = vadd.f32 0.0, %v6547
        %v6549 = vpop.f32.mrb[0].mxu0
        %v6550 = vadd.f32 0.0, %v6549
        %6551 = vmatprep.mubr.bf16.mxu0 0
        %6552 = vmatmul.mubr.bf16.gmra.mrb[0].mxu0 %v6467
        %v6553 = vpop.f32.mrb[0].mxu0
        %v6554 = vadd.f32 0.0, %v6553
        %v6555 = vpop.f32.mrb[0].mxu0
        %v6556 = vadd.f32 0.0, %v6555
        %v6557 = vpop.f32.mrb[0].mxu0
        %v6558 = vadd.f32 0.0, %v6557
        %v6559 = vpop.f32.mrb[0].mxu0
        %v6560 = vadd.f32 0.0, %v6559
        %6561 = vmatprep.mubr.bf16.mxu0 0
        %6562 = vmatmul.mubr.bf16.gmra.mrb[0].mxu0 %v6468
        %v6563 = vpop.f32.mrb[0].mxu0
        %v6564 = vadd.f32 0.0, %v6563
        %v6565 = vpop.f32.mrb[0].mxu0
        %v6566 = vadd.f32 0.0, %v6565
        %v6567 = vpop.f32.mrb[0].mxu0
        %v6568 = vadd.f32 0.0, %v6567
        %v6569 = vpop.f32.mrb[0].mxu0
        %v6570 = vadd.f32 0.0, %v6569
        %6571 = vmatprep.mubr.bf16.mxu0 0
        %6572 = vmatmul.mubr.bf16.gmra.mrb[0].mxu0 %v6469
        %v6573 = vpop.f32.mrb[0].mxu0
        %v6574 = vadd.f32 0.0, %v6573
        %v6575 = vpop.f32.mrb[0].mxu0
        %v6576 = vadd.f32 0.0, %v6575
        %v6577 = vpop.f32.mrb[0].mxu0
        %v6578 = vadd.f32 0.0, %v6577
        %v6579 = vpop.f32.mrb[0].mxu0
        %v6580 = vadd.f32 0.0, %v6579
        %6581 = vmatprep.mubr.bf16.mxu0 0
        %6582 = vmatmul.mubr.bf16.gmra.mrb[0].mxu0 %v6470
        %v6583 = vpop.f32.mrb[0].mxu0
        %v6584 = vadd.f32 0.0, %v6583
        %v6585 = vpop.f32.mrb[0].mxu0
        %v6586 = vadd.f32 0.0, %v6585
        %v6587 = vpop.f32.mrb[0].mxu0
        %v6588 = vadd.f32 0.0, %v6587
        %v6589 = vpop.f32.mrb[0].mxu0
        %v6590 = vadd.f32 0.0, %v6589
        %6591 = vmatprep.mubr.bf16.mxu0 0
        %6592 = vmatmul.mubr.bf16.gmra.mrb[0].mxu0 %v6471
        %v6593 = vpop.f32.mrb[0].mxu0
        %v6594 = vadd.f32 0.0, %v6593
        %v6595 = vpop.f32.mrb[0].mxu0
        %v6596 = vadd.f32 0.0, %v6595
        %v6597 = vpop.f32.mrb[0].mxu0
        %v6598 = vadd.f32 0.0, %v6597
        %v6599 = vpop.f32.mrb[0].mxu0
        %v6600 = vadd.f32 0.0, %v6599
        %6601 = vmatprep.mubr.bf16.mxu0 0
        %6602 = vmatmul.mubr.bf16.gmra.mrb[0].mxu0 %v6472
        %v6603 = vpop.f32.mrb[0].mxu0
        %v6604 = vadd.f32 0.0, %v6603
        %v6605 = vpop.f32.mrb[0].mxu0
        %v6606 = vadd.f32 0.0, %v6605
        %v6607 = vpop.f32.mrb[0].mxu0
        %v6608 = vadd.f32 0.0, %v6607
        %v6609 = vpop.f32.mrb[0].mxu0
        %v6610 = vadd.f32 0.0, %v6609
        %6611 = vmatprep.mubr.bf16.mxu0 0
        %6612 = vmatmul.mubr.bf16.gmra.mrb[0].mxu0 %v6473
        %v6613 = vpop.f32.mrb[0].mxu0
        %v6614 = vadd.f32 0.0, %v6613
        %v6615 = vpop.f32.mrb[0].mxu0
        %v6616 = vadd.f32 0.0, %v6615
        %v6617 = vpop.f32.mrb[0].mxu0
        %v6618 = vadd.f32 0.0, %v6617
        %v6619 = vpop.f32.mrb[0].mxu0
        %v6620 = vadd.f32 0.0, %v6619
        %6621 = vmatprep.mubr.bf16.mxu0 0
        %6622 = vmatmul.mubr.bf16.gmra.mrb[0].mxu0 %v6474
        %v6623 = vpop.f32.mrb[0].mxu0
        %v6624 = vadd.f32 0.0, %v6623
        %v6625 = vpop.f32.mrb[0].mxu0
        %v6626 = vadd.f32 0.0, %v6625
        %v6627 = vpop.f32.mrb[0].mxu0
        %v6628 = vadd.f32 0.0, %v6627
        %v6629 = vpop.f32.mrb[0].mxu0
        %v6630 = vadd.f32 0.0, %v6629
        %6631 = vdwg.mxu0
        %v6632 = vld [vmem:[%s1013] sm:$0x3]
        %v6634 = vlaneseq
        %v6635 = vshrl.u32 %v6634, 7
        %v6636 = vsub.s32 0, %v6635
        %v6637 = vrot.slane %v6632, %v6636
        %v6638 = vlaneseq
        %v6639 = vshrl.u32 %v6638, 7
        %v6640 = vsub.s32 1, %v6639
        %v6641 = vrot.slane %v6632, %v6640
        %v6644 = vmul.f32 %v6534, %v6637
        %v6645 = vmul.f32 %v6536, %v6641
        %v6646 = vmul.f32 %v6538, %v6637
        %v6647 = vmul.f32 %v6540, %v6641
        %v6648 = vmul.f32 %v6544, %v6637
        %v6649 = vmul.f32 %v6546, %v6641
        %v6650 = vmul.f32 %v6548, %v6637
        %v6651 = vmul.f32 %v6550, %v6641
        %v6652 = vmul.f32 %v6554, %v6637
        %v6653 = vmul.f32 %v6556, %v6641
        %v6654 = vmul.f32 %v6558, %v6637
        %v6655 = vmul.f32 %v6560, %v6641
        %v6656 = vmul.f32 %v6564, %v6637
        %v6657 = vmul.f32 %v6566, %v6641
        %v6658 = vmul.f32 %v6568, %v6637
        %v6659 = vmul.f32 %v6570, %v6641
        %v6660 = vmul.f32 %v6574, %v6637
        %v6661 = vmul.f32 %v6576, %v6641
        %v6662 = vmul.f32 %v6578, %v6637
        %v6663 = vmul.f32 %v6580, %v6641
        %v6664 = vmul.f32 %v6584, %v6637
        %v6665 = vmul.f32 %v6586, %v6641
        %v6666 = vmul.f32 %v6588, %v6637
        %v6667 = vmul.f32 %v6590, %v6641
        %v6668 = vmul.f32 %v6594, %v6637
        %v6669 = vmul.f32 %v6596, %v6641
        %v6670 = vmul.f32 %v6598, %v6637
        %v6671 = vmul.f32 %v6600, %v6641
        %v6672 = vmul.f32 %v6604, %v6637
        %v6673 = vmul.f32 %v6606, %v6641
        %v6674 = vmul.f32 %v6608, %v6637
        %v6675 = vmul.f32 %v6610, %v6641
        %v6676 = vmul.f32 %v6614, %v6637
        %v6677 = vmul.f32 %v6616, %v6641
        %v6678 = vmul.f32 %v6618, %v6637
        %v6679 = vmul.f32 %v6620, %v6641
        %v6680 = vmul.f32 %v6624, %v6637
        %v6681 = vmul.f32 %v6626, %v6641
        %v6682 = vmul.f32 %v6628, %v6637
        %v6683 = vmul.f32 %v6630, %v6641
        %v6684 = vld [vmem:[%s1022] sm:$0x3]
        %v6686 = vlaneseq
        %v6687 = vshrl.u32 %v6686, 7
        %v6688 = vsub.s32 0, %v6687
        %v6689 = vrot.slane %v6684, %v6688
        %v6690 = vlaneseq
        %v6691 = vshrl.u32 %v6690, 7
        %v6692 = vsub.s32 1, %v6691
        %v6693 = vrot.slane %v6684, %v6692
        %v6696 = vadd.f32 %v6644, %v6689
        %v6697 = vadd.f32 %v6645, %v6693
        %v6698 = vadd.f32 %v6646, %v6689
        %v6699 = vadd.f32 %v6647, %v6693
        %v6700 = vadd.f32 %v6648, %v6689
        %v6701 = vadd.f32 %v6649, %v6693
        %v6702 = vadd.f32 %v6650, %v6689
        %v6703 = vadd.f32 %v6651, %v6693
        %v6704 = vadd.f32 %v6652, %v6689
        %v6705 = vadd.f32 %v6653, %v6693
        %v6706 = vadd.f32 %v6654, %v6689
        %v6707 = vadd.f32 %v6655, %v6693
        %v6708 = vadd.f32 %v6656, %v6689
        %v6709 = vadd.f32 %v6657, %v6693
        %v6710 = vadd.f32 %v6658, %v6689
        %v6711 = vadd.f32 %v6659, %v6693
        %v6712 = vadd.f32 %v6660, %v6689
        %v6713 = vadd.f32 %v6661, %v6693
        %v6714 = vadd.f32 %v6662, %v6689
        %v6715 = vadd.f32 %v6663, %v6693
        %v6716 = vadd.f32 %v6664, %v6689
        %v6717 = vadd.f32 %v6665, %v6693
        %v6718 = vadd.f32 %v6666, %v6689
        %v6719 = vadd.f32 %v6667, %v6693
        %v6720 = vadd.f32 %v6668, %v6689
        %v6721 = vadd.f32 %v6669, %v6693
        %v6722 = vadd.f32 %v6670, %v6689
        %v6723 = vadd.f32 %v6671, %v6693
        %v6724 = vadd.f32 %v6672, %v6689
        %v6725 = vadd.f32 %v6673, %v6693
        %v6726 = vadd.f32 %v6674, %v6689
        %v6727 = vadd.f32 %v6675, %v6693
        %v6728 = vadd.f32 %v6676, %v6689
        %v6729 = vadd.f32 %v6677, %v6693
        %v6730 = vadd.f32 %v6678, %v6689
        %v6731 = vadd.f32 %v6679, %v6693
        %v6732 = vadd.f32 %v6680, %v6689
        %v6733 = vadd.f32 %v6681, %v6693
        %v6734 = vadd.f32 %v6682, %v6689
        %v6735 = vadd.f32 %v6683, %v6693
        %v6736 = vmul.f32 %v6696, 0.5
        %v6737 = vmul.f32 %v6697, 0.5
        %v6738 = vmul.f32 %v6698, 0.5
        %v6739 = vmul.f32 %v6699, 0.5
        %v6740 = vmul.f32 %v6700, 0.5
        %v6741 = vmul.f32 %v6701, 0.5
        %v6742 = vmul.f32 %v6702, 0.5
        %v6743 = vmul.f32 %v6703, 0.5
        %v6744 = vmul.f32 %v6704, 0.5
        %v6745 = vmul.f32 %v6705, 0.5
        %v6746 = vmul.f32 %v6706, 0.5
        %v6747 = vmul.f32 %v6707, 0.5
        %v6748 = vmul.f32 %v6708, 0.5
        %v6749 = vmul.f32 %v6709, 0.5
        %v6750 = vmul.f32 %v6710, 0.5
        %v6751 = vmul.f32 %v6711, 0.5
        %v6752 = vmul.f32 %v6712, 0.5
        %v6753 = vmul.f32 %v6713, 0.5
        %v6754 = vmul.f32 %v6714, 0.5
        %v6755 = vmul.f32 %v6715, 0.5
        %v6756 = vmul.f32 %v6716, 0.5
        %v6757 = vmul.f32 %v6717, 0.5
        %v6758 = vmul.f32 %v6718, 0.5
        %v6759 = vmul.f32 %v6719, 0.5
        %v6760 = vmul.f32 %v6720, 0.5
        %v6761 = vmul.f32 %v6721, 0.5
        %v6762 = vmul.f32 %v6722, 0.5
        %v6763 = vmul.f32 %v6723, 0.5
        %v6764 = vmul.f32 %v6724, 0.5
        %v6765 = vmul.f32 %v6725, 0.5
        %v6766 = vmul.f32 %v6726, 0.5
        %v6767 = vmul.f32 %v6727, 0.5
        %v6768 = vmul.f32 %v6728, 0.5
        %v6769 = vmul.f32 %v6729, 0.5
        %v6770 = vmul.f32 %v6730, 0.5
        %v6771 = vmul.f32 %v6731, 0.5
        %v6772 = vmul.f32 %v6732, 0.5
        %v6773 = vmul.f32 %v6733, 0.5
        %v6774 = vmul.f32 %v6734, 0.5
        %v6775 = vmul.f32 %v6735, 0.5
        %v6776 = vmul.f32 %v6696, 0.70710677
        %v6777 = vmul.f32 %v6697, 0.70710677
        %v6778 = vmul.f32 %v6698, 0.70710677
        %v6779 = vmul.f32 %v6699, 0.70710677
        %v6780 = vmul.f32 %v6700, 0.70710677
        %v6781 = vmul.f32 %v6701, 0.70710677
        %v6782 = vmul.f32 %v6702, 0.70710677
        %v6783 = vmul.f32 %v6703, 0.70710677
        %v6784 = vmul.f32 %v6704, 0.70710677
        %v6785 = vmul.f32 %v6705, 0.70710677
        %v6786 = vmul.f32 %v6706, 0.70710677
        %v6787 = vmul.f32 %v6707, 0.70710677
        %v6788 = vmul.f32 %v6708, 0.70710677
        %v6789 = vmul.f32 %v6709, 0.70710677
        %v6790 = vmul.f32 %v6710, 0.70710677
        %v6791 = vmul.f32 %v6711, 0.70710677
        %v6792 = vmul.f32 %v6712, 0.70710677
        %v6793 = vmul.f32 %v6713, 0.70710677
        %v6794 = vmul.f32 %v6714, 0.70710677
        %v6795 = vmul.f32 %v6715, 0.70710677
        %v6796 = vmul.f32 %v6716, 0.70710677
        %v6797 = vmul.f32 %v6717, 0.70710677
        %v6798 = vmul.f32 %v6718, 0.70710677
        %v6799 = vmul.f32 %v6719, 0.70710677
        %v6800 = vmul.f32 %v6720, 0.70710677
        %v6801 = vmul.f32 %v6721, 0.70710677
        %v6802 = vmul.f32 %v6722, 0.70710677
        %v6803 = vmul.f32 %v6723, 0.70710677
        %v6804 = vmul.f32 %v6724, 0.70710677
        %v6805 = vmul.f32 %v6725, 0.70710677
        %v6806 = vmul.f32 %v6726, 0.70710677
        %v6807 = vmul.f32 %v6727, 0.70710677
        %v6808 = vmul.f32 %v6728, 0.70710677
        %v6809 = vmul.f32 %v6729, 0.70710677
        %v6810 = vmul.f32 %v6730, 0.70710677
        %v6811 = vmul.f32 %v6731, 0.70710677
        %v6812 = vmul.f32 %v6732, 0.70710677
        %v6813 = vmul.f32 %v6733, 0.70710677
        %v6814 = vmul.f32 %v6734, 0.70710677
        %v6815 = vmul.f32 %v6735, 0.70710677
        %vm6816 = vcmp.ge.f32.partialorder %v6776, 0.0
        %vm6817 = vcmp.ge.f32.partialorder %v6777, 0.0
        %vm6818 = vcmp.ge.f32.partialorder %v6778, 0.0
        %vm6819 = vcmp.ge.f32.partialorder %v6779, 0.0
        %vm6820 = vcmp.ge.f32.partialorder %v6780, 0.0
        %vm6821 = vcmp.ge.f32.partialorder %v6781, 0.0
        %vm6822 = vcmp.ge.f32.partialorder %v6782, 0.0
        %vm6823 = vcmp.ge.f32.partialorder %v6783, 0.0
        %vm6824 = vcmp.ge.f32.partialorder %v6784, 0.0
        %vm6825 = vcmp.ge.f32.partialorder %v6785, 0.0
        %vm6826 = vcmp.ge.f32.partialorder %v6786, 0.0
        %vm6827 = vcmp.ge.f32.partialorder %v6787, 0.0
        %vm6828 = vcmp.ge.f32.partialorder %v6788, 0.0
        %vm6829 = vcmp.ge.f32.partialorder %v6789, 0.0
        %vm6830 = vcmp.ge.f32.partialorder %v6790, 0.0
        %vm6831 = vcmp.ge.f32.partialorder %v6791, 0.0
        %vm6832 = vcmp.ge.f32.partialorder %v6792, 0.0
        %vm6833 = vcmp.ge.f32.partialorder %v6793, 0.0
        %vm6834 = vcmp.ge.f32.partialorder %v6794, 0.0
        %vm6835 = vcmp.ge.f32.partialorder %v6795, 0.0
        %vm6836 = vcmp.ge.f32.partialorder %v6796, 0.0
        %vm6837 = vcmp.ge.f32.partialorder %v6797, 0.0
        %vm6838 = vcmp.ge.f32.partialorder %v6798, 0.0
        %vm6839 = vcmp.ge.f32.partialorder %v6799, 0.0
        %vm6840 = vcmp.ge.f32.partialorder %v6800, 0.0
        %vm6841 = vcmp.ge.f32.partialorder %v6801, 0.0
        %vm6842 = vcmp.ge.f32.partialorder %v6802, 0.0
        %vm6843 = vcmp.ge.f32.partialorder %v6803, 0.0
        %vm6844 = vcmp.ge.f32.partialorder %v6804, 0.0
        %vm6845 = vcmp.ge.f32.partialorder %v6805, 0.0
        %vm6846 = vcmp.ge.f32.partialorder %v6806, 0.0
        %vm6847 = vcmp.ge.f32.partialorder %v6807, 0.0
        %vm6848 = vcmp.ge.f32.partialorder %v6808, 0.0
        %vm6849 = vcmp.ge.f32.partialorder %v6809, 0.0
        %vm6850 = vcmp.ge.f32.partialorder %v6810, 0.0
        %vm6851 = vcmp.ge.f32.partialorder %v6811, 0.0
        %vm6852 = vcmp.ge.f32.partialorder %v6812, 0.0
        %vm6853 = vcmp.ge.f32.partialorder %v6813, 0.0
        %vm6854 = vcmp.ge.f32.partialorder %v6814, 0.0
        %vm6855 = vcmp.ge.f32.partialorder %v6815, 0.0
        %v6856 = vsel %vm6816, 1.0, -1.0
        %v6857 = vsel %vm6817, 1.0, -1.0
        %v6858 = vsel %vm6818, 1.0, -1.0
        %v6859 = vsel %vm6819, 1.0, -1.0
        %v6860 = vsel %vm6820, 1.0, -1.0
        %v6861 = vsel %vm6821, 1.0, -1.0
        %v6862 = vsel %vm6822, 1.0, -1.0
        %v6863 = vsel %vm6823, 1.0, -1.0
        %v6864 = vsel %vm6824, 1.0, -1.0
        %v6865 = vsel %vm6825, 1.0, -1.0
        %v6866 = vsel %vm6826, 1.0, -1.0
        %v6867 = vsel %vm6827, 1.0, -1.0
        %v6868 = vsel %vm6828, 1.0, -1.0
        %v6869 = vsel %vm6829, 1.0, -1.0
        %v6870 = vsel %vm6830, 1.0, -1.0
        %v6871 = vsel %vm6831, 1.0, -1.0
        %v6872 = vsel %vm6832, 1.0, -1.0
        %v6873 = vsel %vm6833, 1.0, -1.0
        %v6874 = vsel %vm6834, 1.0, -1.0
        %v6875 = vsel %vm6835, 1.0, -1.0
        %v6876 = vsel %vm6836, 1.0, -1.0
        %v6877 = vsel %vm6837, 1.0, -1.0
        %v6878 = vsel %vm6838, 1.0, -1.0
        %v6879 = vsel %vm6839, 1.0, -1.0
        %v6880 = vsel %vm6840, 1.0, -1.0
        %v6881 = vsel %vm6841, 1.0, -1.0
        %v6882 = vsel %vm6842, 1.0, -1.0
        %v6883 = vsel %vm6843, 1.0, -1.0
        %v6884 = vsel %vm6844, 1.0, -1.0
        %v6885 = vsel %vm6845, 1.0, -1.0
        %v6886 = vsel %vm6846, 1.0, -1.0
        %v6887 = vsel %vm6847, 1.0, -1.0
        %v6888 = vsel %vm6848, 1.0, -1.0
        %v6889 = vsel %vm6849, 1.0, -1.0
        %v6890 = vsel %vm6850, 1.0, -1.0
        %v6891 = vsel %vm6851, 1.0, -1.0
        %v6892 = vsel %vm6852, 1.0, -1.0
        %v6893 = vsel %vm6853, 1.0, -1.0
        %v6894 = vsel %vm6854, 1.0, -1.0
        %v6895 = vsel %vm6855, 1.0, -1.0
        %v6896 = vand.u32 2147483647, %v6776
        %v6897 = vand.u32 2147483647, %v6777
        %v6898 = vand.u32 2147483647, %v6778
        %v6899 = vand.u32 2147483647, %v6779
        %v6900 = vand.u32 2147483647, %v6780
        %v6901 = vand.u32 2147483647, %v6781
        %v6902 = vand.u32 2147483647, %v6782
        %v6903 = vand.u32 2147483647, %v6783
        %v6904 = vand.u32 2147483647, %v6784
        %v6905 = vand.u32 2147483647, %v6785
        %v6906 = vand.u32 2147483647, %v6786
        %v6907 = vand.u32 2147483647, %v6787
        %v6908 = vand.u32 2147483647, %v6788
        %v6909 = vand.u32 2147483647, %v6789
        %v6910 = vand.u32 2147483647, %v6790
        %v6911 = vand.u32 2147483647, %v6791
        %v6912 = vand.u32 2147483647, %v6792
        %v6913 = vand.u32 2147483647, %v6793
        %v6914 = vand.u32 2147483647, %v6794
        %v6915 = vand.u32 2147483647, %v6795
        %v6916 = vand.u32 2147483647, %v6796
        %v6917 = vand.u32 2147483647, %v6797
        %v6918 = vand.u32 2147483647, %v6798
        %v6919 = vand.u32 2147483647, %v6799
        %v6920 = vand.u32 2147483647, %v6800
        %v6921 = vand.u32 2147483647, %v6801
        %v6922 = vand.u32 2147483647, %v6802
        %v6923 = vand.u32 2147483647, %v6803
        %v6924 = vand.u32 2147483647, %v6804
        %v6925 = vand.u32 2147483647, %v6805
        %v6926 = vand.u32 2147483647, %v6806
        %v6927 = vand.u32 2147483647, %v6807
        %v6928 = vand.u32 2147483647, %v6808
        %v6929 = vand.u32 2147483647, %v6809
        %v6930 = vand.u32 2147483647, %v6810
        %v6931 = vand.u32 2147483647, %v6811
        %v6932 = vand.u32 2147483647, %v6812
        %v6933 = vand.u32 2147483647, %v6813
        %v6934 = vand.u32 2147483647, %v6814
        %v6935 = vand.u32 2147483647, %v6815
        %v6936 = vmul.f32 %v6896, 0.3275911
        %v6937 = vmul.f32 %v6897, 0.3275911
        %v6938 = vmul.f32 %v6898, 0.3275911
        %v6939 = vmul.f32 %v6899, 0.3275911
        %v6940 = vmul.f32 %v6900, 0.3275911
        %v6941 = vmul.f32 %v6901, 0.3275911
        %v6942 = vmul.f32 %v6902, 0.3275911
        %v6943 = vmul.f32 %v6903, 0.3275911
        %v6944 = vmul.f32 %v6904, 0.3275911
        %v6945 = vmul.f32 %v6905, 0.3275911
        %v6946 = vmul.f32 %v6906, 0.3275911
        %v6947 = vmul.f32 %v6907, 0.3275911
        %v6948 = vmul.f32 %v6908, 0.3275911
        %v6949 = vmul.f32 %v6909, 0.3275911
        %v6950 = vmul.f32 %v6910, 0.3275911
        %v6951 = vmul.f32 %v6911, 0.3275911
        %v6952 = vmul.f32 %v6912, 0.3275911
        %v6953 = vmul.f32 %v6913, 0.3275911
        %v6954 = vmul.f32 %v6914, 0.3275911
        %v6955 = vmul.f32 %v6915, 0.3275911
        %v6956 = vmul.f32 %v6916, 0.3275911
        %v6957 = vmul.f32 %v6917, 0.3275911
        %v6958 = vmul.f32 %v6918, 0.3275911
        %v6959 = vmul.f32 %v6919, 0.3275911
        %v6960 = vmul.f32 %v6920, 0.3275911
        %v6961 = vmul.f32 %v6921, 0.3275911
        %v6962 = vmul.f32 %v6922, 0.3275911
        %v6963 = vmul.f32 %v6923, 0.3275911
        %v6964 = vmul.f32 %v6924, 0.3275911
        %v6965 = vmul.f32 %v6925, 0.3275911
        %v6966 = vmul.f32 %v6926, 0.3275911
        %v6967 = vmul.f32 %v6927, 0.3275911
        %v6968 = vmul.f32 %v6928, 0.3275911
        %v6969 = vmul.f32 %v6929, 0.3275911
        %v6970 = vmul.f32 %v6930, 0.3275911
        %v6971 = vmul.f32 %v6931, 0.3275911
        %v6972 = vmul.f32 %v6932, 0.3275911
        %v6973 = vmul.f32 %v6933, 0.3275911
        %v6974 = vmul.f32 %v6934, 0.3275911
        %v6975 = vmul.f32 %v6935, 0.3275911
        %v6976 = vadd.f32 %v6936, 1.0
        %v6977 = vadd.f32 %v6937, 1.0
        %v6978 = vadd.f32 %v6938, 1.0
        %v6979 = vadd.f32 %v6939, 1.0
        %v6980 = vadd.f32 %v6940, 1.0
        %v6981 = vadd.f32 %v6941, 1.0
        %v6982 = vadd.f32 %v6942, 1.0
        %v6983 = vadd.f32 %v6943, 1.0
        %v6984 = vadd.f32 %v6944, 1.0
        %v6985 = vadd.f32 %v6945, 1.0
        %v6986 = vadd.f32 %v6946, 1.0
        %v6987 = vadd.f32 %v6947, 1.0
        %v6988 = vadd.f32 %v6948, 1.0
        %v6989 = vadd.f32 %v6949, 1.0
        %v6990 = vadd.f32 %v6950, 1.0
        %v6991 = vadd.f32 %v6951, 1.0
        %v6992 = vadd.f32 %v6952, 1.0
        %v6993 = vadd.f32 %v6953, 1.0
        %v6994 = vadd.f32 %v6954, 1.0
        %v6995 = vadd.f32 %v6955, 1.0
        %v6996 = vadd.f32 %v6956, 1.0
        %v6997 = vadd.f32 %v6957, 1.0
        %v6998 = vadd.f32 %v6958, 1.0
        %v6999 = vadd.f32 %v6959, 1.0
        %v7000 = vadd.f32 %v6960, 1.0
        %v7001 = vadd.f32 %v6961, 1.0
        %v7002 = vadd.f32 %v6962, 1.0
        %v7003 = vadd.f32 %v6963, 1.0
        %v7004 = vadd.f32 %v6964, 1.0
        %v7005 = vadd.f32 %v6965, 1.0
        %v7006 = vadd.f32 %v6966, 1.0
        %v7007 = vadd.f32 %v6967, 1.0
        %v7008 = vadd.f32 %v6968, 1.0
        %v7009 = vadd.f32 %v6969, 1.0
        %v7010 = vadd.f32 %v6970, 1.0
        %v7011 = vadd.f32 %v6971, 1.0
        %v7012 = vadd.f32 %v6972, 1.0
        %v7013 = vadd.f32 %v6973, 1.0
        %v7014 = vadd.f32 %v6974, 1.0
        %v7015 = vadd.f32 %v6975, 1.0
        %v7016 = vrcp.pop %v6976
        %v7017 = vmul.f32 1.0, %v7016
        %v7018 = vrcp.pop %v6977
        %v7019 = vmul.f32 1.0, %v7018
        %v7020 = vrcp.pop %v6978
        %v7021 = vmul.f32 1.0, %v7020
        %v7022 = vrcp.pop %v6979
        %v7023 = vmul.f32 1.0, %v7022
        %v7024 = vrcp.pop %v6980
        %v7025 = vmul.f32 1.0, %v7024
        %v7026 = vrcp.pop %v6981
        %v7027 = vmul.f32 1.0, %v7026
        %v7028 = vrcp.pop %v6982
        %v7029 = vmul.f32 1.0, %v7028
        %v7030 = vrcp.pop %v6983
        %v7031 = vmul.f32 1.0, %v7030
        %v7032 = vrcp.pop %v6984
        %v7033 = vmul.f32 1.0, %v7032
        %v7034 = vrcp.pop %v6985
        %v7035 = vmul.f32 1.0, %v7034
        %v7036 = vrcp.pop %v6986
        %v7037 = vmul.f32 1.0, %v7036
        %v7038 = vrcp.pop %v6987
        %v7039 = vmul.f32 1.0, %v7038
        %v7040 = vrcp.pop %v6988
        %v7041 = vmul.f32 1.0, %v7040
        %v7042 = vrcp.pop %v6989
        %v7043 = vmul.f32 1.0, %v7042
        %v7044 = vrcp.pop %v6990
        %v7045 = vmul.f32 1.0, %v7044
        %v7046 = vrcp.pop %v6991
        %v7047 = vmul.f32 1.0, %v7046
        %v7048 = vrcp.pop %v6992
        %v7049 = vmul.f32 1.0, %v7048
        %v7050 = vrcp.pop %v6993
        %v7051 = vmul.f32 1.0, %v7050
        %v7052 = vrcp.pop %v6994
        %v7053 = vmul.f32 1.0, %v7052
        %v7054 = vrcp.pop %v6995
        %v7055 = vmul.f32 1.0, %v7054
        %v7056 = vrcp.pop %v6996
        %v7057 = vmul.f32 1.0, %v7056
        %v7058 = vrcp.pop %v6997
        %v7059 = vmul.f32 1.0, %v7058
        %v7060 = vrcp.pop %v6998
        %v7061 = vmul.f32 1.0, %v7060
        %v7062 = vrcp.pop %v6999
        %v7063 = vmul.f32 1.0, %v7062
        %v7064 = vrcp.pop %v7000
        %v7065 = vmul.f32 1.0, %v7064
        %v7066 = vrcp.pop %v7001
        %v7067 = vmul.f32 1.0, %v7066
        %v7068 = vrcp.pop %v7002
        %v7069 = vmul.f32 1.0, %v7068
        %v7070 = vrcp.pop %v7003
        %v7071 = vmul.f32 1.0, %v7070
        %v7072 = vrcp.pop %v7004
        %v7073 = vmul.f32 1.0, %v7072
        %v7074 = vrcp.pop %v7005
        %v7075 = vmul.f32 1.0, %v7074
        %v7076 = vrcp.pop %v7006
        %v7077 = vmul.f32 1.0, %v7076
        %v7078 = vrcp.pop %v7007
        %v7079 = vmul.f32 1.0, %v7078
        %v7080 = vrcp.pop %v7008
        %v7081 = vmul.f32 1.0, %v7080
        %v7082 = vrcp.pop %v7009
        %v7083 = vmul.f32 1.0, %v7082
        %v7084 = vrcp.pop %v7010
        %v7085 = vmul.f32 1.0, %v7084
        %v7086 = vrcp.pop %v7011
        %v7087 = vmul.f32 1.0, %v7086
        %v7088 = vrcp.pop %v7012
        %v7089 = vmul.f32 1.0, %v7088
        %v7090 = vrcp.pop %v7013
        %v7091 = vmul.f32 1.0, %v7090
        %v7092 = vrcp.pop %v7014
        %v7093 = vmul.f32 1.0, %v7092
        %v7094 = vrcp.pop %v7015
        %v7095 = vmul.f32 1.0, %v7094
        %v7096 = vmul.f32 %v7017, 1.0614054
        %v7097 = vmul.f32 %v7019, 1.0614054
        %v7098 = vmul.f32 %v7021, 1.0614054
        %v7099 = vmul.f32 %v7023, 1.0614054
        %v7100 = vmul.f32 %v7025, 1.0614054
        %v7101 = vmul.f32 %v7027, 1.0614054
        %v7102 = vmul.f32 %v7029, 1.0614054
        %v7103 = vmul.f32 %v7031, 1.0614054
        %v7104 = vmul.f32 %v7033, 1.0614054
        %v7105 = vmul.f32 %v7035, 1.0614054
        %v7106 = vmul.f32 %v7037, 1.0614054
        %v7107 = vmul.f32 %v7039, 1.0614054
        %v7108 = vmul.f32 %v7041, 1.0614054
        %v7109 = vmul.f32 %v7043, 1.0614054
        %v7110 = vmul.f32 %v7045, 1.0614054
        %v7111 = vmul.f32 %v7047, 1.0614054
        %v7112 = vmul.f32 %v7049, 1.0614054
        %v7113 = vmul.f32 %v7051, 1.0614054
        %v7114 = vmul.f32 %v7053, 1.0614054
        %v7115 = vmul.f32 %v7055, 1.0614054
        %v7116 = vmul.f32 %v7057, 1.0614054
        %v7117 = vmul.f32 %v7059, 1.0614054
        %v7118 = vmul.f32 %v7061, 1.0614054
        %v7119 = vmul.f32 %v7063, 1.0614054
        %v7120 = vmul.f32 %v7065, 1.0614054
        %v7121 = vmul.f32 %v7067, 1.0614054
        %v7122 = vmul.f32 %v7069, 1.0614054
        %v7123 = vmul.f32 %v7071, 1.0614054
        %v7124 = vmul.f32 %v7073, 1.0614054
        %v7125 = vmul.f32 %v7075, 1.0614054
        %v7126 = vmul.f32 %v7077, 1.0614054
        %v7127 = vmul.f32 %v7079, 1.0614054
        %v7128 = vmul.f32 %v7081, 1.0614054
        %v7129 = vmul.f32 %v7083, 1.0614054
        %v7130 = vmul.f32 %v7085, 1.0614054
        %v7131 = vmul.f32 %v7087, 1.0614054
        %v7132 = vmul.f32 %v7089, 1.0614054
        %v7133 = vmul.f32 %v7091, 1.0614054
        %v7134 = vmul.f32 %v7093, 1.0614054
        %v7135 = vmul.f32 %v7095, 1.0614054
        %v7136 = vadd.f32 %v7096, -1.4531521
        %v7137 = vadd.f32 %v7097, -1.4531521
        %v7138 = vadd.f32 %v7098, -1.4531521
        %v7139 = vadd.f32 %v7099, -1.4531521
        %v7140 = vadd.f32 %v7100, -1.4531521
        %v7141 = vadd.f32 %v7101, -1.4531521
        %v7142 = vadd.f32 %v7102, -1.4531521
        %v7143 = vadd.f32 %v7103, -1.4531521
        %v7144 = vadd.f32 %v7104, -1.4531521
        %v7145 = vadd.f32 %v7105, -1.4531521
        %v7146 = vadd.f32 %v7106, -1.4531521
        %v7147 = vadd.f32 %v7107, -1.4531521
        %v7148 = vadd.f32 %v7108, -1.4531521
        %v7149 = vadd.f32 %v7109, -1.4531521
        %v7150 = vadd.f32 %v7110, -1.4531521
        %v7151 = vadd.f32 %v7111, -1.4531521
        %v7152 = vadd.f32 %v7112, -1.4531521
        %v7153 = vadd.f32 %v7113, -1.4531521
        %v7154 = vadd.f32 %v7114, -1.4531521
        %v7155 = vadd.f32 %v7115, -1.4531521
        %v7156 = vadd.f32 %v7116, -1.4531521
        %v7157 = vadd.f32 %v7117, -1.4531521
        %v7158 = vadd.f32 %v7118, -1.4531521
        %v7159 = vadd.f32 %v7119, -1.4531521
        %v7160 = vadd.f32 %v7120, -1.4531521
        %v7161 = vadd.f32 %v7121, -1.4531521
        %v7162 = vadd.f32 %v7122, -1.4531521
        %v7163 = vadd.f32 %v7123, -1.4531521
        %v7164 = vadd.f32 %v7124, -1.4531521
        %v7165 = vadd.f32 %v7125, -1.4531521
        %v7166 = vadd.f32 %v7126, -1.4531521
        %v7167 = vadd.f32 %v7127, -1.4531521
        %v7168 = vadd.f32 %v7128, -1.4531521
        %v7169 = vadd.f32 %v7129, -1.4531521
        %v7170 = vadd.f32 %v7130, -1.4531521
        %v7171 = vadd.f32 %v7131, -1.4531521
        %v7172 = vadd.f32 %v7132, -1.4531521
        %v7173 = vadd.f32 %v7133, -1.4531521
        %v7174 = vadd.f32 %v7134, -1.4531521
        %v7175 = vadd.f32 %v7135, -1.4531521
        %v7176 = vmul.f32 %v7136, %v7017
        %v7177 = vmul.f32 %v7137, %v7019
        %v7178 = vmul.f32 %v7138, %v7021
        %v7179 = vmul.f32 %v7139, %v7023
        %v7180 = vmul.f32 %v7140, %v7025
        %v7181 = vmul.f32 %v7141, %v7027
        %v7182 = vmul.f32 %v7142, %v7029
        %v7183 = vmul.f32 %v7143, %v7031
        %v7184 = vmul.f32 %v7144, %v7033
        %v7185 = vmul.f32 %v7145, %v7035
        %v7186 = vmul.f32 %v7146, %v7037
        %v7187 = vmul.f32 %v7147, %v7039
        %v7188 = vmul.f32 %v7148, %v7041
        %v7189 = vmul.f32 %v7149, %v7043
        %v7190 = vmul.f32 %v7150, %v7045
        %v7191 = vmul.f32 %v7151, %v7047
        %v7192 = vmul.f32 %v7152, %v7049
        %v7193 = vmul.f32 %v7153, %v7051
        %v7194 = vmul.f32 %v7154, %v7053
        %v7195 = vmul.f32 %v7155, %v7055
        %v7196 = vmul.f32 %v7156, %v7057
        %v7197 = vmul.f32 %v7157, %v7059
        %v7198 = vmul.f32 %v7158, %v7061
        %v7199 = vmul.f32 %v7159, %v7063
        %v7200 = vmul.f32 %v7160, %v7065
        %v7201 = vmul.f32 %v7161, %v7067
        %v7202 = vmul.f32 %v7162, %v7069
        %v7203 = vmul.f32 %v7163, %v7071
        %v7204 = vmul.f32 %v7164, %v7073
        %v7205 = vmul.f32 %v7165, %v7075
        %v7206 = vmul.f32 %v7166, %v7077
        %v7207 = vmul.f32 %v7167, %v7079
        %v7208 = vmul.f32 %v7168, %v7081
        %v7209 = vmul.f32 %v7169, %v7083
        %v7210 = vmul.f32 %v7170, %v7085
        %v7211 = vmul.f32 %v7171, %v7087
        %v7212 = vmul.f32 %v7172, %v7089
        %v7213 = vmul.f32 %v7173, %v7091
        %v7214 = vmul.f32 %v7174, %v7093
        %v7215 = vmul.f32 %v7175, %v7095
        %v7216 = vadd.f32 %v7176, 1.4214138
        %v7217 = vadd.f32 %v7177, 1.4214138
        %v7218 = vadd.f32 %v7178, 1.4214138
        %v7219 = vadd.f32 %v7179, 1.4214138
        %v7220 = vadd.f32 %v7180, 1.4214138
        %v7221 = vadd.f32 %v7181, 1.4214138
        %v7222 = vadd.f32 %v7182, 1.4214138
        %v7223 = vadd.f32 %v7183, 1.4214138
        %v7224 = vadd.f32 %v7184, 1.4214138
        %v7225 = vadd.f32 %v7185, 1.4214138
        %v7226 = vadd.f32 %v7186, 1.4214138
        %v7227 = vadd.f32 %v7187, 1.4214138
        %v7228 = vadd.f32 %v7188, 1.4214138
        %v7229 = vadd.f32 %v7189, 1.4214138
        %v7230 = vadd.f32 %v7190, 1.4214138
        %v7231 = vadd.f32 %v7191, 1.4214138
        %v7232 = vadd.f32 %v7192, 1.4214138
        %v7233 = vadd.f32 %v7193, 1.4214138
        %v7234 = vadd.f32 %v7194, 1.4214138
        %v7235 = vadd.f32 %v7195, 1.4214138
        %v7236 = vadd.f32 %v7196, 1.4214138
        %v7237 = vadd.f32 %v7197, 1.4214138
        %v7238 = vadd.f32 %v7198, 1.4214138
        %v7239 = vadd.f32 %v7199, 1.4214138
        %v7240 = vadd.f32 %v7200, 1.4214138
        %v7241 = vadd.f32 %v7201, 1.4214138
        %v7242 = vadd.f32 %v7202, 1.4214138
        %v7243 = vadd.f32 %v7203, 1.4214138
        %v7244 = vadd.f32 %v7204, 1.4214138
        %v7245 = vadd.f32 %v7205, 1.4214138
        %v7246 = vadd.f32 %v7206, 1.4214138
        %v7247 = vadd.f32 %v7207, 1.4214138
        %v7248 = vadd.f32 %v7208, 1.4214138
        %v7249 = vadd.f32 %v7209, 1.4214138
        %v7250 = vadd.f32 %v7210, 1.4214138
        %v7251 = vadd.f32 %v7211, 1.4214138
        %v7252 = vadd.f32 %v7212, 1.4214138
        %v7253 = vadd.f32 %v7213, 1.4214138
        %v7254 = vadd.f32 %v7214, 1.4214138
        %v7255 = vadd.f32 %v7215, 1.4214138
        %v7256 = vmul.f32 %v7216, %v7017
        %v7257 = vmul.f32 %v7217, %v7019
        %v7258 = vmul.f32 %v7218, %v7021
        %v7259 = vmul.f32 %v7219, %v7023
        %v7260 = vmul.f32 %v7220, %v7025
        %v7261 = vmul.f32 %v7221, %v7027
        %v7262 = vmul.f32 %v7222, %v7029
        %v7263 = vmul.f32 %v7223, %v7031
        %v7264 = vmul.f32 %v7224, %v7033
        %v7265 = vmul.f32 %v7225, %v7035
        %v7266 = vmul.f32 %v7226, %v7037
        %v7267 = vmul.f32 %v7227, %v7039
        %v7268 = vmul.f32 %v7228, %v7041
        %v7269 = vmul.f32 %v7229, %v7043
        %v7270 = vmul.f32 %v7230, %v7045
        %v7271 = vmul.f32 %v7231, %v7047
        %v7272 = vmul.f32 %v7232, %v7049
        %v7273 = vmul.f32 %v7233, %v7051
        %v7274 = vmul.f32 %v7234, %v7053
        %v7275 = vmul.f32 %v7235, %v7055
        %v7276 = vmul.f32 %v7236, %v7057
        %v7277 = vmul.f32 %v7237, %v7059
        %v7278 = vmul.f32 %v7238, %v7061
        %v7279 = vmul.f32 %v7239, %v7063
        %v7280 = vmul.f32 %v7240, %v7065
        %v7281 = vmul.f32 %v7241, %v7067
        %v7282 = vmul.f32 %v7242, %v7069
        %v7283 = vmul.f32 %v7243, %v7071
        %v7284 = vmul.f32 %v7244, %v7073
        %v7285 = vmul.f32 %v7245, %v7075
        %v7286 = vmul.f32 %v7246, %v7077
        %v7287 = vmul.f32 %v7247, %v7079
        %v7288 = vmul.f32 %v7248, %v7081
        %v7289 = vmul.f32 %v7249, %v7083
        %v7290 = vmul.f32 %v7250, %v7085
        %v7291 = vmul.f32 %v7251, %v7087
        %v7292 = vmul.f32 %v7252, %v7089
        %v7293 = vmul.f32 %v7253, %v7091
        %v7294 = vmul.f32 %v7254, %v7093
        %v7295 = vmul.f32 %v7255, %v7095
        %v7296 = vadd.f32 %v7256, -0.28449672
        %v7297 = vadd.f32 %v7257, -0.28449672
        %v7298 = vadd.f32 %v7258, -0.28449672
        %v7299 = vadd.f32 %v7259, -0.28449672
        %v7300 = vadd.f32 %v7260, -0.28449672
        %v7301 = vadd.f32 %v7261, -0.28449672
        %v7302 = vadd.f32 %v7262, -0.28449672
        %v7303 = vadd.f32 %v7263, -0.28449672
        %v7304 = vadd.f32 %v7264, -0.28449672
        %v7305 = vadd.f32 %v7265, -0.28449672
        %v7306 = vadd.f32 %v7266, -0.28449672
        %v7307 = vadd.f32 %v7267, -0.28449672
        %v7308 = vadd.f32 %v7268, -0.28449672
        %v7309 = vadd.f32 %v7269, -0.28449672
        %v7310 = vadd.f32 %v7270, -0.28449672
        %v7311 = vadd.f32 %v7271, -0.28449672
        %v7312 = vadd.f32 %v7272, -0.28449672
        %v7313 = vadd.f32 %v7273, -0.28449672
        %v7314 = vadd.f32 %v7274, -0.28449672
        %v7315 = vadd.f32 %v7275, -0.28449672
        %v7316 = vadd.f32 %v7276, -0.28449672
        %v7317 = vadd.f32 %v7277, -0.28449672
        %v7318 = vadd.f32 %v7278, -0.28449672
        %v7319 = vadd.f32 %v7279, -0.28449672
        %v7320 = vadd.f32 %v7280, -0.28449672
        %v7321 = vadd.f32 %v7281, -0.28449672
        %v7322 = vadd.f32 %v7282, -0.28449672
        %v7323 = vadd.f32 %v7283, -0.28449672
        %v7324 = vadd.f32 %v7284, -0.28449672
        %v7325 = vadd.f32 %v7285, -0.28449672
        %v7326 = vadd.f32 %v7286, -0.28449672
        %v7327 = vadd.f32 %v7287, -0.28449672
        %v7328 = vadd.f32 %v7288, -0.28449672
        %v7329 = vadd.f32 %v7289, -0.28449672
        %v7330 = vadd.f32 %v7290, -0.28449672
        %v7331 = vadd.f32 %v7291, -0.28449672
        %v7332 = vadd.f32 %v7292, -0.28449672
        %v7333 = vadd.f32 %v7293, -0.28449672
        %v7334 = vadd.f32 %v7294, -0.28449672
        %v7335 = vadd.f32 %v7295, -0.28449672
        %v7336 = vmul.f32 %v7296, %v7017
        %v7337 = vmul.f32 %v7297, %v7019
        %v7338 = vmul.f32 %v7298, %v7021
        %v7339 = vmul.f32 %v7299, %v7023
        %v7340 = vmul.f32 %v7300, %v7025
        %v7341 = vmul.f32 %v7301, %v7027
        %v7342 = vmul.f32 %v7302, %v7029
        %v7343 = vmul.f32 %v7303, %v7031
        %v7344 = vmul.f32 %v7304, %v7033
        %v7345 = vmul.f32 %v7305, %v7035
        %v7346 = vmul.f32 %v7306, %v7037
        %v7347 = vmul.f32 %v7307, %v7039
        %v7348 = vmul.f32 %v7308, %v7041
        %v7349 = vmul.f32 %v7309, %v7043
        %v7350 = vmul.f32 %v7310, %v7045
        %v7351 = vmul.f32 %v7311, %v7047
        %v7352 = vmul.f32 %v7312, %v7049
        %v7353 = vmul.f32 %v7313, %v7051
        %v7354 = vmul.f32 %v7314, %v7053
        %v7355 = vmul.f32 %v7315, %v7055
        %v7356 = vmul.f32 %v7316, %v7057
        %v7357 = vmul.f32 %v7317, %v7059
        %v7358 = vmul.f32 %v7318, %v7061
        %v7359 = vmul.f32 %v7319, %v7063
        %v7360 = vmul.f32 %v7320, %v7065
        %v7361 = vmul.f32 %v7321, %v7067
        %v7362 = vmul.f32 %v7322, %v7069
        %v7363 = vmul.f32 %v7323, %v7071
        %v7364 = vmul.f32 %v7324, %v7073
        %v7365 = vmul.f32 %v7325, %v7075
        %v7366 = vmul.f32 %v7326, %v7077
        %v7367 = vmul.f32 %v7327, %v7079
        %v7368 = vmul.f32 %v7328, %v7081
        %v7369 = vmul.f32 %v7329, %v7083
        %v7370 = vmul.f32 %v7330, %v7085
        %v7371 = vmul.f32 %v7331, %v7087
        %v7372 = vmul.f32 %v7332, %v7089
        %v7373 = vmul.f32 %v7333, %v7091
        %v7374 = vmul.f32 %v7334, %v7093
        %v7375 = vmul.f32 %v7335, %v7095
        %v7376 = vadd.f32 %v7336, 0.2548296
        %v7377 = vadd.f32 %v7337, 0.2548296
        %v7378 = vadd.f32 %v7338, 0.2548296
        %v7379 = vadd.f32 %v7339, 0.2548296
        %v7380 = vadd.f32 %v7340, 0.2548296
        %v7381 = vadd.f32 %v7341, 0.2548296
        %v7382 = vadd.f32 %v7342, 0.2548296
        %v7383 = vadd.f32 %v7343, 0.2548296
        %v7384 = vadd.f32 %v7344, 0.2548296
        %v7385 = vadd.f32 %v7345, 0.2548296
        %v7386 = vadd.f32 %v7346, 0.2548296
        %v7387 = vadd.f32 %v7347, 0.2548296
        %v7388 = vadd.f32 %v7348, 0.2548296
        %v7389 = vadd.f32 %v7349, 0.2548296
        %v7390 = vadd.f32 %v7350, 0.2548296
        %v7391 = vadd.f32 %v7351, 0.2548296
        %v7392 = vadd.f32 %v7352, 0.2548296
        %v7393 = vadd.f32 %v7353, 0.2548296
        %v7394 = vadd.f32 %v7354, 0.2548296
        %v7395 = vadd.f32 %v7355, 0.2548296
        %v7396 = vadd.f32 %v7356, 0.2548296
        %v7397 = vadd.f32 %v7357, 0.2548296
        %v7398 = vadd.f32 %v7358, 0.2548296
        %v7399 = vadd.f32 %v7359, 0.2548296
        %v7400 = vadd.f32 %v7360, 0.2548296
        %v7401 = vadd.f32 %v7361, 0.2548296
        %v7402 = vadd.f32 %v7362, 0.2548296
        %v7403 = vadd.f32 %v7363, 0.2548296
        %v7404 = vadd.f32 %v7364, 0.2548296
        %v7405 = vadd.f32 %v7365, 0.2548296
        %v7406 = vadd.f32 %v7366, 0.2548296
        %v7407 = vadd.f32 %v7367, 0.2548296
        %v7408 = vadd.f32 %v7368, 0.2548296
        %v7409 = vadd.f32 %v7369, 0.2548296
        %v7410 = vadd.f32 %v7370, 0.2548296
        %v7411 = vadd.f32 %v7371, 0.2548296
        %v7412 = vadd.f32 %v7372, 0.2548296
        %v7413 = vadd.f32 %v7373, 0.2548296
        %v7414 = vadd.f32 %v7374, 0.2548296
        %v7415 = vadd.f32 %v7375, 0.2548296
        %v7416 = vmul.f32 %v7376, %v7017
        %v7417 = vmul.f32 %v7377, %v7019
        %v7418 = vmul.f32 %v7378, %v7021
        %v7419 = vmul.f32 %v7379, %v7023
        %v7420 = vmul.f32 %v7380, %v7025
        %v7421 = vmul.f32 %v7381, %v7027
        %v7422 = vmul.f32 %v7382, %v7029
        %v7423 = vmul.f32 %v7383, %v7031
        %v7424 = vmul.f32 %v7384, %v7033
        %v7425 = vmul.f32 %v7385, %v7035
        %v7426 = vmul.f32 %v7386, %v7037
        %v7427 = vmul.f32 %v7387, %v7039
        %v7428 = vmul.f32 %v7388, %v7041
        %v7429 = vmul.f32 %v7389, %v7043
        %v7430 = vmul.f32 %v7390, %v7045
        %v7431 = vmul.f32 %v7391, %v7047
        %v7432 = vmul.f32 %v7392, %v7049
        %v7433 = vmul.f32 %v7393, %v7051
        %v7434 = vmul.f32 %v7394, %v7053
        %v7435 = vmul.f32 %v7395, %v7055
        %v7436 = vmul.f32 %v7396, %v7057
        %v7437 = vmul.f32 %v7397, %v7059
        %v7438 = vmul.f32 %v7398, %v7061
        %v7439 = vmul.f32 %v7399, %v7063
        %v7440 = vmul.f32 %v7400, %v7065
        %v7441 = vmul.f32 %v7401, %v7067
        %v7442 = vmul.f32 %v7402, %v7069
        %v7443 = vmul.f32 %v7403, %v7071
        %v7444 = vmul.f32 %v7404, %v7073
        %v7445 = vmul.f32 %v7405, %v7075
        %v7446 = vmul.f32 %v7406, %v7077
        %v7447 = vmul.f32 %v7407, %v7079
        %v7448 = vmul.f32 %v7408, %v7081
        %v7449 = vmul.f32 %v7409, %v7083
        %v7450 = vmul.f32 %v7410, %v7085
        %v7451 = vmul.f32 %v7411, %v7087
        %v7452 = vmul.f32 %v7412, %v7089
        %v7453 = vmul.f32 %v7413, %v7091
        %v7454 = vmul.f32 %v7414, %v7093
        %v7455 = vmul.f32 %v7415, %v7095
        %v7456 = vsub.f32 0.0, %v6896
        %v7457 = vsub.f32 0.0, %v6897
        %v7458 = vsub.f32 0.0, %v6898
        %v7459 = vsub.f32 0.0, %v6899
        %v7460 = vsub.f32 0.0, %v6900
        %v7461 = vsub.f32 0.0, %v6901
        %v7462 = vsub.f32 0.0, %v6902
        %v7463 = vsub.f32 0.0, %v6903
        %v7464 = vsub.f32 0.0, %v6904
        %v7465 = vsub.f32 0.0, %v6905
        %v7466 = vsub.f32 0.0, %v6906
        %v7467 = vsub.f32 0.0, %v6907
        %v7468 = vsub.f32 0.0, %v6908
        %v7469 = vsub.f32 0.0, %v6909
        %v7470 = vsub.f32 0.0, %v6910
        %v7471 = vsub.f32 0.0, %v6911
        %v7472 = vsub.f32 0.0, %v6912
        %v7473 = vsub.f32 0.0, %v6913
        %v7474 = vsub.f32 0.0, %v6914
        %v7475 = vsub.f32 0.0, %v6915
        %v7476 = vsub.f32 0.0, %v6916
        %v7477 = vsub.f32 0.0, %v6917
        %v7478 = vsub.f32 0.0, %v6918
        %v7479 = vsub.f32 0.0, %v6919
        %v7480 = vsub.f32 0.0, %v6920
        %v7481 = vsub.f32 0.0, %v6921
        %v7482 = vsub.f32 0.0, %v6922
        %v7483 = vsub.f32 0.0, %v6923
        %v7484 = vsub.f32 0.0, %v6924
        %v7485 = vsub.f32 0.0, %v6925
        %v7486 = vsub.f32 0.0, %v6926
        %v7487 = vsub.f32 0.0, %v6927
        %v7488 = vsub.f32 0.0, %v6928
        %v7489 = vsub.f32 0.0, %v6929
        %v7490 = vsub.f32 0.0, %v6930
        %v7491 = vsub.f32 0.0, %v6931
        %v7492 = vsub.f32 0.0, %v6932
        %v7493 = vsub.f32 0.0, %v6933
        %v7494 = vsub.f32 0.0, %v6934
        %v7495 = vsub.f32 0.0, %v6935
        %v7496 = vmul.f32 %v7456, %v6896
        %v7497 = vmul.f32 %v7457, %v6897
        %v7498 = vmul.f32 %v7458, %v6898
        %v7499 = vmul.f32 %v7459, %v6899
        %v7500 = vmul.f32 %v7460, %v6900
        %v7501 = vmul.f32 %v7461, %v6901
        %v7502 = vmul.f32 %v7462, %v6902
        %v7503 = vmul.f32 %v7463, %v6903
        %v7504 = vmul.f32 %v7464, %v6904
        %v7505 = vmul.f32 %v7465, %v6905
        %v7506 = vmul.f32 %v7466, %v6906
        %v7507 = vmul.f32 %v7467, %v6907
        %v7508 = vmul.f32 %v7468, %v6908
        %v7509 = vmul.f32 %v7469, %v6909
        %v7510 = vmul.f32 %v7470, %v6910
        %v7511 = vmul.f32 %v7471, %v6911
        %v7512 = vmul.f32 %v7472, %v6912
        %v7513 = vmul.f32 %v7473, %v6913
        %v7514 = vmul.f32 %v7474, %v6914
        %v7515 = vmul.f32 %v7475, %v6915
        %v7516 = vmul.f32 %v7476, %v6916
        %v7517 = vmul.f32 %v7477, %v6917
        %v7518 = vmul.f32 %v7478, %v6918
        %v7519 = vmul.f32 %v7479, %v6919
        %v7520 = vmul.f32 %v7480, %v6920
        %v7521 = vmul.f32 %v7481, %v6921
        %v7522 = vmul.f32 %v7482, %v6922
        %v7523 = vmul.f32 %v7483, %v6923
        %v7524 = vmul.f32 %v7484, %v6924
        %v7525 = vmul.f32 %v7485, %v6925
        %v7526 = vmul.f32 %v7486, %v6926
        %v7527 = vmul.f32 %v7487, %v6927
        %v7528 = vmul.f32 %v7488, %v6928
        %v7529 = vmul.f32 %v7489, %v6929
        %v7530 = vmul.f32 %v7490, %v6930
        %v7531 = vmul.f32 %v7491, %v6931
        %v7532 = vmul.f32 %v7492, %v6932
        %v7533 = vmul.f32 %v7493, %v6933
        %v7534 = vmul.f32 %v7494, %v6934
        %v7535 = vmul.f32 %v7495, %v6935
        %v7536 = vmul.f32 %v7496, 1.442695
        %v7537 = vpow.pop %v7536
        %v7538 = vmul.f32 %v7497, 1.442695
        %v7539 = vpow.pop %v7538
        %v7540 = vmul.f32 %v7498, 1.442695
        %v7541 = vpow.pop %v7540
        %v7542 = vmul.f32 %v7499, 1.442695
        %v7543 = vpow.pop %v7542
        %v7544 = vmul.f32 %v7500, 1.442695
        %v7545 = vpow.pop %v7544
        %v7546 = vmul.f32 %v7501, 1.442695
        %v7547 = vpow.pop %v7546
        %v7548 = vmul.f32 %v7502, 1.442695
        %v7549 = vpow.pop %v7548
        %v7550 = vmul.f32 %v7503, 1.442695
        %v7551 = vpow.pop %v7550
        %v7552 = vmul.f32 %v7504, 1.442695
        %v7553 = vpow.pop %v7552
        %v7554 = vmul.f32 %v7505, 1.442695
        %v7555 = vpow.pop %v7554
        %v7556 = vmul.f32 %v7506, 1.442695
        %v7557 = vpow.pop %v7556
        %v7558 = vmul.f32 %v7507, 1.442695
        %v7559 = vpow.pop %v7558
        %v7560 = vmul.f32 %v7508, 1.442695
        %v7561 = vpow.pop %v7560
        %v7562 = vmul.f32 %v7509, 1.442695
        %v7563 = vpow.pop %v7562
        %v7564 = vmul.f32 %v7510, 1.442695
        %v7565 = vpow.pop %v7564
        %v7566 = vmul.f32 %v7511, 1.442695
        %v7567 = vpow.pop %v7566
        %v7568 = vmul.f32 %v7512, 1.442695
        %v7569 = vpow.pop %v7568
        %v7570 = vmul.f32 %v7513, 1.442695
        %v7571 = vpow.pop %v7570
        %v7572 = vmul.f32 %v7514, 1.442695
        %v7573 = vpow.pop %v7572
        %v7574 = vmul.f32 %v7515, 1.442695
        %v7575 = vpow.pop %v7574
        %v7576 = vmul.f32 %v7516, 1.442695
        %v7577 = vpow.pop %v7576
        %v7578 = vmul.f32 %v7517, 1.442695
        %v7579 = vpow.pop %v7578
        %v7580 = vmul.f32 %v7518, 1.442695
        %v7581 = vpow.pop %v7580
        %v7582 = vmul.f32 %v7519, 1.442695
        %v7583 = vpow.pop %v7582
        %v7584 = vmul.f32 %v7520, 1.442695
        %v7585 = vpow.pop %v7584
        %v7586 = vmul.f32 %v7521, 1.442695
        %v7587 = vpow.pop %v7586
        %v7588 = vmul.f32 %v7522, 1.442695
        %v7589 = vpow.pop %v7588
        %v7590 = vmul.f32 %v7523, 1.442695
        %v7591 = vpow.pop %v7590
        %v7592 = vmul.f32 %v7524, 1.442695
        %v7593 = vpow.pop %v7592
        %v7594 = vmul.f32 %v7525, 1.442695
        %v7595 = vpow.pop %v7594
        %v7596 = vmul.f32 %v7526, 1.442695
        %v7597 = vpow.pop %v7596
        %v7598 = vmul.f32 %v7527, 1.442695
        %v7599 = vpow.pop %v7598
        %v7600 = vmul.f32 %v7528, 1.442695
        %v7601 = vpow.pop %v7600
        %v7602 = vmul.f32 %v7529, 1.442695
        %v7603 = vpow.pop %v7602
        %v7604 = vmul.f32 %v7530, 1.442695
        %v7605 = vpow.pop %v7604
        %v7606 = vmul.f32 %v7531, 1.442695
        %v7607 = vpow.pop %v7606
        %v7608 = vmul.f32 %v7532, 1.442695
        %v7609 = vpow.pop %v7608
        %v7610 = vmul.f32 %v7533, 1.442695
        %v7611 = vpow.pop %v7610
        %v7612 = vmul.f32 %v7534, 1.442695
        %v7613 = vpow.pop %v7612
        %v7614 = vmul.f32 %v7535, 1.442695
        %v7615 = vpow.pop %v7614
        %v7616 = vmul.f32 %v7416, %v7537
        %v7617 = vmul.f32 %v7417, %v7539
        %v7618 = vmul.f32 %v7418, %v7541
        %v7619 = vmul.f32 %v7419, %v7543
        %v7620 = vmul.f32 %v7420, %v7545
        %v7621 = vmul.f32 %v7421, %v7547
        %v7622 = vmul.f32 %v7422, %v7549
        %v7623 = vmul.f32 %v7423, %v7551
        %v7624 = vmul.f32 %v7424, %v7553
        %v7625 = vmul.f32 %v7425, %v7555
        %v7626 = vmul.f32 %v7426, %v7557
        %v7627 = vmul.f32 %v7427, %v7559
        %v7628 = vmul.f32 %v7428, %v7561
        %v7629 = vmul.f32 %v7429, %v7563
        %v7630 = vmul.f32 %v7430, %v7565
        %v7631 = vmul.f32 %v7431, %v7567
        %v7632 = vmul.f32 %v7432, %v7569
        %v7633 = vmul.f32 %v7433, %v7571
        %v7634 = vmul.f32 %v7434, %v7573
        %v7635 = vmul.f32 %v7435, %v7575
        %v7636 = vmul.f32 %v7436, %v7577
        %v7637 = vmul.f32 %v7437, %v7579
        %v7638 = vmul.f32 %v7438, %v7581
        %v7639 = vmul.f32 %v7439, %v7583
        %v7640 = vmul.f32 %v7440, %v7585
        %v7641 = vmul.f32 %v7441, %v7587
        %v7642 = vmul.f32 %v7442, %v7589
        %v7643 = vmul.f32 %v7443, %v7591
        %v7644 = vmul.f32 %v7444, %v7593
        %v7645 = vmul.f32 %v7445, %v7595
        %v7646 = vmul.f32 %v7446, %v7597
        %v7647 = vmul.f32 %v7447, %v7599
        %v7648 = vmul.f32 %v7448, %v7601
        %v7649 = vmul.f32 %v7449, %v7603
        %v7650 = vmul.f32 %v7450, %v7605
        %v7651 = vmul.f32 %v7451, %v7607
        %v7652 = vmul.f32 %v7452, %v7609
        %v7653 = vmul.f32 %v7453, %v7611
        %v7654 = vmul.f32 %v7454, %v7613
        %v7655 = vmul.f32 %v7455, %v7615
        %v7656 = vsub.f32 1.0, %v7616
        %v7657 = vsub.f32 1.0, %v7617
        %v7658 = vsub.f32 1.0, %v7618
        %v7659 = vsub.f32 1.0, %v7619
        %v7660 = vsub.f32 1.0, %v7620
        %v7661 = vsub.f32 1.0, %v7621
        %v7662 = vsub.f32 1.0, %v7622
        %v7663 = vsub.f32 1.0, %v7623
        %v7664 = vsub.f32 1.0, %v7624
        %v7665 = vsub.f32 1.0, %v7625
        %v7666 = vsub.f32 1.0, %v7626
        %v7667 = vsub.f32 1.0, %v7627
        %v7668 = vsub.f32 1.0, %v7628
        %v7669 = vsub.f32 1.0, %v7629
        %v7670 = vsub.f32 1.0, %v7630
        %v7671 = vsub.f32 1.0, %v7631
        %v7672 = vsub.f32 1.0, %v7632
        %v7673 = vsub.f32 1.0, %v7633
        %v7674 = vsub.f32 1.0, %v7634
        %v7675 = vsub.f32 1.0, %v7635
        %v7676 = vsub.f32 1.0, %v7636
        %v7677 = vsub.f32 1.0, %v7637
        %v7678 = vsub.f32 1.0, %v7638
        %v7679 = vsub.f32 1.0, %v7639
        %v7680 = vsub.f32 1.0, %v7640
        %v7681 = vsub.f32 1.0, %v7641
        %v7682 = vsub.f32 1.0, %v7642
        %v7683 = vsub.f32 1.0, %v7643
        %v7684 = vsub.f32 1.0, %v7644
        %v7685 = vsub.f32 1.0, %v7645
        %v7686 = vsub.f32 1.0, %v7646
        %v7687 = vsub.f32 1.0, %v7647
        %v7688 = vsub.f32 1.0, %v7648
        %v7689 = vsub.f32 1.0, %v7649
        %v7690 = vsub.f32 1.0, %v7650
        %v7691 = vsub.f32 1.0, %v7651
        %v7692 = vsub.f32 1.0, %v7652
        %v7693 = vsub.f32 1.0, %v7653
        %v7694 = vsub.f32 1.0, %v7654
        %v7695 = vsub.f32 1.0, %v7655
        %v7696 = vmul.f32 %v6856, %v7656
        %v7697 = vmul.f32 %v6857, %v7657
        %v7698 = vmul.f32 %v6858, %v7658
        %v7699 = vmul.f32 %v6859, %v7659
        %v7700 = vmul.f32 %v6860, %v7660
        %v7701 = vmul.f32 %v6861, %v7661
        %v7702 = vmul.f32 %v6862, %v7662
        %v7703 = vmul.f32 %v6863, %v7663
        %v7704 = vmul.f32 %v6864, %v7664
        %v7705 = vmul.f32 %v6865, %v7665
        %v7706 = vmul.f32 %v6866, %v7666
        %v7707 = vmul.f32 %v6867, %v7667
        %v7708 = vmul.f32 %v6868, %v7668
        %v7709 = vmul.f32 %v6869, %v7669
        %v7710 = vmul.f32 %v6870, %v7670
        %v7711 = vmul.f32 %v6871, %v7671
        %v7712 = vmul.f32 %v6872, %v7672
        %v7713 = vmul.f32 %v6873, %v7673
        %v7714 = vmul.f32 %v6874, %v7674
        %v7715 = vmul.f32 %v6875, %v7675
        %v7716 = vmul.f32 %v6876, %v7676
        %v7717 = vmul.f32 %v6877, %v7677
        %v7718 = vmul.f32 %v6878, %v7678
        %v7719 = vmul.f32 %v6879, %v7679
        %v7720 = vmul.f32 %v6880, %v7680
        %v7721 = vmul.f32 %v6881, %v7681
        %v7722 = vmul.f32 %v6882, %v7682
        %v7723 = vmul.f32 %v6883, %v7683
        %v7724 = vmul.f32 %v6884, %v7684
        %v7725 = vmul.f32 %v6885, %v7685
        %v7726 = vmul.f32 %v6886, %v7686
        %v7727 = vmul.f32 %v6887, %v7687
        %v7728 = vmul.f32 %v6888, %v7688
        %v7729 = vmul.f32 %v6889, %v7689
        %v7730 = vmul.f32 %v6890, %v7690
        %v7731 = vmul.f32 %v6891, %v7691
        %v7732 = vmul.f32 %v6892, %v7692
        %v7733 = vmul.f32 %v6893, %v7693
        %v7734 = vmul.f32 %v6894, %v7694
        %v7735 = vmul.f32 %v6895, %v7695
        %v7736 = vadd.f32 %v7696, 1.0
        %v7737 = vadd.f32 %v7697, 1.0
        %v7738 = vadd.f32 %v7698, 1.0
        %v7739 = vadd.f32 %v7699, 1.0
        %v7740 = vadd.f32 %v7700, 1.0
        %v7741 = vadd.f32 %v7701, 1.0
        %v7742 = vadd.f32 %v7702, 1.0
        %v7743 = vadd.f32 %v7703, 1.0
        %v7744 = vadd.f32 %v7704, 1.0
        %v7745 = vadd.f32 %v7705, 1.0
        %v7746 = vadd.f32 %v7706, 1.0
        %v7747 = vadd.f32 %v7707, 1.0
        %v7748 = vadd.f32 %v7708, 1.0
        %v7749 = vadd.f32 %v7709, 1.0
        %v7750 = vadd.f32 %v7710, 1.0
        %v7751 = vadd.f32 %v7711, 1.0
        %v7752 = vadd.f32 %v7712, 1.0
        %v7753 = vadd.f32 %v7713, 1.0
        %v7754 = vadd.f32 %v7714, 1.0
        %v7755 = vadd.f32 %v7715, 1.0
        %v7756 = vadd.f32 %v7716, 1.0
        %v7757 = vadd.f32 %v7717, 1.0
        %v7758 = vadd.f32 %v7718, 1.0
        %v7759 = vadd.f32 %v7719, 1.0
        %v7760 = vadd.f32 %v7720, 1.0
        %v7761 = vadd.f32 %v7721, 1.0
        %v7762 = vadd.f32 %v7722, 1.0
        %v7763 = vadd.f32 %v7723, 1.0
        %v7764 = vadd.f32 %v7724, 1.0
        %v7765 = vadd.f32 %v7725, 1.0
        %v7766 = vadd.f32 %v7726, 1.0
        %v7767 = vadd.f32 %v7727, 1.0
        %v7768 = vadd.f32 %v7728, 1.0
        %v7769 = vadd.f32 %v7729, 1.0
        %v7770 = vadd.f32 %v7730, 1.0
        %v7771 = vadd.f32 %v7731, 1.0
        %v7772 = vadd.f32 %v7732, 1.0
        %v7773 = vadd.f32 %v7733, 1.0
        %v7774 = vadd.f32 %v7734, 1.0
        %v7775 = vadd.f32 %v7735, 1.0
        %v7776 = vmul.f32 %v6736, %v7736
        %v7777 = vmul.f32 %v6737, %v7737
        %v7778 = vmul.f32 %v6738, %v7738
        %v7779 = vmul.f32 %v6739, %v7739
        %v7780 = vmul.f32 %v6740, %v7740
        %v7781 = vmul.f32 %v6741, %v7741
        %v7782 = vmul.f32 %v6742, %v7742
        %v7783 = vmul.f32 %v6743, %v7743
        %v7784 = vmul.f32 %v6744, %v7744
        %v7785 = vmul.f32 %v6745, %v7745
        %v7786 = vmul.f32 %v6746, %v7746
        %v7787 = vmul.f32 %v6747, %v7747
        %v7788 = vmul.f32 %v6748, %v7748
        %v7789 = vmul.f32 %v6749, %v7749
        %v7790 = vmul.f32 %v6750, %v7750
        %v7791 = vmul.f32 %v6751, %v7751
        %v7792 = vmul.f32 %v6752, %v7752
        %v7793 = vmul.f32 %v6753, %v7753
        %v7794 = vmul.f32 %v6754, %v7754
        %v7795 = vmul.f32 %v6755, %v7755
        %v7796 = vmul.f32 %v6756, %v7756
        %v7797 = vmul.f32 %v6757, %v7757
        %v7798 = vmul.f32 %v6758, %v7758
        %v7799 = vmul.f32 %v6759, %v7759
        %v7800 = vmul.f32 %v6760, %v7760
        %v7801 = vmul.f32 %v6761, %v7761
        %v7802 = vmul.f32 %v6762, %v7762
        %v7803 = vmul.f32 %v6763, %v7763
        %v7804 = vmul.f32 %v6764, %v7764
        %v7805 = vmul.f32 %v6765, %v7765
        %v7806 = vmul.f32 %v6766, %v7766
        %v7807 = vmul.f32 %v6767, %v7767
        %v7808 = vmul.f32 %v6768, %v7768
        %v7809 = vmul.f32 %v6769, %v7769
        %v7810 = vmul.f32 %v6770, %v7770
        %v7811 = vmul.f32 %v6771, %v7771
        %v7812 = vmul.f32 %v6772, %v7772
        %v7813 = vmul.f32 %v6773, %v7773
        %v7814 = vmul.f32 %v6774, %v7774
        %v7815 = vmul.f32 %v6775, %v7775
        %v7816 = vpack.c.bf16 %v7778, %v7776
        %v7817 = vpack.c.bf16 %v7779, %v7777
        %v7818 = vpack.c.bf16 %v7782, %v7780
        %v7819 = vpack.c.bf16 %v7783, %v7781
        %v7820 = vpack.c.bf16 %v7786, %v7784
        %v7821 = vpack.c.bf16 %v7787, %v7785
        %v7822 = vpack.c.bf16 %v7790, %v7788
        %v7823 = vpack.c.bf16 %v7791, %v7789
        %v7824 = vpack.c.bf16 %v7794, %v7792
        %v7825 = vpack.c.bf16 %v7795, %v7793
        %v7826 = vpack.c.bf16 %v7798, %v7796
        %v7827 = vpack.c.bf16 %v7799, %v7797
        %v7828 = vpack.c.bf16 %v7802, %v7800
        %v7829 = vpack.c.bf16 %v7803, %v7801
        %v7830 = vpack.c.bf16 %v7806, %v7804
        %v7831 = vpack.c.bf16 %v7807, %v7805
        %v7832 = vpack.c.bf16 %v7810, %v7808
        %v7833 = vpack.c.bf16 %v7811, %v7809
        %v7834 = vpack.c.bf16 %v7814, %v7812
        %v7835 = vpack.c.bf16 %v7815, %v7813
        %v7836 = vld [vmem:[%s874] sm:$0xff]
        %v7837 = vld [vmem:[%s874 + $0x8] sm:$0xff]
        %v7838 = vld [vmem:[%s874 + $0x10] sm:$0xff]
        %v7839 = vld [vmem:[%s874 + $0x18] sm:$0xff]
        %v7840 = vld [vmem:[%s874 + $0x20] sm:$0xff]
        %v7841 = vld [vmem:[%s874 + $0x28] sm:$0xff]
        %v7842 = vld [vmem:[%s874 + $0x30] sm:$0xff]
        %v7843 = vld [vmem:[%s874 + $0x38] sm:$0xff]
        %v7844 = vunpack.c.l.s8.bf16 %v7836
        %v7845 = vunpack.c.h.s8.bf16 %v7836
        %v7846 = vunpack.c.l.s8.bf16 %v7837
        %v7847 = vunpack.c.h.s8.bf16 %v7837
        %v7848 = vunpack.c.l.s8.bf16 %v7838
        %v7849 = vunpack.c.h.s8.bf16 %v7838
        %v7850 = vunpack.c.l.s8.bf16 %v7839
        %v7851 = vunpack.c.h.s8.bf16 %v7839
        %v7852 = vunpack.c.l.s8.bf16 %v7840
        %v7853 = vunpack.c.h.s8.bf16 %v7840
        %v7854 = vunpack.c.l.s8.bf16 %v7841
        %v7855 = vunpack.c.h.s8.bf16 %v7841
        %v7856 = vunpack.c.l.s8.bf16 %v7842
        %v7857 = vunpack.c.h.s8.bf16 %v7842
        %v7858 = vunpack.c.l.s8.bf16 %v7843
        %v7859 = vunpack.c.h.s8.bf16 %v7843
        %7860 = vmatprep.subr.bf16.mxu0 0
        %7861 = vmatpush1.bf16.msra.mxu0 %v7844
        %7862 = vmatprep.subr.bf16.mxu0 0
        %7863 = vmatpush1.bf16.msra.mxu0 %v7845
        %7864 = vmatprep.subr.bf16.mxu0 0
        %7865 = vmatpush1.bf16.msra.mxu0 %v7846
        %7866 = vmatprep.subr.bf16.mxu0 0
        %7867 = vmatpush1.bf16.msra.mxu0 %v7847
        %7868 = vmatprep.subr.bf16.mxu0 0
        %7869 = vmatpush1.bf16.msra.mxu0 %v7848
        %7870 = vmatprep.subr.bf16.mxu0 0
        %7871 = vmatpush1.bf16.msra.mxu0 %v7849
        %7872 = vmatprep.subr.bf16.mxu0 0
        %7873 = vmatpush1.bf16.msra.mxu0 %v7850
        %7874 = vmatprep.subr.bf16.mxu0 0
        %7875 = vmatpush1.bf16.msra.mxu0 %v7851
        %7876 = vmatprep.subr.bf16.mxu0 0
        %7877 = vmatpush1.bf16.msra.mxu0 %v7852
        %7878 = vmatprep.subr.bf16.mxu0 0
        %7879 = vmatpush1.bf16.msra.mxu0 %v7853
        %7880 = vmatprep.subr.bf16.mxu0 0
        %7881 = vmatpush1.bf16.msra.mxu0 %v7854
        %7882 = vmatprep.subr.bf16.mxu0 0
        %7883 = vmatpush1.bf16.msra.mxu0 %v7855
        %7884 = vmatprep.subr.bf16.mxu0 0
        %7885 = vmatpush1.bf16.msra.mxu0 %v7856
        %7886 = vmatprep.subr.bf16.mxu0 0
        %7887 = vmatpush1.bf16.msra.mxu0 %v7857
        %7888 = vmatprep.subr.bf16.mxu0 0
        %7889 = vmatpush1.bf16.msra.mxu0 %v7858
        %7890 = vmatprep.subr.bf16.mxu0 0
        %7891 = vmatpush1.bf16.msra.mxu0 %v7859
        %7892 = vmatprep.mubr.bf16.mxu0 %v7817
        %7893 = vmatmul.mubr.bf16.gmra.mrb[0].mxu0 %v7816
        %v7894 = vpop.f32.mrb[0].mxu0
        %v7895 = vadd.f32 0.0, %v7894
        %v7896 = vpop.f32.mrb[0].mxu0
        %v7897 = vpop.f32.mrb[0].mxu0
        %v7898 = vadd.f32 0.0, %v7897
        %v7899 = vpop.f32.mrb[0].mxu0
        %7900 = vmatprep.mubr.bf16.mxu0 %v7819
        %7901 = vmatmul.mubr.bf16.gmra.mrb[0].mxu0 %v7818
        %v7902 = vpop.f32.mrb[0].mxu0
        %v7903 = vadd.f32 0.0, %v7902
        %v7904 = vpop.f32.mrb[0].mxu0
        %v7905 = vpop.f32.mrb[0].mxu0
        %v7906 = vadd.f32 0.0, %v7905
        %v7907 = vpop.f32.mrb[0].mxu0
        %7908 = vmatprep.mubr.bf16.mxu0 %v7821
        %7909 = vmatmul.mubr.bf16.gmra.mrb[0].mxu0 %v7820
        %v7910 = vpop.f32.mrb[0].mxu0
        %v7911 = vadd.f32 0.0, %v7910
        %v7912 = vpop.f32.mrb[0].mxu0
        %v7913 = vpop.f32.mrb[0].mxu0
        %v7914 = vadd.f32 0.0, %v7913
        %v7915 = vpop.f32.mrb[0].mxu0
        %7916 = vmatprep.mubr.bf16.mxu0 %v7823
        %7917 = vmatmul.mubr.bf16.gmra.mrb[0].mxu0 %v7822
        %v7918 = vpop.f32.mrb[0].mxu0
        %v7919 = vadd.f32 0.0, %v7918
        %v7920 = vpop.f32.mrb[0].mxu0
        %v7921 = vpop.f32.mrb[0].mxu0
        %v7922 = vadd.f32 0.0, %v7921
        %v7923 = vpop.f32.mrb[0].mxu0
        %7924 = vmatprep.mubr.bf16.mxu0 %v7825
        %7925 = vmatmul.mubr.bf16.gmra.mrb[0].mxu0 %v7824
        %v7926 = vpop.f32.mrb[0].mxu0
        %v7927 = vadd.f32 0.0, %v7926
        %v7928 = vpop.f32.mrb[0].mxu0
        %v7929 = vpop.f32.mrb[0].mxu0
        %v7930 = vadd.f32 0.0, %v7929
        %v7931 = vpop.f32.mrb[0].mxu0
        %7932 = vmatprep.mubr.bf16.mxu0 %v7827
        %7933 = vmatmul.mubr.bf16.gmra.mrb[0].mxu0 %v7826
        %v7934 = vpop.f32.mrb[0].mxu0
        %v7935 = vadd.f32 0.0, %v7934
        %v7936 = vpop.f32.mrb[0].mxu0
        %v7937 = vpop.f32.mrb[0].mxu0
        %v7938 = vadd.f32 0.0, %v7937
        %v7939 = vpop.f32.mrb[0].mxu0
        %7940 = vmatprep.mubr.bf16.mxu0 %v7829
        %7941 = vmatmul.mubr.bf16.gmra.mrb[0].mxu0 %v7828
        %v7942 = vpop.f32.mrb[0].mxu0
        %v7943 = vadd.f32 0.0, %v7942
        %v7944 = vpop.f32.mrb[0].mxu0
        %v7945 = vpop.f32.mrb[0].mxu0
        %v7946 = vadd.f32 0.0, %v7945
        %v7947 = vpop.f32.mrb[0].mxu0
        %7948 = vmatprep.mubr.bf16.mxu0 %v7831
        %7949 = vmatmul.mubr.bf16.gmra.mrb[0].mxu0 %v7830
        %v7950 = vpop.f32.mrb[0].mxu0
        %v7951 = vadd.f32 0.0, %v7950
        %v7952 = vpop.f32.mrb[0].mxu0
        %v7953 = vpop.f32.mrb[0].mxu0
        %v7954 = vadd.f32 0.0, %v7953
        %v7955 = vpop.f32.mrb[0].mxu0
        %7956 = vmatprep.mubr.bf16.mxu0 %v7833
        %7957 = vmatmul.mubr.bf16.gmra.mrb[0].mxu0 %v7832
        %v7958 = vpop.f32.mrb[0].mxu0
        %v7959 = vadd.f32 0.0, %v7958
        %v7960 = vpop.f32.mrb[0].mxu0
        %v7961 = vpop.f32.mrb[0].mxu0
        %v7962 = vadd.f32 0.0, %v7961
        %v7963 = vpop.f32.mrb[0].mxu0
        %7964 = vmatprep.mubr.bf16.mxu0 %v7835
        %7965 = vmatmul.mubr.bf16.gmra.mrb[0].mxu0 %v7834
        %v7966 = vpop.f32.mrb[0].mxu0
        %v7967 = vadd.f32 0.0, %v7966
        %v7968 = vpop.f32.mrb[0].mxu0
        %v7969 = vpop.f32.mrb[0].mxu0
        %v7970 = vadd.f32 0.0, %v7969
        %v7971 = vpop.f32.mrb[0].mxu0
        %7972 = vdwg.mxu0
        %v7973 = vld [vmem:[%s1027] sm:$0x1]
        %v7975 = vlaneseq
        %v7976 = vshrl.u32 %v7975, 7
        %v7977 = vsub.s32 0, %v7976
        %v7978 = vrot.slane %v7973, %v7977
        %v7980 = vmul.f32 %v7895, %v7978
        %v7981 = vmul.f32 %v7898, %v7978
        %v7982 = vmul.f32 %v7903, %v7978
        %v7983 = vmul.f32 %v7906, %v7978
        %v7984 = vmul.f32 %v7911, %v7978
        %v7985 = vmul.f32 %v7914, %v7978
        %v7986 = vmul.f32 %v7919, %v7978
        %v7987 = vmul.f32 %v7922, %v7978
        %v7988 = vmul.f32 %v7927, %v7978
        %v7989 = vmul.f32 %v7930, %v7978
        %v7990 = vmul.f32 %v7935, %v7978
        %v7991 = vmul.f32 %v7938, %v7978
        %v7992 = vmul.f32 %v7943, %v7978
        %v7993 = vmul.f32 %v7946, %v7978
        %v7994 = vmul.f32 %v7951, %v7978
        %v7995 = vmul.f32 %v7954, %v7978
        %v7996 = vmul.f32 %v7959, %v7978
        %v7997 = vmul.f32 %v7962, %v7978
        %v7998 = vmul.f32 %v7967, %v7978
        %v7999 = vmul.f32 %v7970, %v7978
        %v8000 = vld [vmem:[#allocation2] sm:$0xff]
        %v8001 = vld [vmem:[#allocation2 + $0x8] sm:$0xff]
        %v8002 = vld [vmem:[#allocation2 + $0x10] sm:$0xff]
        %v8003 = vld [vmem:[#allocation2 + $0x18] sm:$0xff]
        %v8004 = vld [vmem:[#allocation2 + $0x20] sm:$0xff]
        %v8005 = vld [vmem:[#allocation2 + $0x28] sm:$0xff]
        %v8006 = vld [vmem:[#allocation2 + $0x30] sm:$0xff]
        %v8007 = vld [vmem:[#allocation2 + $0x38] sm:$0xff]
        %v8008 = vld [vmem:[#allocation2 + $0x40] sm:$0xff]
        %v8009 = vld [vmem:[#allocation2 + $0x48] sm:$0xff]
        %v8010 = vld [vmem:[#allocation2 + $0x50] sm:$0xff]
        %v8011 = vld [vmem:[#allocation2 + $0x58] sm:$0xff]
        %v8012 = vld [vmem:[#allocation2 + $0x60] sm:$0xff]
        %v8013 = vld [vmem:[#allocation2 + $0x68] sm:$0xff]
        %v8014 = vld [vmem:[#allocation2 + $0x70] sm:$0xff]
        %v8015 = vld [vmem:[#allocation2 + $0x78] sm:$0xff]
        %v8016 = vld [vmem:[#allocation2 + $0x80] sm:$0xff]
        %v8017 = vld [vmem:[#allocation2 + $0x88] sm:$0xff]
        %v8018 = vld [vmem:[#allocation2 + $0x90] sm:$0xff]
        %v8019 = vld [vmem:[#allocation2 + $0x98] sm:$0xff]
        %v8020 = vadd.f32 %v8000, %v7980
        %v8021 = vadd.f32 %v8001, %v7981
        %v8022 = vadd.f32 %v8002, %v7982
        %v8023 = vadd.f32 %v8003, %v7983
        %v8024 = vadd.f32 %v8004, %v7984
        %v8025 = vadd.f32 %v8005, %v7985
        %v8026 = vadd.f32 %v8006, %v7986
        %v8027 = vadd.f32 %v8007, %v7987
        %v8028 = vadd.f32 %v8008, %v7988
        %v8029 = vadd.f32 %v8009, %v7989
        %v8030 = vadd.f32 %v8010, %v7990
        %v8031 = vadd.f32 %v8011, %v7991
        %v8032 = vadd.f32 %v8012, %v7992
        %v8033 = vadd.f32 %v8013, %v7993
        %v8034 = vadd.f32 %v8014, %v7994
        %v8035 = vadd.f32 %v8015, %v7995
        %v8036 = vadd.f32 %v8016, %v7996
        %v8037 = vadd.f32 %v8017, %v7997
        %v8038 = vadd.f32 %v8018, %v7998
        %v8039 = vadd.f32 %v8019, %v7999
        %8040 = vst [vmem:[#allocation2] sm:$0xff] %v8020
        %8041 = vst [vmem:[#allocation2 + $0x8] sm:$0xff] %v8021
        %8042 = vst [vmem:[#allocation2 + $0x10] sm:$0xff] %v8022
        %8043 = vst [vmem:[#allocation2 + $0x18] sm:$0xff] %v8023
        %8044 = vst [vmem:[#allocation2 + $0x20] sm:$0xff] %v8024
        %8045 = vst [vmem:[#allocation2 + $0x28] sm:$0xff] %v8025
        %8046 = vst [vmem:[#allocation2 + $0x30] sm:$0xff] %v8026
        %8047 = vst [vmem:[#allocation2 + $0x38] sm:$0xff] %v8027
        %8048 = vst [vmem:[#allocation2 + $0x40] sm:$0xff] %v8028
        %8049 = vst [vmem:[#allocation2 + $0x48] sm:$0xff] %v8029
        %8050 = vst [vmem:[#allocation2 + $0x50] sm:$0xff] %v8030
        %8051 = vst [vmem:[#allocation2 + $0x58] sm:$0xff] %v8031
        %8052 = vst [vmem:[#allocation2 + $0x60] sm:$0xff] %v8032
        %8053 = vst [vmem:[#allocation2 + $0x68] sm:$0xff] %v8033
        %8054 = vst [vmem:[#allocation2 + $0x70] sm:$0xff] %v8034
        %8055 = vst [vmem:[#allocation2 + $0x78] sm:$0xff] %v8035
        %8056 = vst [vmem:[#allocation2 + $0x80] sm:$0xff] %v8036
        %8057 = vst [vmem:[#allocation2 + $0x88] sm:$0xff] %v8037
        %8058 = vst [vmem:[#allocation2 + $0x90] sm:$0xff] %v8038
        %8059 = vst [vmem:[#allocation2 + $0x98] sm:$0xff] %v8039
        %p8060 = scmp.eq.s32.totalorder %s49, 1
        // Predicated region
        $region137: #{tpu_custom_call.1} parent=95 // pred_check
          %p8061 = pneg %p8060
        $region138: #{tpu_custom_call.1} parent=95 // pred_check_branch
          %8063 = sbr.rel (%p8061) target = $region140
        $region139: #{tpu_custom_call.1} parent=95 // pred_region
          %v8064 = vld [vmem:[#allocation2] sm:$0xff]
          %v8065 = vld [vmem:[#allocation2 + $0x8] sm:$0xff]
          %v8066 = vld [vmem:[#allocation2 + $0x10] sm:$0xff]
          %v8067 = vld [vmem:[#allocation2 + $0x18] sm:$0xff]
          %v8068 = vld [vmem:[#allocation2 + $0x20] sm:$0xff]
          %v8069 = vld [vmem:[#allocation2 + $0x28] sm:$0xff]
          %v8070 = vld [vmem:[#allocation2 + $0x30] sm:$0xff]
          %v8071 = vld [vmem:[#allocation2 + $0x38] sm:$0xff]
          %v8072 = vld [vmem:[#allocation2 + $0x40] sm:$0xff]
          %v8073 = vld [vmem:[#allocation2 + $0x48] sm:$0xff]
          %v8074 = vld [vmem:[#allocation2 + $0x50] sm:$0xff]
          %v8075 = vld [vmem:[#allocation2 + $0x58] sm:$0xff]
          %v8076 = vld [vmem:[#allocation2 + $0x60] sm:$0xff]
          %v8077 = vld [vmem:[#allocation2 + $0x68] sm:$0xff]
          %v8078 = vld [vmem:[#allocation2 + $0x70] sm:$0xff]
          %v8079 = vld [vmem:[#allocation2 + $0x78] sm:$0xff]
          %v8080 = vld [vmem:[#allocation2 + $0x80] sm:$0xff]
          %v8081 = vld [vmem:[#allocation2 + $0x88] sm:$0xff]
          %v8082 = vld [vmem:[#allocation2 + $0x90] sm:$0xff]
          %v8083 = vld [vmem:[#allocation2 + $0x98] sm:$0xff]
          %v8084 = vld [vmem:[%s1030] sm:$0x1]
          %v8086 = vlaneseq
          %v8087 = vshrl.u32 %v8086, 7
          %v8088 = vsub.s32 0, %v8087
          %v8089 = vrot.slane %v8084, %v8088
          %v8091 = vadd.f32 %v8064, %v8089
          %v8092 = vadd.f32 %v8065, %v8089
          %v8093 = vadd.f32 %v8066, %v8089
          %v8094 = vadd.f32 %v8067, %v8089
          %v8095 = vadd.f32 %v8068, %v8089
          %v8096 = vadd.f32 %v8069, %v8089
          %v8097 = vadd.f32 %v8070, %v8089
          %v8098 = vadd.f32 %v8071, %v8089
          %v8099 = vadd.f32 %v8072, %v8089
          %v8100 = vadd.f32 %v8073, %v8089
          %v8101 = vadd.f32 %v8074, %v8089
          %v8102 = vadd.f32 %v8075, %v8089
          %v8103 = vadd.f32 %v8076, %v8089
          %v8104 = vadd.f32 %v8077, %v8089
          %v8105 = vadd.f32 %v8078, %v8089
          %v8106 = vadd.f32 %v8079, %v8089
          %v8107 = vadd.f32 %v8080, %v8089
          %v8108 = vadd.f32 %v8081, %v8089
          %v8109 = vadd.f32 %v8082, %v8089
          %v8110 = vadd.f32 %v8083, %v8089
          %8111 = vst [vmem:[#allocation2] sm:$0xff] %v8091
          %8112 = vst [vmem:[#allocation2 + $0x8] sm:$0xff] %v8092
          %8113 = vst [vmem:[#allocation2 + $0x10] sm:$0xff] %v8093
          %8114 = vst [vmem:[#allocation2 + $0x18] sm:$0xff] %v8094
          %8115 = vst [vmem:[#allocation2 + $0x20] sm:$0xff] %v8095
          %8116 = vst [vmem:[#allocation2 + $0x28] sm:$0xff] %v8096
          %8117 = vst [vmem:[#allocation2 + $0x30] sm:$0xff] %v8097
          %8118 = vst [vmem:[#allocation2 + $0x38] sm:$0xff] %v8098
          %8119 = vst [vmem:[#allocation2 + $0x40] sm:$0xff] %v8099
          %8120 = vst [vmem:[#allocation2 + $0x48] sm:$0xff] %v8100
          %8121 = vst [vmem:[#allocation2 + $0x50] sm:$0xff] %v8101
          %8122 = vst [vmem:[#allocation2 + $0x58] sm:$0xff] %v8102
          %8123 = vst [vmem:[#allocation2 + $0x60] sm:$0xff] %v8103
          %8124 = vst [vmem:[#allocation2 + $0x68] sm:$0xff] %v8104
          %8125 = vst [vmem:[#allocation2 + $0x70] sm:$0xff] %v8105
          %8126 = vst [vmem:[#allocation2 + $0x78] sm:$0xff] %v8106
          %8127 = vst [vmem:[#allocation2 + $0x80] sm:$0xff] %v8107
          %8128 = vst [vmem:[#allocation2 + $0x88] sm:$0xff] %v8108
          %8129 = vst [vmem:[#allocation2 + $0x90] sm:$0xff] %v8109
          %8130 = vst [vmem:[#allocation2 + $0x98] sm:$0xff] %v8110
          %p8131 = scmp.eq.s32.totalorder %s48, 1
          // Predicated region
          $region141: #{tpu_custom_call.1} parent=139 // pred_check
            %p8132 = pneg %p8131
          $region142: #{tpu_custom_call.1} parent=139 // pred_check_branch
            %8134 = sbr.rel (%p8132) target = $region144
          $region143: #{tpu_custom_call.1} parent=139 // pred_region
            %v8135 = vld [vmem:[%s17] sm:$0x1]
            %v8136 = vld [vmem:[%s18] sm:$0x1]
            %8137 = vadd.xlane.f32.xlu0 %v8091
            %v8138 = vpop.xlane.xlu0 %8137
            %8139 = vadd.xlane.f32.xlu0 %v8092
            %v8140 = vpop.xlane.xlu0 %8139
            %8141 = vadd.xlane.f32.xlu0 %v8093
            %v8142 = vpop.xlane.xlu0 %8141
            %8143 = vadd.xlane.f32.xlu0 %v8094
            %v8144 = vpop.xlane.xlu0 %8143
            %8145 = vadd.xlane.f32.xlu0 %v8095
            %v8146 = vpop.xlane.xlu0 %8145
            %8147 = vadd.xlane.f32.xlu0 %v8096
            %v8148 = vpop.xlane.xlu0 %8147
            %8149 = vadd.xlane.f32.xlu0 %v8097
            %v8150 = vpop.xlane.xlu0 %8149
            %8151 = vadd.xlane.f32.xlu0 %v8098
            %v8152 = vpop.xlane.xlu0 %8151
            %8153 = vadd.xlane.f32.xlu0 %v8099
            %v8154 = vpop.xlane.xlu0 %8153
            %8155 = vadd.xlane.f32.xlu0 %v8100
            %v8156 = vpop.xlane.xlu0 %8155
            %8157 = vadd.xlane.f32.xlu0 %v8101
            %v8158 = vpop.xlane.xlu0 %8157
            %8159 = vadd.xlane.f32.xlu0 %v8102
            %v8160 = vpop.xlane.xlu0 %8159
            %8161 = vadd.xlane.f32.xlu0 %v8103
            %v8162 = vpop.xlane.xlu0 %8161
            %8163 = vadd.xlane.f32.xlu0 %v8104
            %v8164 = vpop.xlane.xlu0 %8163
            %8165 = vadd.xlane.f32.xlu0 %v8105
            %v8166 = vpop.xlane.xlu0 %8165
            %8167 = vadd.xlane.f32.xlu0 %v8106
            %v8168 = vpop.xlane.xlu0 %8167
            %8169 = vadd.xlane.f32.xlu0 %v8107
            %v8170 = vpop.xlane.xlu0 %8169
            %8171 = vadd.xlane.f32.xlu0 %v8108
            %v8172 = vpop.xlane.xlu0 %8171
            %8173 = vadd.xlane.f32.xlu0 %v8109
            %v8174 = vpop.xlane.xlu0 %8173
            %8175 = vadd.xlane.f32.xlu0 %v8110
            %v8176 = vpop.xlane.xlu0 %8175
            %v8177 = vrcp.pop 128.0
            %v8178 = vmul.f32 %v8138, %v8177
            %v8179 = vmul.f32 %v8140, %v8177
            %v8180 = vmul.f32 %v8142, %v8177
            %v8181 = vmul.f32 %v8144, %v8177
            %v8182 = vmul.f32 %v8146, %v8177
            %v8183 = vmul.f32 %v8148, %v8177
            %v8184 = vmul.f32 %v8150, %v8177
            %v8185 = vmul.f32 %v8152, %v8177
            %v8186 = vmul.f32 %v8154, %v8177
            %v8187 = vmul.f32 %v8156, %v8177
            %v8188 = vmul.f32 %v8158, %v8177
            %v8189 = vmul.f32 %v8160, %v8177
            %v8190 = vmul.f32 %v8162, %v8177
            %v8191 = vmul.f32 %v8164, %v8177
            %v8192 = vmul.f32 %v8166, %v8177
            %v8193 = vmul.f32 %v8168, %v8177
            %v8194 = vmul.f32 %v8170, %v8177
            %v8195 = vmul.f32 %v8172, %v8177
            %v8196 = vmul.f32 %v8174, %v8177
            %v8197 = vmul.f32 %v8176, %v8177
            %v8198 = vsub.f32 %v8091, %v8178
            %v8199 = vsub.f32 %v8092, %v8179
            %v8200 = vsub.f32 %v8093, %v8180
            %v8201 = vsub.f32 %v8094, %v8181
            %v8202 = vsub.f32 %v8095, %v8182
            %v8203 = vsub.f32 %v8096, %v8183
            %v8204 = vsub.f32 %v8097, %v8184
            %v8205 = vsub.f32 %v8098, %v8185
            %v8206 = vsub.f32 %v8099, %v8186
            %v8207 = vsub.f32 %v8100, %v8187
            %v8208 = vsub.f32 %v8101, %v8188
            %v8209 = vsub.f32 %v8102, %v8189
            %v8210 = vsub.f32 %v8103, %v8190
            %v8211 = vsub.f32 %v8104, %v8191
            %v8212 = vsub.f32 %v8105, %v8192
            %v8213 = vsub.f32 %v8106, %v8193
            %v8214 = vsub.f32 %v8107, %v8194
            %v8215 = vsub.f32 %v8108, %v8195
            %v8216 = vsub.f32 %v8109, %v8196
            %v8217 = vsub.f32 %v8110, %v8197
            %v8218 = vmul.f32 %v8198, %v8198
            %v8219 = vmul.f32 %v8199, %v8199
            %v8220 = vmul.f32 %v8200, %v8200
            %v8221 = vmul.f32 %v8201, %v8201
            %v8222 = vmul.f32 %v8202, %v8202
            %v8223 = vmul.f32 %v8203, %v8203
            %v8224 = vmul.f32 %v8204, %v8204
            %v8225 = vmul.f32 %v8205, %v8205
            %v8226 = vmul.f32 %v8206, %v8206
            %v8227 = vmul.f32 %v8207, %v8207
            %v8228 = vmul.f32 %v8208, %v8208
            %v8229 = vmul.f32 %v8209, %v8209
            %v8230 = vmul.f32 %v8210, %v8210
            %v8231 = vmul.f32 %v8211, %v8211
            %v8232 = vmul.f32 %v8212, %v8212
            %v8233 = vmul.f32 %v8213, %v8213
            %v8234 = vmul.f32 %v8214, %v8214
            %v8235 = vmul.f32 %v8215, %v8215
            %v8236 = vmul.f32 %v8216, %v8216
            %v8237 = vmul.f32 %v8217, %v8217
            %8238 = vadd.xlane.f32.xlu0 %v8218
            %v8239 = vpop.xlane.xlu0 %8238
            %8240 = vadd.xlane.f32.xlu0 %v8219
            %v8241 = vpop.xlane.xlu0 %8240
            %8242 = vadd.xlane.f32.xlu0 %v8220
            %v8243 = vpop.xlane.xlu0 %8242
            %8244 = vadd.xlane.f32.xlu0 %v8221
            %v8245 = vpop.xlane.xlu0 %8244
            %8246 = vadd.xlane.f32.xlu0 %v8222
            %v8247 = vpop.xlane.xlu0 %8246
            %8248 = vadd.xlane.f32.xlu0 %v8223
            %v8249 = vpop.xlane.xlu0 %8248
            %8250 = vadd.xlane.f32.xlu0 %v8224
            %v8251 = vpop.xlane.xlu0 %8250
            %8252 = vadd.xlane.f32.xlu0 %v8225
            %v8253 = vpop.xlane.xlu0 %8252
            %8254 = vadd.xlane.f32.xlu0 %v8226
            %v8255 = vpop.xlane.xlu0 %8254
            %8256 = vadd.xlane.f32.xlu0 %v8227
            %v8257 = vpop.xlane.xlu0 %8256
            %8258 = vadd.xlane.f32.xlu0 %v8228
            %v8259 = vpop.xlane.xlu0 %8258
            %8260 = vadd.xlane.f32.xlu0 %v8229
            %v8261 = vpop.xlane.xlu0 %8260
            %8262 = vadd.xlane.f32.xlu0 %v8230
            %v8263 = vpop.xlane.xlu0 %8262
            %8264 = vadd.xlane.f32.xlu0 %v8231
            %v8265 = vpop.xlane.xlu0 %8264
            %8266 = vadd.xlane.f32.xlu0 %v8232
            %v8267 = vpop.xlane.xlu0 %8266
            %8268 = vadd.xlane.f32.xlu0 %v8233
            %v8269 = vpop.xlane.xlu0 %8268
            %8270 = vadd.xlane.f32.xlu0 %v8234
            %v8271 = vpop.xlane.xlu0 %8270
            %8272 = vadd.xlane.f32.xlu0 %v8235
            %v8273 = vpop.xlane.xlu0 %8272
            %8274 = vadd.xlane.f32.xlu0 %v8236
            %v8275 = vpop.xlane.xlu0 %8274
            %8276 = vadd.xlane.f32.xlu0 %v8237
            %v8277 = vpop.xlane.xlu0 %8276
            %v8278 = vmul.f32 %v8239, %v8177
            %v8279 = vmul.f32 %v8241, %v8177
            %v8280 = vmul.f32 %v8243, %v8177
            %v8281 = vmul.f32 %v8245, %v8177
            %v8282 = vmul.f32 %v8247, %v8177
            %v8283 = vmul.f32 %v8249, %v8177
            %v8284 = vmul.f32 %v8251, %v8177
            %v8285 = vmul.f32 %v8253, %v8177
            %v8286 = vmul.f32 %v8255, %v8177
            %v8287 = vmul.f32 %v8257, %v8177
            %v8288 = vmul.f32 %v8259, %v8177
            %v8289 = vmul.f32 %v8261, %v8177
            %v8290 = vmul.f32 %v8263, %v8177
            %v8291 = vmul.f32 %v8265, %v8177
            %v8292 = vmul.f32 %v8267, %v8177
            %v8293 = vmul.f32 %v8269, %v8177
            %v8294 = vmul.f32 %v8271, %v8177
            %v8295 = vmul.f32 %v8273, %v8177
            %v8296 = vmul.f32 %v8275, %v8177
            %v8297 = vmul.f32 %v8277, %v8177
            %v8298 = vadd.f32 %v8278, 1e-05
            %v8299 = vadd.f32 %v8279, 1e-05
            %v8300 = vadd.f32 %v8280, 1e-05
            %v8301 = vadd.f32 %v8281, 1e-05
            %v8302 = vadd.f32 %v8282, 1e-05
            %v8303 = vadd.f32 %v8283, 1e-05
            %v8304 = vadd.f32 %v8284, 1e-05
            %v8305 = vadd.f32 %v8285, 1e-05
            %v8306 = vadd.f32 %v8286, 1e-05
            %v8307 = vadd.f32 %v8287, 1e-05
            %v8308 = vadd.f32 %v8288, 1e-05
            %v8309 = vadd.f32 %v8289, 1e-05
            %v8310 = vadd.f32 %v8290, 1e-05
            %v8311 = vadd.f32 %v8291, 1e-05
            %v8312 = vadd.f32 %v8292, 1e-05
            %v8313 = vadd.f32 %v8293, 1e-05
            %v8314 = vadd.f32 %v8294, 1e-05
            %v8315 = vadd.f32 %v8295, 1e-05
            %v8316 = vadd.f32 %v8296, 1e-05
            %v8317 = vadd.f32 %v8297, 1e-05
            %v8318 = vrsqrt.pop %v8298
            %v8319 = vrsqrt.pop %v8299
            %v8320 = vrsqrt.pop %v8300
            %v8321 = vrsqrt.pop %v8301
            %v8322 = vrsqrt.pop %v8302
            %v8323 = vrsqrt.pop %v8303
            %v8324 = vrsqrt.pop %v8304
            %v8325 = vrsqrt.pop %v8305
            %v8326 = vrsqrt.pop %v8306
            %v8327 = vrsqrt.pop %v8307
            %v8328 = vrsqrt.pop %v8308
            %v8329 = vrsqrt.pop %v8309
            %v8330 = vrsqrt.pop %v8310
            %v8331 = vrsqrt.pop %v8311
            %v8332 = vrsqrt.pop %v8312
            %v8333 = vrsqrt.pop %v8313
            %v8334 = vrsqrt.pop %v8314
            %v8335 = vrsqrt.pop %v8315
            %v8336 = vrsqrt.pop %v8316
            %v8337 = vrsqrt.pop %v8317
            %v8338 = vmul.f32 %v8198, %v8318
            %v8339 = vmul.f32 %v8199, %v8319
            %v8340 = vmul.f32 %v8200, %v8320
            %v8341 = vmul.f32 %v8201, %v8321
            %v8342 = vmul.f32 %v8202, %v8322
            %v8343 = vmul.f32 %v8203, %v8323
            %v8344 = vmul.f32 %v8204, %v8324
            %v8345 = vmul.f32 %v8205, %v8325
            %v8346 = vmul.f32 %v8206, %v8326
            %v8347 = vmul.f32 %v8207, %v8327
            %v8348 = vmul.f32 %v8208, %v8328
            %v8349 = vmul.f32 %v8209, %v8329
            %v8350 = vmul.f32 %v8210, %v8330
            %v8351 = vmul.f32 %v8211, %v8331
            %v8352 = vmul.f32 %v8212, %v8332
            %v8353 = vmul.f32 %v8213, %v8333
            %v8354 = vmul.f32 %v8214, %v8334
            %v8355 = vmul.f32 %v8215, %v8335
            %v8356 = vmul.f32 %v8216, %v8336
            %v8357 = vmul.f32 %v8217, %v8337
            %v8359 = vlaneseq
            %v8360 = vshrl.u32 %v8359, 7
            %v8361 = vsub.s32 0, %v8360
            %v8362 = vrot.slane %v8135, %v8361
            %v8364 = vmul.f32 %v8338, %v8362
            %v8365 = vmul.f32 %v8339, %v8362
            %v8366 = vmul.f32 %v8340, %v8362
            %v8367 = vmul.f32 %v8341, %v8362
            %v8368 = vmul.f32 %v8342, %v8362
            %v8369 = vmul.f32 %v8343, %v8362
            %v8370 = vmul.f32 %v8344, %v8362
            %v8371 = vmul.f32 %v8345, %v8362
            %v8372 = vmul.f32 %v8346, %v8362
            %v8373 = vmul.f32 %v8347, %v8362
            %v8374 = vmul.f32 %v8348, %v8362
            %v8375 = vmul.f32 %v8349, %v8362
            %v8376 = vmul.f32 %v8350, %v8362
            %v8377 = vmul.f32 %v8351, %v8362
            %v8378 = vmul.f32 %v8352, %v8362
            %v8379 = vmul.f32 %v8353, %v8362
            %v8380 = vmul.f32 %v8354, %v8362
            %v8381 = vmul.f32 %v8355, %v8362
            %v8382 = vmul.f32 %v8356, %v8362
            %v8383 = vmul.f32 %v8357, %v8362
            %v8385 = vlaneseq
            %v8386 = vshrl.u32 %v8385, 7
            %v8387 = vsub.s32 0, %v8386
            %v8388 = vrot.slane %v8136, %v8387
            %v8390 = vadd.f32 %v8364, %v8388
            %v8391 = vadd.f32 %v8365, %v8388
            %v8392 = vadd.f32 %v8366, %v8388
            %v8393 = vadd.f32 %v8367, %v8388
            %v8394 = vadd.f32 %v8368, %v8388
            %v8395 = vadd.f32 %v8369, %v8388
            %v8396 = vadd.f32 %v8370, %v8388
            %v8397 = vadd.f32 %v8371, %v8388
            %v8398 = vadd.f32 %v8372, %v8388
            %v8399 = vadd.f32 %v8373, %v8388
            %v8400 = vadd.f32 %v8374, %v8388
            %v8401 = vadd.f32 %v8375, %v8388
            %v8402 = vadd.f32 %v8376, %v8388
            %v8403 = vadd.f32 %v8377, %v8388
            %v8404 = vadd.f32 %v8378, %v8388
            %v8405 = vadd.f32 %v8379, %v8388
            %v8406 = vadd.f32 %v8380, %v8388
            %v8407 = vadd.f32 %v8381, %v8388
            %v8408 = vadd.f32 %v8382, %v8388
            %v8409 = vadd.f32 %v8383, %v8388
            %8410 = vst [vmem:[#allocation20] sm:$0xff] %v8390
            %8411 = vst [vmem:[#allocation20 + $0x8] sm:$0xff] %v8391
            %8412 = vst [vmem:[#allocation20 + $0x10] sm:$0xff] %v8392
            %8413 = vst [vmem:[#allocation20 + $0x18] sm:$0xff] %v8393
            %8414 = vst [vmem:[#allocation20 + $0x20] sm:$0xff] %v8394
            %8415 = vst [vmem:[#allocation20 + $0x28] sm:$0xff] %v8395
            %8416 = vst [vmem:[#allocation20 + $0x30] sm:$0xff] %v8396
            %8417 = vst [vmem:[#allocation20 + $0x38] sm:$0xff] %v8397
            %8418 = vst [vmem:[#allocation20 + $0x40] sm:$0xff] %v8398
            %8419 = vst [vmem:[#allocation20 + $0x48] sm:$0xff] %v8399
            %8420 = vst [vmem:[#allocation20 + $0x50] sm:$0xff] %v8400
            %8421 = vst [vmem:[#allocation20 + $0x58] sm:$0xff] %v8401
            %8422 = vst [vmem:[#allocation20 + $0x60] sm:$0xff] %v8402
            %8423 = vst [vmem:[#allocation20 + $0x68] sm:$0xff] %v8403
            %8424 = vst [vmem:[#allocation20 + $0x70] sm:$0xff] %v8404
            %8425 = vst [vmem:[#allocation20 + $0x78] sm:$0xff] %v8405
            %8426 = vst [vmem:[#allocation20 + $0x80] sm:$0xff] %v8406
            %8427 = vst [vmem:[#allocation20 + $0x88] sm:$0xff] %v8407
            %8428 = vst [vmem:[#allocation20 + $0x90] sm:$0xff] %v8408
            %8429 = vst [vmem:[#allocation20 + $0x98] sm:$0xff] %v8409
          $region144: #{tpu_custom_call.1} parent=139 // pred_fallthru
            _
        $region140: #{tpu_custom_call.1} parent=95 // pred_fallthru
          _
        // Predicated region
        $region145: #{tpu_custom_call.1} parent=95 // pred_check
          %p8430 = pneg %p556
        $region146: #{tpu_custom_call.1} parent=95 // pred_check_branch
          %8432 = sbr.rel (%p8430) target = $region148
        $region147: #{tpu_custom_call.1} parent=95 // pred_region
          %s8434 = ssub.s32 2560, 2560
          %8435 = vsyncadd [#allocation8], %s8434
          %s8436 = sshll.u32 [#allocation20], 4
          %s8437 = int_to_ptr.vmem [resolvable:$true] %s8436
          %8442 = dma.vmem_to_hbm [thread:$0]  %s8437, 2560, %s19, [#allocation8], 128, 128, 8
        $region148: #{tpu_custom_call.1} parent=95 // pred_fallthru
          _
        // Predicated region
        $region149: #{tpu_custom_call.1} parent=95 // pred_check
          %p8443 = pneg %p556
        $region150: #{tpu_custom_call.1} parent=95 // pred_check_branch
          %8445 = sbr.rel (%p8443) target = $region152
        $region151: #{tpu_custom_call.1} parent=95 // pred_region
          %8446 = dma.done [#allocation8], 2560
        $region152: #{tpu_custom_call.1} parent=95 // pred_fallthru
          _
      $region96: #{tpu_custom_call.1} parent=5 // pred_fallthru
        _
      %p8447 = scmp.le.s32.totalorder 2, %s39
      // Predicated region
      $region153: #{tpu_custom_call.1} parent=5 // pred_check
        %p8448 = pneg %p8447
      $region154: #{tpu_custom_call.1} parent=5 // pred_check_branch
        %8450 = sbr.rel (%p8448) target = $region156
      $region155: #{tpu_custom_call.1} parent=5 // pred_region
        %s8451 = ssub.s32 %s39, 2
      $region156: #{tpu_custom_call.1} parent=5 // pred_fallthru
        _
    $region6: #{tpu_custom_call.1} parent=1 // loop_footer
      %s43 = sadd.s32 1, %s39
    $region7: #{tpu_custom_call.1} parent=1 // loop_footer_branch
      %38 = sbr.rel target = $region3
    $region8: #{tpu_custom_call.1} parent=1 // loop_exit
      _
    %8452 = vsyncpa [#allocation7], 1
    %s8453 = scalar_lea.sflag [#allocation7], 1
    %8454 = vsyncpa %s8453, 1
    %8455 = vsyncpa [#allocation10], 1
    %s8456 = scalar_lea.sflag [#allocation10], 1
    %8457 = vsyncpa %s8456, 1
    %8458 = vsyncpa [#allocation13], 1
    %s8459 = scalar_lea.sflag [#allocation13], 1
    %8460 = vsyncpa %s8459, 1
    %8461 = vsyncpa [#allocation16], 1
    %s8462 = scalar_lea.sflag [#allocation16], 1
    %8463 = vsyncpa %s8462, 1
    %8464 = vsyncpa [#allocation19], 1
    %s8465 = scalar_lea.sflag [#allocation19], 1
    %8466 = vsyncpa %s8465, 1
    %8467 = vsyncpa [#allocation8], 1
    %s8468 = scalar_lea.sflag [#allocation8], 1
    %8469 = vsyncpa %s8468, 1

</llo_original>
